<compile_context>
chip_gen: v7x
topology: tpu7x:2x2x1
jax: 0.10.0
libtpu: 0.0.40
codegen_flags: <defaults>
</compile_context>

<pallas_src>
import functools
import math

import jax
import jax.numpy as jnp
from jax.experimental import pallas as pl
from jax.experimental.pallas import tpu as pltpu


def _round_up(x, m):
    return (x + m - 1) // m * m


# ----------------------------------------------------------------------------
# Pallas kernel: tiled GEMM + bias + activation (hot path of every layer)
# ----------------------------------------------------------------------------
def _gemm_bias_act_kernel(a_ref, b_ref, bias_ref, o_ref, acc_ref, *, activation):
    @pl.when(pl.program_id(2) == 0)
    def _():
        acc_ref[...] = jnp.zeros_like(acc_ref)

    acc_ref[...] += jnp.dot(a_ref[...], b_ref[...],
                            preferred_element_type=jnp.float32)

    @pl.when(pl.program_id(2) == pl.num_programs(2) - 1)
    def _():
        y = acc_ref[...] + bias_ref[...]
        if activation == "relu":
            y = jnp.maximum(y, 0.0)
        elif activation == "sigmoid":
            # numerically stable sigmoid via EUP tanh (never overflows)
            y = 0.5 * (jnp.tanh(0.5 * y) + 1.0)
        o_ref[...] = y.astype(o_ref.dtype)


def gemm_bias_act(a, b, bias, *, activation, bias_axis):
    """act(a @ b + bias).

    a: (M, K)  b: (K, N)
    bias: (N,) if bias_axis == "row" (broadcast over M, used by Linear)
          (M,) if bias_axis == "col" (broadcast over N, used by convs where
                                      M = Cout and N = spatial/lane axis)
    """
    M, K = a.shape
    K2, N = b.shape
    assert K == K2

    # ---- tiling: lane-dense N, sublane-padded M, full-K block when it fits --
    tn = min(512, _round_up(N, 128))
    Np = _round_up(N, tn)
    tm = min(256, _round_up(M, 8))
    Mp = _round_up(M, tm)
    Kp = _round_up(K, 8)
    if Kp <= 2560:
        tk = Kp                                 # single full-K block (<= ~5 MB)
    else:
        tk = 1024
        Kp = _round_up(K, tk)

    a = jnp.pad(a, ((0, Mp - M), (0, Kp - K)))
    b = jnp.pad(b, ((0, Kp - K), (0, Np - N)))
    if bias_axis == "row":
        bias2 = jnp.pad(bias, ((0, Np - N),)).reshape(1, Np)
        bias_spec = pl.BlockSpec((1, tn), lambda i, j, k: (0, j))
    else:
        bias2 = jnp.pad(bias, ((0, Mp - M),)).reshape(Mp, 1)
        bias_spec = pl.BlockSpec((tm, 1), lambda i, j, k: (i, 0))

    grid = (Mp // tm, Np // tn, Kp // tk)
    out = pl.pallas_call(
        functools.partial(_gemm_bias_act_kernel, activation=activation),
        out_shape=jax.ShapeDtypeStruct((Mp, Np), jnp.float32),
        grid_spec=pltpu.PrefetchScalarGridSpec(
            num_scalar_prefetch=0,
            grid=grid,
            in_specs=[
                pl.BlockSpec((tm, tk), lambda i, j, k: (i, k)),
                pl.BlockSpec((tk, tn), lambda i, j, k: (k, j)),
                bias_spec,
            ],
            out_specs=pl.BlockSpec((tm, tn), lambda i, j, k: (i, j)),
            scratch_shapes=[pltpu.VMEM((tm, tn), jnp.float32)],
        ),
        compiler_params=pltpu.CompilerParams(
            dimension_semantics=("parallel", "parallel", "arbitrary"),
            vmem_limit_bytes=64 * 1024 * 1024),
    )(a, b, bias2)
    return out[:M, :N]


# ----------------------------------------------------------------------------
# Conv2d / polyphase ConvTranspose2d / Linear built on the Pallas GEMM (NCHW)
# ----------------------------------------------------------------------------
def conv2d_gemm(x, wmat, bias, *, kh, kw, stride, pad_h, pad_w, activation):
    """NCHW conv as a lane-dense GEMM:  out^T = act(Wmat @ patches^T + b).

    x: (B, Cin, H, W)   wmat: (Cout, Cin*kh*kw) with K-order (Cin, kh, kw)
    bias: (Cout,)       returns (B, Cout, Ho, Wo) float32
    """
    B, Cin, H, W = x.shape
    Cout = wmat.shape[0]
    Ho = (H + pad_h[0] + pad_h[1] - kh) // stride + 1
    Wo = (W + pad_w[0] + pad_w[1] - kw) // stride + 1
    xp = jnp.pad(x, ((0, 0), (0, 0), pad_h, pad_w))

    # im2col with K-order (Cin, kh, kw) and lane axis (B*Ho*Wo).  Small at this
    # scale; TODO(synk): fuse into the kernel (grid over taps) for large inputs.
    cols = []
    for ki in range(kh):
        for kj in range(kw):
            cols.append(xp[:, :, ki:ki + stride * (Ho - 1) + 1:stride,
                              kj:kj + stride * (Wo - 1) + 1:stride])
    p = jnp.stack(cols, axis=2)                        # (B, Cin, kh*kw, Ho, Wo)
    p = p.transpose(1, 2, 0, 3, 4).reshape(Cin * kh * kw, B * Ho * Wo)

    out = gemm_bias_act(wmat, p, bias, activation=activation, bias_axis="col")
    return out.reshape(Cout, B, Ho, Wo).transpose(1, 0, 2, 3)


def linear_gemm(x, w_t, bias):
    """x: (B, K), w_t: (K, N) == W.T (pre-transposed in init), bias: (N,)."""
    return gemm_bias_act(x, w_t, bias, activation="none", bias_axis="row")


# per-output-parity low/high padding for k=8, stride=2, padding=1, out_pad=1
_PHASE_PADS = {0: (3, 3), 1: (2, 3)}


def conv_transpose2d_polyphase(x, phase_wmats, bias, *, activation):
    """ConvTranspose2d(k=8, s=2, p=1, output_padding=1) via 4-phase polyphase
    decomposition: one stride-1 4x4 conv per output-pixel parity (ry, rx),
    outputs interleaved.  No zero-insertion, 4x fewer FLOPs than the naive path.
    """
    B, Cin, H, W = x.shape
    Cout = bias.shape[0]
    Ho, Wo = 2 * H + 5, 2 * W + 5
    out = jnp.zeros((B, Cout, Ho, Wo), jnp.float32)
    for ry in (0, 1):
        for rx in (0, 1):
            y = conv2d_gemm(x, phase_wmats[2 * ry + rx], bias,
                            kh=4, kw=4, stride=1,
                            pad_h=_PHASE_PADS[ry], pad_w=_PHASE_PADS[rx],
                            activation=activation)
            out = out.at[:, :, ry::2, rx::2].set(y)
    return out


# ----------------------------------------------------------------------------
# Parameters (deterministic synthetic init, GEMM-ready layouts built once)
# ----------------------------------------------------------------------------
DIM, HALF, FOURTH, KSIZE = 64, 32, 26, 8


def _uniform(key, shape, fan_in):
    bound = 1.0 / math.sqrt(fan_in)
    return jax.random.uniform(key, shape, jnp.float32, -bound, bound)


def _conv_wmat(w):
    # Conv2d weight (Cout, Cin, kh, kw) -> (Cout, Cin*kh*kw); K-order matches
    # the im2col order (Cin, kh, kw), so this is a plain reshape.
    return w.reshape(w.shape[0], -1)


def _convT_phase_wmats(w):
    # ConvTranspose2d weight (Cin, Cout, 8, 8) -> four polyphase 4x4 sub-kernels
    # (built-in spatial flip), each as a GEMM-ready (Cout, Cin*16) matrix.
    taps = {0: jnp.array([7, 5, 3, 1]), 1: jnp.array([6, 4, 2, 0])}
    mats = []
    for ry in (0, 1):
        for rx in (0, 1):
            sub = w[:, :, taps[ry], :][:, :, :, taps[rx]]      # (Cin, Cout, 4, 4)
            mats.append(sub.transpose(1, 0, 2, 3).reshape(w.shape[1], -1))
    return tuple(mats)


def init_params(key, lin_dim):
    ks = jax.random.split(key, 14)
    p = {}
    p["enc_w1"] = _conv_wmat(_uniform(ks[0], (DIM, 3, KSIZE, KSIZE), 3 * 64))
    p["enc_b1"] = _uniform(ks[1], (DIM,), 3 * 64)
    p["enc_w2"] = _conv_wmat(_uniform(ks[2], (HALF, DIM, KSIZE, KSIZE), DIM * 64))
    p["enc_b2"] = _uniform(ks[3], (HALF,), DIM * 64)
    p["enc_w3"] = _conv_wmat(_uniform(ks[4], (FOURTH, HALF, KSIZE, KSIZE), HALF * 64))
    p["enc_b3"] = _uniform(ks[5], (FOURTH,), HALF * 64)
    # Linear(lin_dim, lin_dim): store W^T directly (GEMM-ready)
    p["lin_wt"] = _uniform(ks[6], (lin_dim, lin_dim), lin_dim)
    p["lin_b"] = _uniform(ks[7], (lin_dim,), lin_dim)
    p["dec_w1"] = _convT_phase_wmats(_uniform(ks[8], (FOURTH, HALF, KSIZE, KSIZE), FOURTH * 64))
    p["dec_b1"] = _uniform(ks[9], (HALF,), FOURTH * 64)
    p["dec_w2"] = _convT_phase_wmats(_uniform(ks[10], (HALF, DIM, KSIZE, KSIZE), HALF * 64))
    p["dec_b2"] = _uniform(ks[11], (DIM,), HALF * 64)
    p["dec_w3"] = _convT_phase_wmats(_uniform(ks[12], (DIM, 3, KSIZE, KSIZE), DIM * 64))
    p["dec_b3"] = _uniform(ks[13], (3,), DIM * 64)
    return p


# ----------------------------------------------------------------------------
# AE_CNN forward (NCHW in, NCHW out) — params are never mutated
# ----------------------------------------------------------------------------
def ae_cnn_forward(params, x):
    p = params
    # encoder: 3x (Conv2d k=8 s=2 p=1 + ReLU)
    h = conv2d_gemm(x, p["enc_w1"], p["enc_b1"], kh=8, kw=8, stride=2,
                    pad_h=(1, 1), pad_w=(1, 1), activation="relu")
    h = conv2d_gemm(h, p["enc_w2"], p["enc_b2"], kh=8, kw=8, stride=2,
                    pad_h=(1, 1), pad_w=(1, 1), activation="relu")
    h = conv2d_gemm(h, p["enc_w3"], p["enc_b3"], kh=8, kw=8, stride=2,
                    pad_h=(1, 1), pad_w=(1, 1), activation="relu")
    B, C, Hb, Wb = h.shape
    flat = h.reshape(B, C * Hb * Wb)                  # Flatten (NCHW, == torch)
    enc = linear_gemm(flat, p["lin_wt"], p["lin_b"])  # Linear, no activation
    # decoder: Unflatten + 3x (ConvTranspose2d k=8 s=2 p=1 op=1) [ReLU,ReLU,Sigmoid]
    d = enc.reshape(B, C, Hb, Wb)
    d = conv_transpose2d_polyphase(d, p["dec_w1"], p["dec_b1"], activation="relu")
    d = conv_transpose2d_polyphase(d, p["dec_w2"], p["dec_b2"], activation="relu")
    d = conv_transpose2d_polyphase(d, p["dec_w3"], p["dec_b3"], activation="sigmoid")
    return d


def _enc_spatial(s):
    for _ in range(3):
        s = (s + 2 - KSIZE) // 2 + 1
    return s


if __name__ == "__main__":
    # Small shapes (the original 292x292 / Linear(28314,28314) config is far too
    # large for the sandbox): 2x3x64x64 input -> 26x4x4 bottleneck ->
    # Linear(416,416) -> 2x3x67x67 output.  Same layer structure & semantics.
    B, H_IN = 2, 64
    hb = _enc_spatial(H_IN)                           # 4
    lin_dim = FOURTH * hb * hb                        # 416

    key = jax.random.PRNGKey(0)
    k_params, k_x = jax.random.split(key)
    params = init_params(k_params, lin_dim)
    x = jax.random.uniform(k_x, (B, 3, H_IN, H_IN), dtype=jnp.float32)

    forward = jax.jit(ae_cnn_forward)                 # one XLA program
    out = forward(params, x)
    out = jax.block_until_ready(out)

    h_out = 2 * (2 * (2 * hb + 5) + 5) + 5            # 67
    assert out.shape == (B, 3, h_out, h_out), out.shape
    assert out.dtype == jnp.float32
    assert bool(jnp.all(jnp.isfinite(out)))
    assert bool(jnp.all((out >= 0.0) & (out <= 1.0)))  # sigmoid output range
    print("KERNEL_OK")
</pallas_src>

<mosaic_0001>
module attributes {stable_mosaic.version = 11 : i64} {
  func.func @_gemm_bias_act_kernel(%arg0: i32, %arg1: i32, %arg2: i32, %arg3: memref<64x192xf32, #tpu.memory_space<vmem>>, %arg4: memref<192x512xf32, #tpu.memory_space<vmem>>, %arg5: memref<64x1xf32, #tpu.memory_space<vmem>>, %arg6: memref<64x512xf32, #tpu.memory_space<vmem>>, %arg7: memref<64x512xf32, #tpu.memory_space<vmem>>) attributes {dimension_semantics = [#tpu.dimension_semantics<parallel>, #tpu.dimension_semantics<parallel>, #tpu.dimension_semantics<arbitrary>], iteration_bounds = array<i64: 1, 4, 1>, scalar_prefetch = 0 : i64, scratch_operands = 1 : i64, tpu.core_type = #tpu.core_type<tc>, window_params = [{transform_indices = @transform_0, window_bounds = array<i64: 64, 192>}, {transform_indices = @transform_1, window_bounds = array<i64: 192, 512>}, {transform_indices = @transform_2, window_bounds = array<i64: 64, 1>}, {transform_indices = @transform_3, window_bounds = array<i64: 64, 512>}]} {
    %c0_i32 = arith.constant 0 : i32
    %0 = arith.cmpi eq, %arg2, %c0_i32 : i32
    %1 = arith.extui %0 : i1 to i32
    %c0_i32_0 = arith.constant 0 : i32
    %2 = arith.cmpi ne, %1, %c0_i32_0 : i32
    scf.if %2 {
      %cst_10 = arith.constant 0.000000e+00 : f32
      %12 = vector.broadcast %cst_10 : f32 to vector<64x512xf32>
      %c0_11 = arith.constant 0 : index
      %c0_12 = arith.constant 0 : index
      %13 = vector.load %arg7[%c0_11, %c0_12] : memref<64x512xf32, #tpu.memory_space<vmem>>, vector<64x512xf32>
      tpu.vector_store %arg7[%c0_11, %c0_12], %12 {strides = array<i32>} : memref<64x512xf32, #tpu.memory_space<vmem>>, vector<64x512xf32>,
    } else {
    }
    %c0 = arith.constant 0 : index
    %c0_1 = arith.constant 0 : index
    %3 = vector.load %arg7[%c0, %c0_1] : memref<64x512xf32, #tpu.memory_space<vmem>>, vector<64x512xf32>
    %c0_2 = arith.constant 0 : index
    %c0_3 = arith.constant 0 : index
    %4 = vector.load %arg3[%c0_2, %c0_3] : memref<64x192xf32, #tpu.memory_space<vmem>>, vector<64x192xf32>
    %c0_4 = arith.constant 0 : index
    %c0_5 = arith.constant 0 : index
    %5 = vector.load %arg4[%c0_4, %c0_5] : memref<192x512xf32, #tpu.memory_space<vmem>>, vector<192x512xf32>
    %cst = arith.constant dense<0.000000e+00> : vector<64x512xf32>
    %6 = tpu.matmul %4, %5, %cst {dimension_numbers = #tpu.dot_dimension_numbers<[1], [0], [0], [1], [0, 0, 1, 1], [], []>} : vector<64x192xf32>, vector<192x512xf32>, vector<64x512xf32> -> vector<64x512xf32>
    %7 = arith.addf %3, %6 : vector<64x512xf32>
    %c0_6 = arith.constant 0 : index
    %c0_7 = arith.constant 0 : index
    %8 = vector.load %arg7[%c0_6, %c0_7] : memref<64x512xf32, #tpu.memory_space<vmem>>, vector<64x512xf32>
    tpu.vector_store %arg7[%c0_6, %c0_7], %7 {strides = array<i32>} : memref<64x512xf32, #tpu.memory_space<vmem>>, vector<64x512xf32>,
    %c0_i32_8 = arith.constant 0 : i32
    %9 = arith.cmpi eq, %arg2, %c0_i32_8 : i32
    %10 = arith.extui %9 : i1 to i32
    %c0_i32_9 = arith.constant 0 : i32
    %11 = arith.cmpi ne, %10, %c0_i32_9 : i32
    scf.if %11 {
      %c0_10 = arith.constant 0 : index
      %c0_11 = arith.constant 0 : index
      %12 = vector.load %arg7[%c0_10, %c0_11] : memref<64x512xf32, #tpu.memory_space<vmem>>, vector<64x512xf32>
      %c0_12 = arith.constant 0 : index
      %c0_13 = arith.constant 0 : index
      %13 = vector.load %arg5[%c0_12, %c0_13] : memref<64x1xf32, #tpu.memory_space<vmem>>, vector<64x1xf32>
      %14 = vector.broadcast %13 : vector<64x1xf32> to vector<64x512xf32>
      %15 = arith.addf %12, %14 : vector<64x512xf32>
      %cst_14 = arith.constant 0.000000e+00 : f32
      %16 = vector.broadcast %cst_14 : f32 to vector<64x512xf32>
      %17 = arith.maximumf %15, %16 : vector<64x512xf32>
      %c0_15 = arith.constant 0 : index
      %c0_16 = arith.constant 0 : index
      %18 = vector.load %arg6[%c0_15, %c0_16] : memref<64x512xf32, #tpu.memory_space<vmem>>, vector<64x512xf32>
      tpu.vector_store %arg6[%c0_15, %c0_16], %17 {strides = array<i32>} : memref<64x512xf32, #tpu.memory_space<vmem>>, vector<64x512xf32>,
    } else {
    }
    return
  }
  func.func @transform_0(%arg0: i32, %arg1: i32, %arg2: i32) -> (i32, i32) {
    %c0_i32 = arith.constant 0 : i32
    return %arg0, %arg2 : i32, i32
  }
  func.func @transform_1(%arg0: i32, %arg1: i32, %arg2: i32) -> (i32, i32) {
    %c0_i32 = arith.constant 0 : i32
    return %arg2, %arg1 : i32, i32
  }
  func.func @transform_2(%arg0: i32, %arg1: i32, %arg2: i32) -> (i32, i32) {
    %c0_i32 = arith.constant 0 : i32
    %c0_i32_0 = arith.constant 0 : i32
    return %arg0, %c0_i32 : i32, i32
  }
  func.func @transform_3(%arg0: i32, %arg1: i32, %arg2: i32) -> (i32, i32) {
    %c0_i32 = arith.constant 0 : i32
    return %arg0, %arg1 : i32, i32
  }
}

module attributes {stable_mosaic.version = 11 : i64} {
  func.func @_gemm_bias_act_kernel(%arg0: i32, %arg1: i32, %arg2: i32, %arg3: memref<32x1024xf32, #tpu.memory_space<vmem>>, %arg4: memref<1024x384xf32, #tpu.memory_space<vmem>>, %arg5: memref<32x1xf32, #tpu.memory_space<vmem>>, %arg6: memref<32x384xf32, #tpu.memory_space<vmem>>, %arg7: memref<32x384xf32, #tpu.memory_space<vmem>>) attributes {dimension_semantics = [#tpu.dimension_semantics<parallel>, #tpu.dimension_semantics<parallel>, #tpu.dimension_semantics<arbitrary>], iteration_bounds = array<i64: 1, 1, 4>, scalar_prefetch = 0 : i64, scratch_operands = 1 : i64, tpu.core_type = #tpu.core_type<tc>, window_params = [{transform_indices = @transform_0, window_bounds = array<i64: 32, 1024>}, {transform_indices = @transform_1, window_bounds = array<i64: 1024, 384>}, {transform_indices = @transform_2, window_bounds = array<i64: 32, 1>}, {transform_indices = @transform_3, window_bounds = array<i64: 32, 384>}]} {
    %c0_i32 = arith.constant 0 : i32
    %0 = arith.cmpi eq, %arg2, %c0_i32 : i32
    %1 = arith.extui %0 : i1 to i32
    %c0_i32_0 = arith.constant 0 : i32
    %2 = arith.cmpi ne, %1, %c0_i32_0 : i32
    scf.if %2 {
      %cst_9 = arith.constant 0.000000e+00 : f32
      %12 = vector.broadcast %cst_9 : f32 to vector<32x384xf32>
      %c0_10 = arith.constant 0 : index
      %c0_11 = arith.constant 0 : index
      %13 = vector.load %arg7[%c0_10, %c0_11] : memref<32x384xf32, #tpu.memory_space<vmem>>, vector<32x384xf32>
      tpu.vector_store %arg7[%c0_10, %c0_11], %12 {strides = array<i32>} : memref<32x384xf32, #tpu.memory_space<vmem>>, vector<32x384xf32>,
    } else {
    }
    %c0 = arith.constant 0 : index
    %c0_1 = arith.constant 0 : index
    %3 = vector.load %arg7[%c0, %c0_1] : memref<32x384xf32, #tpu.memory_space<vmem>>, vector<32x384xf32>
    %c0_2 = arith.constant 0 : index
    %c0_3 = arith.constant 0 : index
    %4 = vector.load %arg3[%c0_2, %c0_3] : memref<32x1024xf32, #tpu.memory_space<vmem>>, vector<32x1024xf32>
    %c0_4 = arith.constant 0 : index
    %c0_5 = arith.constant 0 : index
    %5 = vector.load %arg4[%c0_4, %c0_5] : memref<1024x384xf32, #tpu.memory_space<vmem>>, vector<1024x384xf32>
    %cst = arith.constant dense<0.000000e+00> : vector<32x384xf32>
    %6 = tpu.matmul %4, %5, %cst {dimension_numbers = #tpu.dot_dimension_numbers<[1], [0], [0], [1], [0, 0, 1, 1], [], []>} : vector<32x1024xf32>, vector<1024x384xf32>, vector<32x384xf32> -> vector<32x384xf32>
    %7 = arith.addf %3, %6 : vector<32x384xf32>
    %c0_6 = arith.constant 0 : index
    %c0_7 = arith.constant 0 : index
    %8 = vector.load %arg7[%c0_6, %c0_7] : memref<32x384xf32, #tpu.memory_space<vmem>>, vector<32x384xf32>
    tpu.vector_store %arg7[%c0_6, %c0_7], %7 {strides = array<i32>} : memref<32x384xf32, #tpu.memory_space<vmem>>, vector<32x384xf32>,
    %c3_i32 = arith.constant 3 : i32
    %9 = arith.cmpi eq, %arg2, %c3_i32 : i32
    %10 = arith.extui %9 : i1 to i32
    %c0_i32_8 = arith.constant 0 : i32
    %11 = arith.cmpi ne, %10, %c0_i32_8 : i32
    scf.if %11 {
      %c0_9 = arith.constant 0 : index
      %c0_10 = arith.constant 0 : index
      %12 = vector.load %arg7[%c0_9, %c0_10] : memref<32x384xf32, #tpu.memory_space<vmem>>, vector<32x384xf32>
      %c0_11 = arith.constant 0 : index
      %c0_12 = arith.constant 0 : index
      %13 = vector.load %arg5[%c0_11, %c0_12] : memref<32x1xf32, #tpu.memory_space<vmem>>, vector<32x1xf32>
      %14 = vector.broadcast %13 : vector<32x1xf32> to vector<32x384xf32>
      %15 = arith.addf %12, %14 : vector<32x384xf32>
      %cst_13 = arith.constant 0.000000e+00 : f32
      %16 = vector.broadcast %cst_13 : f32 to vector<32x384xf32>
      %17 = arith.maximumf %15, %16 : vector<32x384xf32>
      %c0_14 = arith.constant 0 : index
      %c0_15 = arith.constant 0 : index
      %18 = vector.load %arg6[%c0_14, %c0_15] : memref<32x384xf32, #tpu.memory_space<vmem>>, vector<32x384xf32>
      tpu.vector_store %arg6[%c0_14, %c0_15], %17 {strides = array<i32>} : memref<32x384xf32, #tpu.memory_space<vmem>>, vector<32x384xf32>,
    } else {
    }
    return
  }
  func.func @transform_0(%arg0: i32, %arg1: i32, %arg2: i32) -> (i32, i32) {
    %c0_i32 = arith.constant 0 : i32
    return %arg0, %arg2 : i32, i32
  }
  func.func @transform_1(%arg0: i32, %arg1: i32, %arg2: i32) -> (i32, i32) {
    %c0_i32 = arith.constant 0 : i32
    return %arg2, %arg1 : i32, i32
  }
  func.func @transform_2(%arg0: i32, %arg1: i32, %arg2: i32) -> (i32, i32) {
    %c0_i32 = arith.constant 0 : i32
    %c0_i32_0 = arith.constant 0 : i32
    return %arg0, %c0_i32 : i32, i32
  }
  func.func @transform_3(%arg0: i32, %arg1: i32, %arg2: i32) -> (i32, i32) {
    %c0_i32 = arith.constant 0 : i32
    return %arg0, %arg1 : i32, i32
  }
}

module attributes {stable_mosaic.version = 11 : i64} {
  func.func @_gemm_bias_act_kernel(%arg0: i32, %arg1: i32, %arg2: i32, %arg3: memref<32x2048xf32, #tpu.memory_space<vmem>>, %arg4: memref<2048x128xf32, #tpu.memory_space<vmem>>, %arg5: memref<32x1xf32, #tpu.memory_space<vmem>>, %arg6: memref<32x128xf32, #tpu.memory_space<vmem>>, %arg7: memref<32x128xf32, #tpu.memory_space<vmem>>) attributes {dimension_semantics = [#tpu.dimension_semantics<parallel>, #tpu.dimension_semantics<parallel>, #tpu.dimension_semantics<arbitrary>], iteration_bounds = array<i64: 1, 1, 1>, scalar_prefetch = 0 : i64, scratch_operands = 1 : i64, tpu.core_type = #tpu.core_type<tc>, window_params = [{transform_indices = @transform_0, window_bounds = array<i64: 32, 2048>}, {transform_indices = @transform_1, window_bounds = array<i64: 2048, 128>}, {transform_indices = @transform_2, window_bounds = array<i64: 32, 1>}, {transform_indices = @transform_3, window_bounds = array<i64: 32, 128>}]} {
    %c0_i32 = arith.constant 0 : i32
    %0 = arith.cmpi eq, %arg2, %c0_i32 : i32
    %1 = arith.extui %0 : i1 to i32
    %c0_i32_0 = arith.constant 0 : i32
    %2 = arith.cmpi ne, %1, %c0_i32_0 : i32
    scf.if %2 {
      %cst_10 = arith.constant 0.000000e+00 : f32
      %12 = vector.broadcast %cst_10 : f32 to vector<32x128xf32>
      %c0_11 = arith.constant 0 : index
      %c0_12 = arith.constant 0 : index
      %13 = vector.load %arg7[%c0_11, %c0_12] : memref<32x128xf32, #tpu.memory_space<vmem>>, vector<32x128xf32>
      tpu.vector_store %arg7[%c0_11, %c0_12], %12 {strides = array<i32>} : memref<32x128xf32, #tpu.memory_space<vmem>>, vector<32x128xf32>,
    } else {
    }
    %c0 = arith.constant 0 : index
    %c0_1 = arith.constant 0 : index
    %3 = vector.load %arg7[%c0, %c0_1] : memref<32x128xf32, #tpu.memory_space<vmem>>, vector<32x128xf32>
    %c0_2 = arith.constant 0 : index
    %c0_3 = arith.constant 0 : index
    %4 = vector.load %arg3[%c0_2, %c0_3] : memref<32x2048xf32, #tpu.memory_space<vmem>>, vector<32x2048xf32>
    %c0_4 = arith.constant 0 : index
    %c0_5 = arith.constant 0 : index
    %5 = vector.load %arg4[%c0_4, %c0_5] : memref<2048x128xf32, #tpu.memory_space<vmem>>, vector<2048x128xf32>
    %cst = arith.constant dense<0.000000e+00> : vector<32x128xf32>
    %6 = tpu.matmul %4, %5, %cst {dimension_numbers = #tpu.dot_dimension_numbers<[1], [0], [0], [1], [0, 0, 1, 1], [], []>} : vector<32x2048xf32>, vector<2048x128xf32>, vector<32x128xf32> -> vector<32x128xf32>
    %7 = arith.addf %3, %6 : vector<32x128xf32>
    %c0_6 = arith.constant 0 : index
    %c0_7 = arith.constant 0 : index
    %8 = vector.load %arg7[%c0_6, %c0_7] : memref<32x128xf32, #tpu.memory_space<vmem>>, vector<32x128xf32>
    tpu.vector_store %arg7[%c0_6, %c0_7], %7 {strides = array<i32>} : memref<32x128xf32, #tpu.memory_space<vmem>>, vector<32x128xf32>,
    %c0_i32_8 = arith.constant 0 : i32
    %9 = arith.cmpi eq, %arg2, %c0_i32_8 : i32
    %10 = arith.extui %9 : i1 to i32
    %c0_i32_9 = arith.constant 0 : i32
    %11 = arith.cmpi ne, %10, %c0_i32_9 : i32
    scf.if %11 {
      %c0_10 = arith.constant 0 : index
      %c0_11 = arith.constant 0 : index
      %12 = vector.load %arg7[%c0_10, %c0_11] : memref<32x128xf32, #tpu.memory_space<vmem>>, vector<32x128xf32>
      %c0_12 = arith.constant 0 : index
      %c0_13 = arith.constant 0 : index
      %13 = vector.load %arg5[%c0_12, %c0_13] : memref<32x1xf32, #tpu.memory_space<vmem>>, vector<32x1xf32>
      %14 = vector.broadcast %13 : vector<32x1xf32> to vector<32x128xf32>
      %15 = arith.addf %12, %14 : vector<32x128xf32>
      %cst_14 = arith.constant 0.000000e+00 : f32
      %16 = vector.broadcast %cst_14 : f32 to vector<32x128xf32>
      %17 = arith.maximumf %15, %16 : vector<32x128xf32>
      %c0_15 = arith.constant 0 : index
      %c0_16 = arith.constant 0 : index
      %18 = vector.load %arg6[%c0_15, %c0_16] : memref<32x128xf32, #tpu.memory_space<vmem>>, vector<32x128xf32>
      tpu.vector_store %arg6[%c0_15, %c0_16], %17 {strides = array<i32>} : memref<32x128xf32, #tpu.memory_space<vmem>>, vector<32x128xf32>,
    } else {
    }
    return
  }
  func.func @transform_0(%arg0: i32, %arg1: i32, %arg2: i32) -> (i32, i32) {
    %c0_i32 = arith.constant 0 : i32
    return %arg0, %arg2 : i32, i32
  }
  func.func @transform_1(%arg0: i32, %arg1: i32, %arg2: i32) -> (i32, i32) {
    %c0_i32 = arith.constant 0 : i32
    return %arg2, %arg1 : i32, i32
  }
  func.func @transform_2(%arg0: i32, %arg1: i32, %arg2: i32) -> (i32, i32) {
    %c0_i32 = arith.constant 0 : i32
    %c0_i32_0 = arith.constant 0 : i32
    return %arg0, %c0_i32 : i32, i32
  }
  func.func @transform_3(%arg0: i32, %arg1: i32, %arg2: i32) -> (i32, i32) {
    %c0_i32 = arith.constant 0 : i32
    return %arg0, %arg1 : i32, i32
  }
}

module attributes {stable_mosaic.version = 11 : i64} {
  func.func @_gemm_bias_act_kernel(%arg0: i32, %arg1: i32, %arg2: i32, %arg3: memref<8x416xf32, #tpu.memory_space<vmem>>, %arg4: memref<416x512xf32, #tpu.memory_space<vmem>>, %arg5: memref<1x512xf32, #tpu.memory_space<vmem>>, %arg6: memref<8x512xf32, #tpu.memory_space<vmem>>, %arg7: memref<8x512xf32, #tpu.memory_space<vmem>>) attributes {dimension_semantics = [#tpu.dimension_semantics<parallel>, #tpu.dimension_semantics<parallel>, #tpu.dimension_semantics<arbitrary>], iteration_bounds = array<i64: 1, 1, 1>, scalar_prefetch = 0 : i64, scratch_operands = 1 : i64, tpu.core_type = #tpu.core_type<tc>, window_params = [{transform_indices = @transform_0, window_bounds = array<i64: 8, 416>}, {transform_indices = @transform_1, window_bounds = array<i64: 416, 512>}, {transform_indices = @transform_2, window_bounds = array<i64: 1, 512>}, {transform_indices = @transform_3, window_bounds = array<i64: 8, 512>}]} {
    %c0_i32 = arith.constant 0 : i32
    %0 = arith.cmpi eq, %arg2, %c0_i32 : i32
    %1 = arith.extui %0 : i1 to i32
    %c0_i32_0 = arith.constant 0 : i32
    %2 = arith.cmpi ne, %1, %c0_i32_0 : i32
    scf.if %2 {
      %cst_10 = arith.constant 0.000000e+00 : f32
      %12 = vector.broadcast %cst_10 : f32 to vector<8x512xf32>
      %c0_11 = arith.constant 0 : index
      %c0_12 = arith.constant 0 : index
      %13 = vector.load %arg7[%c0_11, %c0_12] : memref<8x512xf32, #tpu.memory_space<vmem>>, vector<8x512xf32>
      tpu.vector_store %arg7[%c0_11, %c0_12], %12 {strides = array<i32>} : memref<8x512xf32, #tpu.memory_space<vmem>>, vector<8x512xf32>,
    } else {
    }
    %c0 = arith.constant 0 : index
    %c0_1 = arith.constant 0 : index
    %3 = vector.load %arg7[%c0, %c0_1] : memref<8x512xf32, #tpu.memory_space<vmem>>, vector<8x512xf32>
    %c0_2 = arith.constant 0 : index
    %c0_3 = arith.constant 0 : index
    %4 = vector.load %arg3[%c0_2, %c0_3] : memref<8x416xf32, #tpu.memory_space<vmem>>, vector<8x416xf32>
    %c0_4 = arith.constant 0 : index
    %c0_5 = arith.constant 0 : index
    %5 = vector.load %arg4[%c0_4, %c0_5] : memref<416x512xf32, #tpu.memory_space<vmem>>, vector<416x512xf32>
    %cst = arith.constant dense<0.000000e+00> : vector<8x512xf32>
    %6 = tpu.matmul %4, %5, %cst {dimension_numbers = #tpu.dot_dimension_numbers<[1], [0], [0], [1], [0, 0, 1, 1], [], []>} : vector<8x416xf32>, vector<416x512xf32>, vector<8x512xf32> -> vector<8x512xf32>
    %7 = arith.addf %3, %6 : vector<8x512xf32>
    %c0_6 = arith.constant 0 : index
    %c0_7 = arith.constant 0 : index
    %8 = vector.load %arg7[%c0_6, %c0_7] : memref<8x512xf32, #tpu.memory_space<vmem>>, vector<8x512xf32>
    tpu.vector_store %arg7[%c0_6, %c0_7], %7 {strides = array<i32>} : memref<8x512xf32, #tpu.memory_space<vmem>>, vector<8x512xf32>,
    %c0_i32_8 = arith.constant 0 : i32
    %9 = arith.cmpi eq, %arg2, %c0_i32_8 : i32
    %10 = arith.extui %9 : i1 to i32
    %c0_i32_9 = arith.constant 0 : i32
    %11 = arith.cmpi ne, %10, %c0_i32_9 : i32
    scf.if %11 {
      %c0_10 = arith.constant 0 : index
      %c0_11 = arith.constant 0 : index
      %12 = vector.load %arg7[%c0_10, %c0_11] : memref<8x512xf32, #tpu.memory_space<vmem>>, vector<8x512xf32>
      %c0_12 = arith.constant 0 : index
      %c0_13 = arith.constant 0 : index
      %13 = vector.load %arg5[%c0_12, %c0_13] : memref<1x512xf32, #tpu.memory_space<vmem>>, vector<1x512xf32>
      %14 = vector.broadcast %13 : vector<1x512xf32> to vector<8x512xf32>
      %15 = arith.addf %12, %14 : vector<8x512xf32>
      %c0_14 = arith.constant 0 : index
      %c0_15 = arith.constant 0 : index
      %16 = vector.load %arg6[%c0_14, %c0_15] : memref<8x512xf32, #tpu.memory_space<vmem>>, vector<8x512xf32>
      tpu.vector_store %arg6[%c0_14, %c0_15], %15 {strides = array<i32>} : memref<8x512xf32, #tpu.memory_space<vmem>>, vector<8x512xf32>,
    } else {
    }
    return
  }
  func.func @transform_0(%arg0: i32, %arg1: i32, %arg2: i32) -> (i32, i32) {
    %c0_i32 = arith.constant 0 : i32
    return %arg0, %arg2 : i32, i32
  }
  func.func @transform_1(%arg0: i32, %arg1: i32, %arg2: i32) -> (i32, i32) {
    %c0_i32 = arith.constant 0 : i32
    return %arg2, %arg1 : i32, i32
  }
  func.func @transform_2(%arg0: i32, %arg1: i32, %arg2: i32) -> (i32, i32) {
    %c0_i32 = arith.constant 0 : i32
    %c0_i32_0 = arith.constant 0 : i32
    return %c0_i32, %arg1 : i32, i32
  }
  func.func @transform_3(%arg0: i32, %arg1: i32, %arg2: i32) -> (i32, i32) {
    %c0_i32 = arith.constant 0 : i32
    return %arg0, %arg1 : i32, i32
  }
}

module attributes {stable_mosaic.version = 11 : i64} {
  func.func @_gemm_bias_act_kernel(%arg0: i32, %arg1: i32, %arg2: i32, %arg3: memref<32x416xf32, #tpu.memory_space<vmem>>, %arg4: memref<416x128xf32, #tpu.memory_space<vmem>>, %arg5: memref<32x1xf32, #tpu.memory_space<vmem>>, %arg6: memref<32x128xf32, #tpu.memory_space<vmem>>, %arg7: memref<32x128xf32, #tpu.memory_space<vmem>>) attributes {dimension_semantics = [#tpu.dimension_semantics<parallel>, #tpu.dimension_semantics<parallel>, #tpu.dimension_semantics<arbitrary>], iteration_bounds = array<i64: 1, 1, 1>, scalar_prefetch = 0 : i64, scratch_operands = 1 : i64, tpu.core_type = #tpu.core_type<tc>, window_params = [{transform_indices = @transform_0, window_bounds = array<i64: 32, 416>}, {transform_indices = @transform_1, window_bounds = array<i64: 416, 128>}, {transform_indices = @transform_2, window_bounds = array<i64: 32, 1>}, {transform_indices = @transform_3, window_bounds = array<i64: 32, 128>}]} {
    %c0_i32 = arith.constant 0 : i32
    %0 = arith.cmpi eq, %arg2, %c0_i32 : i32
    %1 = arith.extui %0 : i1 to i32
    %c0_i32_0 = arith.constant 0 : i32
    %2 = arith.cmpi ne, %1, %c0_i32_0 : i32
    scf.if %2 {
      %cst_10 = arith.constant 0.000000e+00 : f32
      %12 = vector.broadcast %cst_10 : f32 to vector<32x128xf32>
      %c0_11 = arith.constant 0 : index
      %c0_12 = arith.constant 0 : index
      %13 = vector.load %arg7[%c0_11, %c0_12] : memref<32x128xf32, #tpu.memory_space<vmem>>, vector<32x128xf32>
      tpu.vector_store %arg7[%c0_11, %c0_12], %12 {strides = array<i32>} : memref<32x128xf32, #tpu.memory_space<vmem>>, vector<32x128xf32>,
    } else {
    }
    %c0 = arith.constant 0 : index
    %c0_1 = arith.constant 0 : index
    %3 = vector.load %arg7[%c0, %c0_1] : memref<32x128xf32, #tpu.memory_space<vmem>>, vector<32x128xf32>
    %c0_2 = arith.constant 0 : index
    %c0_3 = arith.constant 0 : index
    %4 = vector.load %arg3[%c0_2, %c0_3] : memref<32x416xf32, #tpu.memory_space<vmem>>, vector<32x416xf32>
    %c0_4 = arith.constant 0 : index
    %c0_5 = arith.constant 0 : index
    %5 = vector.load %arg4[%c0_4, %c0_5] : memref<416x128xf32, #tpu.memory_space<vmem>>, vector<416x128xf32>
    %cst = arith.constant dense<0.000000e+00> : vector<32x128xf32>
    %6 = tpu.matmul %4, %5, %cst {dimension_numbers = #tpu.dot_dimension_numbers<[1], [0], [0], [1], [0, 0, 1, 1], [], []>} : vector<32x416xf32>, vector<416x128xf32>, vector<32x128xf32> -> vector<32x128xf32>
    %7 = arith.addf %3, %6 : vector<32x128xf32>
    %c0_6 = arith.constant 0 : index
    %c0_7 = arith.constant 0 : index
    %8 = vector.load %arg7[%c0_6, %c0_7] : memref<32x128xf32, #tpu.memory_space<vmem>>, vector<32x128xf32>
    tpu.vector_store %arg7[%c0_6, %c0_7], %7 {strides = array<i32>} : memref<32x128xf32, #tpu.memory_space<vmem>>, vector<32x128xf32>,
    %c0_i32_8 = arith.constant 0 : i32
    %9 = arith.cmpi eq, %arg2, %c0_i32_8 : i32
    %10 = arith.extui %9 : i1 to i32
    %c0_i32_9 = arith.constant 0 : i32
    %11 = arith.cmpi ne, %10, %c0_i32_9 : i32
    scf.if %11 {
      %c0_10 = arith.constant 0 : index
      %c0_11 = arith.constant 0 : index
      %12 = vector.load %arg7[%c0_10, %c0_11] : memref<32x128xf32, #tpu.memory_space<vmem>>, vector<32x128xf32>
      %c0_12 = arith.constant 0 : index
      %c0_13 = arith.constant 0 : index
      %13 = vector.load %arg5[%c0_12, %c0_13] : memref<32x1xf32, #tpu.memory_space<vmem>>, vector<32x1xf32>
      %14 = vector.broadcast %13 : vector<32x1xf32> to vector<32x128xf32>
      %15 = arith.addf %12, %14 : vector<32x128xf32>
      %cst_14 = arith.constant 0.000000e+00 : f32
      %16 = vector.broadcast %cst_14 : f32 to vector<32x128xf32>
      %17 = arith.maximumf %15, %16 : vector<32x128xf32>
      %c0_15 = arith.constant 0 : index
      %c0_16 = arith.constant 0 : index
      %18 = vector.load %arg6[%c0_15, %c0_16] : memref<32x128xf32, #tpu.memory_space<vmem>>, vector<32x128xf32>
      tpu.vector_store %arg6[%c0_15, %c0_16], %17 {strides = array<i32>} : memref<32x128xf32, #tpu.memory_space<vmem>>, vector<32x128xf32>,
    } else {
    }
    return
  }
  func.func @transform_0(%arg0: i32, %arg1: i32, %arg2: i32) -> (i32, i32) {
    %c0_i32 = arith.constant 0 : i32
    return %arg0, %arg2 : i32, i32
  }
  func.func @transform_1(%arg0: i32, %arg1: i32, %arg2: i32) -> (i32, i32) {
    %c0_i32 = arith.constant 0 : i32
    return %arg2, %arg1 : i32, i32
  }
  func.func @transform_2(%arg0: i32, %arg1: i32, %arg2: i32) -> (i32, i32) {
    %c0_i32 = arith.constant 0 : i32
    %c0_i32_0 = arith.constant 0 : i32
    return %arg0, %c0_i32 : i32, i32
  }
  func.func @transform_3(%arg0: i32, %arg1: i32, %arg2: i32) -> (i32, i32) {
    %c0_i32 = arith.constant 0 : i32
    return %arg0, %arg1 : i32, i32
  }
}

module attributes {stable_mosaic.version = 11 : i64} {
  func.func @_gemm_bias_act_kernel(%arg0: i32, %arg1: i32, %arg2: i32, %arg3: memref<64x512xf32, #tpu.memory_space<vmem>>, %arg4: memref<512x512xf32, #tpu.memory_space<vmem>>, %arg5: memref<64x1xf32, #tpu.memory_space<vmem>>, %arg6: memref<64x512xf32, #tpu.memory_space<vmem>>, %arg7: memref<64x512xf32, #tpu.memory_space<vmem>>) attributes {dimension_semantics = [#tpu.dimension_semantics<parallel>, #tpu.dimension_semantics<parallel>, #tpu.dimension_semantics<arbitrary>], iteration_bounds = array<i64: 1, 1, 1>, scalar_prefetch = 0 : i64, scratch_operands = 1 : i64, tpu.core_type = #tpu.core_type<tc>, window_params = [{transform_indices = @transform_0, window_bounds = array<i64: 64, 512>}, {transform_indices = @transform_1, window_bounds = array<i64: 512, 512>}, {transform_indices = @transform_2, window_bounds = array<i64: 64, 1>}, {transform_indices = @transform_3, window_bounds = array<i64: 64, 512>}]} {
    %c0_i32 = arith.constant 0 : i32
    %0 = arith.cmpi eq, %arg2, %c0_i32 : i32
    %1 = arith.extui %0 : i1 to i32
    %c0_i32_0 = arith.constant 0 : i32
    %2 = arith.cmpi ne, %1, %c0_i32_0 : i32
    scf.if %2 {
      %cst_10 = arith.constant 0.000000e+00 : f32
      %12 = vector.broadcast %cst_10 : f32 to vector<64x512xf32>
      %c0_11 = arith.constant 0 : index
      %c0_12 = arith.constant 0 : index
      %13 = vector.load %arg7[%c0_11, %c0_12] : memref<64x512xf32, #tpu.memory_space<vmem>>, vector<64x512xf32>
      tpu.vector_store %arg7[%c0_11, %c0_12], %12 {strides = array<i32>} : memref<64x512xf32, #tpu.memory_space<vmem>>, vector<64x512xf32>,
    } else {
    }
    %c0 = arith.constant 0 : index
    %c0_1 = arith.constant 0 : index
    %3 = vector.load %arg7[%c0, %c0_1] : memref<64x512xf32, #tpu.memory_space<vmem>>, vector<64x512xf32>
    %c0_2 = arith.constant 0 : index
    %c0_3 = arith.constant 0 : index
    %4 = vector.load %arg3[%c0_2, %c0_3] : memref<64x512xf32, #tpu.memory_space<vmem>>, vector<64x512xf32>
    %c0_4 = arith.constant 0 : index
    %c0_5 = arith.constant 0 : index
    %5 = vector.load %arg4[%c0_4, %c0_5] : memref<512x512xf32, #tpu.memory_space<vmem>>, vector<512x512xf32>
    %cst = arith.constant dense<0.000000e+00> : vector<64x512xf32>
    %6 = tpu.matmul %4, %5, %cst {dimension_numbers = #tpu.dot_dimension_numbers<[1], [0], [0], [1], [0, 0, 1, 1], [], []>} : vector<64x512xf32>, vector<512x512xf32>, vector<64x512xf32> -> vector<64x512xf32>
    %7 = arith.addf %3, %6 : vector<64x512xf32>
    %c0_6 = arith.constant 0 : index
    %c0_7 = arith.constant 0 : index
    %8 = vector.load %arg7[%c0_6, %c0_7] : memref<64x512xf32, #tpu.memory_space<vmem>>, vector<64x512xf32>
    tpu.vector_store %arg7[%c0_6, %c0_7], %7 {strides = array<i32>} : memref<64x512xf32, #tpu.memory_space<vmem>>, vector<64x512xf32>,
    %c0_i32_8 = arith.constant 0 : i32
    %9 = arith.cmpi eq, %arg2, %c0_i32_8 : i32
    %10 = arith.extui %9 : i1 to i32
    %c0_i32_9 = arith.constant 0 : i32
    %11 = arith.cmpi ne, %10, %c0_i32_9 : i32
    scf.if %11 {
      %c0_10 = arith.constant 0 : index
      %c0_11 = arith.constant 0 : index
      %12 = vector.load %arg7[%c0_10, %c0_11] : memref<64x512xf32, #tpu.memory_space<vmem>>, vector<64x512xf32>
      %c0_12 = arith.constant 0 : index
      %c0_13 = arith.constant 0 : index
      %13 = vector.load %arg5[%c0_12, %c0_13] : memref<64x1xf32, #tpu.memory_space<vmem>>, vector<64x1xf32>
      %14 = vector.broadcast %13 : vector<64x1xf32> to vector<64x512xf32>
      %15 = arith.addf %12, %14 : vector<64x512xf32>
      %cst_14 = arith.constant 0.000000e+00 : f32
      %16 = vector.broadcast %cst_14 : f32 to vector<64x512xf32>
      %17 = arith.maximumf %15, %16 : vector<64x512xf32>
      %c0_15 = arith.constant 0 : index
      %c0_16 = arith.constant 0 : index
      %18 = vector.load %arg6[%c0_15, %c0_16] : memref<64x512xf32, #tpu.memory_space<vmem>>, vector<64x512xf32>
      tpu.vector_store %arg6[%c0_15, %c0_16], %17 {strides = array<i32>} : memref<64x512xf32, #tpu.memory_space<vmem>>, vector<64x512xf32>,
    } else {
    }
    return
  }
  func.func @transform_0(%arg0: i32, %arg1: i32, %arg2: i32) -> (i32, i32) {
    %c0_i32 = arith.constant 0 : i32
    return %arg0, %arg2 : i32, i32
  }
  func.func @transform_1(%arg0: i32, %arg1: i32, %arg2: i32) -> (i32, i32) {
    %c0_i32 = arith.constant 0 : i32
    return %arg2, %arg1 : i32, i32
  }
  func.func @transform_2(%arg0: i32, %arg1: i32, %arg2: i32) -> (i32, i32) {
    %c0_i32 = arith.constant 0 : i32
    %c0_i32_0 = arith.constant 0 : i32
    return %arg0, %c0_i32 : i32, i32
  }
  func.func @transform_3(%arg0: i32, %arg1: i32, %arg2: i32) -> (i32, i32) {
    %c0_i32 = arith.constant 0 : i32
    return %arg0, %arg1 : i32, i32
  }
}

module attributes {stable_mosaic.version = 11 : i64} {
  func.func @_gemm_bias_act_kernel(%arg0: i32, %arg1: i32, %arg2: i32, %arg3: memref<8x1024xf32, #tpu.memory_space<vmem>>, %arg4: memref<1024x512xf32, #tpu.memory_space<vmem>>, %arg5: memref<8x1xf32, #tpu.memory_space<vmem>>, %arg6: memref<8x512xf32, #tpu.memory_space<vmem>>, %arg7: memref<8x512xf32, #tpu.memory_space<vmem>>) attributes {dimension_semantics = [#tpu.dimension_semantics<parallel>, #tpu.dimension_semantics<parallel>, #tpu.dimension_semantics<arbitrary>], iteration_bounds = array<i64: 1, 5, 1>, scalar_prefetch = 0 : i64, scratch_operands = 1 : i64, tpu.core_type = #tpu.core_type<tc>, window_params = [{transform_indices = @transform_0, window_bounds = array<i64: 8, 1024>}, {transform_indices = @transform_1, window_bounds = array<i64: 1024, 512>}, {transform_indices = @transform_2, window_bounds = array<i64: 8, 1>}, {transform_indices = @transform_3, window_bounds = array<i64: 8, 512>}]} {
    %c0_i32 = arith.constant 0 : i32
    %0 = arith.cmpi eq, %arg2, %c0_i32 : i32
    %1 = arith.extui %0 : i1 to i32
    %c0_i32_0 = arith.constant 0 : i32
    %2 = arith.cmpi ne, %1, %c0_i32_0 : i32
    scf.if %2 {
      %cst_10 = arith.constant 0.000000e+00 : f32
      %12 = vector.broadcast %cst_10 : f32 to vector<8x512xf32>
      %c0_11 = arith.constant 0 : index
      %c0_12 = arith.constant 0 : index
      %13 = vector.load %arg7[%c0_11, %c0_12] : memref<8x512xf32, #tpu.memory_space<vmem>>, vector<8x512xf32>
      tpu.vector_store %arg7[%c0_11, %c0_12], %12 {strides = array<i32>} : memref<8x512xf32, #tpu.memory_space<vmem>>, vector<8x512xf32>,
    } else {
    }
    %c0 = arith.constant 0 : index
    %c0_1 = arith.constant 0 : index
    %3 = vector.load %arg7[%c0, %c0_1] : memref<8x512xf32, #tpu.memory_space<vmem>>, vector<8x512xf32>
    %c0_2 = arith.constant 0 : index
    %c0_3 = arith.constant 0 : index
    %4 = vector.load %arg3[%c0_2, %c0_3] : memref<8x1024xf32, #tpu.memory_space<vmem>>, vector<8x1024xf32>
    %c0_4 = arith.constant 0 : index
    %c0_5 = arith.constant 0 : index
    %5 = vector.load %arg4[%c0_4, %c0_5] : memref<1024x512xf32, #tpu.memory_space<vmem>>, vector<1024x512xf32>
    %cst = arith.constant dense<0.000000e+00> : vector<8x512xf32>
    %6 = tpu.matmul %4, %5, %cst {dimension_numbers = #tpu.dot_dimension_numbers<[1], [0], [0], [1], [0, 0, 1, 1], [], []>} : vector<8x1024xf32>, vector<1024x512xf32>, vector<8x512xf32> -> vector<8x512xf32>
    %7 = arith.addf %3, %6 : vector<8x512xf32>
    %c0_6 = arith.constant 0 : index
    %c0_7 = arith.constant 0 : index
    %8 = vector.load %arg7[%c0_6, %c0_7] : memref<8x512xf32, #tpu.memory_space<vmem>>, vector<8x512xf32>
    tpu.vector_store %arg7[%c0_6, %c0_7], %7 {strides = array<i32>} : memref<8x512xf32, #tpu.memory_space<vmem>>, vector<8x512xf32>,
    %c0_i32_8 = arith.constant 0 : i32
    %9 = arith.cmpi eq, %arg2, %c0_i32_8 : i32
    %10 = arith.extui %9 : i1 to i32
    %c0_i32_9 = arith.constant 0 : i32
    %11 = arith.cmpi ne, %10, %c0_i32_9 : i32
    scf.if %11 {
      %c0_10 = arith.constant 0 : index
      %c0_11 = arith.constant 0 : index
      %12 = vector.load %arg7[%c0_10, %c0_11] : memref<8x512xf32, #tpu.memory_space<vmem>>, vector<8x512xf32>
      %c0_12 = arith.constant 0 : index
      %c0_13 = arith.constant 0 : index
      %13 = vector.load %arg5[%c0_12, %c0_13] : memref<8x1xf32, #tpu.memory_space<vmem>>, vector<8x1xf32>
      %14 = vector.broadcast %13 : vector<8x1xf32> to vector<8x512xf32>
      %15 = arith.addf %12, %14 : vector<8x512xf32>
      %cst_14 = arith.constant 5.000000e-01 : f32
      %16 = vector.broadcast %cst_14 : f32 to vector<8x512xf32>
      %17 = arith.mulf %16, %15 : vector<8x512xf32>
      %18 = math.tanh %17 : vector<8x512xf32>
      %cst_15 = arith.constant 1.000000e+00 : f32
      %19 = vector.broadcast %cst_15 : f32 to vector<8x512xf32>
      %20 = arith.addf %18, %19 : vector<8x512xf32>
      %cst_16 = arith.constant 5.000000e-01 : f32
      %21 = vector.broadcast %cst_16 : f32 to vector<8x512xf32>
      %22 = arith.mulf %21, %20 : vector<8x512xf32>
      %c0_17 = arith.constant 0 : index
      %c0_18 = arith.constant 0 : index
      %23 = vector.load %arg6[%c0_17, %c0_18] : memref<8x512xf32, #tpu.memory_space<vmem>>, vector<8x512xf32>
      tpu.vector_store %arg6[%c0_17, %c0_18], %22 {strides = array<i32>} : memref<8x512xf32, #tpu.memory_space<vmem>>, vector<8x512xf32>,
    } else {
    }
    return
  }
  func.func @transform_0(%arg0: i32, %arg1: i32, %arg2: i32) -> (i32, i32) {
    %c0_i32 = arith.constant 0 : i32
    return %arg0, %arg2 : i32, i32
  }
  func.func @transform_1(%arg0: i32, %arg1: i32, %arg2: i32) -> (i32, i32) {
    %c0_i32 = arith.constant 0 : i32
    return %arg2, %arg1 : i32, i32
  }
  func.func @transform_2(%arg0: i32, %arg1: i32, %arg2: i32) -> (i32, i32) {
    %c0_i32 = arith.constant 0 : i32
    %c0_i32_0 = arith.constant 0 : i32
    return %arg0, %c0_i32 : i32, i32
  }
  func.func @transform_3(%arg0: i32, %arg1: i32, %arg2: i32) -> (i32, i32) {
    %c0_i32 = arith.constant 0 : i32
    return %arg0, %arg1 : i32, i32
  }
}

</mosaic_0001>

<llo_original>
// kernel: ae_cnn_forward.16
$region0: #{ae_cnn_forward.16}
  #allocation0 [shape = 'u32[]', space=smem, size = 0x4, offset = 0x4, fixed_abs, tag = 'smem constant byte address 0x4 - core index']
  #allocation1 [shape = 'u32[144,128]{1,0:T(1,128)}', space=vmem, size = 0x12000, scoped, tag = 'internal scratch']
  #allocation2 [shape = 'f32[64,512]{1,0:T(8,128)}', space=vmem, size = 0x20000, scoped, tag = 'scratch operand']
  %s0 = inlined_call_operand.hbm [shape: f32[64,192], index: 0, kind: input, shape index: {}]
  %s1 = inlined_call_operand.hbm [shape: f32[192,2048], index: 1, kind: input, shape index: {}]
  %s2 = inlined_call_operand.hbm [shape: f32[64,1], index: 2, kind: input, shape index: {}]
  %s3 = inlined_call_operand.hbm [shape: f32[64,2048], index: 3, kind: output, shape index: {}]
  %s4 = sld [smem:[#allocation0]]
  $region65: #{ae_cnn_forward.16} parent=0
    _
  %s6 = ssub.s32 1, %s4
  %s7 = scalar_select 0, %s6, %s4
  $region1: #{ae_cnn_forward.16} parent=0
    #allocation3 [shape = 'u8[65536]{0}', space=vmem, size = 0x10000, scoped, tag = 'input window, operand 0, single buffered']
    #allocation4 [shape = 's32[2]{0}', space=sflag, size = 0x8, scoped, tag = 'scoped memory for ae_cnn_forward.16']
    #allocation5 [shape = 's32[2]{0}', space=sflag, size = 0x8, scoped, tag = 'scoped memory for ae_cnn_forward.16']
    #allocation6 [shape = 'u8[786432]{0}', space=vmem, size = 0xc0000, scoped, tag = 'input window, operand 1']
    #allocation7 [shape = 's32[2]{0}', space=sflag, size = 0x8, scoped, tag = 'scoped memory for ae_cnn_forward.16']
    #allocation8 [shape = 'u8[32768]{0}', space=vmem, size = 0x8000, scoped, tag = 'input window, operand 2, single buffered']
    #allocation9 [shape = 'u8[262144]{0}', space=vmem, size = 0x40000, scoped, tag = 'output window, operand 0']
    %8 = vsyncpa [#allocation4], 0
    %9 = vsyncpa [#allocation7], 0
    %s10 = scalar_lea.sflag [#allocation7], 1
    %11 = vsyncpa %s10, 0
    %12 = vsyncpa [#allocation5], 0
    %s13 = scalar_lea.sflag [#allocation5], 1
    %14 = vsyncpa %s13, 0
    loop: start=0, step=1, limit=6
    $region2: #{ae_cnn_forward.16} parent=1 // loop_pre_header
      _
    $region3: #{ae_cnn_forward.16} parent=1 // loop_header
      %s16 = sphi 0, %s20
      %p17 = scmp.ge.s32.totalorder %s16, 6
      %s23 = sphi 0, %s42
      %s24 = sphi 0, %s38
      %s25 = sphi 0, %s34
      %s26 = sphi 0, %s23
      %s27 = sphi 0, %s24
      %s28 = sphi 0, %s25
      %s29 = sphi 0, %s26
      %s30 = sphi 0, %s27
      %s31 = sphi 0, %s28
      %s47 = sphi 0, %s49
      %s50 = sphi 0, %s47
      %s51 = sphi 0, %s50
      %s67 = sphi 0, %s51
      %s75 = sphi 0, %s77
      %s78 = sphi 0, %s75
      %s79 = sphi 0, %s78
      %s95 = sphi 0, %s79
      %s101 = sphi 0, %s103
      %s104 = sphi 0, %s101
      %s105 = sphi 0, %s104
      %s121 = sphi 0, %s105
      %s129 = sphi 0, %s131
      %s132 = sphi 0, %s129
      %s133 = sphi 0, %s132
      %s149 = sphi 0, %s133
    $region4: #{ae_cnn_forward.16} parent=1 // loop_header_branch
      %19 = sbr.rel (%p17) target = $region8
    $region5: #{ae_cnn_forward.16} parent=1 // loop_body
      %s21 = ssub.s32 %s16, 1
      %s22 = ssub.s32 %s16, 2
      %s32 = sadd.s32 1, %s25
      %p33 = scmp.ge.s32.totalorder %s32, 1
      %s34 = scalar_select %p33, 0, %s32
      %s35 = sadd.s32 1, %s24
      %s36 = scalar_select %p33, %s35, %s24
      %p37 = scmp.ge.s32.totalorder %s36, 4
      %s38 = scalar_select %p37, 0, %s36
      %s39 = sadd.s32 1, %s23
      %s40 = scalar_select %p37, %s39, %s23
      %p41 = scmp.ge.s32.totalorder %s40, 1
      %s42 = scalar_select %p41, 0, %s40
      %s43 = ssub.s32 %s23, %s42
      %s44 = ssub.s32 %s25, %s34
      %s45 = sor.u32 %s43, %s44
      %p46 = scmp.eq.s32.totalorder %s45, 0
      %s48 = sadd.s32 %s47, 1
      %s49 = scalar_select %p46, %s47, %s48
      %p52 = pneg %p46
      %p53 = scmp.eq.s32.totalorder %s16, 3
      %p54 = por %p52, %p53
      %p55 = scmp.ne.s32.totalorder %s47, %s50
      %p56 = scmp.eq.s32.totalorder %s16, 0
      %p57 = por %p55, %p56
      %p58 = scmp.ne.s32.totalorder %s47, %s50
      %p59 = scmp.eq.s32.totalorder %s21, 3
      %p60 = por %p58, %p59
      %p61 = scmp.ne.s32.totalorder %s50, %s51
      %p62 = scmp.eq.s32.totalorder %s21, 0
      %p63 = por %p61, %p62
      %p64 = scmp.ne.s32.totalorder %s50, %s51
      %p65 = scmp.eq.s32.totalorder %s22, 3
      %p66 = por %p64, %p65
      %p68 = scmp.ne.s32.totalorder %s51, %s67
      %p69 = scmp.eq.s32.totalorder %s22, 0
      %p70 = por %p68, %p69
      %s71 = ssub.s32 %s25, %s34
      %s72 = ssub.s32 %s24, %s38
      %s73 = sor.u32 %s71, %s72
      %p74 = scmp.eq.s32.totalorder %s73, 0
      %s76 = sadd.s32 %s75, 1
      %s77 = scalar_select %p74, %s75, %s76
      %p80 = pneg %p74
      %p81 = scmp.eq.s32.totalorder %s16, 3
      %p82 = por %p80, %p81
      %p83 = scmp.ne.s32.totalorder %s75, %s78
      %p84 = scmp.eq.s32.totalorder %s16, 0
      %p85 = por %p83, %p84
      %p86 = scmp.ne.s32.totalorder %s75, %s78
      %p87 = scmp.eq.s32.totalorder %s21, 3
      %p88 = por %p86, %p87
      %p89 = scmp.ne.s32.totalorder %s78, %s79
      %p90 = scmp.eq.s32.totalorder %s21, 0
      %p91 = por %p89, %p90
      %p92 = scmp.ne.s32.totalorder %s78, %s79
      %p93 = scmp.eq.s32.totalorder %s22, 3
      %p94 = por %p92, %p93
      %p96 = scmp.ne.s32.totalorder %s79, %s95
      %p97 = scmp.eq.s32.totalorder %s22, 0
      %p98 = por %p96, %p97
      %s99 = ssub.s32 %s23, %s42
      %p100 = scmp.eq.s32.totalorder %s99, 0
      %s102 = sadd.s32 %s101, 1
      %s103 = scalar_select %p100, %s101, %s102
      %p106 = pneg %p100
      %p107 = scmp.eq.s32.totalorder %s16, 3
      %p108 = por %p106, %p107
      %p109 = scmp.ne.s32.totalorder %s101, %s104
      %p110 = scmp.eq.s32.totalorder %s16, 0
      %p111 = por %p109, %p110
      %p112 = scmp.ne.s32.totalorder %s101, %s104
      %p113 = scmp.eq.s32.totalorder %s21, 3
      %p114 = por %p112, %p113
      %p115 = scmp.ne.s32.totalorder %s104, %s105
      %p116 = scmp.eq.s32.totalorder %s21, 0
      %p117 = por %p115, %p116
      %p118 = scmp.ne.s32.totalorder %s104, %s105
      %p119 = scmp.eq.s32.totalorder %s22, 3
      %p120 = por %p118, %p119
      %p122 = scmp.ne.s32.totalorder %s105, %s121
      %p123 = scmp.eq.s32.totalorder %s22, 0
      %p124 = por %p122, %p123
      %s125 = ssub.s32 %s23, %s42
      %s126 = ssub.s32 %s24, %s38
      %s127 = sor.u32 %s125, %s126
      %p128 = scmp.eq.s32.totalorder %s127, 0
      %s130 = sadd.s32 %s129, 1
      %s131 = scalar_select %p128, %s129, %s130
      %p134 = pneg %p128
      %p135 = scmp.eq.s32.totalorder %s16, 3
      %p136 = por %p134, %p135
      %p137 = scmp.ne.s32.totalorder %s129, %s132
      %p138 = scmp.eq.s32.totalorder %s16, 0
      %p139 = por %p137, %p138
      %p140 = scmp.ne.s32.totalorder %s129, %s132
      %p141 = scmp.eq.s32.totalorder %s21, 3
      %p142 = por %p140, %p141
      %p143 = scmp.ne.s32.totalorder %s132, %s133
      %p144 = scmp.eq.s32.totalorder %s21, 0
      %p145 = por %p143, %p144
      %p146 = scmp.ne.s32.totalorder %s132, %s133
      %p147 = scmp.eq.s32.totalorder %s22, 3
      %p148 = por %p146, %p147
      %p150 = scmp.ne.s32.totalorder %s133, %s149
      %p151 = scmp.eq.s32.totalorder %s22, 0
      %p152 = por %p150, %p151
      %p153 = scmp.le.s32.totalorder 1, %s16
      %p154 = scmp.lt.s32.totalorder %s16, 5
      %p155 = pnand %p153, %p154
      %p156 = pneg %p155
      // Predicated region
      $region9: #{ae_cnn_forward.16} parent=5 // pred_check
        _
      $region10: #{ae_cnn_forward.16} parent=5 // pred_check_branch
        %158 = sbr.rel (%p155) target = $region12
      $region11: #{ae_cnn_forward.16} parent=5 // pred_region
        %s159 = ssub.s32 %s16, 1
        // Predicated region
        $region13: #{ae_cnn_forward.16} parent=11 // pred_check
          %p160 = pneg %p63
        $region14: #{ae_cnn_forward.16} parent=11 // pred_check_branch
          %162 = sbr.rel (%p160) target = $region16
        $region15: #{ae_cnn_forward.16} parent=11 // pred_region
          %s163 = smul.u32 8, %s26
          %s164 = smul.u32 2, %s28
          %s166 = ssub.s32 2048, 2048
          %167 = vsyncadd [#allocation4], %s166
          %s168 = smul.addr %s163, 2
          %s169 = sadd.s32 %s164, %s168
          %s170 = smul.addr %s169, 128
          %s171 = scalar_lea.hbm %s0, %s170
          %s172 = sshll.u32 [#allocation3], 4
          %s173 = int_to_ptr.vmem [resolvable:$true] %s172
          %178 = dma.hbm_to_vmem [thread:$0]  %s171, 2048, %s173, [#allocation4], 256, 256, 16
        $region16: #{ae_cnn_forward.16} parent=11 // pred_fallthru
          _
        // Predicated region
        $region17: #{ae_cnn_forward.16} parent=11 // pred_check
          %p179 = pneg %p117
        $region18: #{ae_cnn_forward.16} parent=11 // pred_check_branch
          %181 = sbr.rel (%p179) target = $region20
        $region19: #{ae_cnn_forward.16} parent=11 // pred_region
          %s182 = smul.u32 8, %s26
          %s184 = ssub.s32 1024, 1024
          %185 = vsyncadd [#allocation7], %s184
          %s186 = smul.addr %s182, 128
          %s187 = scalar_lea.hbm %s2, %s186
          %s188 = sshll.u32 [#allocation8], 4
          %s189 = int_to_ptr.vmem [resolvable:$true] %s188
          %194 = dma.hbm_to_vmem [thread:$0]  %s187, 1024, %s189, [#allocation7], 128, 128, 8
        $region20: #{ae_cnn_forward.16} parent=11 // pred_fallthru
          _
      $region12: #{ae_cnn_forward.16} parent=5 // pred_fallthru
        _
      %p195 = scmp.lt.s32.totalorder %s16, 4
      // Predicated region
      $region21: #{ae_cnn_forward.16} parent=5 // pred_check
        %p196 = pneg %p195
      $region22: #{ae_cnn_forward.16} parent=5 // pred_check_branch
        %198 = sbr.rel (%p196) target = $region24
      $region23: #{ae_cnn_forward.16} parent=5 // pred_region
        // Predicated region
        $region25: #{ae_cnn_forward.16} parent=23 // pred_check
          %p199 = pneg %p85
        $region26: #{ae_cnn_forward.16} parent=23 // pred_check_branch
          %201 = sbr.rel (%p199) target = $region28
        $region27: #{ae_cnn_forward.16} parent=23 // pred_region
          %s202 = sand.u32 %s16, 1
          %s203 = scalar_lea.sflag [#allocation7], %s202
          %s204 = sand.u32 %s75, 1
          %s205 = smul.addr %s204, 768
          %s206 = scalar_lea.vmem [#allocation6], %s205
          %s207 = smul.u32 24, %s25
          %s208 = smul.u32 4, %s24
          %s210 = ssub.s32 12288, 12288
          %211 = vsyncadd %s203, %s210
          %s212 = smul.addr %s207, 16
          %s213 = sadd.s32 %s208, %s212
          %s214 = smul.addr %s213, 128
          %s215 = scalar_lea.hbm %s1, %s214
          %s216 = sshll.u32 %s206, 4
          %s217 = int_to_ptr.vmem [resolvable:$true] %s216
          %222 = dma.hbm_to_vmem [thread:$0]  %s215, 12288, %s217, %s203, 2048, 512, 32
        $region28: #{ae_cnn_forward.16} parent=23 // pred_fallthru
          _
      $region24: #{ae_cnn_forward.16} parent=5 // pred_fallthru
        _
      %p223 = scmp.le.s32.totalorder 1, %s16
      %p224 = scmp.lt.s32.totalorder %s16, 5
      %p225 = pnand %p223, %p224
      %p226 = pneg %p225
      // Predicated region
      $region29: #{ae_cnn_forward.16} parent=5 // pred_check
        _
      $region30: #{ae_cnn_forward.16} parent=5 // pred_check_branch
        %228 = sbr.rel (%p225) target = $region32
      $region31: #{ae_cnn_forward.16} parent=5 // pred_region
        %s229 = ssub.s32 %s16, 1
        // Predicated region
        $region33: #{ae_cnn_forward.16} parent=31 // pred_check
          %p230 = pneg %p63
        $region34: #{ae_cnn_forward.16} parent=31 // pred_check_branch
          %232 = sbr.rel (%p230) target = $region36
        $region35: #{ae_cnn_forward.16} parent=31 // pred_region
          %233 = dma.done [#allocation4], 2048
        $region36: #{ae_cnn_forward.16} parent=31 // pred_fallthru
          _
        %s234 = sand.u32 %s21, 1
        %s235 = scalar_lea.sflag [#allocation7], %s234
        %s236 = sand.u32 %s78, 1
        %s237 = smul.addr %s236, 768
        %s238 = scalar_lea.vmem [#allocation6], %s237
        // Predicated region
        $region37: #{ae_cnn_forward.16} parent=31 // pred_check
          %p239 = pneg %p91
        $region38: #{ae_cnn_forward.16} parent=31 // pred_check_branch
          %241 = sbr.rel (%p239) target = $region40
        $region39: #{ae_cnn_forward.16} parent=31 // pred_region
          %242 = dma.done %s235, 12288
        $region40: #{ae_cnn_forward.16} parent=31 // pred_fallthru
          _
        // Predicated region
        $region41: #{ae_cnn_forward.16} parent=31 // pred_check
          %p243 = pneg %p117
        $region42: #{ae_cnn_forward.16} parent=31 // pred_check_branch
          %245 = sbr.rel (%p243) target = $region44
        $region43: #{ae_cnn_forward.16} parent=31 // pred_region
          %246 = dma.done [#allocation7], 1024
        $region44: #{ae_cnn_forward.16} parent=31 // pred_fallthru
          _
        %p247 = pneg %p63
        %p248 = pneg %p60
        %s249 = sand.u32 %s21, 1
        %s250 = scalar_lea.sflag [#allocation7], %s249
        %s251 = sand.u32 %s78, 1
        %s252 = smul.addr %s251, 768
        %s253 = scalar_lea.vmem [#allocation6], %s252
        %p254 = pneg %p91
        %p255 = pneg %p88
        %p256 = pneg %p117
        %p257 = pneg %p114
        %p258 = pneg %p145
        %p259 = pneg %p142
        %s260 = sand.u32 %s132, 1
        %s261 = scalar_lea.sflag [#allocation5], %s260
        %s262 = sand.u32 %s132, 1
        %s263 = smul.addr %s262, 256
        %s264 = scalar_lea.vmem [#allocation9], %s263
        %s265 = smul.u32 8, %s26
        %s266 = smul.u32 2, %s28
        %s267 = smul.u32 24, %s28
        %s268 = smul.u32 4, %s27
        %s269 = smul.u32 8, %s26
        %s270 = smul.u32 8, %s26
        %s271 = smul.u32 4, %s27
        %p272 = scmp.eq.s32.totalorder %s28, 0
        // Predicated region
        $region45: #{ae_cnn_forward.16} parent=31 // pred_check
          %p273 = pneg %p272
        $region46: #{ae_cnn_forward.16} parent=31 // pred_check_branch
          %275 = sbr.rel (%p273) target = $region48
        $region47: #{ae_cnn_forward.16} parent=31 // pred_region
          %276 = vst [vmem:[#allocation2] sm:$0xff] 0.0
          %277 = vst [vmem:[#allocation2 + $0x8] sm:$0xff] 0.0
          %278 = vst [vmem:[#allocation2 + $0x10] sm:$0xff] 0.0
          %279 = vst [vmem:[#allocation2 + $0x18] sm:$0xff] 0.0
          %280 = vst [vmem:[#allocation2 + $0x20] sm:$0xff] 0.0
          %281 = vst [vmem:[#allocation2 + $0x28] sm:$0xff] 0.0
          %282 = vst [vmem:[#allocation2 + $0x30] sm:$0xff] 0.0
          %283 = vst [vmem:[#allocation2 + $0x38] sm:$0xff] 0.0
          %284 = vst [vmem:[#allocation2 + $0x40] sm:$0xff] 0.0
          %285 = vst [vmem:[#allocation2 + $0x48] sm:$0xff] 0.0
          %286 = vst [vmem:[#allocation2 + $0x50] sm:$0xff] 0.0
          %287 = vst [vmem:[#allocation2 + $0x58] sm:$0xff] 0.0
          %288 = vst [vmem:[#allocation2 + $0x60] sm:$0xff] 0.0
          %289 = vst [vmem:[#allocation2 + $0x68] sm:$0xff] 0.0
          %290 = vst [vmem:[#allocation2 + $0x70] sm:$0xff] 0.0
          %291 = vst [vmem:[#allocation2 + $0x78] sm:$0xff] 0.0
          %292 = vst [vmem:[#allocation2 + $0x80] sm:$0xff] 0.0
          %293 = vst [vmem:[#allocation2 + $0x88] sm:$0xff] 0.0
          %294 = vst [vmem:[#allocation2 + $0x90] sm:$0xff] 0.0
          %295 = vst [vmem:[#allocation2 + $0x98] sm:$0xff] 0.0
          %296 = vst [vmem:[#allocation2 + $0xa0] sm:$0xff] 0.0
          %297 = vst [vmem:[#allocation2 + $0xa8] sm:$0xff] 0.0
          %298 = vst [vmem:[#allocation2 + $0xb0] sm:$0xff] 0.0
          %299 = vst [vmem:[#allocation2 + $0xb8] sm:$0xff] 0.0
          %300 = vst [vmem:[#allocation2 + $0xc0] sm:$0xff] 0.0
          %301 = vst [vmem:[#allocation2 + $0xc8] sm:$0xff] 0.0
          %302 = vst [vmem:[#allocation2 + $0xd0] sm:$0xff] 0.0
          %303 = vst [vmem:[#allocation2 + $0xd8] sm:$0xff] 0.0
          %304 = vst [vmem:[#allocation2 + $0xe0] sm:$0xff] 0.0
          %305 = vst [vmem:[#allocation2 + $0xe8] sm:$0xff] 0.0
          %306 = vst [vmem:[#allocation2 + $0xf0] sm:$0xff] 0.0
          %307 = vst [vmem:[#allocation2 + $0xf8] sm:$0xff] 0.0
        $region48: #{ae_cnn_forward.16} parent=31 // pred_fallthru
          _
        %v308 = vld [vmem:[#allocation2] sm:$0xff]
        %v309 = vld [vmem:[#allocation2 + $0x8] sm:$0xff]
        %v310 = vld [vmem:[#allocation2 + $0x10] sm:$0xff]
        %v311 = vld [vmem:[#allocation2 + $0x18] sm:$0xff]
        %v312 = vld [vmem:[#allocation2 + $0x20] sm:$0xff]
        %v313 = vld [vmem:[#allocation2 + $0x28] sm:$0xff]
        %v314 = vld [vmem:[#allocation2 + $0x30] sm:$0xff]
        %v315 = vld [vmem:[#allocation2 + $0x38] sm:$0xff]
        %v316 = vld [vmem:[#allocation2 + $0x40] sm:$0xff]
        %v317 = vld [vmem:[#allocation2 + $0x48] sm:$0xff]
        %v318 = vld [vmem:[#allocation2 + $0x50] sm:$0xff]
        %v319 = vld [vmem:[#allocation2 + $0x58] sm:$0xff]
        %v320 = vld [vmem:[#allocation2 + $0x60] sm:$0xff]
        %v321 = vld [vmem:[#allocation2 + $0x68] sm:$0xff]
        %v322 = vld [vmem:[#allocation2 + $0x70] sm:$0xff]
        %v323 = vld [vmem:[#allocation2 + $0x78] sm:$0xff]
        %v324 = vld [vmem:[#allocation2 + $0x80] sm:$0xff]
        %v325 = vld [vmem:[#allocation2 + $0x88] sm:$0xff]
        %v326 = vld [vmem:[#allocation2 + $0x90] sm:$0xff]
        %v327 = vld [vmem:[#allocation2 + $0x98] sm:$0xff]
        %v328 = vld [vmem:[#allocation2 + $0xa0] sm:$0xff]
        %v329 = vld [vmem:[#allocation2 + $0xa8] sm:$0xff]
        %v330 = vld [vmem:[#allocation2 + $0xb0] sm:$0xff]
        %v331 = vld [vmem:[#allocation2 + $0xb8] sm:$0xff]
        %v332 = vld [vmem:[#allocation2 + $0xc0] sm:$0xff]
        %v333 = vld [vmem:[#allocation2 + $0xc8] sm:$0xff]
        %v334 = vld [vmem:[#allocation2 + $0xd0] sm:$0xff]
        %v335 = vld [vmem:[#allocation2 + $0xd8] sm:$0xff]
        %v336 = vld [vmem:[#allocation2 + $0xe0] sm:$0xff]
        %v337 = vld [vmem:[#allocation2 + $0xe8] sm:$0xff]
        %v338 = vld [vmem:[#allocation2 + $0xf0] sm:$0xff]
        %v339 = vld [vmem:[#allocation2 + $0xf8] sm:$0xff]
        %v340 = vld [vmem:[#allocation3] sm:$0xff]
        %v341 = vld [vmem:[#allocation3 + $0x8] sm:$0xff]
        %v342 = vld [vmem:[#allocation3 + $0x10] sm:$0xff]
        %v343 = vld [vmem:[#allocation3 + $0x18] sm:$0xff]
        %v344 = vld [vmem:[#allocation3 + $0x20] sm:$0xff]
        %v345 = vld [vmem:[#allocation3 + $0x28] sm:$0xff]
        %v346 = vld [vmem:[#allocation3 + $0x30] sm:$0xff]
        %v347 = vld [vmem:[#allocation3 + $0x38] sm:$0xff]
        %v348 = vld [vmem:[#allocation3 + $0x40] sm:$0xff]
        %v349 = vld [vmem:[#allocation3 + $0x48] sm:$0xff]
        %v350 = vld [vmem:[#allocation3 + $0x50] sm:$0xff]
        %v351 = vld [vmem:[#allocation3 + $0x58] sm:$0xff]
        %v352 = vld [vmem:[#allocation3 + $0x60] sm:$0xff]
        %v353 = vld [vmem:[#allocation3 + $0x68] sm:$0xff]
        %v354 = vld [vmem:[#allocation3 + $0x70] sm:$0xff]
        %v355 = vld [vmem:[#allocation3 + $0x78] sm:$0xff]
        %v356 = vld [vmem:[%s238] sm:$0xff]
        %v357 = vld [vmem:[%s238 + $0x8] sm:$0xff]
        %v358 = vld [vmem:[%s238 + $0x10] sm:$0xff]
        %v359 = vld [vmem:[%s238 + $0x18] sm:$0xff]
        %v360 = vld [vmem:[%s238 + $0x20] sm:$0xff]
        %v361 = vld [vmem:[%s238 + $0x28] sm:$0xff]
        %v362 = vld [vmem:[%s238 + $0x30] sm:$0xff]
        %v363 = vld [vmem:[%s238 + $0x38] sm:$0xff]
        %v364 = vld [vmem:[%s238 + $0x40] sm:$0xff]
        %v365 = vld [vmem:[%s238 + $0x48] sm:$0xff]
        %v366 = vld [vmem:[%s238 + $0x50] sm:$0xff]
        %v367 = vld [vmem:[%s238 + $0x58] sm:$0xff]
        %v368 = vld [vmem:[%s238 + $0x60] sm:$0xff]
        %v369 = vld [vmem:[%s238 + $0x68] sm:$0xff]
        %v370 = vld [vmem:[%s238 + $0x70] sm:$0xff]
        %v371 = vld [vmem:[%s238 + $0x78] sm:$0xff]
        %v372 = vld [vmem:[%s238 + $0x80] sm:$0xff]
        %v373 = vld [vmem:[%s238 + $0x88] sm:$0xff]
        %v374 = vld [vmem:[%s238 + $0x90] sm:$0xff]
        %v375 = vld [vmem:[%s238 + $0x98] sm:$0xff]
        %v376 = vld [vmem:[%s238 + $0xa0] sm:$0xff]
        %v377 = vld [vmem:[%s238 + $0xa8] sm:$0xff]
        %v378 = vld [vmem:[%s238 + $0xb0] sm:$0xff]
        %v379 = vld [vmem:[%s238 + $0xb8] sm:$0xff]
        %v380 = vld [vmem:[%s238 + $0xc0] sm:$0xff]
        %v381 = vld [vmem:[%s238 + $0xc8] sm:$0xff]
        %v382 = vld [vmem:[%s238 + $0xd0] sm:$0xff]
        %v383 = vld [vmem:[%s238 + $0xd8] sm:$0xff]
        %v384 = vld [vmem:[%s238 + $0xe0] sm:$0xff]
        %v385 = vld [vmem:[%s238 + $0xe8] sm:$0xff]
        %v386 = vld [vmem:[%s238 + $0xf0] sm:$0xff]
        %v387 = vld [vmem:[%s238 + $0xf8] sm:$0xff]
        %v388 = vld [vmem:[%s238 + $0x100] sm:$0xff]
        %v389 = vld [vmem:[%s238 + $0x108] sm:$0xff]
        %v390 = vld [vmem:[%s238 + $0x110] sm:$0xff]
        %v391 = vld [vmem:[%s238 + $0x118] sm:$0xff]
        %v392 = vld [vmem:[%s238 + $0x120] sm:$0xff]
        %v393 = vld [vmem:[%s238 + $0x128] sm:$0xff]
        %v394 = vld [vmem:[%s238 + $0x130] sm:$0xff]
        %v395 = vld [vmem:[%s238 + $0x138] sm:$0xff]
        %v396 = vld [vmem:[%s238 + $0x140] sm:$0xff]
        %v397 = vld [vmem:[%s238 + $0x148] sm:$0xff]
        %v398 = vld [vmem:[%s238 + $0x150] sm:$0xff]
        %v399 = vld [vmem:[%s238 + $0x158] sm:$0xff]
        %v400 = vld [vmem:[%s238 + $0x160] sm:$0xff]
        %v401 = vld [vmem:[%s238 + $0x168] sm:$0xff]
        %v402 = vld [vmem:[%s238 + $0x170] sm:$0xff]
        %v403 = vld [vmem:[%s238 + $0x178] sm:$0xff]
        %v404 = vld [vmem:[%s238 + $0x180] sm:$0xff]
        %v405 = vld [vmem:[%s238 + $0x188] sm:$0xff]
        %v406 = vld [vmem:[%s238 + $0x190] sm:$0xff]
        %v407 = vld [vmem:[%s238 + $0x198] sm:$0xff]
        %v408 = vld [vmem:[%s238 + $0x1a0] sm:$0xff]
        %v409 = vld [vmem:[%s238 + $0x1a8] sm:$0xff]
        %v410 = vld [vmem:[%s238 + $0x1b0] sm:$0xff]
        %v411 = vld [vmem:[%s238 + $0x1b8] sm:$0xff]
        %v412 = vld [vmem:[%s238 + $0x1c0] sm:$0xff]
        %v413 = vld [vmem:[%s238 + $0x1c8] sm:$0xff]
        %v414 = vld [vmem:[%s238 + $0x1d0] sm:$0xff]
        %v415 = vld [vmem:[%s238 + $0x1d8] sm:$0xff]
        %v416 = vld [vmem:[%s238 + $0x1e0] sm:$0xff]
        %v417 = vld [vmem:[%s238 + $0x1e8] sm:$0xff]
        %v418 = vld [vmem:[%s238 + $0x1f0] sm:$0xff]
        %v419 = vld [vmem:[%s238 + $0x1f8] sm:$0xff]
        %v420 = vld [vmem:[%s238 + $0x200] sm:$0xff]
        %v421 = vld [vmem:[%s238 + $0x208] sm:$0xff]
        %v422 = vld [vmem:[%s238 + $0x210] sm:$0xff]
        %v423 = vld [vmem:[%s238 + $0x218] sm:$0xff]
        %v424 = vld [vmem:[%s238 + $0x220] sm:$0xff]
        %v425 = vld [vmem:[%s238 + $0x228] sm:$0xff]
        %v426 = vld [vmem:[%s238 + $0x230] sm:$0xff]
        %v427 = vld [vmem:[%s238 + $0x238] sm:$0xff]
        %v428 = vld [vmem:[%s238 + $0x240] sm:$0xff]
        %v429 = vld [vmem:[%s238 + $0x248] sm:$0xff]
        %v430 = vld [vmem:[%s238 + $0x250] sm:$0xff]
        %v431 = vld [vmem:[%s238 + $0x258] sm:$0xff]
        %v432 = vld [vmem:[%s238 + $0x260] sm:$0xff]
        %v433 = vld [vmem:[%s238 + $0x268] sm:$0xff]
        %v434 = vld [vmem:[%s238 + $0x270] sm:$0xff]
        %v435 = vld [vmem:[%s238 + $0x278] sm:$0xff]
        %v436 = vld [vmem:[%s238 + $0x280] sm:$0xff]
        %v437 = vld [vmem:[%s238 + $0x288] sm:$0xff]
        %v438 = vld [vmem:[%s238 + $0x290] sm:$0xff]
        %v439 = vld [vmem:[%s238 + $0x298] sm:$0xff]
        %v440 = vld [vmem:[%s238 + $0x2a0] sm:$0xff]
        %v441 = vld [vmem:[%s238 + $0x2a8] sm:$0xff]
        %v442 = vld [vmem:[%s238 + $0x2b0] sm:$0xff]
        %v443 = vld [vmem:[%s238 + $0x2b8] sm:$0xff]
        %v444 = vld [vmem:[%s238 + $0x2c0] sm:$0xff]
        %v445 = vld [vmem:[%s238 + $0x2c8] sm:$0xff]
        %v446 = vld [vmem:[%s238 + $0x2d0] sm:$0xff]
        %v447 = vld [vmem:[%s238 + $0x2d8] sm:$0xff]
        %v448 = vld [vmem:[%s238 + $0x2e0] sm:$0xff]
        %v449 = vld [vmem:[%s238 + $0x2e8] sm:$0xff]
        %v450 = vld [vmem:[%s238 + $0x2f0] sm:$0xff]
        %v451 = vld [vmem:[%s238 + $0x2f8] sm:$0xff]
        %vm452 = vcmask 523264
        %v454 = vsel %vm452, %v341, 0
        %v457 = vsel %vm452, %v343, 0
        %v460 = vsel %vm452, %v345, 0
        %v463 = vsel %vm452, %v347, 0
        %v466 = vsel %vm452, %v349, 0
        %v469 = vsel %vm452, %v351, 0
        %v472 = vsel %vm452, %v353, 0
        %v475 = vsel %vm452, %v355, 0
        %477 = vmatprep.subr.mxu0 %v357
        %478 = vmatpush1.msra.mxu0 %v356
        %479 = vmatprep.subr.mxu0 %v361
        %480 = vmatpush1.msra.mxu0 %v360
        %481 = vmatprep.subr.mxu0 %v365
        %482 = vmatpush1.msra.mxu0 %v364
        %483 = vmatprep.subr.mxu0 %v369
        %484 = vmatpush1.msra.mxu0 %v368
        %485 = vmatprep.subr.mxu0 %v373
        %486 = vmatpush1.msra.mxu0 %v372
        %487 = vmatprep.subr.mxu0 %v377
        %488 = vmatpush1.msra.mxu0 %v376
        %489 = vmatprep.subr.mxu0 %v381
        %490 = vmatpush1.msra.mxu0 %v380
        %491 = vmatprep.subr.mxu0 %v385
        %492 = vmatpush1.msra.mxu0 %v384
        %493 = vmatprep.subr.mxu0 %v389
        %494 = vmatpush1.msra.mxu0 %v388
        %495 = vmatprep.subr.mxu0 %v393
        %496 = vmatpush1.msra.mxu0 %v392
        %497 = vmatprep.subr.mxu0 %v397
        %498 = vmatpush1.msra.mxu0 %v396
        %499 = vmatprep.subr.mxu0 %v401
        %500 = vmatpush1.msra.mxu0 %v400
        %501 = vmatprep.subr.mxu0 %v405
        %502 = vmatpush1.msra.mxu0 %v404
        %503 = vmatprep.subr.mxu0 %v409
        %504 = vmatpush1.msra.mxu0 %v408
        %505 = vmatprep.subr.mxu0 %v413
        %506 = vmatpush1.msra.mxu0 %v412
        %507 = vmatprep.subr.mxu0 %v417
        %508 = vmatpush1.msra.mxu0 %v416
        %509 = vmatprep.subr.mxu0 %v421
        %510 = vmatpush1.msra.mxu0 %v420
        %511 = vmatprep.subr.mxu0 %v425
        %512 = vmatpush1.msra.mxu0 %v424
        %513 = vmatprep.subr.mxu0 %v429
        %514 = vmatpush1.msra.mxu0 %v428
        %515 = vmatprep.subr.mxu0 %v433
        %516 = vmatpush1.msra.mxu0 %v432
        %517 = vmatprep.subr.mxu0 %v437
        %518 = vmatpush1.msra.mxu0 %v436
        %519 = vmatprep.subr.mxu0 %v441
        %520 = vmatpush1.msra.mxu0 %v440
        %521 = vmatprep.subr.mxu0 %v445
        %522 = vmatpush1.msra.mxu0 %v444
        %523 = vmatprep.subr.mxu0 %v449
        %524 = vmatpush1.msra.mxu0 %v448
        %525 = vmatprep.subr.mxu0 0.0
        %526 = vmatpush1.msra.mxu0 0.0
        %527 = vmatprep.subr.mxu0 0.0
        %528 = vmatpush1.msra.mxu0 0.0
        %529 = vmatprep.subr.mxu0 0.0
        %530 = vmatpush1.msra.mxu0 0.0
        %531 = vmatprep.subr.mxu0 0.0
        %532 = vmatpush1.msra.mxu0 0.0
        %533 = vmatprep.subr.mxu0 0.0
        %534 = vmatpush1.msra.mxu0 0.0
        %535 = vmatprep.subr.mxu0 0.0
        %536 = vmatpush1.msra.mxu0 0.0
        %537 = vmatprep.subr.mxu0 0.0
        %538 = vmatpush1.msra.mxu0 0.0
        %539 = vmatprep.subr.mxu0 0.0
        %540 = vmatpush1.msra.mxu0 0.0
        %541 = vmatprep.mubr.f32.mxu0 %v454
        %542 = vmatmul.mubr.f32.gmra.mrb[0].mxu0 %v340
        %v543 = vpop.f32.mrb[0].mxu0
        %v544 = vadd.f32 0.0, %v543
        %v545 = vpop.f32.mrb[0].mxu0
        %v546 = vadd.f32 0.0, %v545
        %547 = vmatprep.mubr.f32.mxu0 %v457
        %548 = vmatmul.mubr.f32.gmra.mrb[0].mxu0 %v342
        %v549 = vpop.f32.mrb[0].mxu0
        %v550 = vadd.f32 0.0, %v549
        %v551 = vpop.f32.mrb[0].mxu0
        %v552 = vadd.f32 0.0, %v551
        %553 = vmatprep.mubr.f32.mxu0 %v460
        %554 = vmatmul.mubr.f32.gmra.mrb[0].mxu0 %v344
        %v555 = vpop.f32.mrb[0].mxu0
        %v556 = vadd.f32 0.0, %v555
        %v557 = vpop.f32.mrb[0].mxu0
        %v558 = vadd.f32 0.0, %v557
        %559 = vmatprep.mubr.f32.mxu0 %v463
        %560 = vmatmul.mubr.f32.gmra.mrb[0].mxu0 %v346
        %v561 = vpop.f32.mrb[0].mxu0
        %v562 = vadd.f32 0.0, %v561
        %v563 = vpop.f32.mrb[0].mxu0
        %v564 = vadd.f32 0.0, %v563
        %565 = vmatprep.mubr.f32.mxu0 %v466
        %566 = vmatmul.mubr.f32.gmra.mrb[0].mxu0 %v348
        %v567 = vpop.f32.mrb[0].mxu0
        %v568 = vadd.f32 0.0, %v567
        %v569 = vpop.f32.mrb[0].mxu0
        %v570 = vadd.f32 0.0, %v569
        %571 = vmatprep.mubr.f32.mxu0 %v469
        %572 = vmatmul.mubr.f32.gmra.mrb[0].mxu0 %v350
        %v573 = vpop.f32.mrb[0].mxu0
        %v574 = vadd.f32 0.0, %v573
        %v575 = vpop.f32.mrb[0].mxu0
        %v576 = vadd.f32 0.0, %v575
        %577 = vmatprep.mubr.f32.mxu0 %v472
        %578 = vmatmul.mubr.f32.gmra.mrb[0].mxu0 %v352
        %v579 = vpop.f32.mrb[0].mxu0
        %v580 = vadd.f32 0.0, %v579
        %v581 = vpop.f32.mrb[0].mxu0
        %v582 = vadd.f32 0.0, %v581
        %583 = vmatprep.mubr.f32.mxu0 %v475
        %584 = vmatmul.mubr.f32.gmra.mrb[0].mxu0 %v354
        %v585 = vpop.f32.mrb[0].mxu0
        %v586 = vadd.f32 0.0, %v585
        %v587 = vpop.f32.mrb[0].mxu0
        %v588 = vadd.f32 0.0, %v587
        %589 = vdwg.mxu0
        %590 = vmatprep.subr.mxu0 %v359
        %591 = vmatpush1.msra.mxu0 %v358
        %592 = vmatprep.subr.mxu0 %v363
        %593 = vmatpush1.msra.mxu0 %v362
        %594 = vmatprep.subr.mxu0 %v367
        %595 = vmatpush1.msra.mxu0 %v366
        %596 = vmatprep.subr.mxu0 %v371
        %597 = vmatpush1.msra.mxu0 %v370
        %598 = vmatprep.subr.mxu0 %v375
        %599 = vmatpush1.msra.mxu0 %v374
        %600 = vmatprep.subr.mxu0 %v379
        %601 = vmatpush1.msra.mxu0 %v378
        %602 = vmatprep.subr.mxu0 %v383
        %603 = vmatpush1.msra.mxu0 %v382
        %604 = vmatprep.subr.mxu0 %v387
        %605 = vmatpush1.msra.mxu0 %v386
        %606 = vmatprep.subr.mxu0 %v391
        %607 = vmatpush1.msra.mxu0 %v390
        %608 = vmatprep.subr.mxu0 %v395
        %609 = vmatpush1.msra.mxu0 %v394
        %610 = vmatprep.subr.mxu0 %v399
        %611 = vmatpush1.msra.mxu0 %v398
        %612 = vmatprep.subr.mxu0 %v403
        %613 = vmatpush1.msra.mxu0 %v402
        %614 = vmatprep.subr.mxu0 %v407
        %615 = vmatpush1.msra.mxu0 %v406
        %616 = vmatprep.subr.mxu0 %v411
        %617 = vmatpush1.msra.mxu0 %v410
        %618 = vmatprep.subr.mxu0 %v415
        %619 = vmatpush1.msra.mxu0 %v414
        %620 = vmatprep.subr.mxu0 %v419
        %621 = vmatpush1.msra.mxu0 %v418
        %622 = vmatprep.subr.mxu0 %v423
        %623 = vmatpush1.msra.mxu0 %v422
        %624 = vmatprep.subr.mxu0 %v427
        %625 = vmatpush1.msra.mxu0 %v426
        %626 = vmatprep.subr.mxu0 %v431
        %627 = vmatpush1.msra.mxu0 %v430
        %628 = vmatprep.subr.mxu0 %v435
        %629 = vmatpush1.msra.mxu0 %v434
        %630 = vmatprep.subr.mxu0 %v439
        %631 = vmatpush1.msra.mxu0 %v438
        %632 = vmatprep.subr.mxu0 %v443
        %633 = vmatpush1.msra.mxu0 %v442
        %634 = vmatprep.subr.mxu0 %v447
        %635 = vmatpush1.msra.mxu0 %v446
        %636 = vmatprep.subr.mxu0 %v451
        %637 = vmatpush1.msra.mxu0 %v450
        %638 = vmatprep.subr.mxu0 0.0
        %639 = vmatpush1.msra.mxu0 0.0
        %640 = vmatprep.subr.mxu0 0.0
        %641 = vmatpush1.msra.mxu0 0.0
        %642 = vmatprep.subr.mxu0 0.0
        %643 = vmatpush1.msra.mxu0 0.0
        %644 = vmatprep.subr.mxu0 0.0
        %645 = vmatpush1.msra.mxu0 0.0
        %646 = vmatprep.subr.mxu0 0.0
        %647 = vmatpush1.msra.mxu0 0.0
        %648 = vmatprep.subr.mxu0 0.0
        %649 = vmatpush1.msra.mxu0 0.0
        %650 = vmatprep.subr.mxu0 0.0
        %651 = vmatpush1.msra.mxu0 0.0
        %652 = vmatprep.subr.mxu0 0.0
        %653 = vmatpush1.msra.mxu0 0.0
        %654 = vmatprep.mubr.f32.mxu0 %v454
        %655 = vmatmul.mubr.f32.gmra.mrb[0].mxu0 %v340
        %v656 = vpop.f32.mrb[0].mxu0
        %v657 = vadd.f32 0.0, %v656
        %v658 = vpop.f32.mrb[0].mxu0
        %v659 = vadd.f32 0.0, %v658
        %660 = vmatprep.mubr.f32.mxu0 %v457
        %661 = vmatmul.mubr.f32.gmra.mrb[0].mxu0 %v342
        %v662 = vpop.f32.mrb[0].mxu0
        %v663 = vadd.f32 0.0, %v662
        %v664 = vpop.f32.mrb[0].mxu0
        %v665 = vadd.f32 0.0, %v664
        %666 = vmatprep.mubr.f32.mxu0 %v460
        %667 = vmatmul.mubr.f32.gmra.mrb[0].mxu0 %v344
        %v668 = vpop.f32.mrb[0].mxu0
        %v669 = vadd.f32 0.0, %v668
        %v670 = vpop.f32.mrb[0].mxu0
        %v671 = vadd.f32 0.0, %v670
        %672 = vmatprep.mubr.f32.mxu0 %v463
        %673 = vmatmul.mubr.f32.gmra.mrb[0].mxu0 %v346
        %v674 = vpop.f32.mrb[0].mxu0
        %v675 = vadd.f32 0.0, %v674
        %v676 = vpop.f32.mrb[0].mxu0
        %v677 = vadd.f32 0.0, %v676
        %678 = vmatprep.mubr.f32.mxu0 %v466
        %679 = vmatmul.mubr.f32.gmra.mrb[0].mxu0 %v348
        %v680 = vpop.f32.mrb[0].mxu0
        %v681 = vadd.f32 0.0, %v680
        %v682 = vpop.f32.mrb[0].mxu0
        %v683 = vadd.f32 0.0, %v682
        %684 = vmatprep.mubr.f32.mxu0 %v469
        %685 = vmatmul.mubr.f32.gmra.mrb[0].mxu0 %v350
        %v686 = vpop.f32.mrb[0].mxu0
        %v687 = vadd.f32 0.0, %v686
        %v688 = vpop.f32.mrb[0].mxu0
        %v689 = vadd.f32 0.0, %v688
        %690 = vmatprep.mubr.f32.mxu0 %v472
        %691 = vmatmul.mubr.f32.gmra.mrb[0].mxu0 %v352
        %v692 = vpop.f32.mrb[0].mxu0
        %v693 = vadd.f32 0.0, %v692
        %v694 = vpop.f32.mrb[0].mxu0
        %v695 = vadd.f32 0.0, %v694
        %696 = vmatprep.mubr.f32.mxu0 %v475
        %697 = vmatmul.mubr.f32.gmra.mrb[0].mxu0 %v354
        %v698 = vpop.f32.mrb[0].mxu0
        %v699 = vadd.f32 0.0, %v698
        %v700 = vpop.f32.mrb[0].mxu0
        %v701 = vadd.f32 0.0, %v700
        %702 = vdwg.mxu0
        %v703 = vadd.f32 %v308, %v544
        %v704 = vadd.f32 %v309, %v546
        %v705 = vadd.f32 %v310, %v657
        %v706 = vadd.f32 %v311, %v659
        %v707 = vadd.f32 %v312, %v550
        %v708 = vadd.f32 %v313, %v552
        %v709 = vadd.f32 %v314, %v663
        %v710 = vadd.f32 %v315, %v665
        %v711 = vadd.f32 %v316, %v556
        %v712 = vadd.f32 %v317, %v558
        %v713 = vadd.f32 %v318, %v669
        %v714 = vadd.f32 %v319, %v671
        %v715 = vadd.f32 %v320, %v562
        %v716 = vadd.f32 %v321, %v564
        %v717 = vadd.f32 %v322, %v675
        %v718 = vadd.f32 %v323, %v677
        %v719 = vadd.f32 %v324, %v568
        %v720 = vadd.f32 %v325, %v570
        %v721 = vadd.f32 %v326, %v681
        %v722 = vadd.f32 %v327, %v683
        %v723 = vadd.f32 %v328, %v574
        %v724 = vadd.f32 %v329, %v576
        %v725 = vadd.f32 %v330, %v687
        %v726 = vadd.f32 %v331, %v689
        %v727 = vadd.f32 %v332, %v580
        %v728 = vadd.f32 %v333, %v582
        %v729 = vadd.f32 %v334, %v693
        %v730 = vadd.f32 %v335, %v695
        %v731 = vadd.f32 %v336, %v586
        %v732 = vadd.f32 %v337, %v588
        %v733 = vadd.f32 %v338, %v699
        %v734 = vadd.f32 %v339, %v701
        %735 = vst [vmem:[#allocation2] sm:$0xff] %v703
        %736 = vst [vmem:[#allocation2 + $0x8] sm:$0xff] %v704
        %737 = vst [vmem:[#allocation2 + $0x10] sm:$0xff] %v705
        %738 = vst [vmem:[#allocation2 + $0x18] sm:$0xff] %v706
        %739 = vst [vmem:[#allocation2 + $0x20] sm:$0xff] %v707
        %740 = vst [vmem:[#allocation2 + $0x28] sm:$0xff] %v708
        %741 = vst [vmem:[#allocation2 + $0x30] sm:$0xff] %v709
        %742 = vst [vmem:[#allocation2 + $0x38] sm:$0xff] %v710
        %743 = vst [vmem:[#allocation2 + $0x40] sm:$0xff] %v711
        %744 = vst [vmem:[#allocation2 + $0x48] sm:$0xff] %v712
        %745 = vst [vmem:[#allocation2 + $0x50] sm:$0xff] %v713
        %746 = vst [vmem:[#allocation2 + $0x58] sm:$0xff] %v714
        %747 = vst [vmem:[#allocation2 + $0x60] sm:$0xff] %v715
        %748 = vst [vmem:[#allocation2 + $0x68] sm:$0xff] %v716
        %749 = vst [vmem:[#allocation2 + $0x70] sm:$0xff] %v717
        %750 = vst [vmem:[#allocation2 + $0x78] sm:$0xff] %v718
        %751 = vst [vmem:[#allocation2 + $0x80] sm:$0xff] %v719
        %752 = vst [vmem:[#allocation2 + $0x88] sm:$0xff] %v720
        %753 = vst [vmem:[#allocation2 + $0x90] sm:$0xff] %v721
        %754 = vst [vmem:[#allocation2 + $0x98] sm:$0xff] %v722
        %755 = vst [vmem:[#allocation2 + $0xa0] sm:$0xff] %v723
        %756 = vst [vmem:[#allocation2 + $0xa8] sm:$0xff] %v724
        %757 = vst [vmem:[#allocation2 + $0xb0] sm:$0xff] %v725
        %758 = vst [vmem:[#allocation2 + $0xb8] sm:$0xff] %v726
        %759 = vst [vmem:[#allocation2 + $0xc0] sm:$0xff] %v727
        %760 = vst [vmem:[#allocation2 + $0xc8] sm:$0xff] %v728
        %761 = vst [vmem:[#allocation2 + $0xd0] sm:$0xff] %v729
        %762 = vst [vmem:[#allocation2 + $0xd8] sm:$0xff] %v730
        %763 = vst [vmem:[#allocation2 + $0xe0] sm:$0xff] %v731
        %764 = vst [vmem:[#allocation2 + $0xe8] sm:$0xff] %v732
        %765 = vst [vmem:[#allocation2 + $0xf0] sm:$0xff] %v733
        %766 = vst [vmem:[#allocation2 + $0xf8] sm:$0xff] %v734
        // Predicated region
        $region49: #{ae_cnn_forward.16} parent=31 // pred_check
          %p767 = pneg %p272
        $region50: #{ae_cnn_forward.16} parent=31 // pred_check_branch
          %769 = sbr.rel (%p767) target = $region52
        $region51: #{ae_cnn_forward.16} parent=31 // pred_region
          %v770 = vld [vmem:[#allocation2] sm:$0xff]
          %v771 = vld [vmem:[#allocation2 + $0x8] sm:$0xff]
          %v772 = vld [vmem:[#allocation2 + $0x10] sm:$0xff]
          %v773 = vld [vmem:[#allocation2 + $0x18] sm:$0xff]
          %v774 = vld [vmem:[#allocation2 + $0x20] sm:$0xff]
          %v775 = vld [vmem:[#allocation2 + $0x28] sm:$0xff]
          %v776 = vld [vmem:[#allocation2 + $0x30] sm:$0xff]
          %v777 = vld [vmem:[#allocation2 + $0x38] sm:$0xff]
          %v778 = vld [vmem:[#allocation2 + $0x40] sm:$0xff]
          %v779 = vld [vmem:[#allocation2 + $0x48] sm:$0xff]
          %v780 = vld [vmem:[#allocation2 + $0x50] sm:$0xff]
          %v781 = vld [vmem:[#allocation2 + $0x58] sm:$0xff]
          %v782 = vld [vmem:[#allocation2 + $0x60] sm:$0xff]
          %v783 = vld [vmem:[#allocation2 + $0x68] sm:$0xff]
          %v784 = vld [vmem:[#allocation2 + $0x70] sm:$0xff]
          %v785 = vld [vmem:[#allocation2 + $0x78] sm:$0xff]
          %v786 = vld [vmem:[#allocation2 + $0x80] sm:$0xff]
          %v787 = vld [vmem:[#allocation2 + $0x88] sm:$0xff]
          %v788 = vld [vmem:[#allocation2 + $0x90] sm:$0xff]
          %v789 = vld [vmem:[#allocation2 + $0x98] sm:$0xff]
          %v790 = vld [vmem:[#allocation2 + $0xa0] sm:$0xff]
          %v791 = vld [vmem:[#allocation2 + $0xa8] sm:$0xff]
          %v792 = vld [vmem:[#allocation2 + $0xb0] sm:$0xff]
          %v793 = vld [vmem:[#allocation2 + $0xb8] sm:$0xff]
          %v794 = vld [vmem:[#allocation2 + $0xc0] sm:$0xff]
          %v795 = vld [vmem:[#allocation2 + $0xc8] sm:$0xff]
          %v796 = vld [vmem:[#allocation2 + $0xd0] sm:$0xff]
          %v797 = vld [vmem:[#allocation2 + $0xd8] sm:$0xff]
          %v798 = vld [vmem:[#allocation2 + $0xe0] sm:$0xff]
          %v799 = vld [vmem:[#allocation2 + $0xe8] sm:$0xff]
          %v800 = vld [vmem:[#allocation2 + $0xf0] sm:$0xff]
          %v801 = vld [vmem:[#allocation2 + $0xf8] sm:$0xff]
          %v802 = vld [vmem:[#allocation8] sm:$0xff]
          %v803 = vld [vmem:[#allocation8 + $0x8] sm:$0xff]
          %v804 = vld [vmem:[#allocation8 + $0x10] sm:$0xff]
          %v805 = vld [vmem:[#allocation8 + $0x18] sm:$0xff]
          %v806 = vld [vmem:[#allocation8 + $0x20] sm:$0xff]
          %v807 = vld [vmem:[#allocation8 + $0x28] sm:$0xff]
          %v808 = vld [vmem:[#allocation8 + $0x30] sm:$0xff]
          %v809 = vld [vmem:[#allocation8 + $0x38] sm:$0xff]
          %811 = vset.pattern.permute.xlu0 0
          %812 = vperm.xlu0 %811, %v802
          %v813 = vpop.permute.xlu0 %812
          %816 = vset.pattern.permute.xlu0 0
          %817 = vperm.xlu0 %816, %v803
          %v818 = vpop.permute.xlu0 %817
          %821 = vset.pattern.permute.xlu0 0
          %822 = vperm.xlu0 %821, %v804
          %v823 = vpop.permute.xlu0 %822
          %826 = vset.pattern.permute.xlu0 0
          %827 = vperm.xlu0 %826, %v805
          %v828 = vpop.permute.xlu0 %827
          %831 = vset.pattern.permute.xlu0 0
          %832 = vperm.xlu0 %831, %v806
          %v833 = vpop.permute.xlu0 %832
          %836 = vset.pattern.permute.xlu0 0
          %837 = vperm.xlu0 %836, %v807
          %v838 = vpop.permute.xlu0 %837
          %841 = vset.pattern.permute.xlu0 0
          %842 = vperm.xlu0 %841, %v808
          %v843 = vpop.permute.xlu0 %842
          %846 = vset.pattern.permute.xlu0 0
          %847 = vperm.xlu0 %846, %v809
          %v848 = vpop.permute.xlu0 %847
          %v850 = vadd.f32 %v770, %v813
          %v851 = vadd.f32 %v771, %v813
          %v852 = vadd.f32 %v772, %v813
          %v853 = vadd.f32 %v773, %v813
          %v854 = vadd.f32 %v774, %v818
          %v855 = vadd.f32 %v775, %v818
          %v856 = vadd.f32 %v776, %v818
          %v857 = vadd.f32 %v777, %v818
          %v858 = vadd.f32 %v778, %v823
          %v859 = vadd.f32 %v779, %v823
          %v860 = vadd.f32 %v780, %v823
          %v861 = vadd.f32 %v781, %v823
          %v862 = vadd.f32 %v782, %v828
          %v863 = vadd.f32 %v783, %v828
          %v864 = vadd.f32 %v784, %v828
          %v865 = vadd.f32 %v785, %v828
          %v866 = vadd.f32 %v786, %v833
          %v867 = vadd.f32 %v787, %v833
          %v868 = vadd.f32 %v788, %v833
          %v869 = vadd.f32 %v789, %v833
          %v870 = vadd.f32 %v790, %v838
          %v871 = vadd.f32 %v791, %v838
          %v872 = vadd.f32 %v792, %v838
          %v873 = vadd.f32 %v793, %v838
          %v874 = vadd.f32 %v794, %v843
          %v875 = vadd.f32 %v795, %v843
          %v876 = vadd.f32 %v796, %v843
          %v877 = vadd.f32 %v797, %v843
          %v878 = vadd.f32 %v798, %v848
          %v879 = vadd.f32 %v799, %v848
          %v880 = vadd.f32 %v800, %v848
          %v881 = vadd.f32 %v801, %v848
          %v882 = vmax.f32 %v850, 0.0
          %v883 = vmax.f32 %v851, 0.0
          %v884 = vmax.f32 %v852, 0.0
          %v885 = vmax.f32 %v853, 0.0
          %v886 = vmax.f32 %v854, 0.0
          %v887 = vmax.f32 %v855, 0.0
          %v888 = vmax.f32 %v856, 0.0
          %v889 = vmax.f32 %v857, 0.0
          %v890 = vmax.f32 %v858, 0.0
          %v891 = vmax.f32 %v859, 0.0
          %v892 = vmax.f32 %v860, 0.0
          %v893 = vmax.f32 %v861, 0.0
          %v894 = vmax.f32 %v862, 0.0
          %v895 = vmax.f32 %v863, 0.0
          %v896 = vmax.f32 %v864, 0.0
          %v897 = vmax.f32 %v865, 0.0
          %v898 = vmax.f32 %v866, 0.0
          %v899 = vmax.f32 %v867, 0.0
          %v900 = vmax.f32 %v868, 0.0
          %v901 = vmax.f32 %v869, 0.0
          %v902 = vmax.f32 %v870, 0.0
          %v903 = vmax.f32 %v871, 0.0
          %v904 = vmax.f32 %v872, 0.0
          %v905 = vmax.f32 %v873, 0.0
          %v906 = vmax.f32 %v874, 0.0
          %v907 = vmax.f32 %v875, 0.0
          %v908 = vmax.f32 %v876, 0.0
          %v909 = vmax.f32 %v877, 0.0
          %v910 = vmax.f32 %v878, 0.0
          %v911 = vmax.f32 %v879, 0.0
          %v912 = vmax.f32 %v880, 0.0
          %v913 = vmax.f32 %v881, 0.0
          %914 = vst [vmem:[%s264] sm:$0xff] %v882
          %915 = vst [vmem:[%s264 + $0x8] sm:$0xff] %v883
          %916 = vst [vmem:[%s264 + $0x10] sm:$0xff] %v884
          %917 = vst [vmem:[%s264 + $0x18] sm:$0xff] %v885
          %918 = vst [vmem:[%s264 + $0x20] sm:$0xff] %v886
          %919 = vst [vmem:[%s264 + $0x28] sm:$0xff] %v887
          %920 = vst [vmem:[%s264 + $0x30] sm:$0xff] %v888
          %921 = vst [vmem:[%s264 + $0x38] sm:$0xff] %v889
          %922 = vst [vmem:[%s264 + $0x40] sm:$0xff] %v890
          %923 = vst [vmem:[%s264 + $0x48] sm:$0xff] %v891
          %924 = vst [vmem:[%s264 + $0x50] sm:$0xff] %v892
          %925 = vst [vmem:[%s264 + $0x58] sm:$0xff] %v893
          %926 = vst [vmem:[%s264 + $0x60] sm:$0xff] %v894
          %927 = vst [vmem:[%s264 + $0x68] sm:$0xff] %v895
          %928 = vst [vmem:[%s264 + $0x70] sm:$0xff] %v896
          %929 = vst [vmem:[%s264 + $0x78] sm:$0xff] %v897
          %930 = vst [vmem:[%s264 + $0x80] sm:$0xff] %v898
          %931 = vst [vmem:[%s264 + $0x88] sm:$0xff] %v899
          %932 = vst [vmem:[%s264 + $0x90] sm:$0xff] %v900
          %933 = vst [vmem:[%s264 + $0x98] sm:$0xff] %v901
          %934 = vst [vmem:[%s264 + $0xa0] sm:$0xff] %v902
          %935 = vst [vmem:[%s264 + $0xa8] sm:$0xff] %v903
          %936 = vst [vmem:[%s264 + $0xb0] sm:$0xff] %v904
          %937 = vst [vmem:[%s264 + $0xb8] sm:$0xff] %v905
          %938 = vst [vmem:[%s264 + $0xc0] sm:$0xff] %v906
          %939 = vst [vmem:[%s264 + $0xc8] sm:$0xff] %v907
          %940 = vst [vmem:[%s264 + $0xd0] sm:$0xff] %v908
          %941 = vst [vmem:[%s264 + $0xd8] sm:$0xff] %v909
          %942 = vst [vmem:[%s264 + $0xe0] sm:$0xff] %v910
          %943 = vst [vmem:[%s264 + $0xe8] sm:$0xff] %v911
          %944 = vst [vmem:[%s264 + $0xf0] sm:$0xff] %v912
          %945 = vst [vmem:[%s264 + $0xf8] sm:$0xff] %v913
        $region52: #{ae_cnn_forward.16} parent=31 // pred_fallthru
          _
        %s946 = sand.u32 %s132, 1
        %s947 = scalar_lea.sflag [#allocation5], %s946
        %s948 = sand.u32 %s132, 1
        %s949 = smul.addr %s948, 256
        %s950 = scalar_lea.vmem [#allocation9], %s949
        // Predicated region
        $region53: #{ae_cnn_forward.16} parent=31 // pred_check
          %p951 = pneg %p142
        $region54: #{ae_cnn_forward.16} parent=31 // pred_check_branch
          %953 = sbr.rel (%p951) target = $region56
        $region55: #{ae_cnn_forward.16} parent=31 // pred_region
          %s954 = smul.u32 8, %s26
          %s955 = smul.u32 4, %s27
          %s957 = ssub.s32 4096, 4096
          %958 = vsyncadd %s947, %s957
          %s959 = smul.addr %s954, 16
          %s960 = sadd.s32 %s955, %s959
          %s961 = smul.addr %s960, 128
          %s962 = scalar_lea.hbm %s3, %s961
          %s963 = sshll.u32 %s950, 4
          %s964 = int_to_ptr.vmem [resolvable:$true] %s963
          %969 = dma.vmem_to_hbm [thread:$0]  %s964, 4096, %s962, %s947, 512, 2048, 32
        $region56: #{ae_cnn_forward.16} parent=31 // pred_fallthru
          _
      $region32: #{ae_cnn_forward.16} parent=5 // pred_fallthru
        _
      %p970 = scmp.le.s32.totalorder 2, %s16
      // Predicated region
      $region57: #{ae_cnn_forward.16} parent=5 // pred_check
        %p971 = pneg %p970
      $region58: #{ae_cnn_forward.16} parent=5 // pred_check_branch
        %973 = sbr.rel (%p971) target = $region60
      $region59: #{ae_cnn_forward.16} parent=5 // pred_region
        %s974 = ssub.s32 %s16, 2
        // Predicated region
        $region61: #{ae_cnn_forward.16} parent=59 // pred_check
          %p975 = pneg %p148
        $region62: #{ae_cnn_forward.16} parent=59 // pred_check_branch
          %977 = sbr.rel (%p975) target = $region64
        $region63: #{ae_cnn_forward.16} parent=59 // pred_region
          %s978 = sand.u32 %s133, 1
          %s979 = scalar_lea.sflag [#allocation5], %s978
          %s980 = sand.u32 %s133, 1
          %s981 = smul.addr %s980, 256
          %s982 = scalar_lea.vmem [#allocation9], %s981
          %983 = dma.done %s979, 4096
        $region64: #{ae_cnn_forward.16} parent=59 // pred_fallthru
          _
      $region60: #{ae_cnn_forward.16} parent=5 // pred_fallthru
        _
    $region6: #{ae_cnn_forward.16} parent=1 // loop_footer
      %s20 = sadd.s32 1, %s16
    $region7: #{ae_cnn_forward.16} parent=1 // loop_footer_branch
      %15 = sbr.rel target = $region3
    $region8: #{ae_cnn_forward.16} parent=1 // loop_exit
      _
    %984 = vsyncpa [#allocation4], 1
    %s985 = scalar_lea.sflag [#allocation4], 1
    %986 = vsyncpa %s985, 1
    %987 = vsyncpa [#allocation7], 1
    %s988 = scalar_lea.sflag [#allocation7], 1
    %989 = vsyncpa %s988, 1
    %990 = vsyncpa [#allocation5], 1
    %s991 = scalar_lea.sflag [#allocation5], 1
    %992 = vsyncpa %s991, 1

// kernel: ae_cnn_forward.17
$region0: #{ae_cnn_forward.17}
  #allocation0 [shape = 'u32[]', space=smem, size = 0x4, offset = 0x4, fixed_abs, tag = 'smem constant byte address 0x4 - core index']
  #allocation1 [shape = 'u32[144,128]{1,0:T(1,128)}', space=vmem, size = 0x12000, scoped, tag = 'internal scratch']
  #allocation2 [shape = 'f32[32,384]{1,0:T(8,128)}', space=vmem, size = 0xc000, scoped, tag = 'scratch operand']
  %s0 = inlined_call_operand.hbm [shape: f32[32,4096], index: 0, kind: input, shape index: {}]
  %s1 = inlined_call_operand.hbm [shape: f32[4096,384], index: 1, kind: input, shape index: {}]
  %s2 = inlined_call_operand.hbm [shape: f32[32,1], index: 2, kind: input, shape index: {}]
  %s3 = inlined_call_operand.hbm [shape: f32[32,384], index: 3, kind: output, shape index: {}]
  %s4 = sld [smem:[#allocation0]]
  $region65: #{ae_cnn_forward.17} parent=0
    _
  %s6 = ssub.s32 1, %s4
  %s7 = scalar_select 0, %s6, %s4
  $region1: #{ae_cnn_forward.17} parent=0
    #allocation3 [shape = 'u8[262144]{0}', space=vmem, size = 0x40000, scoped, tag = 'input window, operand 0']
    #allocation4 [shape = 's32[2]{0}', space=sflag, size = 0x8, scoped, tag = 'scoped memory for ae_cnn_forward.17']
    #allocation5 [shape = 's32[2]{0}', space=sflag, size = 0x8, scoped, tag = 'scoped memory for ae_cnn_forward.17']
    #allocation6 [shape = 'u8[3145728]{0}', space=vmem, size = 0x300000, scoped, tag = 'input window, operand 1']
    #allocation7 [shape = 's32[2]{0}', space=sflag, size = 0x8, scoped, tag = 'scoped memory for ae_cnn_forward.17']
    #allocation8 [shape = 'u8[16384]{0}', space=vmem, size = 0x4000, scoped, tag = 'input window, operand 2, single buffered']
    #allocation9 [shape = 'u8[49152]{0}', space=vmem, size = 0xc000, scoped, tag = 'output window, operand 0, single buffered']
    %8 = vsyncpa [#allocation4], 0
    %s9 = scalar_lea.sflag [#allocation4], 1
    %10 = vsyncpa %s9, 0
    %11 = vsyncpa [#allocation7], 0
    %s12 = scalar_lea.sflag [#allocation7], 1
    %13 = vsyncpa %s12, 0
    %14 = vsyncpa [#allocation5], 0
    loop: start=0, step=1, limit=6
    $region2: #{ae_cnn_forward.17} parent=1 // loop_pre_header
      _
    $region3: #{ae_cnn_forward.17} parent=1 // loop_header
      %s16 = sphi 0, %s20
      %p17 = scmp.ge.s32.totalorder %s16, 6
      %s23 = sphi 0, %s42
      %s24 = sphi 0, %s38
      %s25 = sphi 0, %s34
      %s26 = sphi 0, %s23
      %s27 = sphi 0, %s24
      %s28 = sphi 0, %s25
      %s29 = sphi 0, %s26
      %s30 = sphi 0, %s27
      %s31 = sphi 0, %s28
      %s47 = sphi 0, %s49
      %s50 = sphi 0, %s47
      %s51 = sphi 0, %s50
      %s67 = sphi 0, %s51
      %s75 = sphi 0, %s77
      %s78 = sphi 0, %s75
      %s79 = sphi 0, %s78
      %s95 = sphi 0, %s79
      %s101 = sphi 0, %s103
      %s104 = sphi 0, %s101
      %s105 = sphi 0, %s104
      %s121 = sphi 0, %s105
      %s129 = sphi 0, %s131
      %s132 = sphi 0, %s129
      %s133 = sphi 0, %s132
      %s149 = sphi 0, %s133
    $region4: #{ae_cnn_forward.17} parent=1 // loop_header_branch
      %19 = sbr.rel (%p17) target = $region8
    $region5: #{ae_cnn_forward.17} parent=1 // loop_body
      %s21 = ssub.s32 %s16, 1
      %s22 = ssub.s32 %s16, 2
      %s32 = sadd.s32 1, %s25
      %p33 = scmp.ge.s32.totalorder %s32, 4
      %s34 = scalar_select %p33, 0, %s32
      %s35 = sadd.s32 1, %s24
      %s36 = scalar_select %p33, %s35, %s24
      %p37 = scmp.ge.s32.totalorder %s36, 1
      %s38 = scalar_select %p37, 0, %s36
      %s39 = sadd.s32 1, %s23
      %s40 = scalar_select %p37, %s39, %s23
      %p41 = scmp.ge.s32.totalorder %s40, 1
      %s42 = scalar_select %p41, 0, %s40
      %s43 = ssub.s32 %s23, %s42
      %s44 = ssub.s32 %s25, %s34
      %s45 = sor.u32 %s43, %s44
      %p46 = scmp.eq.s32.totalorder %s45, 0
      %s48 = sadd.s32 %s47, 1
      %s49 = scalar_select %p46, %s47, %s48
      %p52 = pneg %p46
      %p53 = scmp.eq.s32.totalorder %s16, 3
      %p54 = por %p52, %p53
      %p55 = scmp.ne.s32.totalorder %s47, %s50
      %p56 = scmp.eq.s32.totalorder %s16, 0
      %p57 = por %p55, %p56
      %p58 = scmp.ne.s32.totalorder %s47, %s50
      %p59 = scmp.eq.s32.totalorder %s21, 3
      %p60 = por %p58, %p59
      %p61 = scmp.ne.s32.totalorder %s50, %s51
      %p62 = scmp.eq.s32.totalorder %s21, 0
      %p63 = por %p61, %p62
      %p64 = scmp.ne.s32.totalorder %s50, %s51
      %p65 = scmp.eq.s32.totalorder %s22, 3
      %p66 = por %p64, %p65
      %p68 = scmp.ne.s32.totalorder %s51, %s67
      %p69 = scmp.eq.s32.totalorder %s22, 0
      %p70 = por %p68, %p69
      %s71 = ssub.s32 %s25, %s34
      %s72 = ssub.s32 %s24, %s38
      %s73 = sor.u32 %s71, %s72
      %p74 = scmp.eq.s32.totalorder %s73, 0
      %s76 = sadd.s32 %s75, 1
      %s77 = scalar_select %p74, %s75, %s76
      %p80 = pneg %p74
      %p81 = scmp.eq.s32.totalorder %s16, 3
      %p82 = por %p80, %p81
      %p83 = scmp.ne.s32.totalorder %s75, %s78
      %p84 = scmp.eq.s32.totalorder %s16, 0
      %p85 = por %p83, %p84
      %p86 = scmp.ne.s32.totalorder %s75, %s78
      %p87 = scmp.eq.s32.totalorder %s21, 3
      %p88 = por %p86, %p87
      %p89 = scmp.ne.s32.totalorder %s78, %s79
      %p90 = scmp.eq.s32.totalorder %s21, 0
      %p91 = por %p89, %p90
      %p92 = scmp.ne.s32.totalorder %s78, %s79
      %p93 = scmp.eq.s32.totalorder %s22, 3
      %p94 = por %p92, %p93
      %p96 = scmp.ne.s32.totalorder %s79, %s95
      %p97 = scmp.eq.s32.totalorder %s22, 0
      %p98 = por %p96, %p97
      %s99 = ssub.s32 %s23, %s42
      %p100 = scmp.eq.s32.totalorder %s99, 0
      %s102 = sadd.s32 %s101, 1
      %s103 = scalar_select %p100, %s101, %s102
      %p106 = pneg %p100
      %p107 = scmp.eq.s32.totalorder %s16, 3
      %p108 = por %p106, %p107
      %p109 = scmp.ne.s32.totalorder %s101, %s104
      %p110 = scmp.eq.s32.totalorder %s16, 0
      %p111 = por %p109, %p110
      %p112 = scmp.ne.s32.totalorder %s101, %s104
      %p113 = scmp.eq.s32.totalorder %s21, 3
      %p114 = por %p112, %p113
      %p115 = scmp.ne.s32.totalorder %s104, %s105
      %p116 = scmp.eq.s32.totalorder %s21, 0
      %p117 = por %p115, %p116
      %p118 = scmp.ne.s32.totalorder %s104, %s105
      %p119 = scmp.eq.s32.totalorder %s22, 3
      %p120 = por %p118, %p119
      %p122 = scmp.ne.s32.totalorder %s105, %s121
      %p123 = scmp.eq.s32.totalorder %s22, 0
      %p124 = por %p122, %p123
      %s125 = ssub.s32 %s23, %s42
      %s126 = ssub.s32 %s24, %s38
      %s127 = sor.u32 %s125, %s126
      %p128 = scmp.eq.s32.totalorder %s127, 0
      %s130 = sadd.s32 %s129, 1
      %s131 = scalar_select %p128, %s129, %s130
      %p134 = pneg %p128
      %p135 = scmp.eq.s32.totalorder %s16, 3
      %p136 = por %p134, %p135
      %p137 = scmp.ne.s32.totalorder %s129, %s132
      %p138 = scmp.eq.s32.totalorder %s16, 0
      %p139 = por %p137, %p138
      %p140 = scmp.ne.s32.totalorder %s129, %s132
      %p141 = scmp.eq.s32.totalorder %s21, 3
      %p142 = por %p140, %p141
      %p143 = scmp.ne.s32.totalorder %s132, %s133
      %p144 = scmp.eq.s32.totalorder %s21, 0
      %p145 = por %p143, %p144
      %p146 = scmp.ne.s32.totalorder %s132, %s133
      %p147 = scmp.eq.s32.totalorder %s22, 3
      %p148 = por %p146, %p147
      %p150 = scmp.ne.s32.totalorder %s133, %s149
      %p151 = scmp.eq.s32.totalorder %s22, 0
      %p152 = por %p150, %p151
      %p153 = scmp.le.s32.totalorder 1, %s16
      %p154 = scmp.lt.s32.totalorder %s16, 5
      %p155 = pnand %p153, %p154
      %p156 = pneg %p155
      // Predicated region
      $region9: #{ae_cnn_forward.17} parent=5 // pred_check
        _
      $region10: #{ae_cnn_forward.17} parent=5 // pred_check_branch
        %158 = sbr.rel (%p155) target = $region12
      $region11: #{ae_cnn_forward.17} parent=5 // pred_region
        %s159 = ssub.s32 %s16, 1
        // Predicated region
        $region13: #{ae_cnn_forward.17} parent=11 // pred_check
          %p160 = pneg %p117
        $region14: #{ae_cnn_forward.17} parent=11 // pred_check_branch
          %162 = sbr.rel (%p160) target = $region16
        $region15: #{ae_cnn_forward.17} parent=11 // pred_region
          %s163 = smul.u32 4, %s26
          %s165 = ssub.s32 512, 512
          %166 = vsyncadd [#allocation7], %s165
          %s167 = smul.addr %s163, 128
          %s168 = scalar_lea.hbm %s2, %s167
          %s169 = sshll.u32 [#allocation8], 4
          %s170 = int_to_ptr.vmem [resolvable:$true] %s169
          %175 = dma.hbm_to_vmem [thread:$0]  %s168, 512, %s170, [#allocation7], 128, 128, 8
        $region16: #{ae_cnn_forward.17} parent=11 // pred_fallthru
          _
      $region12: #{ae_cnn_forward.17} parent=5 // pred_fallthru
        _
      %p176 = scmp.lt.s32.totalorder %s16, 4
      // Predicated region
      $region17: #{ae_cnn_forward.17} parent=5 // pred_check
        %p177 = pneg %p176
      $region18: #{ae_cnn_forward.17} parent=5 // pred_check_branch
        %179 = sbr.rel (%p177) target = $region20
      $region19: #{ae_cnn_forward.17} parent=5 // pred_region
        // Predicated region
        $region21: #{ae_cnn_forward.17} parent=19 // pred_check
          %p180 = pneg %p57
        $region22: #{ae_cnn_forward.17} parent=19 // pred_check_branch
          %182 = sbr.rel (%p180) target = $region24
        $region23: #{ae_cnn_forward.17} parent=19 // pred_region
          %s183 = sand.u32 %s47, 1
          %s184 = scalar_lea.sflag [#allocation4], %s183
          %s185 = sand.u32 %s47, 1
          %s186 = smul.addr %s185, 256
          %s187 = scalar_lea.vmem [#allocation3], %s186
          %s188 = smul.u32 4, %s23
          %s189 = smul.u32 8, %s25
          %s191 = ssub.s32 4096, 4096
          %192 = vsyncadd %s184, %s191
          %s193 = smul.addr %s188, 32
          %s194 = sadd.s32 %s189, %s193
          %s195 = smul.addr %s194, 128
          %s196 = scalar_lea.hbm %s0, %s195
          %s197 = sshll.u32 %s187, 4
          %s198 = int_to_ptr.vmem [resolvable:$true] %s197
          %203 = dma.hbm_to_vmem [thread:$0]  %s196, 4096, %s198, %s184, 4096, 1024, 64
        $region24: #{ae_cnn_forward.17} parent=19 // pred_fallthru
          _
        // Predicated region
        $region25: #{ae_cnn_forward.17} parent=19 // pred_check
          %p204 = pneg %p85
        $region26: #{ae_cnn_forward.17} parent=19 // pred_check_branch
          %206 = sbr.rel (%p204) target = $region28
        $region27: #{ae_cnn_forward.17} parent=19 // pred_region
          %s207 = sand.u32 %s16, 1
          %s208 = scalar_lea.sflag [#allocation7], %s207
          %s209 = sand.u32 %s75, 1
          %s210 = smul.addr %s209, 3072
          %s211 = scalar_lea.vmem [#allocation6], %s210
          %s212 = smul.u32 128, %s25
          %s213 = smul.u32 3, %s24
          %s215 = ssub.s32 49152, 49152
          %216 = vsyncadd %s208, %s215
          %s217 = smul.addr %s212, 3
          %s218 = sadd.s32 %s213, %s217
          %s219 = smul.addr %s218, 128
          %s220 = scalar_lea.hbm %s1, %s219
          %s221 = sshll.u32 %s211, 4
          %s222 = int_to_ptr.vmem [resolvable:$true] %s221
          %227 = dma.hbm_to_vmem [thread:$0]  %s220, 49152, %s222, %s208, 384, 384, 24
        $region28: #{ae_cnn_forward.17} parent=19 // pred_fallthru
          _
      $region20: #{ae_cnn_forward.17} parent=5 // pred_fallthru
        _
      %p228 = scmp.le.s32.totalorder 1, %s16
      %p229 = scmp.lt.s32.totalorder %s16, 5
      %p230 = pnand %p228, %p229
      %p231 = pneg %p230
      // Predicated region
      $region29: #{ae_cnn_forward.17} parent=5 // pred_check
        _
      $region30: #{ae_cnn_forward.17} parent=5 // pred_check_branch
        %233 = sbr.rel (%p230) target = $region32
      $region31: #{ae_cnn_forward.17} parent=5 // pred_region
        %s234 = ssub.s32 %s16, 1
        %s235 = sand.u32 %s50, 1
        %s236 = scalar_lea.sflag [#allocation4], %s235
        %s237 = sand.u32 %s50, 1
        %s238 = smul.addr %s237, 256
        %s239 = scalar_lea.vmem [#allocation3], %s238
        // Predicated region
        $region33: #{ae_cnn_forward.17} parent=31 // pred_check
          %p240 = pneg %p63
        $region34: #{ae_cnn_forward.17} parent=31 // pred_check_branch
          %242 = sbr.rel (%p240) target = $region36
        $region35: #{ae_cnn_forward.17} parent=31 // pred_region
          %243 = dma.done %s236, 4096
        $region36: #{ae_cnn_forward.17} parent=31 // pred_fallthru
          _
        %s244 = sand.u32 %s21, 1
        %s245 = scalar_lea.sflag [#allocation7], %s244
        %s246 = sand.u32 %s78, 1
        %s247 = smul.addr %s246, 3072
        %s248 = scalar_lea.vmem [#allocation6], %s247
        // Predicated region
        $region37: #{ae_cnn_forward.17} parent=31 // pred_check
          %p249 = pneg %p91
        $region38: #{ae_cnn_forward.17} parent=31 // pred_check_branch
          %251 = sbr.rel (%p249) target = $region40
        $region39: #{ae_cnn_forward.17} parent=31 // pred_region
          %252 = dma.done %s245, 49152
        $region40: #{ae_cnn_forward.17} parent=31 // pred_fallthru
          _
        // Predicated region
        $region41: #{ae_cnn_forward.17} parent=31 // pred_check
          %p253 = pneg %p117
        $region42: #{ae_cnn_forward.17} parent=31 // pred_check_branch
          %255 = sbr.rel (%p253) target = $region44
        $region43: #{ae_cnn_forward.17} parent=31 // pred_region
          %256 = dma.done [#allocation7], 512
        $region44: #{ae_cnn_forward.17} parent=31 // pred_fallthru
          _
        %s257 = sand.u32 %s50, 1
        %s258 = scalar_lea.sflag [#allocation4], %s257
        %s259 = sand.u32 %s50, 1
        %s260 = smul.addr %s259, 256
        %s261 = scalar_lea.vmem [#allocation3], %s260
        %p262 = pneg %p63
        %p263 = pneg %p60
        %s264 = sand.u32 %s21, 1
        %s265 = scalar_lea.sflag [#allocation7], %s264
        %s266 = sand.u32 %s78, 1
        %s267 = smul.addr %s266, 3072
        %s268 = scalar_lea.vmem [#allocation6], %s267
        %p269 = pneg %p91
        %p270 = pneg %p88
        %p271 = pneg %p117
        %p272 = pneg %p114
        %p273 = pneg %p145
        %p274 = pneg %p142
        %s275 = smul.u32 4, %s26
        %s276 = smul.u32 8, %s28
        %s277 = smul.u32 128, %s28
        %s278 = smul.u32 3, %s27
        %s279 = smul.u32 4, %s26
        %s280 = smul.u32 4, %s26
        %s281 = smul.u32 3, %s27
        %p282 = scmp.eq.s32.totalorder %s28, 0
        // Predicated region
        $region45: #{ae_cnn_forward.17} parent=31 // pred_check
          %p283 = pneg %p282
        $region46: #{ae_cnn_forward.17} parent=31 // pred_check_branch
          %285 = sbr.rel (%p283) target = $region48
        $region47: #{ae_cnn_forward.17} parent=31 // pred_region
          %286 = vst [vmem:[#allocation2] sm:$0xff] 0.0
          %287 = vst [vmem:[#allocation2 + $0x8] sm:$0xff] 0.0
          %288 = vst [vmem:[#allocation2 + $0x10] sm:$0xff] 0.0
          %289 = vst [vmem:[#allocation2 + $0x18] sm:$0xff] 0.0
          %290 = vst [vmem:[#allocation2 + $0x20] sm:$0xff] 0.0
          %291 = vst [vmem:[#allocation2 + $0x28] sm:$0xff] 0.0
          %292 = vst [vmem:[#allocation2 + $0x30] sm:$0xff] 0.0
          %293 = vst [vmem:[#allocation2 + $0x38] sm:$0xff] 0.0
          %294 = vst [vmem:[#allocation2 + $0x40] sm:$0xff] 0.0
          %295 = vst [vmem:[#allocation2 + $0x48] sm:$0xff] 0.0
          %296 = vst [vmem:[#allocation2 + $0x50] sm:$0xff] 0.0
          %297 = vst [vmem:[#allocation2 + $0x58] sm:$0xff] 0.0
        $region48: #{ae_cnn_forward.17} parent=31 // pred_fallthru
          _
        %v298 = vld [vmem:[#allocation2] sm:$0xff]
        %v299 = vld [vmem:[#allocation2 + $0x8] sm:$0xff]
        %v300 = vld [vmem:[#allocation2 + $0x10] sm:$0xff]
        %v301 = vld [vmem:[#allocation2 + $0x18] sm:$0xff]
        %v302 = vld [vmem:[#allocation2 + $0x20] sm:$0xff]
        %v303 = vld [vmem:[#allocation2 + $0x28] sm:$0xff]
        %v304 = vld [vmem:[#allocation2 + $0x30] sm:$0xff]
        %v305 = vld [vmem:[#allocation2 + $0x38] sm:$0xff]
        %v306 = vld [vmem:[#allocation2 + $0x40] sm:$0xff]
        %v307 = vld [vmem:[#allocation2 + $0x48] sm:$0xff]
        %v308 = vld [vmem:[#allocation2 + $0x50] sm:$0xff]
        %v309 = vld [vmem:[#allocation2 + $0x58] sm:$0xff]
        %v310 = vld [vmem:[%s239] sm:$0xff]
        %v311 = vld [vmem:[%s239 + $0x8] sm:$0xff]
        %v312 = vld [vmem:[%s239 + $0x10] sm:$0xff]
        %v313 = vld [vmem:[%s239 + $0x18] sm:$0xff]
        %v314 = vld [vmem:[%s239 + $0x20] sm:$0xff]
        %v315 = vld [vmem:[%s239 + $0x28] sm:$0xff]
        %v316 = vld [vmem:[%s239 + $0x30] sm:$0xff]
        %v317 = vld [vmem:[%s239 + $0x38] sm:$0xff]
        %v318 = vld [vmem:[%s239 + $0x40] sm:$0xff]
        %v319 = vld [vmem:[%s239 + $0x48] sm:$0xff]
        %v320 = vld [vmem:[%s239 + $0x50] sm:$0xff]
        %v321 = vld [vmem:[%s239 + $0x58] sm:$0xff]
        %v322 = vld [vmem:[%s239 + $0x60] sm:$0xff]
        %v323 = vld [vmem:[%s239 + $0x68] sm:$0xff]
        %v324 = vld [vmem:[%s239 + $0x70] sm:$0xff]
        %v325 = vld [vmem:[%s239 + $0x78] sm:$0xff]
        %v326 = vld [vmem:[%s239 + $0x80] sm:$0xff]
        %v327 = vld [vmem:[%s239 + $0x88] sm:$0xff]
        %v328 = vld [vmem:[%s239 + $0x90] sm:$0xff]
        %v329 = vld [vmem:[%s239 + $0x98] sm:$0xff]
        %v330 = vld [vmem:[%s239 + $0xa0] sm:$0xff]
        %v331 = vld [vmem:[%s239 + $0xa8] sm:$0xff]
        %v332 = vld [vmem:[%s239 + $0xb0] sm:$0xff]
        %v333 = vld [vmem:[%s239 + $0xb8] sm:$0xff]
        %v334 = vld [vmem:[%s239 + $0xc0] sm:$0xff]
        %v335 = vld [vmem:[%s239 + $0xc8] sm:$0xff]
        %v336 = vld [vmem:[%s239 + $0xd0] sm:$0xff]
        %v337 = vld [vmem:[%s239 + $0xd8] sm:$0xff]
        %v338 = vld [vmem:[%s239 + $0xe0] sm:$0xff]
        %v339 = vld [vmem:[%s239 + $0xe8] sm:$0xff]
        %v340 = vld [vmem:[%s239 + $0xf0] sm:$0xff]
        %v341 = vld [vmem:[%s239 + $0xf8] sm:$0xff]
        %v342 = vld [vmem:[%s248] sm:$0xff]
        %v343 = vld [vmem:[%s248 + $0x8] sm:$0xff]
        %v344 = vld [vmem:[%s248 + $0x10] sm:$0xff]
        %v345 = vld [vmem:[%s248 + $0x18] sm:$0xff]
        %v346 = vld [vmem:[%s248 + $0x20] sm:$0xff]
        %v347 = vld [vmem:[%s248 + $0x28] sm:$0xff]
        %v348 = vld [vmem:[%s248 + $0x30] sm:$0xff]
        %v349 = vld [vmem:[%s248 + $0x38] sm:$0xff]
        %v350 = vld [vmem:[%s248 + $0x40] sm:$0xff]
        %v351 = vld [vmem:[%s248 + $0x48] sm:$0xff]
        %v352 = vld [vmem:[%s248 + $0x50] sm:$0xff]
        %v353 = vld [vmem:[%s248 + $0x58] sm:$0xff]
        %v354 = vld [vmem:[%s248 + $0x60] sm:$0xff]
        %v355 = vld [vmem:[%s248 + $0x68] sm:$0xff]
        %v356 = vld [vmem:[%s248 + $0x70] sm:$0xff]
        %v357 = vld [vmem:[%s248 + $0x78] sm:$0xff]
        %v358 = vld [vmem:[%s248 + $0x80] sm:$0xff]
        %v359 = vld [vmem:[%s248 + $0x88] sm:$0xff]
        %v360 = vld [vmem:[%s248 + $0x90] sm:$0xff]
        %v361 = vld [vmem:[%s248 + $0x98] sm:$0xff]
        %v362 = vld [vmem:[%s248 + $0xa0] sm:$0xff]
        %v363 = vld [vmem:[%s248 + $0xa8] sm:$0xff]
        %v364 = vld [vmem:[%s248 + $0xb0] sm:$0xff]
        %v365 = vld [vmem:[%s248 + $0xb8] sm:$0xff]
        %v366 = vld [vmem:[%s248 + $0xc0] sm:$0xff]
        %v367 = vld [vmem:[%s248 + $0xc8] sm:$0xff]
        %v368 = vld [vmem:[%s248 + $0xd0] sm:$0xff]
        %v369 = vld [vmem:[%s248 + $0xd8] sm:$0xff]
        %v370 = vld [vmem:[%s248 + $0xe0] sm:$0xff]
        %v371 = vld [vmem:[%s248 + $0xe8] sm:$0xff]
        %v372 = vld [vmem:[%s248 + $0xf0] sm:$0xff]
        %v373 = vld [vmem:[%s248 + $0xf8] sm:$0xff]
        %v374 = vld [vmem:[%s248 + $0x100] sm:$0xff]
        %v375 = vld [vmem:[%s248 + $0x108] sm:$0xff]
        %v376 = vld [vmem:[%s248 + $0x110] sm:$0xff]
        %v377 = vld [vmem:[%s248 + $0x118] sm:$0xff]
        %v378 = vld [vmem:[%s248 + $0x120] sm:$0xff]
        %v379 = vld [vmem:[%s248 + $0x128] sm:$0xff]
        %v380 = vld [vmem:[%s248 + $0x130] sm:$0xff]
        %v381 = vld [vmem:[%s248 + $0x138] sm:$0xff]
        %v382 = vld [vmem:[%s248 + $0x140] sm:$0xff]
        %v383 = vld [vmem:[%s248 + $0x148] sm:$0xff]
        %v384 = vld [vmem:[%s248 + $0x150] sm:$0xff]
        %v385 = vld [vmem:[%s248 + $0x158] sm:$0xff]
        %v386 = vld [vmem:[%s248 + $0x160] sm:$0xff]
        %v387 = vld [vmem:[%s248 + $0x168] sm:$0xff]
        %v388 = vld [vmem:[%s248 + $0x170] sm:$0xff]
        %v389 = vld [vmem:[%s248 + $0x178] sm:$0xff]
        %v390 = vld [vmem:[%s248 + $0x180] sm:$0xff]
        %v391 = vld [vmem:[%s248 + $0x188] sm:$0xff]
        %v392 = vld [vmem:[%s248 + $0x190] sm:$0xff]
        %v393 = vld [vmem:[%s248 + $0x198] sm:$0xff]
        %v394 = vld [vmem:[%s248 + $0x1a0] sm:$0xff]
        %v395 = vld [vmem:[%s248 + $0x1a8] sm:$0xff]
        %v396 = vld [vmem:[%s248 + $0x1b0] sm:$0xff]
        %v397 = vld [vmem:[%s248 + $0x1b8] sm:$0xff]
        %v398 = vld [vmem:[%s248 + $0x1c0] sm:$0xff]
        %v399 = vld [vmem:[%s248 + $0x1c8] sm:$0xff]
        %v400 = vld [vmem:[%s248 + $0x1d0] sm:$0xff]
        %v401 = vld [vmem:[%s248 + $0x1d8] sm:$0xff]
        %v402 = vld [vmem:[%s248 + $0x1e0] sm:$0xff]
        %v403 = vld [vmem:[%s248 + $0x1e8] sm:$0xff]
        %v404 = vld [vmem:[%s248 + $0x1f0] sm:$0xff]
        %v405 = vld [vmem:[%s248 + $0x1f8] sm:$0xff]
        %v406 = vld [vmem:[%s248 + $0x200] sm:$0xff]
        %v407 = vld [vmem:[%s248 + $0x208] sm:$0xff]
        %v408 = vld [vmem:[%s248 + $0x210] sm:$0xff]
        %v409 = vld [vmem:[%s248 + $0x218] sm:$0xff]
        %v410 = vld [vmem:[%s248 + $0x220] sm:$0xff]
        %v411 = vld [vmem:[%s248 + $0x228] sm:$0xff]
        %v412 = vld [vmem:[%s248 + $0x230] sm:$0xff]
        %v413 = vld [vmem:[%s248 + $0x238] sm:$0xff]
        %v414 = vld [vmem:[%s248 + $0x240] sm:$0xff]
        %v415 = vld [vmem:[%s248 + $0x248] sm:$0xff]
        %v416 = vld [vmem:[%s248 + $0x250] sm:$0xff]
        %v417 = vld [vmem:[%s248 + $0x258] sm:$0xff]
        %v418 = vld [vmem:[%s248 + $0x260] sm:$0xff]
        %v419 = vld [vmem:[%s248 + $0x268] sm:$0xff]
        %v420 = vld [vmem:[%s248 + $0x270] sm:$0xff]
        %v421 = vld [vmem:[%s248 + $0x278] sm:$0xff]
        %v422 = vld [vmem:[%s248 + $0x280] sm:$0xff]
        %v423 = vld [vmem:[%s248 + $0x288] sm:$0xff]
        %v424 = vld [vmem:[%s248 + $0x290] sm:$0xff]
        %v425 = vld [vmem:[%s248 + $0x298] sm:$0xff]
        %v426 = vld [vmem:[%s248 + $0x2a0] sm:$0xff]
        %v427 = vld [vmem:[%s248 + $0x2a8] sm:$0xff]
        %v428 = vld [vmem:[%s248 + $0x2b0] sm:$0xff]
        %v429 = vld [vmem:[%s248 + $0x2b8] sm:$0xff]
        %v430 = vld [vmem:[%s248 + $0x2c0] sm:$0xff]
        %v431 = vld [vmem:[%s248 + $0x2c8] sm:$0xff]
        %v432 = vld [vmem:[%s248 + $0x2d0] sm:$0xff]
        %v433 = vld [vmem:[%s248 + $0x2d8] sm:$0xff]
        %v434 = vld [vmem:[%s248 + $0x2e0] sm:$0xff]
        %v435 = vld [vmem:[%s248 + $0x2e8] sm:$0xff]
        %v436 = vld [vmem:[%s248 + $0x2f0] sm:$0xff]
        %v437 = vld [vmem:[%s248 + $0x2f8] sm:$0xff]
        %v438 = vld [vmem:[%s248 + $0x300] sm:$0xff]
        %v439 = vld [vmem:[%s248 + $0x308] sm:$0xff]
        %v440 = vld [vmem:[%s248 + $0x310] sm:$0xff]
        %v441 = vld [vmem:[%s248 + $0x318] sm:$0xff]
        %v442 = vld [vmem:[%s248 + $0x320] sm:$0xff]
        %v443 = vld [vmem:[%s248 + $0x328] sm:$0xff]
        %v444 = vld [vmem:[%s248 + $0x330] sm:$0xff]
        %v445 = vld [vmem:[%s248 + $0x338] sm:$0xff]
        %v446 = vld [vmem:[%s248 + $0x340] sm:$0xff]
        %v447 = vld [vmem:[%s248 + $0x348] sm:$0xff]
        %v448 = vld [vmem:[%s248 + $0x350] sm:$0xff]
        %v449 = vld [vmem:[%s248 + $0x358] sm:$0xff]
        %v450 = vld [vmem:[%s248 + $0x360] sm:$0xff]
        %v451 = vld [vmem:[%s248 + $0x368] sm:$0xff]
        %v452 = vld [vmem:[%s248 + $0x370] sm:$0xff]
        %v453 = vld [vmem:[%s248 + $0x378] sm:$0xff]
        %v454 = vld [vmem:[%s248 + $0x380] sm:$0xff]
        %v455 = vld [vmem:[%s248 + $0x388] sm:$0xff]
        %v456 = vld [vmem:[%s248 + $0x390] sm:$0xff]
        %v457 = vld [vmem:[%s248 + $0x398] sm:$0xff]
        %v458 = vld [vmem:[%s248 + $0x3a0] sm:$0xff]
        %v459 = vld [vmem:[%s248 + $0x3a8] sm:$0xff]
        %v460 = vld [vmem:[%s248 + $0x3b0] sm:$0xff]
        %v461 = vld [vmem:[%s248 + $0x3b8] sm:$0xff]
        %v462 = vld [vmem:[%s248 + $0x3c0] sm:$0xff]
        %v463 = vld [vmem:[%s248 + $0x3c8] sm:$0xff]
        %v464 = vld [vmem:[%s248 + $0x3d0] sm:$0xff]
        %v465 = vld [vmem:[%s248 + $0x3d8] sm:$0xff]
        %v466 = vld [vmem:[%s248 + $0x3e0] sm:$0xff]
        %v467 = vld [vmem:[%s248 + $0x3e8] sm:$0xff]
        %v468 = vld [vmem:[%s248 + $0x3f0] sm:$0xff]
        %v469 = vld [vmem:[%s248 + $0x3f8] sm:$0xff]
        %v470 = vld [vmem:[%s248 + $0x400] sm:$0xff]
        %v471 = vld [vmem:[%s248 + $0x408] sm:$0xff]
        %v472 = vld [vmem:[%s248 + $0x410] sm:$0xff]
        %v473 = vld [vmem:[%s248 + $0x418] sm:$0xff]
        %v474 = vld [vmem:[%s248 + $0x420] sm:$0xff]
        %v475 = vld [vmem:[%s248 + $0x428] sm:$0xff]
        %v476 = vld [vmem:[%s248 + $0x430] sm:$0xff]
        %v477 = vld [vmem:[%s248 + $0x438] sm:$0xff]
        %v478 = vld [vmem:[%s248 + $0x440] sm:$0xff]
        %v479 = vld [vmem:[%s248 + $0x448] sm:$0xff]
        %v480 = vld [vmem:[%s248 + $0x450] sm:$0xff]
        %v481 = vld [vmem:[%s248 + $0x458] sm:$0xff]
        %v482 = vld [vmem:[%s248 + $0x460] sm:$0xff]
        %v483 = vld [vmem:[%s248 + $0x468] sm:$0xff]
        %v484 = vld [vmem:[%s248 + $0x470] sm:$0xff]
        %v485 = vld [vmem:[%s248 + $0x478] sm:$0xff]
        %v486 = vld [vmem:[%s248 + $0x480] sm:$0xff]
        %v487 = vld [vmem:[%s248 + $0x488] sm:$0xff]
        %v488 = vld [vmem:[%s248 + $0x490] sm:$0xff]
        %v489 = vld [vmem:[%s248 + $0x498] sm:$0xff]
        %v490 = vld [vmem:[%s248 + $0x4a0] sm:$0xff]
        %v491 = vld [vmem:[%s248 + $0x4a8] sm:$0xff]
        %v492 = vld [vmem:[%s248 + $0x4b0] sm:$0xff]
        %v493 = vld [vmem:[%s248 + $0x4b8] sm:$0xff]
        %v494 = vld [vmem:[%s248 + $0x4c0] sm:$0xff]
        %v495 = vld [vmem:[%s248 + $0x4c8] sm:$0xff]
        %v496 = vld [vmem:[%s248 + $0x4d0] sm:$0xff]
        %v497 = vld [vmem:[%s248 + $0x4d8] sm:$0xff]
        %v498 = vld [vmem:[%s248 + $0x4e0] sm:$0xff]
        %v499 = vld [vmem:[%s248 + $0x4e8] sm:$0xff]
        %v500 = vld [vmem:[%s248 + $0x4f0] sm:$0xff]
        %v501 = vld [vmem:[%s248 + $0x4f8] sm:$0xff]
        %v502 = vld [vmem:[%s248 + $0x500] sm:$0xff]
        %v503 = vld [vmem:[%s248 + $0x508] sm:$0xff]
        %v504 = vld [vmem:[%s248 + $0x510] sm:$0xff]
        %v505 = vld [vmem:[%s248 + $0x518] sm:$0xff]
        %v506 = vld [vmem:[%s248 + $0x520] sm:$0xff]
        %v507 = vld [vmem:[%s248 + $0x528] sm:$0xff]
        %v508 = vld [vmem:[%s248 + $0x530] sm:$0xff]
        %v509 = vld [vmem:[%s248 + $0x538] sm:$0xff]
        %v510 = vld [vmem:[%s248 + $0x540] sm:$0xff]
        %v511 = vld [vmem:[%s248 + $0x548] sm:$0xff]
        %v512 = vld [vmem:[%s248 + $0x550] sm:$0xff]
        %v513 = vld [vmem:[%s248 + $0x558] sm:$0xff]
        %v514 = vld [vmem:[%s248 + $0x560] sm:$0xff]
        %v515 = vld [vmem:[%s248 + $0x568] sm:$0xff]
        %v516 = vld [vmem:[%s248 + $0x570] sm:$0xff]
        %v517 = vld [vmem:[%s248 + $0x578] sm:$0xff]
        %v518 = vld [vmem:[%s248 + $0x580] sm:$0xff]
        %v519 = vld [vmem:[%s248 + $0x588] sm:$0xff]
        %v520 = vld [vmem:[%s248 + $0x590] sm:$0xff]
        %v521 = vld [vmem:[%s248 + $0x598] sm:$0xff]
        %v522 = vld [vmem:[%s248 + $0x5a0] sm:$0xff]
        %v523 = vld [vmem:[%s248 + $0x5a8] sm:$0xff]
        %v524 = vld [vmem:[%s248 + $0x5b0] sm:$0xff]
        %v525 = vld [vmem:[%s248 + $0x5b8] sm:$0xff]
        %v526 = vld [vmem:[%s248 + $0x5c0] sm:$0xff]
        %v527 = vld [vmem:[%s248 + $0x5c8] sm:$0xff]
        %v528 = vld [vmem:[%s248 + $0x5d0] sm:$0xff]
        %v529 = vld [vmem:[%s248 + $0x5d8] sm:$0xff]
        %v530 = vld [vmem:[%s248 + $0x5e0] sm:$0xff]
        %v531 = vld [vmem:[%s248 + $0x5e8] sm:$0xff]
        %v532 = vld [vmem:[%s248 + $0x5f0] sm:$0xff]
        %v533 = vld [vmem:[%s248 + $0x5f8] sm:$0xff]
        %v534 = vld [vmem:[%s248 + $0x600] sm:$0xff]
        %v535 = vld [vmem:[%s248 + $0x608] sm:$0xff]
        %v536 = vld [vmem:[%s248 + $0x610] sm:$0xff]
        %v537 = vld [vmem:[%s248 + $0x618] sm:$0xff]
        %v538 = vld [vmem:[%s248 + $0x620] sm:$0xff]
        %v539 = vld [vmem:[%s248 + $0x628] sm:$0xff]
        %v540 = vld [vmem:[%s248 + $0x630] sm:$0xff]
        %v541 = vld [vmem:[%s248 + $0x638] sm:$0xff]
        %v542 = vld [vmem:[%s248 + $0x640] sm:$0xff]
        %v543 = vld [vmem:[%s248 + $0x648] sm:$0xff]
        %v544 = vld [vmem:[%s248 + $0x650] sm:$0xff]
        %v545 = vld [vmem:[%s248 + $0x658] sm:$0xff]
        %v546 = vld [vmem:[%s248 + $0x660] sm:$0xff]
        %v547 = vld [vmem:[%s248 + $0x668] sm:$0xff]
        %v548 = vld [vmem:[%s248 + $0x670] sm:$0xff]
        %v549 = vld [vmem:[%s248 + $0x678] sm:$0xff]
        %v550 = vld [vmem:[%s248 + $0x680] sm:$0xff]
        %v551 = vld [vmem:[%s248 + $0x688] sm:$0xff]
        %v552 = vld [vmem:[%s248 + $0x690] sm:$0xff]
        %v553 = vld [vmem:[%s248 + $0x698] sm:$0xff]
        %v554 = vld [vmem:[%s248 + $0x6a0] sm:$0xff]
        %v555 = vld [vmem:[%s248 + $0x6a8] sm:$0xff]
        %v556 = vld [vmem:[%s248 + $0x6b0] sm:$0xff]
        %v557 = vld [vmem:[%s248 + $0x6b8] sm:$0xff]
        %v558 = vld [vmem:[%s248 + $0x6c0] sm:$0xff]
        %v559 = vld [vmem:[%s248 + $0x6c8] sm:$0xff]
        %v560 = vld [vmem:[%s248 + $0x6d0] sm:$0xff]
        %v561 = vld [vmem:[%s248 + $0x6d8] sm:$0xff]
        %v562 = vld [vmem:[%s248 + $0x6e0] sm:$0xff]
        %v563 = vld [vmem:[%s248 + $0x6e8] sm:$0xff]
        %v564 = vld [vmem:[%s248 + $0x6f0] sm:$0xff]
        %v565 = vld [vmem:[%s248 + $0x6f8] sm:$0xff]
        %v566 = vld [vmem:[%s248 + $0x700] sm:$0xff]
        %v567 = vld [vmem:[%s248 + $0x708] sm:$0xff]
        %v568 = vld [vmem:[%s248 + $0x710] sm:$0xff]
        %v569 = vld [vmem:[%s248 + $0x718] sm:$0xff]
        %v570 = vld [vmem:[%s248 + $0x720] sm:$0xff]
        %v571 = vld [vmem:[%s248 + $0x728] sm:$0xff]
        %v572 = vld [vmem:[%s248 + $0x730] sm:$0xff]
        %v573 = vld [vmem:[%s248 + $0x738] sm:$0xff]
        %v574 = vld [vmem:[%s248 + $0x740] sm:$0xff]
        %v575 = vld [vmem:[%s248 + $0x748] sm:$0xff]
        %v576 = vld [vmem:[%s248 + $0x750] sm:$0xff]
        %v577 = vld [vmem:[%s248 + $0x758] sm:$0xff]
        %v578 = vld [vmem:[%s248 + $0x760] sm:$0xff]
        %v579 = vld [vmem:[%s248 + $0x768] sm:$0xff]
        %v580 = vld [vmem:[%s248 + $0x770] sm:$0xff]
        %v581 = vld [vmem:[%s248 + $0x778] sm:$0xff]
        %v582 = vld [vmem:[%s248 + $0x780] sm:$0xff]
        %v583 = vld [vmem:[%s248 + $0x788] sm:$0xff]
        %v584 = vld [vmem:[%s248 + $0x790] sm:$0xff]
        %v585 = vld [vmem:[%s248 + $0x798] sm:$0xff]
        %v586 = vld [vmem:[%s248 + $0x7a0] sm:$0xff]
        %v587 = vld [vmem:[%s248 + $0x7a8] sm:$0xff]
        %v588 = vld [vmem:[%s248 + $0x7b0] sm:$0xff]
        %v589 = vld [vmem:[%s248 + $0x7b8] sm:$0xff]
        %v590 = vld [vmem:[%s248 + $0x7c0] sm:$0xff]
        %v591 = vld [vmem:[%s248 + $0x7c8] sm:$0xff]
        %v592 = vld [vmem:[%s248 + $0x7d0] sm:$0xff]
        %v593 = vld [vmem:[%s248 + $0x7d8] sm:$0xff]
        %v594 = vld [vmem:[%s248 + $0x7e0] sm:$0xff]
        %v595 = vld [vmem:[%s248 + $0x7e8] sm:$0xff]
        %v596 = vld [vmem:[%s248 + $0x7f0] sm:$0xff]
        %v597 = vld [vmem:[%s248 + $0x7f8] sm:$0xff]
        %v598 = vld [vmem:[%s248 + $0x800] sm:$0xff]
        %v599 = vld [vmem:[%s248 + $0x808] sm:$0xff]
        %v600 = vld [vmem:[%s248 + $0x810] sm:$0xff]
        %v601 = vld [vmem:[%s248 + $0x818] sm:$0xff]
        %v602 = vld [vmem:[%s248 + $0x820] sm:$0xff]
        %v603 = vld [vmem:[%s248 + $0x828] sm:$0xff]
        %v604 = vld [vmem:[%s248 + $0x830] sm:$0xff]
        %v605 = vld [vmem:[%s248 + $0x838] sm:$0xff]
        %v606 = vld [vmem:[%s248 + $0x840] sm:$0xff]
        %v607 = vld [vmem:[%s248 + $0x848] sm:$0xff]
        %v608 = vld [vmem:[%s248 + $0x850] sm:$0xff]
        %v609 = vld [vmem:[%s248 + $0x858] sm:$0xff]
        %v610 = vld [vmem:[%s248 + $0x860] sm:$0xff]
        %v611 = vld [vmem:[%s248 + $0x868] sm:$0xff]
        %v612 = vld [vmem:[%s248 + $0x870] sm:$0xff]
        %v613 = vld [vmem:[%s248 + $0x878] sm:$0xff]
        %v614 = vld [vmem:[%s248 + $0x880] sm:$0xff]
        %v615 = vld [vmem:[%s248 + $0x888] sm:$0xff]
        %v616 = vld [vmem:[%s248 + $0x890] sm:$0xff]
        %v617 = vld [vmem:[%s248 + $0x898] sm:$0xff]
        %v618 = vld [vmem:[%s248 + $0x8a0] sm:$0xff]
        %v619 = vld [vmem:[%s248 + $0x8a8] sm:$0xff]
        %v620 = vld [vmem:[%s248 + $0x8b0] sm:$0xff]
        %v621 = vld [vmem:[%s248 + $0x8b8] sm:$0xff]
        %v622 = vld [vmem:[%s248 + $0x8c0] sm:$0xff]
        %v623 = vld [vmem:[%s248 + $0x8c8] sm:$0xff]
        %v624 = vld [vmem:[%s248 + $0x8d0] sm:$0xff]
        %v625 = vld [vmem:[%s248 + $0x8d8] sm:$0xff]
        %v626 = vld [vmem:[%s248 + $0x8e0] sm:$0xff]
        %v627 = vld [vmem:[%s248 + $0x8e8] sm:$0xff]
        %v628 = vld [vmem:[%s248 + $0x8f0] sm:$0xff]
        %v629 = vld [vmem:[%s248 + $0x8f8] sm:$0xff]
        %v630 = vld [vmem:[%s248 + $0x900] sm:$0xff]
        %v631 = vld [vmem:[%s248 + $0x908] sm:$0xff]
        %v632 = vld [vmem:[%s248 + $0x910] sm:$0xff]
        %v633 = vld [vmem:[%s248 + $0x918] sm:$0xff]
        %v634 = vld [vmem:[%s248 + $0x920] sm:$0xff]
        %v635 = vld [vmem:[%s248 + $0x928] sm:$0xff]
        %v636 = vld [vmem:[%s248 + $0x930] sm:$0xff]
        %v637 = vld [vmem:[%s248 + $0x938] sm:$0xff]
        %v638 = vld [vmem:[%s248 + $0x940] sm:$0xff]
        %v639 = vld [vmem:[%s248 + $0x948] sm:$0xff]
        %v640 = vld [vmem:[%s248 + $0x950] sm:$0xff]
        %v641 = vld [vmem:[%s248 + $0x958] sm:$0xff]
        %v642 = vld [vmem:[%s248 + $0x960] sm:$0xff]
        %v643 = vld [vmem:[%s248 + $0x968] sm:$0xff]
        %v644 = vld [vmem:[%s248 + $0x970] sm:$0xff]
        %v645 = vld [vmem:[%s248 + $0x978] sm:$0xff]
        %v646 = vld [vmem:[%s248 + $0x980] sm:$0xff]
        %v647 = vld [vmem:[%s248 + $0x988] sm:$0xff]
        %v648 = vld [vmem:[%s248 + $0x990] sm:$0xff]
        %v649 = vld [vmem:[%s248 + $0x998] sm:$0xff]
        %v650 = vld [vmem:[%s248 + $0x9a0] sm:$0xff]
        %v651 = vld [vmem:[%s248 + $0x9a8] sm:$0xff]
        %v652 = vld [vmem:[%s248 + $0x9b0] sm:$0xff]
        %v653 = vld [vmem:[%s248 + $0x9b8] sm:$0xff]
        %v654 = vld [vmem:[%s248 + $0x9c0] sm:$0xff]
        %v655 = vld [vmem:[%s248 + $0x9c8] sm:$0xff]
        %v656 = vld [vmem:[%s248 + $0x9d0] sm:$0xff]
        %v657 = vld [vmem:[%s248 + $0x9d8] sm:$0xff]
        %v658 = vld [vmem:[%s248 + $0x9e0] sm:$0xff]
        %v659 = vld [vmem:[%s248 + $0x9e8] sm:$0xff]
        %v660 = vld [vmem:[%s248 + $0x9f0] sm:$0xff]
        %v661 = vld [vmem:[%s248 + $0x9f8] sm:$0xff]
        %v662 = vld [vmem:[%s248 + $0xa00] sm:$0xff]
        %v663 = vld [vmem:[%s248 + $0xa08] sm:$0xff]
        %v664 = vld [vmem:[%s248 + $0xa10] sm:$0xff]
        %v665 = vld [vmem:[%s248 + $0xa18] sm:$0xff]
        %v666 = vld [vmem:[%s248 + $0xa20] sm:$0xff]
        %v667 = vld [vmem:[%s248 + $0xa28] sm:$0xff]
        %v668 = vld [vmem:[%s248 + $0xa30] sm:$0xff]
        %v669 = vld [vmem:[%s248 + $0xa38] sm:$0xff]
        %v670 = vld [vmem:[%s248 + $0xa40] sm:$0xff]
        %v671 = vld [vmem:[%s248 + $0xa48] sm:$0xff]
        %v672 = vld [vmem:[%s248 + $0xa50] sm:$0xff]
        %v673 = vld [vmem:[%s248 + $0xa58] sm:$0xff]
        %v674 = vld [vmem:[%s248 + $0xa60] sm:$0xff]
        %v675 = vld [vmem:[%s248 + $0xa68] sm:$0xff]
        %v676 = vld [vmem:[%s248 + $0xa70] sm:$0xff]
        %v677 = vld [vmem:[%s248 + $0xa78] sm:$0xff]
        %v678 = vld [vmem:[%s248 + $0xa80] sm:$0xff]
        %v679 = vld [vmem:[%s248 + $0xa88] sm:$0xff]
        %v680 = vld [vmem:[%s248 + $0xa90] sm:$0xff]
        %v681 = vld [vmem:[%s248 + $0xa98] sm:$0xff]
        %v682 = vld [vmem:[%s248 + $0xaa0] sm:$0xff]
        %v683 = vld [vmem:[%s248 + $0xaa8] sm:$0xff]
        %v684 = vld [vmem:[%s248 + $0xab0] sm:$0xff]
        %v685 = vld [vmem:[%s248 + $0xab8] sm:$0xff]
        %v686 = vld [vmem:[%s248 + $0xac0] sm:$0xff]
        %v687 = vld [vmem:[%s248 + $0xac8] sm:$0xff]
        %v688 = vld [vmem:[%s248 + $0xad0] sm:$0xff]
        %v689 = vld [vmem:[%s248 + $0xad8] sm:$0xff]
        %v690 = vld [vmem:[%s248 + $0xae0] sm:$0xff]
        %v691 = vld [vmem:[%s248 + $0xae8] sm:$0xff]
        %v692 = vld [vmem:[%s248 + $0xaf0] sm:$0xff]
        %v693 = vld [vmem:[%s248 + $0xaf8] sm:$0xff]
        %v694 = vld [vmem:[%s248 + $0xb00] sm:$0xff]
        %v695 = vld [vmem:[%s248 + $0xb08] sm:$0xff]
        %v696 = vld [vmem:[%s248 + $0xb10] sm:$0xff]
        %v697 = vld [vmem:[%s248 + $0xb18] sm:$0xff]
        %v698 = vld [vmem:[%s248 + $0xb20] sm:$0xff]
        %v699 = vld [vmem:[%s248 + $0xb28] sm:$0xff]
        %v700 = vld [vmem:[%s248 + $0xb30] sm:$0xff]
        %v701 = vld [vmem:[%s248 + $0xb38] sm:$0xff]
        %v702 = vld [vmem:[%s248 + $0xb40] sm:$0xff]
        %v703 = vld [vmem:[%s248 + $0xb48] sm:$0xff]
        %v704 = vld [vmem:[%s248 + $0xb50] sm:$0xff]
        %v705 = vld [vmem:[%s248 + $0xb58] sm:$0xff]
        %v706 = vld [vmem:[%s248 + $0xb60] sm:$0xff]
        %v707 = vld [vmem:[%s248 + $0xb68] sm:$0xff]
        %v708 = vld [vmem:[%s248 + $0xb70] sm:$0xff]
        %v709 = vld [vmem:[%s248 + $0xb78] sm:$0xff]
        %v710 = vld [vmem:[%s248 + $0xb80] sm:$0xff]
        %v711 = vld [vmem:[%s248 + $0xb88] sm:$0xff]
        %v712 = vld [vmem:[%s248 + $0xb90] sm:$0xff]
        %v713 = vld [vmem:[%s248 + $0xb98] sm:$0xff]
        %v714 = vld [vmem:[%s248 + $0xba0] sm:$0xff]
        %v715 = vld [vmem:[%s248 + $0xba8] sm:$0xff]
        %v716 = vld [vmem:[%s248 + $0xbb0] sm:$0xff]
        %v717 = vld [vmem:[%s248 + $0xbb8] sm:$0xff]
        %v718 = vld [vmem:[%s248 + $0xbc0] sm:$0xff]
        %v719 = vld [vmem:[%s248 + $0xbc8] sm:$0xff]
        %v720 = vld [vmem:[%s248 + $0xbd0] sm:$0xff]
        %v721 = vld [vmem:[%s248 + $0xbd8] sm:$0xff]
        %v722 = vld [vmem:[%s248 + $0xbe0] sm:$0xff]
        %v723 = vld [vmem:[%s248 + $0xbe8] sm:$0xff]
        %v724 = vld [vmem:[%s248 + $0xbf0] sm:$0xff]
        %v725 = vld [vmem:[%s248 + $0xbf8] sm:$0xff]
        %726 = vmatprep.subr.mxu0 %v343
        %727 = vmatpush1.msra.mxu0 %v342
        %728 = vmatprep.subr.mxu0 %v346
        %729 = vmatpush1.msra.mxu0 %v345
        %730 = vmatprep.subr.mxu0 %v349
        %731 = vmatpush1.msra.mxu0 %v348
        %732 = vmatprep.subr.mxu0 %v352
        %733 = vmatpush1.msra.mxu0 %v351
        %734 = vmatprep.subr.mxu0 %v355
        %735 = vmatpush1.msra.mxu0 %v354
        %736 = vmatprep.subr.mxu0 %v358
        %737 = vmatpush1.msra.mxu0 %v357
        %738 = vmatprep.subr.mxu0 %v361
        %739 = vmatpush1.msra.mxu0 %v360
        %740 = vmatprep.subr.mxu0 %v364
        %741 = vmatpush1.msra.mxu0 %v363
        %742 = vmatprep.subr.mxu0 %v367
        %743 = vmatpush1.msra.mxu0 %v366
        %744 = vmatprep.subr.mxu0 %v370
        %745 = vmatpush1.msra.mxu0 %v369
        %746 = vmatprep.subr.mxu0 %v373
        %747 = vmatpush1.msra.mxu0 %v372
        %748 = vmatprep.subr.mxu0 %v376
        %749 = vmatpush1.msra.mxu0 %v375
        %750 = vmatprep.subr.mxu0 %v379
        %751 = vmatpush1.msra.mxu0 %v378
        %752 = vmatprep.subr.mxu0 %v382
        %753 = vmatpush1.msra.mxu0 %v381
        %754 = vmatprep.subr.mxu0 %v385
        %755 = vmatpush1.msra.mxu0 %v384
        %756 = vmatprep.subr.mxu0 %v388
        %757 = vmatpush1.msra.mxu0 %v387
        %758 = vmatprep.subr.mxu0 %v391
        %759 = vmatpush1.msra.mxu0 %v390
        %760 = vmatprep.subr.mxu0 %v394
        %761 = vmatpush1.msra.mxu0 %v393
        %762 = vmatprep.subr.mxu0 %v397
        %763 = vmatpush1.msra.mxu0 %v396
        %764 = vmatprep.subr.mxu0 %v400
        %765 = vmatpush1.msra.mxu0 %v399
        %766 = vmatprep.subr.mxu0 %v403
        %767 = vmatpush1.msra.mxu0 %v402
        %768 = vmatprep.subr.mxu0 %v406
        %769 = vmatpush1.msra.mxu0 %v405
        %770 = vmatprep.subr.mxu0 %v409
        %771 = vmatpush1.msra.mxu0 %v408
        %772 = vmatprep.subr.mxu0 %v412
        %773 = vmatpush1.msra.mxu0 %v411
        %774 = vmatprep.subr.mxu0 %v415
        %775 = vmatpush1.msra.mxu0 %v414
        %776 = vmatprep.subr.mxu0 %v418
        %777 = vmatpush1.msra.mxu0 %v417
        %778 = vmatprep.subr.mxu0 %v421
        %779 = vmatpush1.msra.mxu0 %v420
        %780 = vmatprep.subr.mxu0 %v424
        %781 = vmatpush1.msra.mxu0 %v423
        %782 = vmatprep.subr.mxu0 %v427
        %783 = vmatpush1.msra.mxu0 %v426
        %784 = vmatprep.subr.mxu0 %v430
        %785 = vmatpush1.msra.mxu0 %v429
        %786 = vmatprep.subr.mxu0 %v433
        %787 = vmatpush1.msra.mxu0 %v432
        %788 = vmatprep.subr.mxu0 %v436
        %789 = vmatpush1.msra.mxu0 %v435
        %790 = vmatprep.mubr.f32.mxu0 %v311
        %791 = vmatmul.mubr.f32.gmra.mrb[0].mxu0 %v310
        %v792 = vpop.f32.mrb[0].mxu0
        %v793 = vadd.f32 0.0, %v792
        %v794 = vpop.f32.mrb[0].mxu0
        %v795 = vadd.f32 0.0, %v794
        %796 = vmatprep.mubr.f32.mxu0 %v319
        %797 = vmatmul.mubr.f32.gmra.mrb[0].mxu0 %v318
        %v798 = vpop.f32.mrb[0].mxu0
        %v799 = vadd.f32 0.0, %v798
        %v800 = vpop.f32.mrb[0].mxu0
        %v801 = vadd.f32 0.0, %v800
        %802 = vmatprep.mubr.f32.mxu0 %v327
        %803 = vmatmul.mubr.f32.gmra.mrb[0].mxu0 %v326
        %v804 = vpop.f32.mrb[0].mxu0
        %v805 = vadd.f32 0.0, %v804
        %v806 = vpop.f32.mrb[0].mxu0
        %v807 = vadd.f32 0.0, %v806
        %808 = vmatprep.mubr.f32.mxu0 %v335
        %809 = vmatmul.mubr.f32.gmra.mrb[0].mxu0 %v334
        %v810 = vpop.f32.mrb[0].mxu0
        %v811 = vadd.f32 0.0, %v810
        %v812 = vpop.f32.mrb[0].mxu0
        %v813 = vadd.f32 0.0, %v812
        %814 = vdwg.mxu0
        %815 = vmatprep.subr.mxu0 %v439
        %816 = vmatpush1.msra.mxu0 %v438
        %817 = vmatprep.subr.mxu0 %v442
        %818 = vmatpush1.msra.mxu0 %v441
        %819 = vmatprep.subr.mxu0 %v445
        %820 = vmatpush1.msra.mxu0 %v444
        %821 = vmatprep.subr.mxu0 %v448
        %822 = vmatpush1.msra.mxu0 %v447
        %823 = vmatprep.subr.mxu0 %v451
        %824 = vmatpush1.msra.mxu0 %v450
        %825 = vmatprep.subr.mxu0 %v454
        %826 = vmatpush1.msra.mxu0 %v453
        %827 = vmatprep.subr.mxu0 %v457
        %828 = vmatpush1.msra.mxu0 %v456
        %829 = vmatprep.subr.mxu0 %v460
        %830 = vmatpush1.msra.mxu0 %v459
        %831 = vmatprep.subr.mxu0 %v463
        %832 = vmatpush1.msra.mxu0 %v462
        %833 = vmatprep.subr.mxu0 %v466
        %834 = vmatpush1.msra.mxu0 %v465
        %835 = vmatprep.subr.mxu0 %v469
        %836 = vmatpush1.msra.mxu0 %v468
        %837 = vmatprep.subr.mxu0 %v472
        %838 = vmatpush1.msra.mxu0 %v471
        %839 = vmatprep.subr.mxu0 %v475
        %840 = vmatpush1.msra.mxu0 %v474
        %841 = vmatprep.subr.mxu0 %v478
        %842 = vmatpush1.msra.mxu0 %v477
        %843 = vmatprep.subr.mxu0 %v481
        %844 = vmatpush1.msra.mxu0 %v480
        %845 = vmatprep.subr.mxu0 %v484
        %846 = vmatpush1.msra.mxu0 %v483
        %847 = vmatprep.subr.mxu0 %v487
        %848 = vmatpush1.msra.mxu0 %v486
        %849 = vmatprep.subr.mxu0 %v490
        %850 = vmatpush1.msra.mxu0 %v489
        %851 = vmatprep.subr.mxu0 %v493
        %852 = vmatpush1.msra.mxu0 %v492
        %853 = vmatprep.subr.mxu0 %v496
        %854 = vmatpush1.msra.mxu0 %v495
        %855 = vmatprep.subr.mxu0 %v499
        %856 = vmatpush1.msra.mxu0 %v498
        %857 = vmatprep.subr.mxu0 %v502
        %858 = vmatpush1.msra.mxu0 %v501
        %859 = vmatprep.subr.mxu0 %v505
        %860 = vmatpush1.msra.mxu0 %v504
        %861 = vmatprep.subr.mxu0 %v508
        %862 = vmatpush1.msra.mxu0 %v507
        %863 = vmatprep.subr.mxu0 %v511
        %864 = vmatpush1.msra.mxu0 %v510
        %865 = vmatprep.subr.mxu0 %v514
        %866 = vmatpush1.msra.mxu0 %v513
        %867 = vmatprep.subr.mxu0 %v517
        %868 = vmatpush1.msra.mxu0 %v516
        %869 = vmatprep.subr.mxu0 %v520
        %870 = vmatpush1.msra.mxu0 %v519
        %871 = vmatprep.subr.mxu0 %v523
        %872 = vmatpush1.msra.mxu0 %v522
        %873 = vmatprep.subr.mxu0 %v526
        %874 = vmatpush1.msra.mxu0 %v525
        %875 = vmatprep.subr.mxu0 %v529
        %876 = vmatpush1.msra.mxu0 %v528
        %877 = vmatprep.subr.mxu0 %v532
        %878 = vmatpush1.msra.mxu0 %v531
        %879 = vmatprep.mubr.f32.mxu0 %v313
        %880 = vmatmul.mubr.f32.gmra.mrb[0].mxu0 %v312
        %v881 = vpop.f32.mrb[0].mxu0
        %v882 = vadd.f32 %v793, %v881
        %v883 = vpop.f32.mrb[0].mxu0
        %v884 = vadd.f32 %v795, %v883
        %885 = vmatprep.mubr.f32.mxu0 %v321
        %886 = vmatmul.mubr.f32.gmra.mrb[0].mxu0 %v320
        %v887 = vpop.f32.mrb[0].mxu0
        %v888 = vadd.f32 %v799, %v887
        %v889 = vpop.f32.mrb[0].mxu0
        %v890 = vadd.f32 %v801, %v889
        %891 = vmatprep.mubr.f32.mxu0 %v329
        %892 = vmatmul.mubr.f32.gmra.mrb[0].mxu0 %v328
        %v893 = vpop.f32.mrb[0].mxu0
        %v894 = vadd.f32 %v805, %v893
        %v895 = vpop.f32.mrb[0].mxu0
        %v896 = vadd.f32 %v807, %v895
        %897 = vmatprep.mubr.f32.mxu0 %v337
        %898 = vmatmul.mubr.f32.gmra.mrb[0].mxu0 %v336
        %v899 = vpop.f32.mrb[0].mxu0
        %v900 = vadd.f32 %v811, %v899
        %v901 = vpop.f32.mrb[0].mxu0
        %v902 = vadd.f32 %v813, %v901
        %903 = vdwg.mxu0
        %904 = vmatprep.subr.mxu0 %v535
        %905 = vmatpush1.msra.mxu0 %v534
        %906 = vmatprep.subr.mxu0 %v538
        %907 = vmatpush1.msra.mxu0 %v537
        %908 = vmatprep.subr.mxu0 %v541
        %909 = vmatpush1.msra.mxu0 %v540
        %910 = vmatprep.subr.mxu0 %v544
        %911 = vmatpush1.msra.mxu0 %v543
        %912 = vmatprep.subr.mxu0 %v547
        %913 = vmatpush1.msra.mxu0 %v546
        %914 = vmatprep.subr.mxu0 %v550
        %915 = vmatpush1.msra.mxu0 %v549
        %916 = vmatprep.subr.mxu0 %v553
        %917 = vmatpush1.msra.mxu0 %v552
        %918 = vmatprep.subr.mxu0 %v556
        %919 = vmatpush1.msra.mxu0 %v555
        %920 = vmatprep.subr.mxu0 %v559
        %921 = vmatpush1.msra.mxu0 %v558
        %922 = vmatprep.subr.mxu0 %v562
        %923 = vmatpush1.msra.mxu0 %v561
        %924 = vmatprep.subr.mxu0 %v565
        %925 = vmatpush1.msra.mxu0 %v564
        %926 = vmatprep.subr.mxu0 %v568
        %927 = vmatpush1.msra.mxu0 %v567
        %928 = vmatprep.subr.mxu0 %v571
        %929 = vmatpush1.msra.mxu0 %v570
        %930 = vmatprep.subr.mxu0 %v574
        %931 = vmatpush1.msra.mxu0 %v573
        %932 = vmatprep.subr.mxu0 %v577
        %933 = vmatpush1.msra.mxu0 %v576
        %934 = vmatprep.subr.mxu0 %v580
        %935 = vmatpush1.msra.mxu0 %v579
        %936 = vmatprep.subr.mxu0 %v583
        %937 = vmatpush1.msra.mxu0 %v582
        %938 = vmatprep.subr.mxu0 %v586
        %939 = vmatpush1.msra.mxu0 %v585
        %940 = vmatprep.subr.mxu0 %v589
        %941 = vmatpush1.msra.mxu0 %v588
        %942 = vmatprep.subr.mxu0 %v592
        %943 = vmatpush1.msra.mxu0 %v591
        %944 = vmatprep.subr.mxu0 %v595
        %945 = vmatpush1.msra.mxu0 %v594
        %946 = vmatprep.subr.mxu0 %v598
        %947 = vmatpush1.msra.mxu0 %v597
        %948 = vmatprep.subr.mxu0 %v601
        %949 = vmatpush1.msra.mxu0 %v600
        %950 = vmatprep.subr.mxu0 %v604
        %951 = vmatpush1.msra.mxu0 %v603
        %952 = vmatprep.subr.mxu0 %v607
        %953 = vmatpush1.msra.mxu0 %v606
        %954 = vmatprep.subr.mxu0 %v610
        %955 = vmatpush1.msra.mxu0 %v609
        %956 = vmatprep.subr.mxu0 %v613
        %957 = vmatpush1.msra.mxu0 %v612
        %958 = vmatprep.subr.mxu0 %v616
        %959 = vmatpush1.msra.mxu0 %v615
        %960 = vmatprep.subr.mxu0 %v619
        %961 = vmatpush1.msra.mxu0 %v618
        %962 = vmatprep.subr.mxu0 %v622
        %963 = vmatpush1.msra.mxu0 %v621
        %964 = vmatprep.subr.mxu0 %v625
        %965 = vmatpush1.msra.mxu0 %v624
        %966 = vmatprep.subr.mxu0 %v628
        %967 = vmatpush1.msra.mxu0 %v627
        %968 = vmatprep.mubr.f32.mxu0 %v315
        %969 = vmatmul.mubr.f32.gmra.mrb[0].mxu0 %v314
        %v970 = vpop.f32.mrb[0].mxu0
        %v971 = vadd.f32 %v882, %v970
        %v972 = vpop.f32.mrb[0].mxu0
        %v973 = vadd.f32 %v884, %v972
        %974 = vmatprep.mubr.f32.mxu0 %v323
        %975 = vmatmul.mubr.f32.gmra.mrb[0].mxu0 %v322
        %v976 = vpop.f32.mrb[0].mxu0
        %v977 = vadd.f32 %v888, %v976
        %v978 = vpop.f32.mrb[0].mxu0
        %v979 = vadd.f32 %v890, %v978
        %980 = vmatprep.mubr.f32.mxu0 %v331
        %981 = vmatmul.mubr.f32.gmra.mrb[0].mxu0 %v330
        %v982 = vpop.f32.mrb[0].mxu0
        %v983 = vadd.f32 %v894, %v982
        %v984 = vpop.f32.mrb[0].mxu0
        %v985 = vadd.f32 %v896, %v984
        %986 = vmatprep.mubr.f32.mxu0 %v339
        %987 = vmatmul.mubr.f32.gmra.mrb[0].mxu0 %v338
        %v988 = vpop.f32.mrb[0].mxu0
        %v989 = vadd.f32 %v900, %v988
        %v990 = vpop.f32.mrb[0].mxu0
        %v991 = vadd.f32 %v902, %v990
        %992 = vdwg.mxu0
        %993 = vmatprep.subr.mxu0 %v631
        %994 = vmatpush1.msra.mxu0 %v630
        %995 = vmatprep.subr.mxu0 %v634
        %996 = vmatpush1.msra.mxu0 %v633
        %997 = vmatprep.subr.mxu0 %v637
        %998 = vmatpush1.msra.mxu0 %v636
        %999 = vmatprep.subr.mxu0 %v640
        %1000 = vmatpush1.msra.mxu0 %v639
        %1001 = vmatprep.subr.mxu0 %v643
        %1002 = vmatpush1.msra.mxu0 %v642
        %1003 = vmatprep.subr.mxu0 %v646
        %1004 = vmatpush1.msra.mxu0 %v645
        %1005 = vmatprep.subr.mxu0 %v649
        %1006 = vmatpush1.msra.mxu0 %v648
        %1007 = vmatprep.subr.mxu0 %v652
        %1008 = vmatpush1.msra.mxu0 %v651
        %1009 = vmatprep.subr.mxu0 %v655
        %1010 = vmatpush1.msra.mxu0 %v654
        %1011 = vmatprep.subr.mxu0 %v658
        %1012 = vmatpush1.msra.mxu0 %v657
        %1013 = vmatprep.subr.mxu0 %v661
        %1014 = vmatpush1.msra.mxu0 %v660
        %1015 = vmatprep.subr.mxu0 %v664
        %1016 = vmatpush1.msra.mxu0 %v663
        %1017 = vmatprep.subr.mxu0 %v667
        %1018 = vmatpush1.msra.mxu0 %v666
        %1019 = vmatprep.subr.mxu0 %v670
        %1020 = vmatpush1.msra.mxu0 %v669
        %1021 = vmatprep.subr.mxu0 %v673
        %1022 = vmatpush1.msra.mxu0 %v672
        %1023 = vmatprep.subr.mxu0 %v676
        %1024 = vmatpush1.msra.mxu0 %v675
        %1025 = vmatprep.subr.mxu0 %v679
        %1026 = vmatpush1.msra.mxu0 %v678
        %1027 = vmatprep.subr.mxu0 %v682
        %1028 = vmatpush1.msra.mxu0 %v681
        %1029 = vmatprep.subr.mxu0 %v685
        %1030 = vmatpush1.msra.mxu0 %v684
        %1031 = vmatprep.subr.mxu0 %v688
        %1032 = vmatpush1.msra.mxu0 %v687
        %1033 = vmatprep.subr.mxu0 %v691
        %1034 = vmatpush1.msra.mxu0 %v690
        %1035 = vmatprep.subr.mxu0 %v694
        %1036 = vmatpush1.msra.mxu0 %v693
        %1037 = vmatprep.subr.mxu0 %v697
        %1038 = vmatpush1.msra.mxu0 %v696
        %1039 = vmatprep.subr.mxu0 %v700
        %1040 = vmatpush1.msra.mxu0 %v699
        %1041 = vmatprep.subr.mxu0 %v703
        %1042 = vmatpush1.msra.mxu0 %v702
        %1043 = vmatprep.subr.mxu0 %v706
        %1044 = vmatpush1.msra.mxu0 %v705
        %1045 = vmatprep.subr.mxu0 %v709
        %1046 = vmatpush1.msra.mxu0 %v708
        %1047 = vmatprep.subr.mxu0 %v712
        %1048 = vmatpush1.msra.mxu0 %v711
        %1049 = vmatprep.subr.mxu0 %v715
        %1050 = vmatpush1.msra.mxu0 %v714
        %1051 = vmatprep.subr.mxu0 %v718
        %1052 = vmatpush1.msra.mxu0 %v717
        %1053 = vmatprep.subr.mxu0 %v721
        %1054 = vmatpush1.msra.mxu0 %v720
        %1055 = vmatprep.subr.mxu0 %v724
        %1056 = vmatpush1.msra.mxu0 %v723
        %1057 = vmatprep.mubr.f32.mxu0 %v317
        %1058 = vmatmul.mubr.f32.gmra.mrb[0].mxu0 %v316
        %v1059 = vpop.f32.mrb[0].mxu0
        %v1060 = vadd.f32 %v971, %v1059
        %v1061 = vpop.f32.mrb[0].mxu0
        %v1062 = vadd.f32 %v973, %v1061
        %1063 = vmatprep.mubr.f32.mxu0 %v325
        %1064 = vmatmul.mubr.f32.gmra.mrb[0].mxu0 %v324
        %v1065 = vpop.f32.mrb[0].mxu0
        %v1066 = vadd.f32 %v977, %v1065
        %v1067 = vpop.f32.mrb[0].mxu0
        %v1068 = vadd.f32 %v979, %v1067
        %1069 = vmatprep.mubr.f32.mxu0 %v333
        %1070 = vmatmul.mubr.f32.gmra.mrb[0].mxu0 %v332
        %v1071 = vpop.f32.mrb[0].mxu0
        %v1072 = vadd.f32 %v983, %v1071
        %v1073 = vpop.f32.mrb[0].mxu0
        %v1074 = vadd.f32 %v985, %v1073
        %1075 = vmatprep.mubr.f32.mxu0 %v341
        %1076 = vmatmul.mubr.f32.gmra.mrb[0].mxu0 %v340
        %v1077 = vpop.f32.mrb[0].mxu0
        %v1078 = vadd.f32 %v989, %v1077
        %v1079 = vpop.f32.mrb[0].mxu0
        %v1080 = vadd.f32 %v991, %v1079
        %1081 = vdwg.mxu0
        %1082 = vmatprep.subr.mxu0 0.0
        %1083 = vmatpush1.msra.mxu0 %v344
        %1084 = vmatprep.subr.mxu0 0.0
        %1085 = vmatpush1.msra.mxu0 %v347
        %1086 = vmatprep.subr.mxu0 0.0
        %1087 = vmatpush1.msra.mxu0 %v350
        %1088 = vmatprep.subr.mxu0 0.0
        %1089 = vmatpush1.msra.mxu0 %v353
        %1090 = vmatprep.subr.mxu0 0.0
        %1091 = vmatpush1.msra.mxu0 %v356
        %1092 = vmatprep.subr.mxu0 0.0
        %1093 = vmatpush1.msra.mxu0 %v359
        %1094 = vmatprep.subr.mxu0 0.0
        %1095 = vmatpush1.msra.mxu0 %v362
        %1096 = vmatprep.subr.mxu0 0.0
        %1097 = vmatpush1.msra.mxu0 %v365
        %1098 = vmatprep.subr.mxu0 0.0
        %1099 = vmatpush1.msra.mxu0 %v368
        %1100 = vmatprep.subr.mxu0 0.0
        %1101 = vmatpush1.msra.mxu0 %v371
        %1102 = vmatprep.subr.mxu0 0.0
        %1103 = vmatpush1.msra.mxu0 %v374
        %1104 = vmatprep.subr.mxu0 0.0
        %1105 = vmatpush1.msra.mxu0 %v377
        %1106 = vmatprep.subr.mxu0 0.0
        %1107 = vmatpush1.msra.mxu0 %v380
        %1108 = vmatprep.subr.mxu0 0.0
        %1109 = vmatpush1.msra.mxu0 %v383
        %1110 = vmatprep.subr.mxu0 0.0
        %1111 = vmatpush1.msra.mxu0 %v386
        %1112 = vmatprep.subr.mxu0 0.0
        %1113 = vmatpush1.msra.mxu0 %v389
        %1114 = vmatprep.subr.mxu0 0.0
        %1115 = vmatpush1.msra.mxu0 %v392
        %1116 = vmatprep.subr.mxu0 0.0
        %1117 = vmatpush1.msra.mxu0 %v395
        %1118 = vmatprep.subr.mxu0 0.0
        %1119 = vmatpush1.msra.mxu0 %v398
        %1120 = vmatprep.subr.mxu0 0.0
        %1121 = vmatpush1.msra.mxu0 %v401
        %1122 = vmatprep.subr.mxu0 0.0
        %1123 = vmatpush1.msra.mxu0 %v404
        %1124 = vmatprep.subr.mxu0 0.0
        %1125 = vmatpush1.msra.mxu0 %v407
        %1126 = vmatprep.subr.mxu0 0.0
        %1127 = vmatpush1.msra.mxu0 %v410
        %1128 = vmatprep.subr.mxu0 0.0
        %1129 = vmatpush1.msra.mxu0 %v413
        %1130 = vmatprep.subr.mxu0 0.0
        %1131 = vmatpush1.msra.mxu0 %v416
        %1132 = vmatprep.subr.mxu0 0.0
        %1133 = vmatpush1.msra.mxu0 %v419
        %1134 = vmatprep.subr.mxu0 0.0
        %1135 = vmatpush1.msra.mxu0 %v422
        %1136 = vmatprep.subr.mxu0 0.0
        %1137 = vmatpush1.msra.mxu0 %v425
        %1138 = vmatprep.subr.mxu0 0.0
        %1139 = vmatpush1.msra.mxu0 %v428
        %1140 = vmatprep.subr.mxu0 0.0
        %1141 = vmatpush1.msra.mxu0 %v431
        %1142 = vmatprep.subr.mxu0 0.0
        %1143 = vmatpush1.msra.mxu0 %v434
        %1144 = vmatprep.subr.mxu0 0.0
        %1145 = vmatpush1.msra.mxu0 %v437
        %1146 = vmatprep.mubr.f32.mxu0 %v311
        %1147 = vmatmul.mubr.f32.gmra.mrb[0].mxu0 %v310
        %v1148 = vpop.f32.mrb[0].mxu0
        %v1149 = vadd.f32 0.0, %v1148
        %v1150 = vpop.f32.mrb[0].mxu0
        %1151 = vmatprep.mubr.f32.mxu0 %v319
        %1152 = vmatmul.mubr.f32.gmra.mrb[0].mxu0 %v318
        %v1153 = vpop.f32.mrb[0].mxu0
        %v1154 = vadd.f32 0.0, %v1153
        %v1155 = vpop.f32.mrb[0].mxu0
        %1156 = vmatprep.mubr.f32.mxu0 %v327
        %1157 = vmatmul.mubr.f32.gmra.mrb[0].mxu0 %v326
        %v1158 = vpop.f32.mrb[0].mxu0
        %v1159 = vadd.f32 0.0, %v1158
        %v1160 = vpop.f32.mrb[0].mxu0
        %1161 = vmatprep.mubr.f32.mxu0 %v335
        %1162 = vmatmul.mubr.f32.gmra.mrb[0].mxu0 %v334
        %v1163 = vpop.f32.mrb[0].mxu0
        %v1164 = vadd.f32 0.0, %v1163
        %v1165 = vpop.f32.mrb[0].mxu0
        %1166 = vdwg.mxu0
        %1167 = vmatprep.subr.mxu0 0.0
        %1168 = vmatpush1.msra.mxu0 %v440
        %1169 = vmatprep.subr.mxu0 0.0
        %1170 = vmatpush1.msra.mxu0 %v443
        %1171 = vmatprep.subr.mxu0 0.0
        %1172 = vmatpush1.msra.mxu0 %v446
        %1173 = vmatprep.subr.mxu0 0.0
        %1174 = vmatpush1.msra.mxu0 %v449
        %1175 = vmatprep.subr.mxu0 0.0
        %1176 = vmatpush1.msra.mxu0 %v452
        %1177 = vmatprep.subr.mxu0 0.0
        %1178 = vmatpush1.msra.mxu0 %v455
        %1179 = vmatprep.subr.mxu0 0.0
        %1180 = vmatpush1.msra.mxu0 %v458
        %1181 = vmatprep.subr.mxu0 0.0
        %1182 = vmatpush1.msra.mxu0 %v461
        %1183 = vmatprep.subr.mxu0 0.0
        %1184 = vmatpush1.msra.mxu0 %v464
        %1185 = vmatprep.subr.mxu0 0.0
        %1186 = vmatpush1.msra.mxu0 %v467
        %1187 = vmatprep.subr.mxu0 0.0
        %1188 = vmatpush1.msra.mxu0 %v470
        %1189 = vmatprep.subr.mxu0 0.0
        %1190 = vmatpush1.msra.mxu0 %v473
        %1191 = vmatprep.subr.mxu0 0.0
        %1192 = vmatpush1.msra.mxu0 %v476
        %1193 = vmatprep.subr.mxu0 0.0
        %1194 = vmatpush1.msra.mxu0 %v479
        %1195 = vmatprep.subr.mxu0 0.0
        %1196 = vmatpush1.msra.mxu0 %v482
        %1197 = vmatprep.subr.mxu0 0.0
        %1198 = vmatpush1.msra.mxu0 %v485
        %1199 = vmatprep.subr.mxu0 0.0
        %1200 = vmatpush1.msra.mxu0 %v488
        %1201 = vmatprep.subr.mxu0 0.0
        %1202 = vmatpush1.msra.mxu0 %v491
        %1203 = vmatprep.subr.mxu0 0.0
        %1204 = vmatpush1.msra.mxu0 %v494
        %1205 = vmatprep.subr.mxu0 0.0
        %1206 = vmatpush1.msra.mxu0 %v497
        %1207 = vmatprep.subr.mxu0 0.0
        %1208 = vmatpush1.msra.mxu0 %v500
        %1209 = vmatprep.subr.mxu0 0.0
        %1210 = vmatpush1.msra.mxu0 %v503
        %1211 = vmatprep.subr.mxu0 0.0
        %1212 = vmatpush1.msra.mxu0 %v506
        %1213 = vmatprep.subr.mxu0 0.0
        %1214 = vmatpush1.msra.mxu0 %v509
        %1215 = vmatprep.subr.mxu0 0.0
        %1216 = vmatpush1.msra.mxu0 %v512
        %1217 = vmatprep.subr.mxu0 0.0
        %1218 = vmatpush1.msra.mxu0 %v515
        %1219 = vmatprep.subr.mxu0 0.0
        %1220 = vmatpush1.msra.mxu0 %v518
        %1221 = vmatprep.subr.mxu0 0.0
        %1222 = vmatpush1.msra.mxu0 %v521
        %1223 = vmatprep.subr.mxu0 0.0
        %1224 = vmatpush1.msra.mxu0 %v524
        %1225 = vmatprep.subr.mxu0 0.0
        %1226 = vmatpush1.msra.mxu0 %v527
        %1227 = vmatprep.subr.mxu0 0.0
        %1228 = vmatpush1.msra.mxu0 %v530
        %1229 = vmatprep.subr.mxu0 0.0
        %1230 = vmatpush1.msra.mxu0 %v533
        %1231 = vmatprep.mubr.f32.mxu0 %v313
        %1232 = vmatmul.mubr.f32.gmra.mrb[0].mxu0 %v312
        %v1233 = vpop.f32.mrb[0].mxu0
        %v1234 = vadd.f32 %v1149, %v1233
        %v1235 = vpop.f32.mrb[0].mxu0
        %1236 = vmatprep.mubr.f32.mxu0 %v321
        %1237 = vmatmul.mubr.f32.gmra.mrb[0].mxu0 %v320
        %v1238 = vpop.f32.mrb[0].mxu0
        %v1239 = vadd.f32 %v1154, %v1238
        %v1240 = vpop.f32.mrb[0].mxu0
        %1241 = vmatprep.mubr.f32.mxu0 %v329
        %1242 = vmatmul.mubr.f32.gmra.mrb[0].mxu0 %v328
        %v1243 = vpop.f32.mrb[0].mxu0
        %v1244 = vadd.f32 %v1159, %v1243
        %v1245 = vpop.f32.mrb[0].mxu0
        %1246 = vmatprep.mubr.f32.mxu0 %v337
        %1247 = vmatmul.mubr.f32.gmra.mrb[0].mxu0 %v336
        %v1248 = vpop.f32.mrb[0].mxu0
        %v1249 = vadd.f32 %v1164, %v1248
        %v1250 = vpop.f32.mrb[0].mxu0
        %1251 = vdwg.mxu0
        %1252 = vmatprep.subr.mxu0 0.0
        %1253 = vmatpush1.msra.mxu0 %v536
        %1254 = vmatprep.subr.mxu0 0.0
        %1255 = vmatpush1.msra.mxu0 %v539
        %1256 = vmatprep.subr.mxu0 0.0
        %1257 = vmatpush1.msra.mxu0 %v542
        %1258 = vmatprep.subr.mxu0 0.0
        %1259 = vmatpush1.msra.mxu0 %v545
        %1260 = vmatprep.subr.mxu0 0.0
        %1261 = vmatpush1.msra.mxu0 %v548
        %1262 = vmatprep.subr.mxu0 0.0
        %1263 = vmatpush1.msra.mxu0 %v551
        %1264 = vmatprep.subr.mxu0 0.0
        %1265 = vmatpush1.msra.mxu0 %v554
        %1266 = vmatprep.subr.mxu0 0.0
        %1267 = vmatpush1.msra.mxu0 %v557
        %1268 = vmatprep.subr.mxu0 0.0
        %1269 = vmatpush1.msra.mxu0 %v560
        %1270 = vmatprep.subr.mxu0 0.0
        %1271 = vmatpush1.msra.mxu0 %v563
        %1272 = vmatprep.subr.mxu0 0.0
        %1273 = vmatpush1.msra.mxu0 %v566
        %1274 = vmatprep.subr.mxu0 0.0
        %1275 = vmatpush1.msra.mxu0 %v569
        %1276 = vmatprep.subr.mxu0 0.0
        %1277 = vmatpush1.msra.mxu0 %v572
        %1278 = vmatprep.subr.mxu0 0.0
        %1279 = vmatpush1.msra.mxu0 %v575
        %1280 = vmatprep.subr.mxu0 0.0
        %1281 = vmatpush1.msra.mxu0 %v578
        %1282 = vmatprep.subr.mxu0 0.0
        %1283 = vmatpush1.msra.mxu0 %v581
        %1284 = vmatprep.subr.mxu0 0.0
        %1285 = vmatpush1.msra.mxu0 %v584
        %1286 = vmatprep.subr.mxu0 0.0
        %1287 = vmatpush1.msra.mxu0 %v587
        %1288 = vmatprep.subr.mxu0 0.0
        %1289 = vmatpush1.msra.mxu0 %v590
        %1290 = vmatprep.subr.mxu0 0.0
        %1291 = vmatpush1.msra.mxu0 %v593
        %1292 = vmatprep.subr.mxu0 0.0
        %1293 = vmatpush1.msra.mxu0 %v596
        %1294 = vmatprep.subr.mxu0 0.0
        %1295 = vmatpush1.msra.mxu0 %v599
        %1296 = vmatprep.subr.mxu0 0.0
        %1297 = vmatpush1.msra.mxu0 %v602
        %1298 = vmatprep.subr.mxu0 0.0
        %1299 = vmatpush1.msra.mxu0 %v605
        %1300 = vmatprep.subr.mxu0 0.0
        %1301 = vmatpush1.msra.mxu0 %v608
        %1302 = vmatprep.subr.mxu0 0.0
        %1303 = vmatpush1.msra.mxu0 %v611
        %1304 = vmatprep.subr.mxu0 0.0
        %1305 = vmatpush1.msra.mxu0 %v614
        %1306 = vmatprep.subr.mxu0 0.0
        %1307 = vmatpush1.msra.mxu0 %v617
        %1308 = vmatprep.subr.mxu0 0.0
        %1309 = vmatpush1.msra.mxu0 %v620
        %1310 = vmatprep.subr.mxu0 0.0
        %1311 = vmatpush1.msra.mxu0 %v623
        %1312 = vmatprep.subr.mxu0 0.0
        %1313 = vmatpush1.msra.mxu0 %v626
        %1314 = vmatprep.subr.mxu0 0.0
        %1315 = vmatpush1.msra.mxu0 %v629
        %1316 = vmatprep.mubr.f32.mxu0 %v315
        %1317 = vmatmul.mubr.f32.gmra.mrb[0].mxu0 %v314
        %v1318 = vpop.f32.mrb[0].mxu0
        %v1319 = vadd.f32 %v1234, %v1318
        %v1320 = vpop.f32.mrb[0].mxu0
        %1321 = vmatprep.mubr.f32.mxu0 %v323
        %1322 = vmatmul.mubr.f32.gmra.mrb[0].mxu0 %v322
        %v1323 = vpop.f32.mrb[0].mxu0
        %v1324 = vadd.f32 %v1239, %v1323
        %v1325 = vpop.f32.mrb[0].mxu0
        %1326 = vmatprep.mubr.f32.mxu0 %v331
        %1327 = vmatmul.mubr.f32.gmra.mrb[0].mxu0 %v330
        %v1328 = vpop.f32.mrb[0].mxu0
        %v1329 = vadd.f32 %v1244, %v1328
        %v1330 = vpop.f32.mrb[0].mxu0
        %1331 = vmatprep.mubr.f32.mxu0 %v339
        %1332 = vmatmul.mubr.f32.gmra.mrb[0].mxu0 %v338
        %v1333 = vpop.f32.mrb[0].mxu0
        %v1334 = vadd.f32 %v1249, %v1333
        %v1335 = vpop.f32.mrb[0].mxu0
        %1336 = vdwg.mxu0
        %1337 = vmatprep.subr.mxu0 0.0
        %1338 = vmatpush1.msra.mxu0 %v632
        %1339 = vmatprep.subr.mxu0 0.0
        %1340 = vmatpush1.msra.mxu0 %v635
        %1341 = vmatprep.subr.mxu0 0.0
        %1342 = vmatpush1.msra.mxu0 %v638
        %1343 = vmatprep.subr.mxu0 0.0
        %1344 = vmatpush1.msra.mxu0 %v641
        %1345 = vmatprep.subr.mxu0 0.0
        %1346 = vmatpush1.msra.mxu0 %v644
        %1347 = vmatprep.subr.mxu0 0.0
        %1348 = vmatpush1.msra.mxu0 %v647
        %1349 = vmatprep.subr.mxu0 0.0
        %1350 = vmatpush1.msra.mxu0 %v650
        %1351 = vmatprep.subr.mxu0 0.0
        %1352 = vmatpush1.msra.mxu0 %v653
        %1353 = vmatprep.subr.mxu0 0.0
        %1354 = vmatpush1.msra.mxu0 %v656
        %1355 = vmatprep.subr.mxu0 0.0
        %1356 = vmatpush1.msra.mxu0 %v659
        %1357 = vmatprep.subr.mxu0 0.0
        %1358 = vmatpush1.msra.mxu0 %v662
        %1359 = vmatprep.subr.mxu0 0.0
        %1360 = vmatpush1.msra.mxu0 %v665
        %1361 = vmatprep.subr.mxu0 0.0
        %1362 = vmatpush1.msra.mxu0 %v668
        %1363 = vmatprep.subr.mxu0 0.0
        %1364 = vmatpush1.msra.mxu0 %v671
        %1365 = vmatprep.subr.mxu0 0.0
        %1366 = vmatpush1.msra.mxu0 %v674
        %1367 = vmatprep.subr.mxu0 0.0
        %1368 = vmatpush1.msra.mxu0 %v677
        %1369 = vmatprep.subr.mxu0 0.0
        %1370 = vmatpush1.msra.mxu0 %v680
        %1371 = vmatprep.subr.mxu0 0.0
        %1372 = vmatpush1.msra.mxu0 %v683
        %1373 = vmatprep.subr.mxu0 0.0
        %1374 = vmatpush1.msra.mxu0 %v686
        %1375 = vmatprep.subr.mxu0 0.0
        %1376 = vmatpush1.msra.mxu0 %v689
        %1377 = vmatprep.subr.mxu0 0.0
        %1378 = vmatpush1.msra.mxu0 %v692
        %1379 = vmatprep.subr.mxu0 0.0
        %1380 = vmatpush1.msra.mxu0 %v695
        %1381 = vmatprep.subr.mxu0 0.0
        %1382 = vmatpush1.msra.mxu0 %v698
        %1383 = vmatprep.subr.mxu0 0.0
        %1384 = vmatpush1.msra.mxu0 %v701
        %1385 = vmatprep.subr.mxu0 0.0
        %1386 = vmatpush1.msra.mxu0 %v704
        %1387 = vmatprep.subr.mxu0 0.0
        %1388 = vmatpush1.msra.mxu0 %v707
        %1389 = vmatprep.subr.mxu0 0.0
        %1390 = vmatpush1.msra.mxu0 %v710
        %1391 = vmatprep.subr.mxu0 0.0
        %1392 = vmatpush1.msra.mxu0 %v713
        %1393 = vmatprep.subr.mxu0 0.0
        %1394 = vmatpush1.msra.mxu0 %v716
        %1395 = vmatprep.subr.mxu0 0.0
        %1396 = vmatpush1.msra.mxu0 %v719
        %1397 = vmatprep.subr.mxu0 0.0
        %1398 = vmatpush1.msra.mxu0 %v722
        %1399 = vmatprep.subr.mxu0 0.0
        %1400 = vmatpush1.msra.mxu0 %v725
        %1401 = vmatprep.mubr.f32.mxu0 %v317
        %1402 = vmatmul.mubr.f32.gmra.mrb[0].mxu0 %v316
        %v1403 = vpop.f32.mrb[0].mxu0
        %v1404 = vadd.f32 %v1319, %v1403
        %v1405 = vpop.f32.mrb[0].mxu0
        %1406 = vmatprep.mubr.f32.mxu0 %v325
        %1407 = vmatmul.mubr.f32.gmra.mrb[0].mxu0 %v324
        %v1408 = vpop.f32.mrb[0].mxu0
        %v1409 = vadd.f32 %v1324, %v1408
        %v1410 = vpop.f32.mrb[0].mxu0
        %1411 = vmatprep.mubr.f32.mxu0 %v333
        %1412 = vmatmul.mubr.f32.gmra.mrb[0].mxu0 %v332
        %v1413 = vpop.f32.mrb[0].mxu0
        %v1414 = vadd.f32 %v1329, %v1413
        %v1415 = vpop.f32.mrb[0].mxu0
        %1416 = vmatprep.mubr.f32.mxu0 %v341
        %1417 = vmatmul.mubr.f32.gmra.mrb[0].mxu0 %v340
        %v1418 = vpop.f32.mrb[0].mxu0
        %v1419 = vadd.f32 %v1334, %v1418
        %v1420 = vpop.f32.mrb[0].mxu0
        %1421 = vdwg.mxu0
        %v1422 = vadd.f32 %v298, %v1060
        %v1423 = vadd.f32 %v299, %v1062
        %v1424 = vadd.f32 %v300, %v1404
        %v1425 = vadd.f32 %v301, %v1066
        %v1426 = vadd.f32 %v302, %v1068
        %v1427 = vadd.f32 %v303, %v1409
        %v1428 = vadd.f32 %v304, %v1072
        %v1429 = vadd.f32 %v305, %v1074
        %v1430 = vadd.f32 %v306, %v1414
        %v1431 = vadd.f32 %v307, %v1078
        %v1432 = vadd.f32 %v308, %v1080
        %v1433 = vadd.f32 %v309, %v1419
        %1434 = vst [vmem:[#allocation2] sm:$0xff] %v1422
        %1435 = vst [vmem:[#allocation2 + $0x8] sm:$0xff] %v1423
        %1436 = vst [vmem:[#allocation2 + $0x10] sm:$0xff] %v1424
        %1437 = vst [vmem:[#allocation2 + $0x18] sm:$0xff] %v1425
        %1438 = vst [vmem:[#allocation2 + $0x20] sm:$0xff] %v1426
        %1439 = vst [vmem:[#allocation2 + $0x28] sm:$0xff] %v1427
        %1440 = vst [vmem:[#allocation2 + $0x30] sm:$0xff] %v1428
        %1441 = vst [vmem:[#allocation2 + $0x38] sm:$0xff] %v1429
        %1442 = vst [vmem:[#allocation2 + $0x40] sm:$0xff] %v1430
        %1443 = vst [vmem:[#allocation2 + $0x48] sm:$0xff] %v1431
        %1444 = vst [vmem:[#allocation2 + $0x50] sm:$0xff] %v1432
        %1445 = vst [vmem:[#allocation2 + $0x58] sm:$0xff] %v1433
        %p1446 = scmp.eq.s32.totalorder %s28, 3
        // Predicated region
        $region49: #{ae_cnn_forward.17} parent=31 // pred_check
          %p1447 = pneg %p1446
        $region50: #{ae_cnn_forward.17} parent=31 // pred_check_branch
          %1449 = sbr.rel (%p1447) target = $region52
        $region51: #{ae_cnn_forward.17} parent=31 // pred_region
          %v1450 = vld [vmem:[#allocation2] sm:$0xff]
          %v1451 = vld [vmem:[#allocation2 + $0x8] sm:$0xff]
          %v1452 = vld [vmem:[#allocation2 + $0x10] sm:$0xff]
          %v1453 = vld [vmem:[#allocation2 + $0x18] sm:$0xff]
          %v1454 = vld [vmem:[#allocation2 + $0x20] sm:$0xff]
          %v1455 = vld [vmem:[#allocation2 + $0x28] sm:$0xff]
          %v1456 = vld [vmem:[#allocation2 + $0x30] sm:$0xff]
          %v1457 = vld [vmem:[#allocation2 + $0x38] sm:$0xff]
          %v1458 = vld [vmem:[#allocation2 + $0x40] sm:$0xff]
          %v1459 = vld [vmem:[#allocation2 + $0x48] sm:$0xff]
          %v1460 = vld [vmem:[#allocation2 + $0x50] sm:$0xff]
          %v1461 = vld [vmem:[#allocation2 + $0x58] sm:$0xff]
          %v1462 = vld [vmem:[#allocation8] sm:$0xff]
          %v1463 = vld [vmem:[#allocation8 + $0x8] sm:$0xff]
          %v1464 = vld [vmem:[#allocation8 + $0x10] sm:$0xff]
          %v1465 = vld [vmem:[#allocation8 + $0x18] sm:$0xff]
          %1467 = vset.pattern.permute.xlu0 0
          %1468 = vperm.xlu0 %1467, %v1462
          %v1469 = vpop.permute.xlu0 %1468
          %1472 = vset.pattern.permute.xlu0 0
          %1473 = vperm.xlu0 %1472, %v1463
          %v1474 = vpop.permute.xlu0 %1473
          %1477 = vset.pattern.permute.xlu0 0
          %1478 = vperm.xlu0 %1477, %v1464
          %v1479 = vpop.permute.xlu0 %1478
          %1482 = vset.pattern.permute.xlu0 0
          %1483 = vperm.xlu0 %1482, %v1465
          %v1484 = vpop.permute.xlu0 %1483
          %v1486 = vadd.f32 %v1450, %v1469
          %v1487 = vadd.f32 %v1451, %v1469
          %v1488 = vadd.f32 %v1452, %v1469
          %v1489 = vadd.f32 %v1453, %v1474
          %v1490 = vadd.f32 %v1454, %v1474
          %v1491 = vadd.f32 %v1455, %v1474
          %v1492 = vadd.f32 %v1456, %v1479
          %v1493 = vadd.f32 %v1457, %v1479
          %v1494 = vadd.f32 %v1458, %v1479
          %v1495 = vadd.f32 %v1459, %v1484
          %v1496 = vadd.f32 %v1460, %v1484
          %v1497 = vadd.f32 %v1461, %v1484
          %v1498 = vmax.f32 %v1486, 0.0
          %v1499 = vmax.f32 %v1487, 0.0
          %v1500 = vmax.f32 %v1488, 0.0
          %v1501 = vmax.f32 %v1489, 0.0
          %v1502 = vmax.f32 %v1490, 0.0
          %v1503 = vmax.f32 %v1491, 0.0
          %v1504 = vmax.f32 %v1492, 0.0
          %v1505 = vmax.f32 %v1493, 0.0
          %v1506 = vmax.f32 %v1494, 0.0
          %v1507 = vmax.f32 %v1495, 0.0
          %v1508 = vmax.f32 %v1496, 0.0
          %v1509 = vmax.f32 %v1497, 0.0
          %1510 = vst [vmem:[#allocation9] sm:$0xff] %v1498
          %1511 = vst [vmem:[#allocation9 + $0x8] sm:$0xff] %v1499
          %1512 = vst [vmem:[#allocation9 + $0x10] sm:$0xff] %v1500
          %1513 = vst [vmem:[#allocation9 + $0x18] sm:$0xff] %v1501
          %1514 = vst [vmem:[#allocation9 + $0x20] sm:$0xff] %v1502
          %1515 = vst [vmem:[#allocation9 + $0x28] sm:$0xff] %v1503
          %1516 = vst [vmem:[#allocation9 + $0x30] sm:$0xff] %v1504
          %1517 = vst [vmem:[#allocation9 + $0x38] sm:$0xff] %v1505
          %1518 = vst [vmem:[#allocation9 + $0x40] sm:$0xff] %v1506
          %1519 = vst [vmem:[#allocation9 + $0x48] sm:$0xff] %v1507
          %1520 = vst [vmem:[#allocation9 + $0x50] sm:$0xff] %v1508
          %1521 = vst [vmem:[#allocation9 + $0x58] sm:$0xff] %v1509
        $region52: #{ae_cnn_forward.17} parent=31 // pred_fallthru
          _
        // Predicated region
        $region53: #{ae_cnn_forward.17} parent=31 // pred_check
          %p1522 = pneg %p142
        $region54: #{ae_cnn_forward.17} parent=31 // pred_check_branch
          %1524 = sbr.rel (%p1522) target = $region56
        $region55: #{ae_cnn_forward.17} parent=31 // pred_region
          %s1525 = smul.u32 4, %s26
          %s1526 = smul.u32 3, %s27
          %s1528 = ssub.s32 1536, 1536
          %1529 = vsyncadd [#allocation5], %s1528
          %s1530 = smul.addr %s1525, 3
          %s1531 = sadd.s32 %s1526, %s1530
          %s1532 = smul.addr %s1531, 128
          %s1533 = scalar_lea.hbm %s3, %s1532
          %s1534 = sshll.u32 [#allocation9], 4
          %s1535 = int_to_ptr.vmem [resolvable:$true] %s1534
          %1540 = dma.vmem_to_hbm [thread:$0]  %s1535, 1536, %s1533, [#allocation5], 384, 384, 24
        $region56: #{ae_cnn_forward.17} parent=31 // pred_fallthru
          _
        // Predicated region
        $region57: #{ae_cnn_forward.17} parent=31 // pred_check
          %p1541 = pneg %p142
        $region58: #{ae_cnn_forward.17} parent=31 // pred_check_branch
          %1543 = sbr.rel (%p1541) target = $region60
        $region59: #{ae_cnn_forward.17} parent=31 // pred_region
          %1544 = dma.done [#allocation5], 1536
        $region60: #{ae_cnn_forward.17} parent=31 // pred_fallthru
          _
      $region32: #{ae_cnn_forward.17} parent=5 // pred_fallthru
        _
      %p1545 = scmp.le.s32.totalorder 2, %s16
      // Predicated region
      $region61: #{ae_cnn_forward.17} parent=5 // pred_check
        %p1546 = pneg %p1545
      $region62: #{ae_cnn_forward.17} parent=5 // pred_check_branch
        %1548 = sbr.rel (%p1546) target = $region64
      $region63: #{ae_cnn_forward.17} parent=5 // pred_region
        %s1549 = ssub.s32 %s16, 2
      $region64: #{ae_cnn_forward.17} parent=5 // pred_fallthru
        _
    $region6: #{ae_cnn_forward.17} parent=1 // loop_footer
      %s20 = sadd.s32 1, %s16
    $region7: #{ae_cnn_forward.17} parent=1 // loop_footer_branch
      %15 = sbr.rel target = $region3
    $region8: #{ae_cnn_forward.17} parent=1 // loop_exit
      _
    %1550 = vsyncpa [#allocation4], 1
    %s1551 = scalar_lea.sflag [#allocation4], 1
    %1552 = vsyncpa %s1551, 1
    %1553 = vsyncpa [#allocation7], 1
    %s1554 = scalar_lea.sflag [#allocation7], 1
    %1555 = vsyncpa %s1554, 1
    %1556 = vsyncpa [#allocation5], 1
    %s1557 = scalar_lea.sflag [#allocation5], 1
    %1558 = vsyncpa %s1557, 1

// kernel: ae_cnn_forward.18
$region0: #{ae_cnn_forward.18}
  #allocation0 [shape = 'u32[]', space=smem, size = 0x4, offset = 0x4, fixed_abs, tag = 'smem constant byte address 0x4 - core index']
  #allocation1 [shape = 'u32[144,128]{1,0:T(1,128)}', space=vmem, size = 0x12000, scoped, tag = 'internal scratch']
  #allocation2 [shape = 'f32[32,128]{1,0:T(8,128)}', space=vmem, size = 0x4000, scoped, tag = 'scratch operand']
  %s0 = inlined_call_operand.hbm [shape: f32[32,2048], index: 0, kind: input, shape index: {}]
  %s1 = inlined_call_operand.hbm [shape: f32[2048,128], index: 1, kind: input, shape index: {}]
  %s2 = inlined_call_operand.hbm [shape: f32[32,1], index: 2, kind: input, shape index: {}]
  %s3 = inlined_call_operand.hbm [shape: f32[32,128], index: 3, kind: output, shape index: {}]
  %s4 = sld [smem:[#allocation0]]
  $region42: #{ae_cnn_forward.18} parent=0
    _
  %s6 = ssub.s32 1, %s4
  %s7 = scalar_select 0, %s6, %s4
  $region1: #{ae_cnn_forward.18} parent=0
    #allocation3 [shape = 'u8[262144]{0}', space=vmem, size = 0x40000, scoped, tag = 'input window, operand 0, single buffered']
    #allocation4 [shape = 's32[1]{0}', space=sflag, size = 0x4, scoped, tag = 'scoped memory for ae_cnn_forward.18']
    #allocation5 [shape = 's32[1]{0}', space=sflag, size = 0x4, scoped, tag = 'scoped memory for ae_cnn_forward.18']
    #allocation6 [shape = 'u8[1048576]{0}', space=vmem, size = 0x100000, scoped, tag = 'input window, operand 1, single buffered']
    #allocation7 [shape = 's32[1]{0}', space=sflag, size = 0x4, scoped, tag = 'scoped memory for ae_cnn_forward.18']
    #allocation8 [shape = 'u8[16384]{0}', space=vmem, size = 0x4000, scoped, tag = 'input window, operand 2, single buffered']
    #allocation9 [shape = 'u8[16384]{0}', space=vmem, size = 0x4000, scoped, tag = 'output window, operand 0, single buffered']
    %8 = vsyncpa [#allocation4], 0
    %9 = vsyncpa [#allocation7], 0
    %10 = vsyncpa [#allocation5], 0
    // Predicated region
    $region2: #{ae_cnn_forward.18} parent=1 // pred_check
      _
    $region3: #{ae_cnn_forward.18} parent=1 // pred_check_branch
      %12 = sbr.rel (0) target = $region5
    $region4: #{ae_cnn_forward.18} parent=1 // pred_region
      %s14 = ssub.s32 8192, 8192
      %15 = vsyncadd [#allocation4], %s14
      %s16 = sshll.u32 [#allocation3], 4
      %s17 = int_to_ptr.vmem [resolvable:$true] %s16
      %22 = dma.hbm_to_vmem [thread:$0]  %s0, 8192, %s17, [#allocation4], 2048, 2048, 128
    $region5: #{ae_cnn_forward.18} parent=1 // pred_fallthru
      _
    // Predicated region
    $region6: #{ae_cnn_forward.18} parent=1 // pred_check
      _
    $region7: #{ae_cnn_forward.18} parent=1 // pred_check_branch
      %24 = sbr.rel (0) target = $region9
    $region8: #{ae_cnn_forward.18} parent=1 // pred_region
      %s26 = ssub.s32 32768, 32768
      %27 = vsyncadd [#allocation7], %s26
      %s28 = sshll.u32 [#allocation6], 4
      %s29 = int_to_ptr.vmem [resolvable:$true] %s28
      %34 = dma.hbm_to_vmem [thread:$0]  %s1, 32768, %s29, [#allocation7], 128, 128, 8
    $region9: #{ae_cnn_forward.18} parent=1 // pred_fallthru
      _
    // Predicated region
    $region10: #{ae_cnn_forward.18} parent=1 // pred_check
      _
    $region11: #{ae_cnn_forward.18} parent=1 // pred_check_branch
      %36 = sbr.rel (0) target = $region13
    $region12: #{ae_cnn_forward.18} parent=1 // pred_region
      %s38 = ssub.s32 512, 512
      %39 = vsyncadd [#allocation7], %s38
      %s40 = sshll.u32 [#allocation8], 4
      %s41 = int_to_ptr.vmem [resolvable:$true] %s40
      %46 = dma.hbm_to_vmem [thread:$0]  %s2, 512, %s41, [#allocation7], 128, 128, 8
    $region13: #{ae_cnn_forward.18} parent=1 // pred_fallthru
      _
    // Predicated region
    $region14: #{ae_cnn_forward.18} parent=1 // pred_check
      _
    $region15: #{ae_cnn_forward.18} parent=1 // pred_check_branch
      %48 = sbr.rel (0) target = $region17
    $region16: #{ae_cnn_forward.18} parent=1 // pred_region
      %49 = dma.done [#allocation4], 8192
    $region17: #{ae_cnn_forward.18} parent=1 // pred_fallthru
      _
    // Predicated region
    $region18: #{ae_cnn_forward.18} parent=1 // pred_check
      _
    $region19: #{ae_cnn_forward.18} parent=1 // pred_check_branch
      %51 = sbr.rel (0) target = $region21
    $region20: #{ae_cnn_forward.18} parent=1 // pred_region
      %52 = dma.done [#allocation7], 32768
    $region21: #{ae_cnn_forward.18} parent=1 // pred_fallthru
      _
    // Predicated region
    $region22: #{ae_cnn_forward.18} parent=1 // pred_check
      _
    $region23: #{ae_cnn_forward.18} parent=1 // pred_check_branch
      %54 = sbr.rel (0) target = $region25
    $region24: #{ae_cnn_forward.18} parent=1 // pred_region
      %55 = dma.done [#allocation7], 512
    $region25: #{ae_cnn_forward.18} parent=1 // pred_fallthru
      _
    %p56 = scmp.eq.s32.totalorder 0, 0
    // Predicated region
    $region26: #{ae_cnn_forward.18} parent=1 // pred_check
      %p57 = pneg %p56
    $region27: #{ae_cnn_forward.18} parent=1 // pred_check_branch
      %59 = sbr.rel (%p57) target = $region29
    $region28: #{ae_cnn_forward.18} parent=1 // pred_region
      %60 = vst [vmem:[#allocation2] sm:$0xff] 0.0
      %61 = vst [vmem:[#allocation2 + $0x8] sm:$0xff] 0.0
      %62 = vst [vmem:[#allocation2 + $0x10] sm:$0xff] 0.0
      %63 = vst [vmem:[#allocation2 + $0x18] sm:$0xff] 0.0
    $region29: #{ae_cnn_forward.18} parent=1 // pred_fallthru
      _
    %v64 = vld [vmem:[#allocation2] sm:$0xff]
    %v65 = vld [vmem:[#allocation2 + $0x8] sm:$0xff]
    %v66 = vld [vmem:[#allocation2 + $0x10] sm:$0xff]
    %v67 = vld [vmem:[#allocation2 + $0x18] sm:$0xff]
    %v68 = vld [vmem:[#allocation3] sm:$0xff]
    %v69 = vld [vmem:[#allocation3 + $0x8] sm:$0xff]
    %v70 = vld [vmem:[#allocation3 + $0x10] sm:$0xff]
    %v71 = vld [vmem:[#allocation3 + $0x18] sm:$0xff]
    %v72 = vld [vmem:[#allocation3 + $0x20] sm:$0xff]
    %v73 = vld [vmem:[#allocation3 + $0x28] sm:$0xff]
    %v74 = vld [vmem:[#allocation3 + $0x30] sm:$0xff]
    %v75 = vld [vmem:[#allocation3 + $0x38] sm:$0xff]
    %v76 = vld [vmem:[#allocation3 + $0x40] sm:$0xff]
    %v77 = vld [vmem:[#allocation3 + $0x48] sm:$0xff]
    %v78 = vld [vmem:[#allocation3 + $0x50] sm:$0xff]
    %v79 = vld [vmem:[#allocation3 + $0x58] sm:$0xff]
    %v80 = vld [vmem:[#allocation3 + $0x60] sm:$0xff]
    %v81 = vld [vmem:[#allocation3 + $0x68] sm:$0xff]
    %v82 = vld [vmem:[#allocation3 + $0x70] sm:$0xff]
    %v83 = vld [vmem:[#allocation3 + $0x78] sm:$0xff]
    %v84 = vld [vmem:[#allocation3 + $0x80] sm:$0xff]
    %v85 = vld [vmem:[#allocation3 + $0x88] sm:$0xff]
    %v86 = vld [vmem:[#allocation3 + $0x90] sm:$0xff]
    %v87 = vld [vmem:[#allocation3 + $0x98] sm:$0xff]
    %v88 = vld [vmem:[#allocation3 + $0xa0] sm:$0xff]
    %v89 = vld [vmem:[#allocation3 + $0xa8] sm:$0xff]
    %v90 = vld [vmem:[#allocation3 + $0xb0] sm:$0xff]
    %v91 = vld [vmem:[#allocation3 + $0xb8] sm:$0xff]
    %v92 = vld [vmem:[#allocation3 + $0xc0] sm:$0xff]
    %v93 = vld [vmem:[#allocation3 + $0xc8] sm:$0xff]
    %v94 = vld [vmem:[#allocation3 + $0xd0] sm:$0xff]
    %v95 = vld [vmem:[#allocation3 + $0xd8] sm:$0xff]
    %v96 = vld [vmem:[#allocation3 + $0xe0] sm:$0xff]
    %v97 = vld [vmem:[#allocation3 + $0xe8] sm:$0xff]
    %v98 = vld [vmem:[#allocation3 + $0xf0] sm:$0xff]
    %v99 = vld [vmem:[#allocation3 + $0xf8] sm:$0xff]
    %v100 = vld [vmem:[#allocation3 + $0x100] sm:$0xff]
    %v101 = vld [vmem:[#allocation3 + $0x108] sm:$0xff]
    %v102 = vld [vmem:[#allocation3 + $0x110] sm:$0xff]
    %v103 = vld [vmem:[#allocation3 + $0x118] sm:$0xff]
    %v104 = vld [vmem:[#allocation3 + $0x120] sm:$0xff]
    %v105 = vld [vmem:[#allocation3 + $0x128] sm:$0xff]
    %v106 = vld [vmem:[#allocation3 + $0x130] sm:$0xff]
    %v107 = vld [vmem:[#allocation3 + $0x138] sm:$0xff]
    %v108 = vld [vmem:[#allocation3 + $0x140] sm:$0xff]
    %v109 = vld [vmem:[#allocation3 + $0x148] sm:$0xff]
    %v110 = vld [vmem:[#allocation3 + $0x150] sm:$0xff]
    %v111 = vld [vmem:[#allocation3 + $0x158] sm:$0xff]
    %v112 = vld [vmem:[#allocation3 + $0x160] sm:$0xff]
    %v113 = vld [vmem:[#allocation3 + $0x168] sm:$0xff]
    %v114 = vld [vmem:[#allocation3 + $0x170] sm:$0xff]
    %v115 = vld [vmem:[#allocation3 + $0x178] sm:$0xff]
    %v116 = vld [vmem:[#allocation3 + $0x180] sm:$0xff]
    %v117 = vld [vmem:[#allocation3 + $0x188] sm:$0xff]
    %v118 = vld [vmem:[#allocation3 + $0x190] sm:$0xff]
    %v119 = vld [vmem:[#allocation3 + $0x198] sm:$0xff]
    %v120 = vld [vmem:[#allocation3 + $0x1a0] sm:$0xff]
    %v121 = vld [vmem:[#allocation3 + $0x1a8] sm:$0xff]
    %v122 = vld [vmem:[#allocation3 + $0x1b0] sm:$0xff]
    %v123 = vld [vmem:[#allocation3 + $0x1b8] sm:$0xff]
    %v124 = vld [vmem:[#allocation3 + $0x1c0] sm:$0xff]
    %v125 = vld [vmem:[#allocation3 + $0x1c8] sm:$0xff]
    %v126 = vld [vmem:[#allocation3 + $0x1d0] sm:$0xff]
    %v127 = vld [vmem:[#allocation3 + $0x1d8] sm:$0xff]
    %v128 = vld [vmem:[#allocation3 + $0x1e0] sm:$0xff]
    %v129 = vld [vmem:[#allocation3 + $0x1e8] sm:$0xff]
    %v130 = vld [vmem:[#allocation3 + $0x1f0] sm:$0xff]
    %v131 = vld [vmem:[#allocation3 + $0x1f8] sm:$0xff]
    %v132 = vld [vmem:[#allocation6] sm:$0xff]
    %v133 = vld [vmem:[#allocation6 + $0x8] sm:$0xff]
    %v134 = vld [vmem:[#allocation6 + $0x10] sm:$0xff]
    %v135 = vld [vmem:[#allocation6 + $0x18] sm:$0xff]
    %v136 = vld [vmem:[#allocation6 + $0x20] sm:$0xff]
    %v137 = vld [vmem:[#allocation6 + $0x28] sm:$0xff]
    %v138 = vld [vmem:[#allocation6 + $0x30] sm:$0xff]
    %v139 = vld [vmem:[#allocation6 + $0x38] sm:$0xff]
    %v140 = vld [vmem:[#allocation6 + $0x40] sm:$0xff]
    %v141 = vld [vmem:[#allocation6 + $0x48] sm:$0xff]
    %v142 = vld [vmem:[#allocation6 + $0x50] sm:$0xff]
    %v143 = vld [vmem:[#allocation6 + $0x58] sm:$0xff]
    %v144 = vld [vmem:[#allocation6 + $0x60] sm:$0xff]
    %v145 = vld [vmem:[#allocation6 + $0x68] sm:$0xff]
    %v146 = vld [vmem:[#allocation6 + $0x70] sm:$0xff]
    %v147 = vld [vmem:[#allocation6 + $0x78] sm:$0xff]
    %v148 = vld [vmem:[#allocation6 + $0x80] sm:$0xff]
    %v149 = vld [vmem:[#allocation6 + $0x88] sm:$0xff]
    %v150 = vld [vmem:[#allocation6 + $0x90] sm:$0xff]
    %v151 = vld [vmem:[#allocation6 + $0x98] sm:$0xff]
    %v152 = vld [vmem:[#allocation6 + $0xa0] sm:$0xff]
    %v153 = vld [vmem:[#allocation6 + $0xa8] sm:$0xff]
    %v154 = vld [vmem:[#allocation6 + $0xb0] sm:$0xff]
    %v155 = vld [vmem:[#allocation6 + $0xb8] sm:$0xff]
    %v156 = vld [vmem:[#allocation6 + $0xc0] sm:$0xff]
    %v157 = vld [vmem:[#allocation6 + $0xc8] sm:$0xff]
    %v158 = vld [vmem:[#allocation6 + $0xd0] sm:$0xff]
    %v159 = vld [vmem:[#allocation6 + $0xd8] sm:$0xff]
    %v160 = vld [vmem:[#allocation6 + $0xe0] sm:$0xff]
    %v161 = vld [vmem:[#allocation6 + $0xe8] sm:$0xff]
    %v162 = vld [vmem:[#allocation6 + $0xf0] sm:$0xff]
    %v163 = vld [vmem:[#allocation6 + $0xf8] sm:$0xff]
    %v164 = vld [vmem:[#allocation6 + $0x100] sm:$0xff]
    %v165 = vld [vmem:[#allocation6 + $0x108] sm:$0xff]
    %v166 = vld [vmem:[#allocation6 + $0x110] sm:$0xff]
    %v167 = vld [vmem:[#allocation6 + $0x118] sm:$0xff]
    %v168 = vld [vmem:[#allocation6 + $0x120] sm:$0xff]
    %v169 = vld [vmem:[#allocation6 + $0x128] sm:$0xff]
    %v170 = vld [vmem:[#allocation6 + $0x130] sm:$0xff]
    %v171 = vld [vmem:[#allocation6 + $0x138] sm:$0xff]
    %v172 = vld [vmem:[#allocation6 + $0x140] sm:$0xff]
    %v173 = vld [vmem:[#allocation6 + $0x148] sm:$0xff]
    %v174 = vld [vmem:[#allocation6 + $0x150] sm:$0xff]
    %v175 = vld [vmem:[#allocation6 + $0x158] sm:$0xff]
    %v176 = vld [vmem:[#allocation6 + $0x160] sm:$0xff]
    %v177 = vld [vmem:[#allocation6 + $0x168] sm:$0xff]
    %v178 = vld [vmem:[#allocation6 + $0x170] sm:$0xff]
    %v179 = vld [vmem:[#allocation6 + $0x178] sm:$0xff]
    %v180 = vld [vmem:[#allocation6 + $0x180] sm:$0xff]
    %v181 = vld [vmem:[#allocation6 + $0x188] sm:$0xff]
    %v182 = vld [vmem:[#allocation6 + $0x190] sm:$0xff]
    %v183 = vld [vmem:[#allocation6 + $0x198] sm:$0xff]
    %v184 = vld [vmem:[#allocation6 + $0x1a0] sm:$0xff]
    %v185 = vld [vmem:[#allocation6 + $0x1a8] sm:$0xff]
    %v186 = vld [vmem:[#allocation6 + $0x1b0] sm:$0xff]
    %v187 = vld [vmem:[#allocation6 + $0x1b8] sm:$0xff]
    %v188 = vld [vmem:[#allocation6 + $0x1c0] sm:$0xff]
    %v189 = vld [vmem:[#allocation6 + $0x1c8] sm:$0xff]
    %v190 = vld [vmem:[#allocation6 + $0x1d0] sm:$0xff]
    %v191 = vld [vmem:[#allocation6 + $0x1d8] sm:$0xff]
    %v192 = vld [vmem:[#allocation6 + $0x1e0] sm:$0xff]
    %v193 = vld [vmem:[#allocation6 + $0x1e8] sm:$0xff]
    %v194 = vld [vmem:[#allocation6 + $0x1f0] sm:$0xff]
    %v195 = vld [vmem:[#allocation6 + $0x1f8] sm:$0xff]
    %v196 = vld [vmem:[#allocation6 + $0x200] sm:$0xff]
    %v197 = vld [vmem:[#allocation6 + $0x208] sm:$0xff]
    %v198 = vld [vmem:[#allocation6 + $0x210] sm:$0xff]
    %v199 = vld [vmem:[#allocation6 + $0x218] sm:$0xff]
    %v200 = vld [vmem:[#allocation6 + $0x220] sm:$0xff]
    %v201 = vld [vmem:[#allocation6 + $0x228] sm:$0xff]
    %v202 = vld [vmem:[#allocation6 + $0x230] sm:$0xff]
    %v203 = vld [vmem:[#allocation6 + $0x238] sm:$0xff]
    %v204 = vld [vmem:[#allocation6 + $0x240] sm:$0xff]
    %v205 = vld [vmem:[#allocation6 + $0x248] sm:$0xff]
    %v206 = vld [vmem:[#allocation6 + $0x250] sm:$0xff]
    %v207 = vld [vmem:[#allocation6 + $0x258] sm:$0xff]
    %v208 = vld [vmem:[#allocation6 + $0x260] sm:$0xff]
    %v209 = vld [vmem:[#allocation6 + $0x268] sm:$0xff]
    %v210 = vld [vmem:[#allocation6 + $0x270] sm:$0xff]
    %v211 = vld [vmem:[#allocation6 + $0x278] sm:$0xff]
    %v212 = vld [vmem:[#allocation6 + $0x280] sm:$0xff]
    %v213 = vld [vmem:[#allocation6 + $0x288] sm:$0xff]
    %v214 = vld [vmem:[#allocation6 + $0x290] sm:$0xff]
    %v215 = vld [vmem:[#allocation6 + $0x298] sm:$0xff]
    %v216 = vld [vmem:[#allocation6 + $0x2a0] sm:$0xff]
    %v217 = vld [vmem:[#allocation6 + $0x2a8] sm:$0xff]
    %v218 = vld [vmem:[#allocation6 + $0x2b0] sm:$0xff]
    %v219 = vld [vmem:[#allocation6 + $0x2b8] sm:$0xff]
    %v220 = vld [vmem:[#allocation6 + $0x2c0] sm:$0xff]
    %v221 = vld [vmem:[#allocation6 + $0x2c8] sm:$0xff]
    %v222 = vld [vmem:[#allocation6 + $0x2d0] sm:$0xff]
    %v223 = vld [vmem:[#allocation6 + $0x2d8] sm:$0xff]
    %v224 = vld [vmem:[#allocation6 + $0x2e0] sm:$0xff]
    %v225 = vld [vmem:[#allocation6 + $0x2e8] sm:$0xff]
    %v226 = vld [vmem:[#allocation6 + $0x2f0] sm:$0xff]
    %v227 = vld [vmem:[#allocation6 + $0x2f8] sm:$0xff]
    %v228 = vld [vmem:[#allocation6 + $0x300] sm:$0xff]
    %v229 = vld [vmem:[#allocation6 + $0x308] sm:$0xff]
    %v230 = vld [vmem:[#allocation6 + $0x310] sm:$0xff]
    %v231 = vld [vmem:[#allocation6 + $0x318] sm:$0xff]
    %v232 = vld [vmem:[#allocation6 + $0x320] sm:$0xff]
    %v233 = vld [vmem:[#allocation6 + $0x328] sm:$0xff]
    %v234 = vld [vmem:[#allocation6 + $0x330] sm:$0xff]
    %v235 = vld [vmem:[#allocation6 + $0x338] sm:$0xff]
    %v236 = vld [vmem:[#allocation6 + $0x340] sm:$0xff]
    %v237 = vld [vmem:[#allocation6 + $0x348] sm:$0xff]
    %v238 = vld [vmem:[#allocation6 + $0x350] sm:$0xff]
    %v239 = vld [vmem:[#allocation6 + $0x358] sm:$0xff]
    %v240 = vld [vmem:[#allocation6 + $0x360] sm:$0xff]
    %v241 = vld [vmem:[#allocation6 + $0x368] sm:$0xff]
    %v242 = vld [vmem:[#allocation6 + $0x370] sm:$0xff]
    %v243 = vld [vmem:[#allocation6 + $0x378] sm:$0xff]
    %v244 = vld [vmem:[#allocation6 + $0x380] sm:$0xff]
    %v245 = vld [vmem:[#allocation6 + $0x388] sm:$0xff]
    %v246 = vld [vmem:[#allocation6 + $0x390] sm:$0xff]
    %v247 = vld [vmem:[#allocation6 + $0x398] sm:$0xff]
    %v248 = vld [vmem:[#allocation6 + $0x3a0] sm:$0xff]
    %v249 = vld [vmem:[#allocation6 + $0x3a8] sm:$0xff]
    %v250 = vld [vmem:[#allocation6 + $0x3b0] sm:$0xff]
    %v251 = vld [vmem:[#allocation6 + $0x3b8] sm:$0xff]
    %v252 = vld [vmem:[#allocation6 + $0x3c0] sm:$0xff]
    %v253 = vld [vmem:[#allocation6 + $0x3c8] sm:$0xff]
    %v254 = vld [vmem:[#allocation6 + $0x3d0] sm:$0xff]
    %v255 = vld [vmem:[#allocation6 + $0x3d8] sm:$0xff]
    %v256 = vld [vmem:[#allocation6 + $0x3e0] sm:$0xff]
    %v257 = vld [vmem:[#allocation6 + $0x3e8] sm:$0xff]
    %v258 = vld [vmem:[#allocation6 + $0x3f0] sm:$0xff]
    %v259 = vld [vmem:[#allocation6 + $0x3f8] sm:$0xff]
    %v260 = vld [vmem:[#allocation6 + $0x400] sm:$0xff]
    %v261 = vld [vmem:[#allocation6 + $0x408] sm:$0xff]
    %v262 = vld [vmem:[#allocation6 + $0x410] sm:$0xff]
    %v263 = vld [vmem:[#allocation6 + $0x418] sm:$0xff]
    %v264 = vld [vmem:[#allocation6 + $0x420] sm:$0xff]
    %v265 = vld [vmem:[#allocation6 + $0x428] sm:$0xff]
    %v266 = vld [vmem:[#allocation6 + $0x430] sm:$0xff]
    %v267 = vld [vmem:[#allocation6 + $0x438] sm:$0xff]
    %v268 = vld [vmem:[#allocation6 + $0x440] sm:$0xff]
    %v269 = vld [vmem:[#allocation6 + $0x448] sm:$0xff]
    %v270 = vld [vmem:[#allocation6 + $0x450] sm:$0xff]
    %v271 = vld [vmem:[#allocation6 + $0x458] sm:$0xff]
    %v272 = vld [vmem:[#allocation6 + $0x460] sm:$0xff]
    %v273 = vld [vmem:[#allocation6 + $0x468] sm:$0xff]
    %v274 = vld [vmem:[#allocation6 + $0x470] sm:$0xff]
    %v275 = vld [vmem:[#allocation6 + $0x478] sm:$0xff]
    %v276 = vld [vmem:[#allocation6 + $0x480] sm:$0xff]
    %v277 = vld [vmem:[#allocation6 + $0x488] sm:$0xff]
    %v278 = vld [vmem:[#allocation6 + $0x490] sm:$0xff]
    %v279 = vld [vmem:[#allocation6 + $0x498] sm:$0xff]
    %v280 = vld [vmem:[#allocation6 + $0x4a0] sm:$0xff]
    %v281 = vld [vmem:[#allocation6 + $0x4a8] sm:$0xff]
    %v282 = vld [vmem:[#allocation6 + $0x4b0] sm:$0xff]
    %v283 = vld [vmem:[#allocation6 + $0x4b8] sm:$0xff]
    %v284 = vld [vmem:[#allocation6 + $0x4c0] sm:$0xff]
    %v285 = vld [vmem:[#allocation6 + $0x4c8] sm:$0xff]
    %v286 = vld [vmem:[#allocation6 + $0x4d0] sm:$0xff]
    %v287 = vld [vmem:[#allocation6 + $0x4d8] sm:$0xff]
    %v288 = vld [vmem:[#allocation6 + $0x4e0] sm:$0xff]
    %v289 = vld [vmem:[#allocation6 + $0x4e8] sm:$0xff]
    %v290 = vld [vmem:[#allocation6 + $0x4f0] sm:$0xff]
    %v291 = vld [vmem:[#allocation6 + $0x4f8] sm:$0xff]
    %v292 = vld [vmem:[#allocation6 + $0x500] sm:$0xff]
    %v293 = vld [vmem:[#allocation6 + $0x508] sm:$0xff]
    %v294 = vld [vmem:[#allocation6 + $0x510] sm:$0xff]
    %v295 = vld [vmem:[#allocation6 + $0x518] sm:$0xff]
    %v296 = vld [vmem:[#allocation6 + $0x520] sm:$0xff]
    %v297 = vld [vmem:[#allocation6 + $0x528] sm:$0xff]
    %v298 = vld [vmem:[#allocation6 + $0x530] sm:$0xff]
    %v299 = vld [vmem:[#allocation6 + $0x538] sm:$0xff]
    %v300 = vld [vmem:[#allocation6 + $0x540] sm:$0xff]
    %v301 = vld [vmem:[#allocation6 + $0x548] sm:$0xff]
    %v302 = vld [vmem:[#allocation6 + $0x550] sm:$0xff]
    %v303 = vld [vmem:[#allocation6 + $0x558] sm:$0xff]
    %v304 = vld [vmem:[#allocation6 + $0x560] sm:$0xff]
    %v305 = vld [vmem:[#allocation6 + $0x568] sm:$0xff]
    %v306 = vld [vmem:[#allocation6 + $0x570] sm:$0xff]
    %v307 = vld [vmem:[#allocation6 + $0x578] sm:$0xff]
    %v308 = vld [vmem:[#allocation6 + $0x580] sm:$0xff]
    %v309 = vld [vmem:[#allocation6 + $0x588] sm:$0xff]
    %v310 = vld [vmem:[#allocation6 + $0x590] sm:$0xff]
    %v311 = vld [vmem:[#allocation6 + $0x598] sm:$0xff]
    %v312 = vld [vmem:[#allocation6 + $0x5a0] sm:$0xff]
    %v313 = vld [vmem:[#allocation6 + $0x5a8] sm:$0xff]
    %v314 = vld [vmem:[#allocation6 + $0x5b0] sm:$0xff]
    %v315 = vld [vmem:[#allocation6 + $0x5b8] sm:$0xff]
    %v316 = vld [vmem:[#allocation6 + $0x5c0] sm:$0xff]
    %v317 = vld [vmem:[#allocation6 + $0x5c8] sm:$0xff]
    %v318 = vld [vmem:[#allocation6 + $0x5d0] sm:$0xff]
    %v319 = vld [vmem:[#allocation6 + $0x5d8] sm:$0xff]
    %v320 = vld [vmem:[#allocation6 + $0x5e0] sm:$0xff]
    %v321 = vld [vmem:[#allocation6 + $0x5e8] sm:$0xff]
    %v322 = vld [vmem:[#allocation6 + $0x5f0] sm:$0xff]
    %v323 = vld [vmem:[#allocation6 + $0x5f8] sm:$0xff]
    %v324 = vld [vmem:[#allocation6 + $0x600] sm:$0xff]
    %v325 = vld [vmem:[#allocation6 + $0x608] sm:$0xff]
    %v326 = vld [vmem:[#allocation6 + $0x610] sm:$0xff]
    %v327 = vld [vmem:[#allocation6 + $0x618] sm:$0xff]
    %v328 = vld [vmem:[#allocation6 + $0x620] sm:$0xff]
    %v329 = vld [vmem:[#allocation6 + $0x628] sm:$0xff]
    %v330 = vld [vmem:[#allocation6 + $0x630] sm:$0xff]
    %v331 = vld [vmem:[#allocation6 + $0x638] sm:$0xff]
    %v332 = vld [vmem:[#allocation6 + $0x640] sm:$0xff]
    %v333 = vld [vmem:[#allocation6 + $0x648] sm:$0xff]
    %v334 = vld [vmem:[#allocation6 + $0x650] sm:$0xff]
    %v335 = vld [vmem:[#allocation6 + $0x658] sm:$0xff]
    %v336 = vld [vmem:[#allocation6 + $0x660] sm:$0xff]
    %v337 = vld [vmem:[#allocation6 + $0x668] sm:$0xff]
    %v338 = vld [vmem:[#allocation6 + $0x670] sm:$0xff]
    %v339 = vld [vmem:[#allocation6 + $0x678] sm:$0xff]
    %v340 = vld [vmem:[#allocation6 + $0x680] sm:$0xff]
    %v341 = vld [vmem:[#allocation6 + $0x688] sm:$0xff]
    %v342 = vld [vmem:[#allocation6 + $0x690] sm:$0xff]
    %v343 = vld [vmem:[#allocation6 + $0x698] sm:$0xff]
    %v344 = vld [vmem:[#allocation6 + $0x6a0] sm:$0xff]
    %v345 = vld [vmem:[#allocation6 + $0x6a8] sm:$0xff]
    %v346 = vld [vmem:[#allocation6 + $0x6b0] sm:$0xff]
    %v347 = vld [vmem:[#allocation6 + $0x6b8] sm:$0xff]
    %v348 = vld [vmem:[#allocation6 + $0x6c0] sm:$0xff]
    %v349 = vld [vmem:[#allocation6 + $0x6c8] sm:$0xff]
    %v350 = vld [vmem:[#allocation6 + $0x6d0] sm:$0xff]
    %v351 = vld [vmem:[#allocation6 + $0x6d8] sm:$0xff]
    %v352 = vld [vmem:[#allocation6 + $0x6e0] sm:$0xff]
    %v353 = vld [vmem:[#allocation6 + $0x6e8] sm:$0xff]
    %v354 = vld [vmem:[#allocation6 + $0x6f0] sm:$0xff]
    %v355 = vld [vmem:[#allocation6 + $0x6f8] sm:$0xff]
    %v356 = vld [vmem:[#allocation6 + $0x700] sm:$0xff]
    %v357 = vld [vmem:[#allocation6 + $0x708] sm:$0xff]
    %v358 = vld [vmem:[#allocation6 + $0x710] sm:$0xff]
    %v359 = vld [vmem:[#allocation6 + $0x718] sm:$0xff]
    %v360 = vld [vmem:[#allocation6 + $0x720] sm:$0xff]
    %v361 = vld [vmem:[#allocation6 + $0x728] sm:$0xff]
    %v362 = vld [vmem:[#allocation6 + $0x730] sm:$0xff]
    %v363 = vld [vmem:[#allocation6 + $0x738] sm:$0xff]
    %v364 = vld [vmem:[#allocation6 + $0x740] sm:$0xff]
    %v365 = vld [vmem:[#allocation6 + $0x748] sm:$0xff]
    %v366 = vld [vmem:[#allocation6 + $0x750] sm:$0xff]
    %v367 = vld [vmem:[#allocation6 + $0x758] sm:$0xff]
    %v368 = vld [vmem:[#allocation6 + $0x760] sm:$0xff]
    %v369 = vld [vmem:[#allocation6 + $0x768] sm:$0xff]
    %v370 = vld [vmem:[#allocation6 + $0x770] sm:$0xff]
    %v371 = vld [vmem:[#allocation6 + $0x778] sm:$0xff]
    %v372 = vld [vmem:[#allocation6 + $0x780] sm:$0xff]
    %v373 = vld [vmem:[#allocation6 + $0x788] sm:$0xff]
    %v374 = vld [vmem:[#allocation6 + $0x790] sm:$0xff]
    %v375 = vld [vmem:[#allocation6 + $0x798] sm:$0xff]
    %v376 = vld [vmem:[#allocation6 + $0x7a0] sm:$0xff]
    %v377 = vld [vmem:[#allocation6 + $0x7a8] sm:$0xff]
    %v378 = vld [vmem:[#allocation6 + $0x7b0] sm:$0xff]
    %v379 = vld [vmem:[#allocation6 + $0x7b8] sm:$0xff]
    %v380 = vld [vmem:[#allocation6 + $0x7c0] sm:$0xff]
    %v381 = vld [vmem:[#allocation6 + $0x7c8] sm:$0xff]
    %v382 = vld [vmem:[#allocation6 + $0x7d0] sm:$0xff]
    %v383 = vld [vmem:[#allocation6 + $0x7d8] sm:$0xff]
    %v384 = vld [vmem:[#allocation6 + $0x7e0] sm:$0xff]
    %v385 = vld [vmem:[#allocation6 + $0x7e8] sm:$0xff]
    %v386 = vld [vmem:[#allocation6 + $0x7f0] sm:$0xff]
    %v387 = vld [vmem:[#allocation6 + $0x7f8] sm:$0xff]
    %388 = vmatprep.subr.mxu0 0.0
    %389 = vmatpush1.msra.mxu0 %v132
    %390 = vmatprep.subr.mxu0 0.0
    %391 = vmatpush1.msra.mxu0 %v133
    %392 = vmatprep.subr.mxu0 0.0
    %393 = vmatpush1.msra.mxu0 %v134
    %394 = vmatprep.subr.mxu0 0.0
    %395 = vmatpush1.msra.mxu0 %v135
    %396 = vmatprep.subr.mxu0 0.0
    %397 = vmatpush1.msra.mxu0 %v136
    %398 = vmatprep.subr.mxu0 0.0
    %399 = vmatpush1.msra.mxu0 %v137
    %400 = vmatprep.subr.mxu0 0.0
    %401 = vmatpush1.msra.mxu0 %v138
    %402 = vmatprep.subr.mxu0 0.0
    %403 = vmatpush1.msra.mxu0 %v139
    %404 = vmatprep.subr.mxu0 0.0
    %405 = vmatpush1.msra.mxu0 %v140
    %406 = vmatprep.subr.mxu0 0.0
    %407 = vmatpush1.msra.mxu0 %v141
    %408 = vmatprep.subr.mxu0 0.0
    %409 = vmatpush1.msra.mxu0 %v142
    %410 = vmatprep.subr.mxu0 0.0
    %411 = vmatpush1.msra.mxu0 %v143
    %412 = vmatprep.subr.mxu0 0.0
    %413 = vmatpush1.msra.mxu0 %v144
    %414 = vmatprep.subr.mxu0 0.0
    %415 = vmatpush1.msra.mxu0 %v145
    %416 = vmatprep.subr.mxu0 0.0
    %417 = vmatpush1.msra.mxu0 %v146
    %418 = vmatprep.subr.mxu0 0.0
    %419 = vmatpush1.msra.mxu0 %v147
    %420 = vmatprep.subr.mxu0 0.0
    %421 = vmatpush1.msra.mxu0 %v148
    %422 = vmatprep.subr.mxu0 0.0
    %423 = vmatpush1.msra.mxu0 %v149
    %424 = vmatprep.subr.mxu0 0.0
    %425 = vmatpush1.msra.mxu0 %v150
    %426 = vmatprep.subr.mxu0 0.0
    %427 = vmatpush1.msra.mxu0 %v151
    %428 = vmatprep.subr.mxu0 0.0
    %429 = vmatpush1.msra.mxu0 %v152
    %430 = vmatprep.subr.mxu0 0.0
    %431 = vmatpush1.msra.mxu0 %v153
    %432 = vmatprep.subr.mxu0 0.0
    %433 = vmatpush1.msra.mxu0 %v154
    %434 = vmatprep.subr.mxu0 0.0
    %435 = vmatpush1.msra.mxu0 %v155
    %436 = vmatprep.subr.mxu0 0.0
    %437 = vmatpush1.msra.mxu0 %v156
    %438 = vmatprep.subr.mxu0 0.0
    %439 = vmatpush1.msra.mxu0 %v157
    %440 = vmatprep.subr.mxu0 0.0
    %441 = vmatpush1.msra.mxu0 %v158
    %442 = vmatprep.subr.mxu0 0.0
    %443 = vmatpush1.msra.mxu0 %v159
    %444 = vmatprep.subr.mxu0 0.0
    %445 = vmatpush1.msra.mxu0 %v160
    %446 = vmatprep.subr.mxu0 0.0
    %447 = vmatpush1.msra.mxu0 %v161
    %448 = vmatprep.subr.mxu0 0.0
    %449 = vmatpush1.msra.mxu0 %v162
    %450 = vmatprep.subr.mxu0 0.0
    %451 = vmatpush1.msra.mxu0 %v163
    %452 = vmatprep.mubr.f32.mxu0 %v69
    %453 = vmatmul.mubr.f32.gmra.mrb[0].mxu0 %v68
    %v454 = vpop.f32.mrb[0].mxu0
    %v455 = vadd.f32 0.0, %v454
    %v456 = vpop.f32.mrb[0].mxu0
    %457 = vmatprep.mubr.f32.mxu0 %v85
    %458 = vmatmul.mubr.f32.gmra.mrb[0].mxu0 %v84
    %v459 = vpop.f32.mrb[0].mxu0
    %v460 = vadd.f32 0.0, %v459
    %v461 = vpop.f32.mrb[0].mxu0
    %462 = vmatprep.mubr.f32.mxu0 %v101
    %463 = vmatmul.mubr.f32.gmra.mrb[0].mxu0 %v100
    %v464 = vpop.f32.mrb[0].mxu0
    %v465 = vadd.f32 0.0, %v464
    %v466 = vpop.f32.mrb[0].mxu0
    %467 = vmatprep.mubr.f32.mxu0 %v117
    %468 = vmatmul.mubr.f32.gmra.mrb[0].mxu0 %v116
    %v469 = vpop.f32.mrb[0].mxu0
    %v470 = vadd.f32 0.0, %v469
    %v471 = vpop.f32.mrb[0].mxu0
    %472 = vdwg.mxu0
    %473 = vmatprep.subr.mxu0 0.0
    %474 = vmatpush1.msra.mxu0 %v164
    %475 = vmatprep.subr.mxu0 0.0
    %476 = vmatpush1.msra.mxu0 %v165
    %477 = vmatprep.subr.mxu0 0.0
    %478 = vmatpush1.msra.mxu0 %v166
    %479 = vmatprep.subr.mxu0 0.0
    %480 = vmatpush1.msra.mxu0 %v167
    %481 = vmatprep.subr.mxu0 0.0
    %482 = vmatpush1.msra.mxu0 %v168
    %483 = vmatprep.subr.mxu0 0.0
    %484 = vmatpush1.msra.mxu0 %v169
    %485 = vmatprep.subr.mxu0 0.0
    %486 = vmatpush1.msra.mxu0 %v170
    %487 = vmatprep.subr.mxu0 0.0
    %488 = vmatpush1.msra.mxu0 %v171
    %489 = vmatprep.subr.mxu0 0.0
    %490 = vmatpush1.msra.mxu0 %v172
    %491 = vmatprep.subr.mxu0 0.0
    %492 = vmatpush1.msra.mxu0 %v173
    %493 = vmatprep.subr.mxu0 0.0
    %494 = vmatpush1.msra.mxu0 %v174
    %495 = vmatprep.subr.mxu0 0.0
    %496 = vmatpush1.msra.mxu0 %v175
    %497 = vmatprep.subr.mxu0 0.0
    %498 = vmatpush1.msra.mxu0 %v176
    %499 = vmatprep.subr.mxu0 0.0
    %500 = vmatpush1.msra.mxu0 %v177
    %501 = vmatprep.subr.mxu0 0.0
    %502 = vmatpush1.msra.mxu0 %v178
    %503 = vmatprep.subr.mxu0 0.0
    %504 = vmatpush1.msra.mxu0 %v179
    %505 = vmatprep.subr.mxu0 0.0
    %506 = vmatpush1.msra.mxu0 %v180
    %507 = vmatprep.subr.mxu0 0.0
    %508 = vmatpush1.msra.mxu0 %v181
    %509 = vmatprep.subr.mxu0 0.0
    %510 = vmatpush1.msra.mxu0 %v182
    %511 = vmatprep.subr.mxu0 0.0
    %512 = vmatpush1.msra.mxu0 %v183
    %513 = vmatprep.subr.mxu0 0.0
    %514 = vmatpush1.msra.mxu0 %v184
    %515 = vmatprep.subr.mxu0 0.0
    %516 = vmatpush1.msra.mxu0 %v185
    %517 = vmatprep.subr.mxu0 0.0
    %518 = vmatpush1.msra.mxu0 %v186
    %519 = vmatprep.subr.mxu0 0.0
    %520 = vmatpush1.msra.mxu0 %v187
    %521 = vmatprep.subr.mxu0 0.0
    %522 = vmatpush1.msra.mxu0 %v188
    %523 = vmatprep.subr.mxu0 0.0
    %524 = vmatpush1.msra.mxu0 %v189
    %525 = vmatprep.subr.mxu0 0.0
    %526 = vmatpush1.msra.mxu0 %v190
    %527 = vmatprep.subr.mxu0 0.0
    %528 = vmatpush1.msra.mxu0 %v191
    %529 = vmatprep.subr.mxu0 0.0
    %530 = vmatpush1.msra.mxu0 %v192
    %531 = vmatprep.subr.mxu0 0.0
    %532 = vmatpush1.msra.mxu0 %v193
    %533 = vmatprep.subr.mxu0 0.0
    %534 = vmatpush1.msra.mxu0 %v194
    %535 = vmatprep.subr.mxu0 0.0
    %536 = vmatpush1.msra.mxu0 %v195
    %537 = vmatprep.mubr.f32.mxu0 %v71
    %538 = vmatmul.mubr.f32.gmra.mrb[0].mxu0 %v70
    %v539 = vpop.f32.mrb[0].mxu0
    %v540 = vadd.f32 %v455, %v539
    %v541 = vpop.f32.mrb[0].mxu0
    %542 = vmatprep.mubr.f32.mxu0 %v87
    %543 = vmatmul.mubr.f32.gmra.mrb[0].mxu0 %v86
    %v544 = vpop.f32.mrb[0].mxu0
    %v545 = vadd.f32 %v460, %v544
    %v546 = vpop.f32.mrb[0].mxu0
    %547 = vmatprep.mubr.f32.mxu0 %v103
    %548 = vmatmul.mubr.f32.gmra.mrb[0].mxu0 %v102
    %v549 = vpop.f32.mrb[0].mxu0
    %v550 = vadd.f32 %v465, %v549
    %v551 = vpop.f32.mrb[0].mxu0
    %552 = vmatprep.mubr.f32.mxu0 %v119
    %553 = vmatmul.mubr.f32.gmra.mrb[0].mxu0 %v118
    %v554 = vpop.f32.mrb[0].mxu0
    %v555 = vadd.f32 %v470, %v554
    %v556 = vpop.f32.mrb[0].mxu0
    %557 = vdwg.mxu0
    %558 = vmatprep.subr.mxu0 0.0
    %559 = vmatpush1.msra.mxu0 %v196
    %560 = vmatprep.subr.mxu0 0.0
    %561 = vmatpush1.msra.mxu0 %v197
    %562 = vmatprep.subr.mxu0 0.0
    %563 = vmatpush1.msra.mxu0 %v198
    %564 = vmatprep.subr.mxu0 0.0
    %565 = vmatpush1.msra.mxu0 %v199
    %566 = vmatprep.subr.mxu0 0.0
    %567 = vmatpush1.msra.mxu0 %v200
    %568 = vmatprep.subr.mxu0 0.0
    %569 = vmatpush1.msra.mxu0 %v201
    %570 = vmatprep.subr.mxu0 0.0
    %571 = vmatpush1.msra.mxu0 %v202
    %572 = vmatprep.subr.mxu0 0.0
    %573 = vmatpush1.msra.mxu0 %v203
    %574 = vmatprep.subr.mxu0 0.0
    %575 = vmatpush1.msra.mxu0 %v204
    %576 = vmatprep.subr.mxu0 0.0
    %577 = vmatpush1.msra.mxu0 %v205
    %578 = vmatprep.subr.mxu0 0.0
    %579 = vmatpush1.msra.mxu0 %v206
    %580 = vmatprep.subr.mxu0 0.0
    %581 = vmatpush1.msra.mxu0 %v207
    %582 = vmatprep.subr.mxu0 0.0
    %583 = vmatpush1.msra.mxu0 %v208
    %584 = vmatprep.subr.mxu0 0.0
    %585 = vmatpush1.msra.mxu0 %v209
    %586 = vmatprep.subr.mxu0 0.0
    %587 = vmatpush1.msra.mxu0 %v210
    %588 = vmatprep.subr.mxu0 0.0
    %589 = vmatpush1.msra.mxu0 %v211
    %590 = vmatprep.subr.mxu0 0.0
    %591 = vmatpush1.msra.mxu0 %v212
    %592 = vmatprep.subr.mxu0 0.0
    %593 = vmatpush1.msra.mxu0 %v213
    %594 = vmatprep.subr.mxu0 0.0
    %595 = vmatpush1.msra.mxu0 %v214
    %596 = vmatprep.subr.mxu0 0.0
    %597 = vmatpush1.msra.mxu0 %v215
    %598 = vmatprep.subr.mxu0 0.0
    %599 = vmatpush1.msra.mxu0 %v216
    %600 = vmatprep.subr.mxu0 0.0
    %601 = vmatpush1.msra.mxu0 %v217
    %602 = vmatprep.subr.mxu0 0.0
    %603 = vmatpush1.msra.mxu0 %v218
    %604 = vmatprep.subr.mxu0 0.0
    %605 = vmatpush1.msra.mxu0 %v219
    %606 = vmatprep.subr.mxu0 0.0
    %607 = vmatpush1.msra.mxu0 %v220
    %608 = vmatprep.subr.mxu0 0.0
    %609 = vmatpush1.msra.mxu0 %v221
    %610 = vmatprep.subr.mxu0 0.0
    %611 = vmatpush1.msra.mxu0 %v222
    %612 = vmatprep.subr.mxu0 0.0
    %613 = vmatpush1.msra.mxu0 %v223
    %614 = vmatprep.subr.mxu0 0.0
    %615 = vmatpush1.msra.mxu0 %v224
    %616 = vmatprep.subr.mxu0 0.0
    %617 = vmatpush1.msra.mxu0 %v225
    %618 = vmatprep.subr.mxu0 0.0
    %619 = vmatpush1.msra.mxu0 %v226
    %620 = vmatprep.subr.mxu0 0.0
    %621 = vmatpush1.msra.mxu0 %v227
    %622 = vmatprep.mubr.f32.mxu0 %v73
    %623 = vmatmul.mubr.f32.gmra.mrb[0].mxu0 %v72
    %v624 = vpop.f32.mrb[0].mxu0
    %v625 = vadd.f32 %v540, %v624
    %v626 = vpop.f32.mrb[0].mxu0
    %627 = vmatprep.mubr.f32.mxu0 %v89
    %628 = vmatmul.mubr.f32.gmra.mrb[0].mxu0 %v88
    %v629 = vpop.f32.mrb[0].mxu0
    %v630 = vadd.f32 %v545, %v629
    %v631 = vpop.f32.mrb[0].mxu0
    %632 = vmatprep.mubr.f32.mxu0 %v105
    %633 = vmatmul.mubr.f32.gmra.mrb[0].mxu0 %v104
    %v634 = vpop.f32.mrb[0].mxu0
    %v635 = vadd.f32 %v550, %v634
    %v636 = vpop.f32.mrb[0].mxu0
    %637 = vmatprep.mubr.f32.mxu0 %v121
    %638 = vmatmul.mubr.f32.gmra.mrb[0].mxu0 %v120
    %v639 = vpop.f32.mrb[0].mxu0
    %v640 = vadd.f32 %v555, %v639
    %v641 = vpop.f32.mrb[0].mxu0
    %642 = vdwg.mxu0
    %643 = vmatprep.subr.mxu0 0.0
    %644 = vmatpush1.msra.mxu0 %v228
    %645 = vmatprep.subr.mxu0 0.0
    %646 = vmatpush1.msra.mxu0 %v229
    %647 = vmatprep.subr.mxu0 0.0
    %648 = vmatpush1.msra.mxu0 %v230
    %649 = vmatprep.subr.mxu0 0.0
    %650 = vmatpush1.msra.mxu0 %v231
    %651 = vmatprep.subr.mxu0 0.0
    %652 = vmatpush1.msra.mxu0 %v232
    %653 = vmatprep.subr.mxu0 0.0
    %654 = vmatpush1.msra.mxu0 %v233
    %655 = vmatprep.subr.mxu0 0.0
    %656 = vmatpush1.msra.mxu0 %v234
    %657 = vmatprep.subr.mxu0 0.0
    %658 = vmatpush1.msra.mxu0 %v235
    %659 = vmatprep.subr.mxu0 0.0
    %660 = vmatpush1.msra.mxu0 %v236
    %661 = vmatprep.subr.mxu0 0.0
    %662 = vmatpush1.msra.mxu0 %v237
    %663 = vmatprep.subr.mxu0 0.0
    %664 = vmatpush1.msra.mxu0 %v238
    %665 = vmatprep.subr.mxu0 0.0
    %666 = vmatpush1.msra.mxu0 %v239
    %667 = vmatprep.subr.mxu0 0.0
    %668 = vmatpush1.msra.mxu0 %v240
    %669 = vmatprep.subr.mxu0 0.0
    %670 = vmatpush1.msra.mxu0 %v241
    %671 = vmatprep.subr.mxu0 0.0
    %672 = vmatpush1.msra.mxu0 %v242
    %673 = vmatprep.subr.mxu0 0.0
    %674 = vmatpush1.msra.mxu0 %v243
    %675 = vmatprep.subr.mxu0 0.0
    %676 = vmatpush1.msra.mxu0 %v244
    %677 = vmatprep.subr.mxu0 0.0
    %678 = vmatpush1.msra.mxu0 %v245
    %679 = vmatprep.subr.mxu0 0.0
    %680 = vmatpush1.msra.mxu0 %v246
    %681 = vmatprep.subr.mxu0 0.0
    %682 = vmatpush1.msra.mxu0 %v247
    %683 = vmatprep.subr.mxu0 0.0
    %684 = vmatpush1.msra.mxu0 %v248
    %685 = vmatprep.subr.mxu0 0.0
    %686 = vmatpush1.msra.mxu0 %v249
    %687 = vmatprep.subr.mxu0 0.0
    %688 = vmatpush1.msra.mxu0 %v250
    %689 = vmatprep.subr.mxu0 0.0
    %690 = vmatpush1.msra.mxu0 %v251
    %691 = vmatprep.subr.mxu0 0.0
    %692 = vmatpush1.msra.mxu0 %v252
    %693 = vmatprep.subr.mxu0 0.0
    %694 = vmatpush1.msra.mxu0 %v253
    %695 = vmatprep.subr.mxu0 0.0
    %696 = vmatpush1.msra.mxu0 %v254
    %697 = vmatprep.subr.mxu0 0.0
    %698 = vmatpush1.msra.mxu0 %v255
    %699 = vmatprep.subr.mxu0 0.0
    %700 = vmatpush1.msra.mxu0 %v256
    %701 = vmatprep.subr.mxu0 0.0
    %702 = vmatpush1.msra.mxu0 %v257
    %703 = vmatprep.subr.mxu0 0.0
    %704 = vmatpush1.msra.mxu0 %v258
    %705 = vmatprep.subr.mxu0 0.0
    %706 = vmatpush1.msra.mxu0 %v259
    %707 = vmatprep.mubr.f32.mxu0 %v75
    %708 = vmatmul.mubr.f32.gmra.mrb[0].mxu0 %v74
    %v709 = vpop.f32.mrb[0].mxu0
    %v710 = vadd.f32 %v625, %v709
    %v711 = vpop.f32.mrb[0].mxu0
    %712 = vmatprep.mubr.f32.mxu0 %v91
    %713 = vmatmul.mubr.f32.gmra.mrb[0].mxu0 %v90
    %v714 = vpop.f32.mrb[0].mxu0
    %v715 = vadd.f32 %v630, %v714
    %v716 = vpop.f32.mrb[0].mxu0
    %717 = vmatprep.mubr.f32.mxu0 %v107
    %718 = vmatmul.mubr.f32.gmra.mrb[0].mxu0 %v106
    %v719 = vpop.f32.mrb[0].mxu0
    %v720 = vadd.f32 %v635, %v719
    %v721 = vpop.f32.mrb[0].mxu0
    %722 = vmatprep.mubr.f32.mxu0 %v123
    %723 = vmatmul.mubr.f32.gmra.mrb[0].mxu0 %v122
    %v724 = vpop.f32.mrb[0].mxu0
    %v725 = vadd.f32 %v640, %v724
    %v726 = vpop.f32.mrb[0].mxu0
    %727 = vdwg.mxu0
    %728 = vmatprep.subr.mxu0 0.0
    %729 = vmatpush1.msra.mxu0 %v260
    %730 = vmatprep.subr.mxu0 0.0
    %731 = vmatpush1.msra.mxu0 %v261
    %732 = vmatprep.subr.mxu0 0.0
    %733 = vmatpush1.msra.mxu0 %v262
    %734 = vmatprep.subr.mxu0 0.0
    %735 = vmatpush1.msra.mxu0 %v263
    %736 = vmatprep.subr.mxu0 0.0
    %737 = vmatpush1.msra.mxu0 %v264
    %738 = vmatprep.subr.mxu0 0.0
    %739 = vmatpush1.msra.mxu0 %v265
    %740 = vmatprep.subr.mxu0 0.0
    %741 = vmatpush1.msra.mxu0 %v266
    %742 = vmatprep.subr.mxu0 0.0
    %743 = vmatpush1.msra.mxu0 %v267
    %744 = vmatprep.subr.mxu0 0.0
    %745 = vmatpush1.msra.mxu0 %v268
    %746 = vmatprep.subr.mxu0 0.0
    %747 = vmatpush1.msra.mxu0 %v269
    %748 = vmatprep.subr.mxu0 0.0
    %749 = vmatpush1.msra.mxu0 %v270
    %750 = vmatprep.subr.mxu0 0.0
    %751 = vmatpush1.msra.mxu0 %v271
    %752 = vmatprep.subr.mxu0 0.0
    %753 = vmatpush1.msra.mxu0 %v272
    %754 = vmatprep.subr.mxu0 0.0
    %755 = vmatpush1.msra.mxu0 %v273
    %756 = vmatprep.subr.mxu0 0.0
    %757 = vmatpush1.msra.mxu0 %v274
    %758 = vmatprep.subr.mxu0 0.0
    %759 = vmatpush1.msra.mxu0 %v275
    %760 = vmatprep.subr.mxu0 0.0
    %761 = vmatpush1.msra.mxu0 %v276
    %762 = vmatprep.subr.mxu0 0.0
    %763 = vmatpush1.msra.mxu0 %v277
    %764 = vmatprep.subr.mxu0 0.0
    %765 = vmatpush1.msra.mxu0 %v278
    %766 = vmatprep.subr.mxu0 0.0
    %767 = vmatpush1.msra.mxu0 %v279
    %768 = vmatprep.subr.mxu0 0.0
    %769 = vmatpush1.msra.mxu0 %v280
    %770 = vmatprep.subr.mxu0 0.0
    %771 = vmatpush1.msra.mxu0 %v281
    %772 = vmatprep.subr.mxu0 0.0
    %773 = vmatpush1.msra.mxu0 %v282
    %774 = vmatprep.subr.mxu0 0.0
    %775 = vmatpush1.msra.mxu0 %v283
    %776 = vmatprep.subr.mxu0 0.0
    %777 = vmatpush1.msra.mxu0 %v284
    %778 = vmatprep.subr.mxu0 0.0
    %779 = vmatpush1.msra.mxu0 %v285
    %780 = vmatprep.subr.mxu0 0.0
    %781 = vmatpush1.msra.mxu0 %v286
    %782 = vmatprep.subr.mxu0 0.0
    %783 = vmatpush1.msra.mxu0 %v287
    %784 = vmatprep.subr.mxu0 0.0
    %785 = vmatpush1.msra.mxu0 %v288
    %786 = vmatprep.subr.mxu0 0.0
    %787 = vmatpush1.msra.mxu0 %v289
    %788 = vmatprep.subr.mxu0 0.0
    %789 = vmatpush1.msra.mxu0 %v290
    %790 = vmatprep.subr.mxu0 0.0
    %791 = vmatpush1.msra.mxu0 %v291
    %792 = vmatprep.mubr.f32.mxu0 %v77
    %793 = vmatmul.mubr.f32.gmra.mrb[0].mxu0 %v76
    %v794 = vpop.f32.mrb[0].mxu0
    %v795 = vadd.f32 %v710, %v794
    %v796 = vpop.f32.mrb[0].mxu0
    %797 = vmatprep.mubr.f32.mxu0 %v93
    %798 = vmatmul.mubr.f32.gmra.mrb[0].mxu0 %v92
    %v799 = vpop.f32.mrb[0].mxu0
    %v800 = vadd.f32 %v715, %v799
    %v801 = vpop.f32.mrb[0].mxu0
    %802 = vmatprep.mubr.f32.mxu0 %v109
    %803 = vmatmul.mubr.f32.gmra.mrb[0].mxu0 %v108
    %v804 = vpop.f32.mrb[0].mxu0
    %v805 = vadd.f32 %v720, %v804
    %v806 = vpop.f32.mrb[0].mxu0
    %807 = vmatprep.mubr.f32.mxu0 %v125
    %808 = vmatmul.mubr.f32.gmra.mrb[0].mxu0 %v124
    %v809 = vpop.f32.mrb[0].mxu0
    %v810 = vadd.f32 %v725, %v809
    %v811 = vpop.f32.mrb[0].mxu0
    %812 = vdwg.mxu0
    %813 = vmatprep.subr.mxu0 0.0
    %814 = vmatpush1.msra.mxu0 %v292
    %815 = vmatprep.subr.mxu0 0.0
    %816 = vmatpush1.msra.mxu0 %v293
    %817 = vmatprep.subr.mxu0 0.0
    %818 = vmatpush1.msra.mxu0 %v294
    %819 = vmatprep.subr.mxu0 0.0
    %820 = vmatpush1.msra.mxu0 %v295
    %821 = vmatprep.subr.mxu0 0.0
    %822 = vmatpush1.msra.mxu0 %v296
    %823 = vmatprep.subr.mxu0 0.0
    %824 = vmatpush1.msra.mxu0 %v297
    %825 = vmatprep.subr.mxu0 0.0
    %826 = vmatpush1.msra.mxu0 %v298
    %827 = vmatprep.subr.mxu0 0.0
    %828 = vmatpush1.msra.mxu0 %v299
    %829 = vmatprep.subr.mxu0 0.0
    %830 = vmatpush1.msra.mxu0 %v300
    %831 = vmatprep.subr.mxu0 0.0
    %832 = vmatpush1.msra.mxu0 %v301
    %833 = vmatprep.subr.mxu0 0.0
    %834 = vmatpush1.msra.mxu0 %v302
    %835 = vmatprep.subr.mxu0 0.0
    %836 = vmatpush1.msra.mxu0 %v303
    %837 = vmatprep.subr.mxu0 0.0
    %838 = vmatpush1.msra.mxu0 %v304
    %839 = vmatprep.subr.mxu0 0.0
    %840 = vmatpush1.msra.mxu0 %v305
    %841 = vmatprep.subr.mxu0 0.0
    %842 = vmatpush1.msra.mxu0 %v306
    %843 = vmatprep.subr.mxu0 0.0
    %844 = vmatpush1.msra.mxu0 %v307
    %845 = vmatprep.subr.mxu0 0.0
    %846 = vmatpush1.msra.mxu0 %v308
    %847 = vmatprep.subr.mxu0 0.0
    %848 = vmatpush1.msra.mxu0 %v309
    %849 = vmatprep.subr.mxu0 0.0
    %850 = vmatpush1.msra.mxu0 %v310
    %851 = vmatprep.subr.mxu0 0.0
    %852 = vmatpush1.msra.mxu0 %v311
    %853 = vmatprep.subr.mxu0 0.0
    %854 = vmatpush1.msra.mxu0 %v312
    %855 = vmatprep.subr.mxu0 0.0
    %856 = vmatpush1.msra.mxu0 %v313
    %857 = vmatprep.subr.mxu0 0.0
    %858 = vmatpush1.msra.mxu0 %v314
    %859 = vmatprep.subr.mxu0 0.0
    %860 = vmatpush1.msra.mxu0 %v315
    %861 = vmatprep.subr.mxu0 0.0
    %862 = vmatpush1.msra.mxu0 %v316
    %863 = vmatprep.subr.mxu0 0.0
    %864 = vmatpush1.msra.mxu0 %v317
    %865 = vmatprep.subr.mxu0 0.0
    %866 = vmatpush1.msra.mxu0 %v318
    %867 = vmatprep.subr.mxu0 0.0
    %868 = vmatpush1.msra.mxu0 %v319
    %869 = vmatprep.subr.mxu0 0.0
    %870 = vmatpush1.msra.mxu0 %v320
    %871 = vmatprep.subr.mxu0 0.0
    %872 = vmatpush1.msra.mxu0 %v321
    %873 = vmatprep.subr.mxu0 0.0
    %874 = vmatpush1.msra.mxu0 %v322
    %875 = vmatprep.subr.mxu0 0.0
    %876 = vmatpush1.msra.mxu0 %v323
    %877 = vmatprep.mubr.f32.mxu0 %v79
    %878 = vmatmul.mubr.f32.gmra.mrb[0].mxu0 %v78
    %v879 = vpop.f32.mrb[0].mxu0
    %v880 = vadd.f32 %v795, %v879
    %v881 = vpop.f32.mrb[0].mxu0
    %882 = vmatprep.mubr.f32.mxu0 %v95
    %883 = vmatmul.mubr.f32.gmra.mrb[0].mxu0 %v94
    %v884 = vpop.f32.mrb[0].mxu0
    %v885 = vadd.f32 %v800, %v884
    %v886 = vpop.f32.mrb[0].mxu0
    %887 = vmatprep.mubr.f32.mxu0 %v111
    %888 = vmatmul.mubr.f32.gmra.mrb[0].mxu0 %v110
    %v889 = vpop.f32.mrb[0].mxu0
    %v890 = vadd.f32 %v805, %v889
    %v891 = vpop.f32.mrb[0].mxu0
    %892 = vmatprep.mubr.f32.mxu0 %v127
    %893 = vmatmul.mubr.f32.gmra.mrb[0].mxu0 %v126
    %v894 = vpop.f32.mrb[0].mxu0
    %v895 = vadd.f32 %v810, %v894
    %v896 = vpop.f32.mrb[0].mxu0
    %897 = vdwg.mxu0
    %898 = vmatprep.subr.mxu0 0.0
    %899 = vmatpush1.msra.mxu0 %v324
    %900 = vmatprep.subr.mxu0 0.0
    %901 = vmatpush1.msra.mxu0 %v325
    %902 = vmatprep.subr.mxu0 0.0
    %903 = vmatpush1.msra.mxu0 %v326
    %904 = vmatprep.subr.mxu0 0.0
    %905 = vmatpush1.msra.mxu0 %v327
    %906 = vmatprep.subr.mxu0 0.0
    %907 = vmatpush1.msra.mxu0 %v328
    %908 = vmatprep.subr.mxu0 0.0
    %909 = vmatpush1.msra.mxu0 %v329
    %910 = vmatprep.subr.mxu0 0.0
    %911 = vmatpush1.msra.mxu0 %v330
    %912 = vmatprep.subr.mxu0 0.0
    %913 = vmatpush1.msra.mxu0 %v331
    %914 = vmatprep.subr.mxu0 0.0
    %915 = vmatpush1.msra.mxu0 %v332
    %916 = vmatprep.subr.mxu0 0.0
    %917 = vmatpush1.msra.mxu0 %v333
    %918 = vmatprep.subr.mxu0 0.0
    %919 = vmatpush1.msra.mxu0 %v334
    %920 = vmatprep.subr.mxu0 0.0
    %921 = vmatpush1.msra.mxu0 %v335
    %922 = vmatprep.subr.mxu0 0.0
    %923 = vmatpush1.msra.mxu0 %v336
    %924 = vmatprep.subr.mxu0 0.0
    %925 = vmatpush1.msra.mxu0 %v337
    %926 = vmatprep.subr.mxu0 0.0
    %927 = vmatpush1.msra.mxu0 %v338
    %928 = vmatprep.subr.mxu0 0.0
    %929 = vmatpush1.msra.mxu0 %v339
    %930 = vmatprep.subr.mxu0 0.0
    %931 = vmatpush1.msra.mxu0 %v340
    %932 = vmatprep.subr.mxu0 0.0
    %933 = vmatpush1.msra.mxu0 %v341
    %934 = vmatprep.subr.mxu0 0.0
    %935 = vmatpush1.msra.mxu0 %v342
    %936 = vmatprep.subr.mxu0 0.0
    %937 = vmatpush1.msra.mxu0 %v343
    %938 = vmatprep.subr.mxu0 0.0
    %939 = vmatpush1.msra.mxu0 %v344
    %940 = vmatprep.subr.mxu0 0.0
    %941 = vmatpush1.msra.mxu0 %v345
    %942 = vmatprep.subr.mxu0 0.0
    %943 = vmatpush1.msra.mxu0 %v346
    %944 = vmatprep.subr.mxu0 0.0
    %945 = vmatpush1.msra.mxu0 %v347
    %946 = vmatprep.subr.mxu0 0.0
    %947 = vmatpush1.msra.mxu0 %v348
    %948 = vmatprep.subr.mxu0 0.0
    %949 = vmatpush1.msra.mxu0 %v349
    %950 = vmatprep.subr.mxu0 0.0
    %951 = vmatpush1.msra.mxu0 %v350
    %952 = vmatprep.subr.mxu0 0.0
    %953 = vmatpush1.msra.mxu0 %v351
    %954 = vmatprep.subr.mxu0 0.0
    %955 = vmatpush1.msra.mxu0 %v352
    %956 = vmatprep.subr.mxu0 0.0
    %957 = vmatpush1.msra.mxu0 %v353
    %958 = vmatprep.subr.mxu0 0.0
    %959 = vmatpush1.msra.mxu0 %v354
    %960 = vmatprep.subr.mxu0 0.0
    %961 = vmatpush1.msra.mxu0 %v355
    %962 = vmatprep.mubr.f32.mxu0 %v81
    %963 = vmatmul.mubr.f32.gmra.mrb[0].mxu0 %v80
    %v964 = vpop.f32.mrb[0].mxu0
    %v965 = vadd.f32 %v880, %v964
    %v966 = vpop.f32.mrb[0].mxu0
    %967 = vmatprep.mubr.f32.mxu0 %v97
    %968 = vmatmul.mubr.f32.gmra.mrb[0].mxu0 %v96
    %v969 = vpop.f32.mrb[0].mxu0
    %v970 = vadd.f32 %v885, %v969
    %v971 = vpop.f32.mrb[0].mxu0
    %972 = vmatprep.mubr.f32.mxu0 %v113
    %973 = vmatmul.mubr.f32.gmra.mrb[0].mxu0 %v112
    %v974 = vpop.f32.mrb[0].mxu0
    %v975 = vadd.f32 %v890, %v974
    %v976 = vpop.f32.mrb[0].mxu0
    %977 = vmatprep.mubr.f32.mxu0 %v129
    %978 = vmatmul.mubr.f32.gmra.mrb[0].mxu0 %v128
    %v979 = vpop.f32.mrb[0].mxu0
    %v980 = vadd.f32 %v895, %v979
    %v981 = vpop.f32.mrb[0].mxu0
    %982 = vdwg.mxu0
    %983 = vmatprep.subr.mxu0 0.0
    %984 = vmatpush1.msra.mxu0 %v356
    %985 = vmatprep.subr.mxu0 0.0
    %986 = vmatpush1.msra.mxu0 %v357
    %987 = vmatprep.subr.mxu0 0.0
    %988 = vmatpush1.msra.mxu0 %v358
    %989 = vmatprep.subr.mxu0 0.0
    %990 = vmatpush1.msra.mxu0 %v359
    %991 = vmatprep.subr.mxu0 0.0
    %992 = vmatpush1.msra.mxu0 %v360
    %993 = vmatprep.subr.mxu0 0.0
    %994 = vmatpush1.msra.mxu0 %v361
    %995 = vmatprep.subr.mxu0 0.0
    %996 = vmatpush1.msra.mxu0 %v362
    %997 = vmatprep.subr.mxu0 0.0
    %998 = vmatpush1.msra.mxu0 %v363
    %999 = vmatprep.subr.mxu0 0.0
    %1000 = vmatpush1.msra.mxu0 %v364
    %1001 = vmatprep.subr.mxu0 0.0
    %1002 = vmatpush1.msra.mxu0 %v365
    %1003 = vmatprep.subr.mxu0 0.0
    %1004 = vmatpush1.msra.mxu0 %v366
    %1005 = vmatprep.subr.mxu0 0.0
    %1006 = vmatpush1.msra.mxu0 %v367
    %1007 = vmatprep.subr.mxu0 0.0
    %1008 = vmatpush1.msra.mxu0 %v368
    %1009 = vmatprep.subr.mxu0 0.0
    %1010 = vmatpush1.msra.mxu0 %v369
    %1011 = vmatprep.subr.mxu0 0.0
    %1012 = vmatpush1.msra.mxu0 %v370
    %1013 = vmatprep.subr.mxu0 0.0
    %1014 = vmatpush1.msra.mxu0 %v371
    %1015 = vmatprep.subr.mxu0 0.0
    %1016 = vmatpush1.msra.mxu0 %v372
    %1017 = vmatprep.subr.mxu0 0.0
    %1018 = vmatpush1.msra.mxu0 %v373
    %1019 = vmatprep.subr.mxu0 0.0
    %1020 = vmatpush1.msra.mxu0 %v374
    %1021 = vmatprep.subr.mxu0 0.0
    %1022 = vmatpush1.msra.mxu0 %v375
    %1023 = vmatprep.subr.mxu0 0.0
    %1024 = vmatpush1.msra.mxu0 %v376
    %1025 = vmatprep.subr.mxu0 0.0
    %1026 = vmatpush1.msra.mxu0 %v377
    %1027 = vmatprep.subr.mxu0 0.0
    %1028 = vmatpush1.msra.mxu0 %v378
    %1029 = vmatprep.subr.mxu0 0.0
    %1030 = vmatpush1.msra.mxu0 %v379
    %1031 = vmatprep.subr.mxu0 0.0
    %1032 = vmatpush1.msra.mxu0 %v380
    %1033 = vmatprep.subr.mxu0 0.0
    %1034 = vmatpush1.msra.mxu0 %v381
    %1035 = vmatprep.subr.mxu0 0.0
    %1036 = vmatpush1.msra.mxu0 %v382
    %1037 = vmatprep.subr.mxu0 0.0
    %1038 = vmatpush1.msra.mxu0 %v383
    %1039 = vmatprep.subr.mxu0 0.0
    %1040 = vmatpush1.msra.mxu0 %v384
    %1041 = vmatprep.subr.mxu0 0.0
    %1042 = vmatpush1.msra.mxu0 %v385
    %1043 = vmatprep.subr.mxu0 0.0
    %1044 = vmatpush1.msra.mxu0 %v386
    %1045 = vmatprep.subr.mxu0 0.0
    %1046 = vmatpush1.msra.mxu0 %v387
    %1047 = vmatprep.mubr.f32.mxu0 %v83
    %1048 = vmatmul.mubr.f32.gmra.mrb[0].mxu0 %v82
    %v1049 = vpop.f32.mrb[0].mxu0
    %v1050 = vadd.f32 %v965, %v1049
    %v1051 = vpop.f32.mrb[0].mxu0
    %1052 = vmatprep.mubr.f32.mxu0 %v99
    %1053 = vmatmul.mubr.f32.gmra.mrb[0].mxu0 %v98
    %v1054 = vpop.f32.mrb[0].mxu0
    %v1055 = vadd.f32 %v970, %v1054
    %v1056 = vpop.f32.mrb[0].mxu0
    %1057 = vmatprep.mubr.f32.mxu0 %v115
    %1058 = vmatmul.mubr.f32.gmra.mrb[0].mxu0 %v114
    %v1059 = vpop.f32.mrb[0].mxu0
    %v1060 = vadd.f32 %v975, %v1059
    %v1061 = vpop.f32.mrb[0].mxu0
    %1062 = vmatprep.mubr.f32.mxu0 %v131
    %1063 = vmatmul.mubr.f32.gmra.mrb[0].mxu0 %v130
    %v1064 = vpop.f32.mrb[0].mxu0
    %v1065 = vadd.f32 %v980, %v1064
    %v1066 = vpop.f32.mrb[0].mxu0
    %1067 = vdwg.mxu0
    %v1068 = vadd.f32 %v64, %v1050
    %v1069 = vadd.f32 %v65, %v1055
    %v1070 = vadd.f32 %v66, %v1060
    %v1071 = vadd.f32 %v67, %v1065
    %1072 = vst [vmem:[#allocation2] sm:$0xff] %v1068
    %1073 = vst [vmem:[#allocation2 + $0x8] sm:$0xff] %v1069
    %1074 = vst [vmem:[#allocation2 + $0x10] sm:$0xff] %v1070
    %1075 = vst [vmem:[#allocation2 + $0x18] sm:$0xff] %v1071
    // Predicated region
    $region30: #{ae_cnn_forward.18} parent=1 // pred_check
      %p1076 = pneg %p56
    $region31: #{ae_cnn_forward.18} parent=1 // pred_check_branch
      %1078 = sbr.rel (%p1076) target = $region33
    $region32: #{ae_cnn_forward.18} parent=1 // pred_region
      %v1079 = vld [vmem:[#allocation2] sm:$0xff]
      %v1080 = vld [vmem:[#allocation2 + $0x8] sm:$0xff]
      %v1081 = vld [vmem:[#allocation2 + $0x10] sm:$0xff]
      %v1082 = vld [vmem:[#allocation2 + $0x18] sm:$0xff]
      %v1083 = vld [vmem:[#allocation8] sm:$0xff]
      %v1084 = vld [vmem:[#allocation8 + $0x8] sm:$0xff]
      %v1085 = vld [vmem:[#allocation8 + $0x10] sm:$0xff]
      %v1086 = vld [vmem:[#allocation8 + $0x18] sm:$0xff]
      %1088 = vset.pattern.permute.xlu0 0
      %1089 = vperm.xlu0 %1088, %v1083
      %v1090 = vpop.permute.xlu0 %1089
      %1093 = vset.pattern.permute.xlu0 0
      %1094 = vperm.xlu0 %1093, %v1084
      %v1095 = vpop.permute.xlu0 %1094
      %1098 = vset.pattern.permute.xlu0 0
      %1099 = vperm.xlu0 %1098, %v1085
      %v1100 = vpop.permute.xlu0 %1099
      %1103 = vset.pattern.permute.xlu0 0
      %1104 = vperm.xlu0 %1103, %v1086
      %v1105 = vpop.permute.xlu0 %1104
      %v1107 = vadd.f32 %v1079, %v1090
      %v1108 = vadd.f32 %v1080, %v1095
      %v1109 = vadd.f32 %v1081, %v1100
      %v1110 = vadd.f32 %v1082, %v1105
      %v1111 = vmax.f32 %v1107, 0.0
      %v1112 = vmax.f32 %v1108, 0.0
      %v1113 = vmax.f32 %v1109, 0.0
      %v1114 = vmax.f32 %v1110, 0.0
      %1115 = vst [vmem:[#allocation9] sm:$0xff] %v1111
      %1116 = vst [vmem:[#allocation9 + $0x8] sm:$0xff] %v1112
      %1117 = vst [vmem:[#allocation9 + $0x10] sm:$0xff] %v1113
      %1118 = vst [vmem:[#allocation9 + $0x18] sm:$0xff] %v1114
    $region33: #{ae_cnn_forward.18} parent=1 // pred_fallthru
      _
    // Predicated region
    $region34: #{ae_cnn_forward.18} parent=1 // pred_check
      _
    $region35: #{ae_cnn_forward.18} parent=1 // pred_check_branch
      %1120 = sbr.rel (0) target = $region37
    $region36: #{ae_cnn_forward.18} parent=1 // pred_region
      %s1122 = ssub.s32 512, 512
      %1123 = vsyncadd [#allocation5], %s1122
      %s1124 = sshll.u32 [#allocation9], 4
      %s1125 = int_to_ptr.vmem [resolvable:$true] %s1124
      %1130 = dma.vmem_to_hbm [thread:$0]  %s1125, 512, %s3, [#allocation5], 128, 128, 8
    $region37: #{ae_cnn_forward.18} parent=1 // pred_fallthru
      _
    // Predicated region
    $region38: #{ae_cnn_forward.18} parent=1 // pred_check
      _
    $region39: #{ae_cnn_forward.18} parent=1 // pred_check_branch
      %1132 = sbr.rel (0) target = $region41
    $region40: #{ae_cnn_forward.18} parent=1 // pred_region
      %1133 = dma.done [#allocation5], 512
    $region41: #{ae_cnn_forward.18} parent=1 // pred_fallthru
      _
    %1134 = vsyncpa [#allocation4], 1
    %1135 = vsyncpa [#allocation7], 1
    %1136 = vsyncpa [#allocation5], 1

// kernel: ae_cnn_forward.19
$region0: #{ae_cnn_forward.19}
  #allocation0 [shape = 'u32[]', space=smem, size = 0x4, offset = 0x4, fixed_abs, tag = 'smem constant byte address 0x4 - core index']
  #allocation1 [shape = 'u32[144,128]{1,0:T(1,128)}', space=vmem, size = 0x12000, scoped, tag = 'internal scratch']
  #allocation2 [shape = 'f32[8,512]{1,0:T(8,128)}', space=vmem, size = 0x4000, scoped, tag = 'scratch operand']
  %s0 = inlined_call_operand.hbm [shape: f32[8,416], index: 0, kind: input, shape index: {}]
  %s1 = inlined_call_operand.hbm [shape: f32[416,512], index: 1, kind: input, shape index: {}]
  %s2 = inlined_call_operand.hbm [shape: f32[1,512], index: 2, kind: input, shape index: {}]
  %s3 = inlined_call_operand.hbm [shape: f32[8,512], index: 3, kind: output, shape index: {}]
  %s4 = sld [smem:[#allocation0]]
  $region42: #{ae_cnn_forward.19} parent=0
    _
  %s6 = ssub.s32 1, %s4
  %s7 = scalar_select 0, %s6, %s4
  $region1: #{ae_cnn_forward.19} parent=0
    #allocation3 [shape = 'u8[16384]{0}', space=vmem, size = 0x4000, scoped, tag = 'input window, operand 0, single buffered']
    #allocation4 [shape = 's32[1]{0}', space=sflag, size = 0x4, scoped, tag = 'scoped memory for ae_cnn_forward.19']
    #allocation5 [shape = 's32[1]{0}', space=sflag, size = 0x4, scoped, tag = 'scoped memory for ae_cnn_forward.19']
    #allocation6 [shape = 'u8[851968]{0}', space=vmem, size = 0xd0000, scoped, tag = 'input window, operand 1, single buffered']
    #allocation7 [shape = 's32[1]{0}', space=sflag, size = 0x4, scoped, tag = 'scoped memory for ae_cnn_forward.19']
    #allocation8 [shape = 'u8[2048]{0}', space=vmem, size = 0x800, scoped, tag = 'input window, operand 2, single buffered']
    #allocation9 [shape = 'u8[16384]{0}', space=vmem, size = 0x4000, scoped, tag = 'output window, operand 0, single buffered']
    %8 = vsyncpa [#allocation4], 0
    %9 = vsyncpa [#allocation7], 0
    %10 = vsyncpa [#allocation5], 0
    // Predicated region
    $region2: #{ae_cnn_forward.19} parent=1 // pred_check
      _
    $region3: #{ae_cnn_forward.19} parent=1 // pred_check_branch
      %12 = sbr.rel (0) target = $region5
    $region4: #{ae_cnn_forward.19} parent=1 // pred_region
      %s14 = ssub.s32 512, 512
      %15 = vsyncadd [#allocation4], %s14
      %s17 = sshll.u32 [#allocation3], 4
      %s18 = int_to_ptr.vmem [resolvable:$true] %s17
      %20 = dma.hbm_to_vmem [thread:$0]  %s0, 512, %s18, [#allocation4]
    $region5: #{ae_cnn_forward.19} parent=1 // pred_fallthru
      _
    // Predicated region
    $region6: #{ae_cnn_forward.19} parent=1 // pred_check
      _
    $region7: #{ae_cnn_forward.19} parent=1 // pred_check_branch
      %22 = sbr.rel (0) target = $region9
    $region8: #{ae_cnn_forward.19} parent=1 // pred_region
      %s24 = ssub.s32 26624, 26624
      %25 = vsyncadd [#allocation7], %s24
      %s26 = sshll.u32 [#allocation6], 4
      %s27 = int_to_ptr.vmem [resolvable:$true] %s26
      %32 = dma.hbm_to_vmem [thread:$0]  %s1, 26624, %s27, [#allocation7], 512, 512, 32
    $region9: #{ae_cnn_forward.19} parent=1 // pred_fallthru
      _
    // Predicated region
    $region10: #{ae_cnn_forward.19} parent=1 // pred_check
      _
    $region11: #{ae_cnn_forward.19} parent=1 // pred_check_branch
      %34 = sbr.rel (0) target = $region13
    $region12: #{ae_cnn_forward.19} parent=1 // pred_region
      %s36 = ssub.s32 64, 64
      %37 = vsyncadd [#allocation7], %s36
      %s39 = sshll.u32 [#allocation8], 4
      %s40 = int_to_ptr.vmem [resolvable:$true] %s39
      %42 = dma.hbm_to_vmem [thread:$0]  %s2, 64, %s40, [#allocation7]
    $region13: #{ae_cnn_forward.19} parent=1 // pred_fallthru
      _
    // Predicated region
    $region14: #{ae_cnn_forward.19} parent=1 // pred_check
      _
    $region15: #{ae_cnn_forward.19} parent=1 // pred_check_branch
      %44 = sbr.rel (0) target = $region17
    $region16: #{ae_cnn_forward.19} parent=1 // pred_region
      %45 = dma.done [#allocation4], 512
    $region17: #{ae_cnn_forward.19} parent=1 // pred_fallthru
      _
    // Predicated region
    $region18: #{ae_cnn_forward.19} parent=1 // pred_check
      _
    $region19: #{ae_cnn_forward.19} parent=1 // pred_check_branch
      %47 = sbr.rel (0) target = $region21
    $region20: #{ae_cnn_forward.19} parent=1 // pred_region
      %48 = dma.done [#allocation7], 26624
    $region21: #{ae_cnn_forward.19} parent=1 // pred_fallthru
      _
    // Predicated region
    $region22: #{ae_cnn_forward.19} parent=1 // pred_check
      _
    $region23: #{ae_cnn_forward.19} parent=1 // pred_check_branch
      %50 = sbr.rel (0) target = $region25
    $region24: #{ae_cnn_forward.19} parent=1 // pred_region
      %51 = dma.done [#allocation7], 64
    $region25: #{ae_cnn_forward.19} parent=1 // pred_fallthru
      _
    %p52 = scmp.eq.s32.totalorder 0, 0
    // Predicated region
    $region26: #{ae_cnn_forward.19} parent=1 // pred_check
      %p53 = pneg %p52
    $region27: #{ae_cnn_forward.19} parent=1 // pred_check_branch
      %55 = sbr.rel (%p53) target = $region29
    $region28: #{ae_cnn_forward.19} parent=1 // pred_region
      %56 = vst [vmem:[#allocation2] sm:$0xff] 0.0
      %57 = vst [vmem:[#allocation2 + $0x8] sm:$0xff] 0.0
      %58 = vst [vmem:[#allocation2 + $0x10] sm:$0xff] 0.0
      %59 = vst [vmem:[#allocation2 + $0x18] sm:$0xff] 0.0
    $region29: #{ae_cnn_forward.19} parent=1 // pred_fallthru
      _
    %v60 = vld [vmem:[#allocation2] sm:$0xff]
    %v61 = vld [vmem:[#allocation2 + $0x8] sm:$0xff]
    %v62 = vld [vmem:[#allocation2 + $0x10] sm:$0xff]
    %v63 = vld [vmem:[#allocation2 + $0x18] sm:$0xff]
    %v64 = vld [vmem:[#allocation3] sm:$0xff]
    %v65 = vld [vmem:[#allocation3 + $0x8] sm:$0xff]
    %v66 = vld [vmem:[#allocation3 + $0x10] sm:$0xff]
    %v67 = vld [vmem:[#allocation3 + $0x18] sm:$0xff]
    %v68 = vld [vmem:[#allocation6] sm:$0xff]
    %v69 = vld [vmem:[#allocation6 + $0x8] sm:$0xff]
    %v70 = vld [vmem:[#allocation6 + $0x10] sm:$0xff]
    %v71 = vld [vmem:[#allocation6 + $0x18] sm:$0xff]
    %v72 = vld [vmem:[#allocation6 + $0x20] sm:$0xff]
    %v73 = vld [vmem:[#allocation6 + $0x28] sm:$0xff]
    %v74 = vld [vmem:[#allocation6 + $0x30] sm:$0xff]
    %v75 = vld [vmem:[#allocation6 + $0x38] sm:$0xff]
    %v76 = vld [vmem:[#allocation6 + $0x40] sm:$0xff]
    %v77 = vld [vmem:[#allocation6 + $0x48] sm:$0xff]
    %v78 = vld [vmem:[#allocation6 + $0x50] sm:$0xff]
    %v79 = vld [vmem:[#allocation6 + $0x58] sm:$0xff]
    %v80 = vld [vmem:[#allocation6 + $0x60] sm:$0xff]
    %v81 = vld [vmem:[#allocation6 + $0x68] sm:$0xff]
    %v82 = vld [vmem:[#allocation6 + $0x70] sm:$0xff]
    %v83 = vld [vmem:[#allocation6 + $0x78] sm:$0xff]
    %v84 = vld [vmem:[#allocation6 + $0x80] sm:$0xff]
    %v85 = vld [vmem:[#allocation6 + $0x88] sm:$0xff]
    %v86 = vld [vmem:[#allocation6 + $0x90] sm:$0xff]
    %v87 = vld [vmem:[#allocation6 + $0x98] sm:$0xff]
    %v88 = vld [vmem:[#allocation6 + $0xa0] sm:$0xff]
    %v89 = vld [vmem:[#allocation6 + $0xa8] sm:$0xff]
    %v90 = vld [vmem:[#allocation6 + $0xb0] sm:$0xff]
    %v91 = vld [vmem:[#allocation6 + $0xb8] sm:$0xff]
    %v92 = vld [vmem:[#allocation6 + $0xc0] sm:$0xff]
    %v93 = vld [vmem:[#allocation6 + $0xc8] sm:$0xff]
    %v94 = vld [vmem:[#allocation6 + $0xd0] sm:$0xff]
    %v95 = vld [vmem:[#allocation6 + $0xd8] sm:$0xff]
    %v96 = vld [vmem:[#allocation6 + $0xe0] sm:$0xff]
    %v97 = vld [vmem:[#allocation6 + $0xe8] sm:$0xff]
    %v98 = vld [vmem:[#allocation6 + $0xf0] sm:$0xff]
    %v99 = vld [vmem:[#allocation6 + $0xf8] sm:$0xff]
    %v100 = vld [vmem:[#allocation6 + $0x100] sm:$0xff]
    %v101 = vld [vmem:[#allocation6 + $0x108] sm:$0xff]
    %v102 = vld [vmem:[#allocation6 + $0x110] sm:$0xff]
    %v103 = vld [vmem:[#allocation6 + $0x118] sm:$0xff]
    %v104 = vld [vmem:[#allocation6 + $0x120] sm:$0xff]
    %v105 = vld [vmem:[#allocation6 + $0x128] sm:$0xff]
    %v106 = vld [vmem:[#allocation6 + $0x130] sm:$0xff]
    %v107 = vld [vmem:[#allocation6 + $0x138] sm:$0xff]
    %v108 = vld [vmem:[#allocation6 + $0x140] sm:$0xff]
    %v109 = vld [vmem:[#allocation6 + $0x148] sm:$0xff]
    %v110 = vld [vmem:[#allocation6 + $0x150] sm:$0xff]
    %v111 = vld [vmem:[#allocation6 + $0x158] sm:$0xff]
    %v112 = vld [vmem:[#allocation6 + $0x160] sm:$0xff]
    %v113 = vld [vmem:[#allocation6 + $0x168] sm:$0xff]
    %v114 = vld [vmem:[#allocation6 + $0x170] sm:$0xff]
    %v115 = vld [vmem:[#allocation6 + $0x178] sm:$0xff]
    %v116 = vld [vmem:[#allocation6 + $0x180] sm:$0xff]
    %v117 = vld [vmem:[#allocation6 + $0x188] sm:$0xff]
    %v118 = vld [vmem:[#allocation6 + $0x190] sm:$0xff]
    %v119 = vld [vmem:[#allocation6 + $0x198] sm:$0xff]
    %v120 = vld [vmem:[#allocation6 + $0x1a0] sm:$0xff]
    %v121 = vld [vmem:[#allocation6 + $0x1a8] sm:$0xff]
    %v122 = vld [vmem:[#allocation6 + $0x1b0] sm:$0xff]
    %v123 = vld [vmem:[#allocation6 + $0x1b8] sm:$0xff]
    %v124 = vld [vmem:[#allocation6 + $0x1c0] sm:$0xff]
    %v125 = vld [vmem:[#allocation6 + $0x1c8] sm:$0xff]
    %v126 = vld [vmem:[#allocation6 + $0x1d0] sm:$0xff]
    %v127 = vld [vmem:[#allocation6 + $0x1d8] sm:$0xff]
    %v128 = vld [vmem:[#allocation6 + $0x1e0] sm:$0xff]
    %v129 = vld [vmem:[#allocation6 + $0x1e8] sm:$0xff]
    %v130 = vld [vmem:[#allocation6 + $0x1f0] sm:$0xff]
    %v131 = vld [vmem:[#allocation6 + $0x1f8] sm:$0xff]
    %v132 = vld [vmem:[#allocation6 + $0x200] sm:$0xff]
    %v133 = vld [vmem:[#allocation6 + $0x208] sm:$0xff]
    %v134 = vld [vmem:[#allocation6 + $0x210] sm:$0xff]
    %v135 = vld [vmem:[#allocation6 + $0x218] sm:$0xff]
    %v136 = vld [vmem:[#allocation6 + $0x220] sm:$0xff]
    %v137 = vld [vmem:[#allocation6 + $0x228] sm:$0xff]
    %v138 = vld [vmem:[#allocation6 + $0x230] sm:$0xff]
    %v139 = vld [vmem:[#allocation6 + $0x238] sm:$0xff]
    %v140 = vld [vmem:[#allocation6 + $0x240] sm:$0xff]
    %v141 = vld [vmem:[#allocation6 + $0x248] sm:$0xff]
    %v142 = vld [vmem:[#allocation6 + $0x250] sm:$0xff]
    %v143 = vld [vmem:[#allocation6 + $0x258] sm:$0xff]
    %v144 = vld [vmem:[#allocation6 + $0x260] sm:$0xff]
    %v145 = vld [vmem:[#allocation6 + $0x268] sm:$0xff]
    %v146 = vld [vmem:[#allocation6 + $0x270] sm:$0xff]
    %v147 = vld [vmem:[#allocation6 + $0x278] sm:$0xff]
    %v148 = vld [vmem:[#allocation6 + $0x280] sm:$0xff]
    %v149 = vld [vmem:[#allocation6 + $0x288] sm:$0xff]
    %v150 = vld [vmem:[#allocation6 + $0x290] sm:$0xff]
    %v151 = vld [vmem:[#allocation6 + $0x298] sm:$0xff]
    %v152 = vld [vmem:[#allocation6 + $0x2a0] sm:$0xff]
    %v153 = vld [vmem:[#allocation6 + $0x2a8] sm:$0xff]
    %v154 = vld [vmem:[#allocation6 + $0x2b0] sm:$0xff]
    %v155 = vld [vmem:[#allocation6 + $0x2b8] sm:$0xff]
    %v156 = vld [vmem:[#allocation6 + $0x2c0] sm:$0xff]
    %v157 = vld [vmem:[#allocation6 + $0x2c8] sm:$0xff]
    %v158 = vld [vmem:[#allocation6 + $0x2d0] sm:$0xff]
    %v159 = vld [vmem:[#allocation6 + $0x2d8] sm:$0xff]
    %v160 = vld [vmem:[#allocation6 + $0x2e0] sm:$0xff]
    %v161 = vld [vmem:[#allocation6 + $0x2e8] sm:$0xff]
    %v162 = vld [vmem:[#allocation6 + $0x2f0] sm:$0xff]
    %v163 = vld [vmem:[#allocation6 + $0x2f8] sm:$0xff]
    %v164 = vld [vmem:[#allocation6 + $0x300] sm:$0xff]
    %v165 = vld [vmem:[#allocation6 + $0x308] sm:$0xff]
    %v166 = vld [vmem:[#allocation6 + $0x310] sm:$0xff]
    %v167 = vld [vmem:[#allocation6 + $0x318] sm:$0xff]
    %v168 = vld [vmem:[#allocation6 + $0x320] sm:$0xff]
    %v169 = vld [vmem:[#allocation6 + $0x328] sm:$0xff]
    %v170 = vld [vmem:[#allocation6 + $0x330] sm:$0xff]
    %v171 = vld [vmem:[#allocation6 + $0x338] sm:$0xff]
    %v172 = vld [vmem:[#allocation6 + $0x340] sm:$0xff]
    %v173 = vld [vmem:[#allocation6 + $0x348] sm:$0xff]
    %v174 = vld [vmem:[#allocation6 + $0x350] sm:$0xff]
    %v175 = vld [vmem:[#allocation6 + $0x358] sm:$0xff]
    %v176 = vld [vmem:[#allocation6 + $0x360] sm:$0xff]
    %v177 = vld [vmem:[#allocation6 + $0x368] sm:$0xff]
    %v178 = vld [vmem:[#allocation6 + $0x370] sm:$0xff]
    %v179 = vld [vmem:[#allocation6 + $0x378] sm:$0xff]
    %v180 = vld [vmem:[#allocation6 + $0x380] sm:$0xff]
    %v181 = vld [vmem:[#allocation6 + $0x388] sm:$0xff]
    %v182 = vld [vmem:[#allocation6 + $0x390] sm:$0xff]
    %v183 = vld [vmem:[#allocation6 + $0x398] sm:$0xff]
    %v184 = vld [vmem:[#allocation6 + $0x3a0] sm:$0xff]
    %v185 = vld [vmem:[#allocation6 + $0x3a8] sm:$0xff]
    %v186 = vld [vmem:[#allocation6 + $0x3b0] sm:$0xff]
    %v187 = vld [vmem:[#allocation6 + $0x3b8] sm:$0xff]
    %v188 = vld [vmem:[#allocation6 + $0x3c0] sm:$0xff]
    %v189 = vld [vmem:[#allocation6 + $0x3c8] sm:$0xff]
    %v190 = vld [vmem:[#allocation6 + $0x3d0] sm:$0xff]
    %v191 = vld [vmem:[#allocation6 + $0x3d8] sm:$0xff]
    %v192 = vld [vmem:[#allocation6 + $0x3e0] sm:$0xff]
    %v193 = vld [vmem:[#allocation6 + $0x3e8] sm:$0xff]
    %v194 = vld [vmem:[#allocation6 + $0x3f0] sm:$0xff]
    %v195 = vld [vmem:[#allocation6 + $0x3f8] sm:$0xff]
    %v196 = vld [vmem:[#allocation6 + $0x400] sm:$0xff]
    %v197 = vld [vmem:[#allocation6 + $0x408] sm:$0xff]
    %v198 = vld [vmem:[#allocation6 + $0x410] sm:$0xff]
    %v199 = vld [vmem:[#allocation6 + $0x418] sm:$0xff]
    %v200 = vld [vmem:[#allocation6 + $0x420] sm:$0xff]
    %v201 = vld [vmem:[#allocation6 + $0x428] sm:$0xff]
    %v202 = vld [vmem:[#allocation6 + $0x430] sm:$0xff]
    %v203 = vld [vmem:[#allocation6 + $0x438] sm:$0xff]
    %v204 = vld [vmem:[#allocation6 + $0x440] sm:$0xff]
    %v205 = vld [vmem:[#allocation6 + $0x448] sm:$0xff]
    %v206 = vld [vmem:[#allocation6 + $0x450] sm:$0xff]
    %v207 = vld [vmem:[#allocation6 + $0x458] sm:$0xff]
    %v208 = vld [vmem:[#allocation6 + $0x460] sm:$0xff]
    %v209 = vld [vmem:[#allocation6 + $0x468] sm:$0xff]
    %v210 = vld [vmem:[#allocation6 + $0x470] sm:$0xff]
    %v211 = vld [vmem:[#allocation6 + $0x478] sm:$0xff]
    %v212 = vld [vmem:[#allocation6 + $0x480] sm:$0xff]
    %v213 = vld [vmem:[#allocation6 + $0x488] sm:$0xff]
    %v214 = vld [vmem:[#allocation6 + $0x490] sm:$0xff]
    %v215 = vld [vmem:[#allocation6 + $0x498] sm:$0xff]
    %v216 = vld [vmem:[#allocation6 + $0x4a0] sm:$0xff]
    %v217 = vld [vmem:[#allocation6 + $0x4a8] sm:$0xff]
    %v218 = vld [vmem:[#allocation6 + $0x4b0] sm:$0xff]
    %v219 = vld [vmem:[#allocation6 + $0x4b8] sm:$0xff]
    %v220 = vld [vmem:[#allocation6 + $0x4c0] sm:$0xff]
    %v221 = vld [vmem:[#allocation6 + $0x4c8] sm:$0xff]
    %v222 = vld [vmem:[#allocation6 + $0x4d0] sm:$0xff]
    %v223 = vld [vmem:[#allocation6 + $0x4d8] sm:$0xff]
    %v224 = vld [vmem:[#allocation6 + $0x4e0] sm:$0xff]
    %v225 = vld [vmem:[#allocation6 + $0x4e8] sm:$0xff]
    %v226 = vld [vmem:[#allocation6 + $0x4f0] sm:$0xff]
    %v227 = vld [vmem:[#allocation6 + $0x4f8] sm:$0xff]
    %v228 = vld [vmem:[#allocation6 + $0x500] sm:$0xff]
    %v229 = vld [vmem:[#allocation6 + $0x508] sm:$0xff]
    %v230 = vld [vmem:[#allocation6 + $0x510] sm:$0xff]
    %v231 = vld [vmem:[#allocation6 + $0x518] sm:$0xff]
    %v232 = vld [vmem:[#allocation6 + $0x520] sm:$0xff]
    %v233 = vld [vmem:[#allocation6 + $0x528] sm:$0xff]
    %v234 = vld [vmem:[#allocation6 + $0x530] sm:$0xff]
    %v235 = vld [vmem:[#allocation6 + $0x538] sm:$0xff]
    %v236 = vld [vmem:[#allocation6 + $0x540] sm:$0xff]
    %v237 = vld [vmem:[#allocation6 + $0x548] sm:$0xff]
    %v238 = vld [vmem:[#allocation6 + $0x550] sm:$0xff]
    %v239 = vld [vmem:[#allocation6 + $0x558] sm:$0xff]
    %v240 = vld [vmem:[#allocation6 + $0x560] sm:$0xff]
    %v241 = vld [vmem:[#allocation6 + $0x568] sm:$0xff]
    %v242 = vld [vmem:[#allocation6 + $0x570] sm:$0xff]
    %v243 = vld [vmem:[#allocation6 + $0x578] sm:$0xff]
    %v244 = vld [vmem:[#allocation6 + $0x580] sm:$0xff]
    %v245 = vld [vmem:[#allocation6 + $0x588] sm:$0xff]
    %v246 = vld [vmem:[#allocation6 + $0x590] sm:$0xff]
    %v247 = vld [vmem:[#allocation6 + $0x598] sm:$0xff]
    %v248 = vld [vmem:[#allocation6 + $0x5a0] sm:$0xff]
    %v249 = vld [vmem:[#allocation6 + $0x5a8] sm:$0xff]
    %v250 = vld [vmem:[#allocation6 + $0x5b0] sm:$0xff]
    %v251 = vld [vmem:[#allocation6 + $0x5b8] sm:$0xff]
    %v252 = vld [vmem:[#allocation6 + $0x5c0] sm:$0xff]
    %v253 = vld [vmem:[#allocation6 + $0x5c8] sm:$0xff]
    %v254 = vld [vmem:[#allocation6 + $0x5d0] sm:$0xff]
    %v255 = vld [vmem:[#allocation6 + $0x5d8] sm:$0xff]
    %v256 = vld [vmem:[#allocation6 + $0x5e0] sm:$0xff]
    %v257 = vld [vmem:[#allocation6 + $0x5e8] sm:$0xff]
    %v258 = vld [vmem:[#allocation6 + $0x5f0] sm:$0xff]
    %v259 = vld [vmem:[#allocation6 + $0x5f8] sm:$0xff]
    %v260 = vld [vmem:[#allocation6 + $0x600] sm:$0xff]
    %v261 = vld [vmem:[#allocation6 + $0x608] sm:$0xff]
    %v262 = vld [vmem:[#allocation6 + $0x610] sm:$0xff]
    %v263 = vld [vmem:[#allocation6 + $0x618] sm:$0xff]
    %v264 = vld [vmem:[#allocation6 + $0x620] sm:$0xff]
    %v265 = vld [vmem:[#allocation6 + $0x628] sm:$0xff]
    %v266 = vld [vmem:[#allocation6 + $0x630] sm:$0xff]
    %v267 = vld [vmem:[#allocation6 + $0x638] sm:$0xff]
    %v268 = vld [vmem:[#allocation6 + $0x640] sm:$0xff]
    %v269 = vld [vmem:[#allocation6 + $0x648] sm:$0xff]
    %v270 = vld [vmem:[#allocation6 + $0x650] sm:$0xff]
    %v271 = vld [vmem:[#allocation6 + $0x658] sm:$0xff]
    %v272 = vld [vmem:[#allocation6 + $0x660] sm:$0xff]
    %v273 = vld [vmem:[#allocation6 + $0x668] sm:$0xff]
    %v274 = vld [vmem:[#allocation6 + $0x670] sm:$0xff]
    %v275 = vld [vmem:[#allocation6 + $0x678] sm:$0xff]
    %vm276 = vcmask 261120
    %v278 = vsel %vm276, %v67, 0
    %280 = vmatprep.subr.mxu0 %v69
    %281 = vmatpush1.msra.mxu0 %v68
    %282 = vmatprep.subr.mxu0 %v73
    %283 = vmatpush1.msra.mxu0 %v72
    %284 = vmatprep.subr.mxu0 %v77
    %285 = vmatpush1.msra.mxu0 %v76
    %286 = vmatprep.subr.mxu0 %v81
    %287 = vmatpush1.msra.mxu0 %v80
    %288 = vmatprep.subr.mxu0 %v85
    %289 = vmatpush1.msra.mxu0 %v84
    %290 = vmatprep.subr.mxu0 %v89
    %291 = vmatpush1.msra.mxu0 %v88
    %292 = vmatprep.subr.mxu0 %v93
    %293 = vmatpush1.msra.mxu0 %v92
    %294 = vmatprep.subr.mxu0 %v97
    %295 = vmatpush1.msra.mxu0 %v96
    %296 = vmatprep.subr.mxu0 %v101
    %297 = vmatpush1.msra.mxu0 %v100
    %298 = vmatprep.subr.mxu0 %v105
    %299 = vmatpush1.msra.mxu0 %v104
    %300 = vmatprep.subr.mxu0 %v109
    %301 = vmatpush1.msra.mxu0 %v108
    %302 = vmatprep.subr.mxu0 %v113
    %303 = vmatpush1.msra.mxu0 %v112
    %304 = vmatprep.subr.mxu0 %v117
    %305 = vmatpush1.msra.mxu0 %v116
    %306 = vmatprep.subr.mxu0 %v121
    %307 = vmatpush1.msra.mxu0 %v120
    %308 = vmatprep.subr.mxu0 %v125
    %309 = vmatpush1.msra.mxu0 %v124
    %310 = vmatprep.subr.mxu0 %v129
    %311 = vmatpush1.msra.mxu0 %v128
    %312 = vmatprep.subr.mxu0 %v133
    %313 = vmatpush1.msra.mxu0 %v132
    %314 = vmatprep.subr.mxu0 %v137
    %315 = vmatpush1.msra.mxu0 %v136
    %316 = vmatprep.subr.mxu0 %v141
    %317 = vmatpush1.msra.mxu0 %v140
    %318 = vmatprep.subr.mxu0 %v145
    %319 = vmatpush1.msra.mxu0 %v144
    %320 = vmatprep.subr.mxu0 %v149
    %321 = vmatpush1.msra.mxu0 %v148
    %322 = vmatprep.subr.mxu0 %v153
    %323 = vmatpush1.msra.mxu0 %v152
    %324 = vmatprep.subr.mxu0 %v157
    %325 = vmatpush1.msra.mxu0 %v156
    %326 = vmatprep.subr.mxu0 %v161
    %327 = vmatpush1.msra.mxu0 %v160
    %328 = vmatprep.subr.mxu0 %v165
    %329 = vmatpush1.msra.mxu0 %v164
    %330 = vmatprep.subr.mxu0 %v169
    %331 = vmatpush1.msra.mxu0 %v168
    %332 = vmatprep.subr.mxu0 %v173
    %333 = vmatpush1.msra.mxu0 %v172
    %334 = vmatprep.subr.mxu0 %v177
    %335 = vmatpush1.msra.mxu0 %v176
    %336 = vmatprep.subr.mxu0 %v181
    %337 = vmatpush1.msra.mxu0 %v180
    %338 = vmatprep.subr.mxu0 %v185
    %339 = vmatpush1.msra.mxu0 %v184
    %340 = vmatprep.subr.mxu0 %v189
    %341 = vmatpush1.msra.mxu0 %v188
    %342 = vmatprep.subr.mxu0 %v193
    %343 = vmatpush1.msra.mxu0 %v192
    %344 = vmatprep.mubr.f32.mxu0 %v65
    %345 = vmatmul.mubr.f32.gmra.mrb[0].mxu0 %v64
    %v346 = vpop.f32.mrb[0].mxu0
    %v347 = vadd.f32 0.0, %v346
    %v348 = vpop.f32.mrb[0].mxu0
    %v349 = vadd.f32 0.0, %v348
    %350 = vdwg.mxu0
    %351 = vmatprep.subr.mxu0 %v197
    %352 = vmatpush1.msra.mxu0 %v196
    %353 = vmatprep.subr.mxu0 %v201
    %354 = vmatpush1.msra.mxu0 %v200
    %355 = vmatprep.subr.mxu0 %v205
    %356 = vmatpush1.msra.mxu0 %v204
    %357 = vmatprep.subr.mxu0 %v209
    %358 = vmatpush1.msra.mxu0 %v208
    %359 = vmatprep.subr.mxu0 %v213
    %360 = vmatpush1.msra.mxu0 %v212
    %361 = vmatprep.subr.mxu0 %v217
    %362 = vmatpush1.msra.mxu0 %v216
    %363 = vmatprep.subr.mxu0 %v221
    %364 = vmatpush1.msra.mxu0 %v220
    %365 = vmatprep.subr.mxu0 %v225
    %366 = vmatpush1.msra.mxu0 %v224
    %367 = vmatprep.subr.mxu0 %v229
    %368 = vmatpush1.msra.mxu0 %v228
    %369 = vmatprep.subr.mxu0 %v233
    %370 = vmatpush1.msra.mxu0 %v232
    %371 = vmatprep.subr.mxu0 %v237
    %372 = vmatpush1.msra.mxu0 %v236
    %373 = vmatprep.subr.mxu0 %v241
    %374 = vmatpush1.msra.mxu0 %v240
    %375 = vmatprep.subr.mxu0 %v245
    %376 = vmatpush1.msra.mxu0 %v244
    %377 = vmatprep.subr.mxu0 %v249
    %378 = vmatpush1.msra.mxu0 %v248
    %379 = vmatprep.subr.mxu0 %v253
    %380 = vmatpush1.msra.mxu0 %v252
    %381 = vmatprep.subr.mxu0 %v257
    %382 = vmatpush1.msra.mxu0 %v256
    %383 = vmatprep.subr.mxu0 %v261
    %384 = vmatpush1.msra.mxu0 %v260
    %385 = vmatprep.subr.mxu0 %v265
    %386 = vmatpush1.msra.mxu0 %v264
    %387 = vmatprep.subr.mxu0 %v269
    %388 = vmatpush1.msra.mxu0 %v268
    %389 = vmatprep.subr.mxu0 %v273
    %390 = vmatpush1.msra.mxu0 %v272
    %391 = vmatprep.subr.mxu0 0.0
    %392 = vmatpush1.msra.mxu0 0.0
    %393 = vmatprep.subr.mxu0 0.0
    %394 = vmatpush1.msra.mxu0 0.0
    %395 = vmatprep.subr.mxu0 0.0
    %396 = vmatpush1.msra.mxu0 0.0
    %397 = vmatprep.subr.mxu0 0.0
    %398 = vmatpush1.msra.mxu0 0.0
    %399 = vmatprep.subr.mxu0 0.0
    %400 = vmatpush1.msra.mxu0 0.0
    %401 = vmatprep.subr.mxu0 0.0
    %402 = vmatpush1.msra.mxu0 0.0
    %403 = vmatprep.subr.mxu0 0.0
    %404 = vmatpush1.msra.mxu0 0.0
    %405 = vmatprep.subr.mxu0 0.0
    %406 = vmatpush1.msra.mxu0 0.0
    %407 = vmatprep.subr.mxu0 0.0
    %408 = vmatpush1.msra.mxu0 0.0
    %409 = vmatprep.subr.mxu0 0.0
    %410 = vmatpush1.msra.mxu0 0.0
    %411 = vmatprep.subr.mxu0 0.0
    %412 = vmatpush1.msra.mxu0 0.0
    %413 = vmatprep.subr.mxu0 0.0
    %414 = vmatpush1.msra.mxu0 0.0
    %415 = vmatprep.mubr.f32.mxu0 %v278
    %416 = vmatmul.mubr.f32.gmra.mrb[0].mxu0 %v66
    %v417 = vpop.f32.mrb[0].mxu0
    %v418 = vadd.f32 %v347, %v417
    %v419 = vpop.f32.mrb[0].mxu0
    %v420 = vadd.f32 %v349, %v419
    %421 = vdwg.mxu0
    %422 = vmatprep.subr.mxu0 %v71
    %423 = vmatpush1.msra.mxu0 %v70
    %424 = vmatprep.subr.mxu0 %v75
    %425 = vmatpush1.msra.mxu0 %v74
    %426 = vmatprep.subr.mxu0 %v79
    %427 = vmatpush1.msra.mxu0 %v78
    %428 = vmatprep.subr.mxu0 %v83
    %429 = vmatpush1.msra.mxu0 %v82
    %430 = vmatprep.subr.mxu0 %v87
    %431 = vmatpush1.msra.mxu0 %v86
    %432 = vmatprep.subr.mxu0 %v91
    %433 = vmatpush1.msra.mxu0 %v90
    %434 = vmatprep.subr.mxu0 %v95
    %435 = vmatpush1.msra.mxu0 %v94
    %436 = vmatprep.subr.mxu0 %v99
    %437 = vmatpush1.msra.mxu0 %v98
    %438 = vmatprep.subr.mxu0 %v103
    %439 = vmatpush1.msra.mxu0 %v102
    %440 = vmatprep.subr.mxu0 %v107
    %441 = vmatpush1.msra.mxu0 %v106
    %442 = vmatprep.subr.mxu0 %v111
    %443 = vmatpush1.msra.mxu0 %v110
    %444 = vmatprep.subr.mxu0 %v115
    %445 = vmatpush1.msra.mxu0 %v114
    %446 = vmatprep.subr.mxu0 %v119
    %447 = vmatpush1.msra.mxu0 %v118
    %448 = vmatprep.subr.mxu0 %v123
    %449 = vmatpush1.msra.mxu0 %v122
    %450 = vmatprep.subr.mxu0 %v127
    %451 = vmatpush1.msra.mxu0 %v126
    %452 = vmatprep.subr.mxu0 %v131
    %453 = vmatpush1.msra.mxu0 %v130
    %454 = vmatprep.subr.mxu0 %v135
    %455 = vmatpush1.msra.mxu0 %v134
    %456 = vmatprep.subr.mxu0 %v139
    %457 = vmatpush1.msra.mxu0 %v138
    %458 = vmatprep.subr.mxu0 %v143
    %459 = vmatpush1.msra.mxu0 %v142
    %460 = vmatprep.subr.mxu0 %v147
    %461 = vmatpush1.msra.mxu0 %v146
    %462 = vmatprep.subr.mxu0 %v151
    %463 = vmatpush1.msra.mxu0 %v150
    %464 = vmatprep.subr.mxu0 %v155
    %465 = vmatpush1.msra.mxu0 %v154
    %466 = vmatprep.subr.mxu0 %v159
    %467 = vmatpush1.msra.mxu0 %v158
    %468 = vmatprep.subr.mxu0 %v163
    %469 = vmatpush1.msra.mxu0 %v162
    %470 = vmatprep.subr.mxu0 %v167
    %471 = vmatpush1.msra.mxu0 %v166
    %472 = vmatprep.subr.mxu0 %v171
    %473 = vmatpush1.msra.mxu0 %v170
    %474 = vmatprep.subr.mxu0 %v175
    %475 = vmatpush1.msra.mxu0 %v174
    %476 = vmatprep.subr.mxu0 %v179
    %477 = vmatpush1.msra.mxu0 %v178
    %478 = vmatprep.subr.mxu0 %v183
    %479 = vmatpush1.msra.mxu0 %v182
    %480 = vmatprep.subr.mxu0 %v187
    %481 = vmatpush1.msra.mxu0 %v186
    %482 = vmatprep.subr.mxu0 %v191
    %483 = vmatpush1.msra.mxu0 %v190
    %484 = vmatprep.subr.mxu0 %v195
    %485 = vmatpush1.msra.mxu0 %v194
    %486 = vmatprep.mubr.f32.mxu0 %v65
    %487 = vmatmul.mubr.f32.gmra.mrb[0].mxu0 %v64
    %v488 = vpop.f32.mrb[0].mxu0
    %v489 = vadd.f32 0.0, %v488
    %v490 = vpop.f32.mrb[0].mxu0
    %v491 = vadd.f32 0.0, %v490
    %492 = vdwg.mxu0
    %493 = vmatprep.subr.mxu0 %v199
    %494 = vmatpush1.msra.mxu0 %v198
    %495 = vmatprep.subr.mxu0 %v203
    %496 = vmatpush1.msra.mxu0 %v202
    %497 = vmatprep.subr.mxu0 %v207
    %498 = vmatpush1.msra.mxu0 %v206
    %499 = vmatprep.subr.mxu0 %v211
    %500 = vmatpush1.msra.mxu0 %v210
    %501 = vmatprep.subr.mxu0 %v215
    %502 = vmatpush1.msra.mxu0 %v214
    %503 = vmatprep.subr.mxu0 %v219
    %504 = vmatpush1.msra.mxu0 %v218
    %505 = vmatprep.subr.mxu0 %v223
    %506 = vmatpush1.msra.mxu0 %v222
    %507 = vmatprep.subr.mxu0 %v227
    %508 = vmatpush1.msra.mxu0 %v226
    %509 = vmatprep.subr.mxu0 %v231
    %510 = vmatpush1.msra.mxu0 %v230
    %511 = vmatprep.subr.mxu0 %v235
    %512 = vmatpush1.msra.mxu0 %v234
    %513 = vmatprep.subr.mxu0 %v239
    %514 = vmatpush1.msra.mxu0 %v238
    %515 = vmatprep.subr.mxu0 %v243
    %516 = vmatpush1.msra.mxu0 %v242
    %517 = vmatprep.subr.mxu0 %v247
    %518 = vmatpush1.msra.mxu0 %v246
    %519 = vmatprep.subr.mxu0 %v251
    %520 = vmatpush1.msra.mxu0 %v250
    %521 = vmatprep.subr.mxu0 %v255
    %522 = vmatpush1.msra.mxu0 %v254
    %523 = vmatprep.subr.mxu0 %v259
    %524 = vmatpush1.msra.mxu0 %v258
    %525 = vmatprep.subr.mxu0 %v263
    %526 = vmatpush1.msra.mxu0 %v262
    %527 = vmatprep.subr.mxu0 %v267
    %528 = vmatpush1.msra.mxu0 %v266
    %529 = vmatprep.subr.mxu0 %v271
    %530 = vmatpush1.msra.mxu0 %v270
    %531 = vmatprep.subr.mxu0 %v275
    %532 = vmatpush1.msra.mxu0 %v274
    %533 = vmatprep.subr.mxu0 0.0
    %534 = vmatpush1.msra.mxu0 0.0
    %535 = vmatprep.subr.mxu0 0.0
    %536 = vmatpush1.msra.mxu0 0.0
    %537 = vmatprep.subr.mxu0 0.0
    %538 = vmatpush1.msra.mxu0 0.0
    %539 = vmatprep.subr.mxu0 0.0
    %540 = vmatpush1.msra.mxu0 0.0
    %541 = vmatprep.subr.mxu0 0.0
    %542 = vmatpush1.msra.mxu0 0.0
    %543 = vmatprep.subr.mxu0 0.0
    %544 = vmatpush1.msra.mxu0 0.0
    %545 = vmatprep.subr.mxu0 0.0
    %546 = vmatpush1.msra.mxu0 0.0
    %547 = vmatprep.subr.mxu0 0.0
    %548 = vmatpush1.msra.mxu0 0.0
    %549 = vmatprep.subr.mxu0 0.0
    %550 = vmatpush1.msra.mxu0 0.0
    %551 = vmatprep.subr.mxu0 0.0
    %552 = vmatpush1.msra.mxu0 0.0
    %553 = vmatprep.subr.mxu0 0.0
    %554 = vmatpush1.msra.mxu0 0.0
    %555 = vmatprep.subr.mxu0 0.0
    %556 = vmatpush1.msra.mxu0 0.0
    %557 = vmatprep.mubr.f32.mxu0 %v278
    %558 = vmatmul.mubr.f32.gmra.mrb[0].mxu0 %v66
    %v559 = vpop.f32.mrb[0].mxu0
    %v560 = vadd.f32 %v489, %v559
    %v561 = vpop.f32.mrb[0].mxu0
    %v562 = vadd.f32 %v491, %v561
    %563 = vdwg.mxu0
    %v564 = vadd.f32 %v60, %v418
    %v565 = vadd.f32 %v61, %v420
    %v566 = vadd.f32 %v62, %v560
    %v567 = vadd.f32 %v63, %v562
    %568 = vst [vmem:[#allocation2] sm:$0xff] %v564
    %569 = vst [vmem:[#allocation2 + $0x8] sm:$0xff] %v565
    %570 = vst [vmem:[#allocation2 + $0x10] sm:$0xff] %v566
    %571 = vst [vmem:[#allocation2 + $0x18] sm:$0xff] %v567
    // Predicated region
    $region30: #{ae_cnn_forward.19} parent=1 // pred_check
      %p572 = pneg %p52
    $region31: #{ae_cnn_forward.19} parent=1 // pred_check_branch
      %574 = sbr.rel (%p572) target = $region33
    $region32: #{ae_cnn_forward.19} parent=1 // pred_region
      %v575 = vld [vmem:[#allocation2] sm:$0xff]
      %v576 = vld [vmem:[#allocation2 + $0x8] sm:$0xff]
      %v577 = vld [vmem:[#allocation2 + $0x10] sm:$0xff]
      %v578 = vld [vmem:[#allocation2 + $0x18] sm:$0xff]
      %v579 = vld [vmem:[#allocation8] sm:$0xf]
      %v581 = vlaneseq
      %v582 = vshrl.u32 %v581, 7
      %v583 = vsub.s32 0, %v582
      %v584 = vrot.slane %v579, %v583
      %v585 = vlaneseq
      %v586 = vshrl.u32 %v585, 7
      %v587 = vsub.s32 1, %v586
      %v588 = vrot.slane %v579, %v587
      %v589 = vlaneseq
      %v590 = vshrl.u32 %v589, 7
      %v591 = vsub.s32 2, %v590
      %v592 = vrot.slane %v579, %v591
      %v593 = vlaneseq
      %v594 = vshrl.u32 %v593, 7
      %v595 = vsub.s32 3, %v594
      %v596 = vrot.slane %v579, %v595
      %v601 = vadd.f32 %v575, %v584
      %v602 = vadd.f32 %v576, %v588
      %v603 = vadd.f32 %v577, %v592
      %v604 = vadd.f32 %v578, %v596
      %605 = vst [vmem:[#allocation9] sm:$0xff] %v601
      %606 = vst [vmem:[#allocation9 + $0x8] sm:$0xff] %v602
      %607 = vst [vmem:[#allocation9 + $0x10] sm:$0xff] %v603
      %608 = vst [vmem:[#allocation9 + $0x18] sm:$0xff] %v604
    $region33: #{ae_cnn_forward.19} parent=1 // pred_fallthru
      _
    // Predicated region
    $region34: #{ae_cnn_forward.19} parent=1 // pred_check
      _
    $region35: #{ae_cnn_forward.19} parent=1 // pred_check_branch
      %610 = sbr.rel (0) target = $region37
    $region36: #{ae_cnn_forward.19} parent=1 // pred_region
      %s612 = ssub.s32 512, 512
      %613 = vsyncadd [#allocation5], %s612
      %s615 = sshll.u32 [#allocation9], 4
      %s616 = int_to_ptr.vmem [resolvable:$true] %s615
      %618 = dma.vmem_to_hbm [thread:$0]  %s616, 512, %s3, [#allocation5]
    $region37: #{ae_cnn_forward.19} parent=1 // pred_fallthru
      _
    // Predicated region
    $region38: #{ae_cnn_forward.19} parent=1 // pred_check
      _
    $region39: #{ae_cnn_forward.19} parent=1 // pred_check_branch
      %620 = sbr.rel (0) target = $region41
    $region40: #{ae_cnn_forward.19} parent=1 // pred_region
      %621 = dma.done [#allocation5], 512
    $region41: #{ae_cnn_forward.19} parent=1 // pred_fallthru
      _
    %622 = vsyncpa [#allocation4], 1
    %623 = vsyncpa [#allocation7], 1
    %624 = vsyncpa [#allocation5], 1

// kernel: ae_cnn_forward.23
$region0: #{ae_cnn_forward.23}
  #allocation0 [shape = 'u32[]', space=smem, size = 0x4, offset = 0x4, fixed_abs, tag = 'smem constant byte address 0x4 - core index']
  #allocation1 [shape = 'u32[144,128]{1,0:T(1,128)}', space=vmem, size = 0x12000, scoped, tag = 'internal scratch']
  #allocation2 [shape = 'f32[32,128]{1,0:T(8,128)}', space=vmem, size = 0x4000, scoped, tag = 'scratch operand']
  %s0 = inlined_call_operand.hbm [shape: f32[32,416], index: 0, kind: input, shape index: {}]
  %s1 = inlined_call_operand.hbm [shape: f32[416,128], index: 1, kind: input, shape index: {}]
  %s2 = inlined_call_operand.hbm [shape: f32[32,1], index: 2, kind: input, shape index: {}]
  %s3 = inlined_call_operand.hbm [shape: f32[32,128], index: 3, kind: output, shape index: {}]
  %s4 = sld [smem:[#allocation0]]
  $region42: #{ae_cnn_forward.23} parent=0
    _
  %s6 = ssub.s32 1, %s4
  %s7 = scalar_select 0, %s6, %s4
  $region1: #{ae_cnn_forward.23} parent=0
    #allocation3 [shape = 'u8[65536]{0}', space=vmem, size = 0x10000, scoped, tag = 'input window, operand 0, single buffered']
    #allocation4 [shape = 's32[1]{0}', space=sflag, size = 0x4, scoped, tag = 'scoped memory for ae_cnn_forward.23']
    #allocation5 [shape = 's32[1]{0}', space=sflag, size = 0x4, scoped, tag = 'scoped memory for ae_cnn_forward.23']
    #allocation6 [shape = 'u8[212992]{0}', space=vmem, size = 0x34000, scoped, tag = 'input window, operand 1, single buffered']
    #allocation7 [shape = 's32[1]{0}', space=sflag, size = 0x4, scoped, tag = 'scoped memory for ae_cnn_forward.23']
    #allocation8 [shape = 'u8[16384]{0}', space=vmem, size = 0x4000, scoped, tag = 'input window, operand 2, single buffered']
    #allocation9 [shape = 'u8[16384]{0}', space=vmem, size = 0x4000, scoped, tag = 'output window, operand 0, single buffered']
    %8 = vsyncpa [#allocation4], 0
    %9 = vsyncpa [#allocation7], 0
    %10 = vsyncpa [#allocation5], 0
    // Predicated region
    $region2: #{ae_cnn_forward.23} parent=1 // pred_check
      _
    $region3: #{ae_cnn_forward.23} parent=1 // pred_check_branch
      %12 = sbr.rel (0) target = $region5
    $region4: #{ae_cnn_forward.23} parent=1 // pred_region
      %s14 = ssub.s32 2048, 2048
      %15 = vsyncadd [#allocation4], %s14
      %s16 = sshll.u32 [#allocation3], 4
      %s17 = int_to_ptr.vmem [resolvable:$true] %s16
      %22 = dma.hbm_to_vmem [thread:$0]  %s0, 2048, %s17, [#allocation4], 512, 512, 32
    $region5: #{ae_cnn_forward.23} parent=1 // pred_fallthru
      _
    // Predicated region
    $region6: #{ae_cnn_forward.23} parent=1 // pred_check
      _
    $region7: #{ae_cnn_forward.23} parent=1 // pred_check_branch
      %24 = sbr.rel (0) target = $region9
    $region8: #{ae_cnn_forward.23} parent=1 // pred_region
      %s26 = ssub.s32 6656, 6656
      %27 = vsyncadd [#allocation7], %s26
      %s28 = sshll.u32 [#allocation6], 4
      %s29 = int_to_ptr.vmem [resolvable:$true] %s28
      %34 = dma.hbm_to_vmem [thread:$0]  %s1, 6656, %s29, [#allocation7], 128, 128, 8
    $region9: #{ae_cnn_forward.23} parent=1 // pred_fallthru
      _
    // Predicated region
    $region10: #{ae_cnn_forward.23} parent=1 // pred_check
      _
    $region11: #{ae_cnn_forward.23} parent=1 // pred_check_branch
      %36 = sbr.rel (0) target = $region13
    $region12: #{ae_cnn_forward.23} parent=1 // pred_region
      %s38 = ssub.s32 512, 512
      %39 = vsyncadd [#allocation7], %s38
      %s40 = sshll.u32 [#allocation8], 4
      %s41 = int_to_ptr.vmem [resolvable:$true] %s40
      %46 = dma.hbm_to_vmem [thread:$0]  %s2, 512, %s41, [#allocation7], 128, 128, 8
    $region13: #{ae_cnn_forward.23} parent=1 // pred_fallthru
      _
    // Predicated region
    $region14: #{ae_cnn_forward.23} parent=1 // pred_check
      _
    $region15: #{ae_cnn_forward.23} parent=1 // pred_check_branch
      %48 = sbr.rel (0) target = $region17
    $region16: #{ae_cnn_forward.23} parent=1 // pred_region
      %49 = dma.done [#allocation4], 2048
    $region17: #{ae_cnn_forward.23} parent=1 // pred_fallthru
      _
    // Predicated region
    $region18: #{ae_cnn_forward.23} parent=1 // pred_check
      _
    $region19: #{ae_cnn_forward.23} parent=1 // pred_check_branch
      %51 = sbr.rel (0) target = $region21
    $region20: #{ae_cnn_forward.23} parent=1 // pred_region
      %52 = dma.done [#allocation7], 6656
    $region21: #{ae_cnn_forward.23} parent=1 // pred_fallthru
      _
    // Predicated region
    $region22: #{ae_cnn_forward.23} parent=1 // pred_check
      _
    $region23: #{ae_cnn_forward.23} parent=1 // pred_check_branch
      %54 = sbr.rel (0) target = $region25
    $region24: #{ae_cnn_forward.23} parent=1 // pred_region
      %55 = dma.done [#allocation7], 512
    $region25: #{ae_cnn_forward.23} parent=1 // pred_fallthru
      _
    %p56 = scmp.eq.s32.totalorder 0, 0
    // Predicated region
    $region26: #{ae_cnn_forward.23} parent=1 // pred_check
      %p57 = pneg %p56
    $region27: #{ae_cnn_forward.23} parent=1 // pred_check_branch
      %59 = sbr.rel (%p57) target = $region29
    $region28: #{ae_cnn_forward.23} parent=1 // pred_region
      %60 = vst [vmem:[#allocation2] sm:$0xff] 0.0
      %61 = vst [vmem:[#allocation2 + $0x8] sm:$0xff] 0.0
      %62 = vst [vmem:[#allocation2 + $0x10] sm:$0xff] 0.0
      %63 = vst [vmem:[#allocation2 + $0x18] sm:$0xff] 0.0
    $region29: #{ae_cnn_forward.23} parent=1 // pred_fallthru
      _
    %v64 = vld [vmem:[#allocation2] sm:$0xff]
    %v65 = vld [vmem:[#allocation2 + $0x8] sm:$0xff]
    %v66 = vld [vmem:[#allocation2 + $0x10] sm:$0xff]
    %v67 = vld [vmem:[#allocation2 + $0x18] sm:$0xff]
    %v68 = vld [vmem:[#allocation3] sm:$0xff]
    %v69 = vld [vmem:[#allocation3 + $0x8] sm:$0xff]
    %v70 = vld [vmem:[#allocation3 + $0x10] sm:$0xff]
    %v71 = vld [vmem:[#allocation3 + $0x18] sm:$0xff]
    %v72 = vld [vmem:[#allocation3 + $0x20] sm:$0xff]
    %v73 = vld [vmem:[#allocation3 + $0x28] sm:$0xff]
    %v74 = vld [vmem:[#allocation3 + $0x30] sm:$0xff]
    %v75 = vld [vmem:[#allocation3 + $0x38] sm:$0xff]
    %v76 = vld [vmem:[#allocation3 + $0x40] sm:$0xff]
    %v77 = vld [vmem:[#allocation3 + $0x48] sm:$0xff]
    %v78 = vld [vmem:[#allocation3 + $0x50] sm:$0xff]
    %v79 = vld [vmem:[#allocation3 + $0x58] sm:$0xff]
    %v80 = vld [vmem:[#allocation3 + $0x60] sm:$0xff]
    %v81 = vld [vmem:[#allocation3 + $0x68] sm:$0xff]
    %v82 = vld [vmem:[#allocation3 + $0x70] sm:$0xff]
    %v83 = vld [vmem:[#allocation3 + $0x78] sm:$0xff]
    %v84 = vld [vmem:[#allocation6] sm:$0xff]
    %v85 = vld [vmem:[#allocation6 + $0x8] sm:$0xff]
    %v86 = vld [vmem:[#allocation6 + $0x10] sm:$0xff]
    %v87 = vld [vmem:[#allocation6 + $0x18] sm:$0xff]
    %v88 = vld [vmem:[#allocation6 + $0x20] sm:$0xff]
    %v89 = vld [vmem:[#allocation6 + $0x28] sm:$0xff]
    %v90 = vld [vmem:[#allocation6 + $0x30] sm:$0xff]
    %v91 = vld [vmem:[#allocation6 + $0x38] sm:$0xff]
    %v92 = vld [vmem:[#allocation6 + $0x40] sm:$0xff]
    %v93 = vld [vmem:[#allocation6 + $0x48] sm:$0xff]
    %v94 = vld [vmem:[#allocation6 + $0x50] sm:$0xff]
    %v95 = vld [vmem:[#allocation6 + $0x58] sm:$0xff]
    %v96 = vld [vmem:[#allocation6 + $0x60] sm:$0xff]
    %v97 = vld [vmem:[#allocation6 + $0x68] sm:$0xff]
    %v98 = vld [vmem:[#allocation6 + $0x70] sm:$0xff]
    %v99 = vld [vmem:[#allocation6 + $0x78] sm:$0xff]
    %v100 = vld [vmem:[#allocation6 + $0x80] sm:$0xff]
    %v101 = vld [vmem:[#allocation6 + $0x88] sm:$0xff]
    %v102 = vld [vmem:[#allocation6 + $0x90] sm:$0xff]
    %v103 = vld [vmem:[#allocation6 + $0x98] sm:$0xff]
    %v104 = vld [vmem:[#allocation6 + $0xa0] sm:$0xff]
    %v105 = vld [vmem:[#allocation6 + $0xa8] sm:$0xff]
    %v106 = vld [vmem:[#allocation6 + $0xb0] sm:$0xff]
    %v107 = vld [vmem:[#allocation6 + $0xb8] sm:$0xff]
    %v108 = vld [vmem:[#allocation6 + $0xc0] sm:$0xff]
    %v109 = vld [vmem:[#allocation6 + $0xc8] sm:$0xff]
    %v110 = vld [vmem:[#allocation6 + $0xd0] sm:$0xff]
    %v111 = vld [vmem:[#allocation6 + $0xd8] sm:$0xff]
    %v112 = vld [vmem:[#allocation6 + $0xe0] sm:$0xff]
    %v113 = vld [vmem:[#allocation6 + $0xe8] sm:$0xff]
    %v114 = vld [vmem:[#allocation6 + $0xf0] sm:$0xff]
    %v115 = vld [vmem:[#allocation6 + $0xf8] sm:$0xff]
    %v116 = vld [vmem:[#allocation6 + $0x100] sm:$0xff]
    %v117 = vld [vmem:[#allocation6 + $0x108] sm:$0xff]
    %v118 = vld [vmem:[#allocation6 + $0x110] sm:$0xff]
    %v119 = vld [vmem:[#allocation6 + $0x118] sm:$0xff]
    %v120 = vld [vmem:[#allocation6 + $0x120] sm:$0xff]
    %v121 = vld [vmem:[#allocation6 + $0x128] sm:$0xff]
    %v122 = vld [vmem:[#allocation6 + $0x130] sm:$0xff]
    %v123 = vld [vmem:[#allocation6 + $0x138] sm:$0xff]
    %v124 = vld [vmem:[#allocation6 + $0x140] sm:$0xff]
    %v125 = vld [vmem:[#allocation6 + $0x148] sm:$0xff]
    %v126 = vld [vmem:[#allocation6 + $0x150] sm:$0xff]
    %v127 = vld [vmem:[#allocation6 + $0x158] sm:$0xff]
    %v128 = vld [vmem:[#allocation6 + $0x160] sm:$0xff]
    %v129 = vld [vmem:[#allocation6 + $0x168] sm:$0xff]
    %v130 = vld [vmem:[#allocation6 + $0x170] sm:$0xff]
    %v131 = vld [vmem:[#allocation6 + $0x178] sm:$0xff]
    %v132 = vld [vmem:[#allocation6 + $0x180] sm:$0xff]
    %v133 = vld [vmem:[#allocation6 + $0x188] sm:$0xff]
    %v134 = vld [vmem:[#allocation6 + $0x190] sm:$0xff]
    %v135 = vld [vmem:[#allocation6 + $0x198] sm:$0xff]
    %vm136 = vcmask 261120
    %v138 = vsel %vm136, %v71, 0
    %v141 = vsel %vm136, %v75, 0
    %v144 = vsel %vm136, %v79, 0
    %v147 = vsel %vm136, %v83, 0
    %149 = vmatprep.subr.mxu0 0.0
    %150 = vmatpush1.msra.mxu0 %v84
    %151 = vmatprep.subr.mxu0 0.0
    %152 = vmatpush1.msra.mxu0 %v85
    %153 = vmatprep.subr.mxu0 0.0
    %154 = vmatpush1.msra.mxu0 %v86
    %155 = vmatprep.subr.mxu0 0.0
    %156 = vmatpush1.msra.mxu0 %v87
    %157 = vmatprep.subr.mxu0 0.0
    %158 = vmatpush1.msra.mxu0 %v88
    %159 = vmatprep.subr.mxu0 0.0
    %160 = vmatpush1.msra.mxu0 %v89
    %161 = vmatprep.subr.mxu0 0.0
    %162 = vmatpush1.msra.mxu0 %v90
    %163 = vmatprep.subr.mxu0 0.0
    %164 = vmatpush1.msra.mxu0 %v91
    %165 = vmatprep.subr.mxu0 0.0
    %166 = vmatpush1.msra.mxu0 %v92
    %167 = vmatprep.subr.mxu0 0.0
    %168 = vmatpush1.msra.mxu0 %v93
    %169 = vmatprep.subr.mxu0 0.0
    %170 = vmatpush1.msra.mxu0 %v94
    %171 = vmatprep.subr.mxu0 0.0
    %172 = vmatpush1.msra.mxu0 %v95
    %173 = vmatprep.subr.mxu0 0.0
    %174 = vmatpush1.msra.mxu0 %v96
    %175 = vmatprep.subr.mxu0 0.0
    %176 = vmatpush1.msra.mxu0 %v97
    %177 = vmatprep.subr.mxu0 0.0
    %178 = vmatpush1.msra.mxu0 %v98
    %179 = vmatprep.subr.mxu0 0.0
    %180 = vmatpush1.msra.mxu0 %v99
    %181 = vmatprep.subr.mxu0 0.0
    %182 = vmatpush1.msra.mxu0 %v100
    %183 = vmatprep.subr.mxu0 0.0
    %184 = vmatpush1.msra.mxu0 %v101
    %185 = vmatprep.subr.mxu0 0.0
    %186 = vmatpush1.msra.mxu0 %v102
    %187 = vmatprep.subr.mxu0 0.0
    %188 = vmatpush1.msra.mxu0 %v103
    %189 = vmatprep.subr.mxu0 0.0
    %190 = vmatpush1.msra.mxu0 %v104
    %191 = vmatprep.subr.mxu0 0.0
    %192 = vmatpush1.msra.mxu0 %v105
    %193 = vmatprep.subr.mxu0 0.0
    %194 = vmatpush1.msra.mxu0 %v106
    %195 = vmatprep.subr.mxu0 0.0
    %196 = vmatpush1.msra.mxu0 %v107
    %197 = vmatprep.subr.mxu0 0.0
    %198 = vmatpush1.msra.mxu0 %v108
    %199 = vmatprep.subr.mxu0 0.0
    %200 = vmatpush1.msra.mxu0 %v109
    %201 = vmatprep.subr.mxu0 0.0
    %202 = vmatpush1.msra.mxu0 %v110
    %203 = vmatprep.subr.mxu0 0.0
    %204 = vmatpush1.msra.mxu0 %v111
    %205 = vmatprep.subr.mxu0 0.0
    %206 = vmatpush1.msra.mxu0 %v112
    %207 = vmatprep.subr.mxu0 0.0
    %208 = vmatpush1.msra.mxu0 %v113
    %209 = vmatprep.subr.mxu0 0.0
    %210 = vmatpush1.msra.mxu0 %v114
    %211 = vmatprep.subr.mxu0 0.0
    %212 = vmatpush1.msra.mxu0 %v115
    %213 = vmatprep.mubr.f32.mxu0 %v69
    %214 = vmatmul.mubr.f32.gmra.mrb[0].mxu0 %v68
    %v215 = vpop.f32.mrb[0].mxu0
    %v216 = vadd.f32 0.0, %v215
    %v217 = vpop.f32.mrb[0].mxu0
    %218 = vmatprep.mubr.f32.mxu0 %v73
    %219 = vmatmul.mubr.f32.gmra.mrb[0].mxu0 %v72
    %v220 = vpop.f32.mrb[0].mxu0
    %v221 = vadd.f32 0.0, %v220
    %v222 = vpop.f32.mrb[0].mxu0
    %223 = vmatprep.mubr.f32.mxu0 %v77
    %224 = vmatmul.mubr.f32.gmra.mrb[0].mxu0 %v76
    %v225 = vpop.f32.mrb[0].mxu0
    %v226 = vadd.f32 0.0, %v225
    %v227 = vpop.f32.mrb[0].mxu0
    %228 = vmatprep.mubr.f32.mxu0 %v81
    %229 = vmatmul.mubr.f32.gmra.mrb[0].mxu0 %v80
    %v230 = vpop.f32.mrb[0].mxu0
    %v231 = vadd.f32 0.0, %v230
    %v232 = vpop.f32.mrb[0].mxu0
    %233 = vdwg.mxu0
    %234 = vmatprep.subr.mxu0 0.0
    %235 = vmatpush1.msra.mxu0 %v116
    %236 = vmatprep.subr.mxu0 0.0
    %237 = vmatpush1.msra.mxu0 %v117
    %238 = vmatprep.subr.mxu0 0.0
    %239 = vmatpush1.msra.mxu0 %v118
    %240 = vmatprep.subr.mxu0 0.0
    %241 = vmatpush1.msra.mxu0 %v119
    %242 = vmatprep.subr.mxu0 0.0
    %243 = vmatpush1.msra.mxu0 %v120
    %244 = vmatprep.subr.mxu0 0.0
    %245 = vmatpush1.msra.mxu0 %v121
    %246 = vmatprep.subr.mxu0 0.0
    %247 = vmatpush1.msra.mxu0 %v122
    %248 = vmatprep.subr.mxu0 0.0
    %249 = vmatpush1.msra.mxu0 %v123
    %250 = vmatprep.subr.mxu0 0.0
    %251 = vmatpush1.msra.mxu0 %v124
    %252 = vmatprep.subr.mxu0 0.0
    %253 = vmatpush1.msra.mxu0 %v125
    %254 = vmatprep.subr.mxu0 0.0
    %255 = vmatpush1.msra.mxu0 %v126
    %256 = vmatprep.subr.mxu0 0.0
    %257 = vmatpush1.msra.mxu0 %v127
    %258 = vmatprep.subr.mxu0 0.0
    %259 = vmatpush1.msra.mxu0 %v128
    %260 = vmatprep.subr.mxu0 0.0
    %261 = vmatpush1.msra.mxu0 %v129
    %262 = vmatprep.subr.mxu0 0.0
    %263 = vmatpush1.msra.mxu0 %v130
    %264 = vmatprep.subr.mxu0 0.0
    %265 = vmatpush1.msra.mxu0 %v131
    %266 = vmatprep.subr.mxu0 0.0
    %267 = vmatpush1.msra.mxu0 %v132
    %268 = vmatprep.subr.mxu0 0.0
    %269 = vmatpush1.msra.mxu0 %v133
    %270 = vmatprep.subr.mxu0 0.0
    %271 = vmatpush1.msra.mxu0 %v134
    %272 = vmatprep.subr.mxu0 0.0
    %273 = vmatpush1.msra.mxu0 %v135
    %274 = vmatprep.subr.mxu0 0.0
    %275 = vmatpush1.msra.mxu0 0.0
    %276 = vmatprep.subr.mxu0 0.0
    %277 = vmatpush1.msra.mxu0 0.0
    %278 = vmatprep.subr.mxu0 0.0
    %279 = vmatpush1.msra.mxu0 0.0
    %280 = vmatprep.subr.mxu0 0.0
    %281 = vmatpush1.msra.mxu0 0.0
    %282 = vmatprep.subr.mxu0 0.0
    %283 = vmatpush1.msra.mxu0 0.0
    %284 = vmatprep.subr.mxu0 0.0
    %285 = vmatpush1.msra.mxu0 0.0
    %286 = vmatprep.subr.mxu0 0.0
    %287 = vmatpush1.msra.mxu0 0.0
    %288 = vmatprep.subr.mxu0 0.0
    %289 = vmatpush1.msra.mxu0 0.0
    %290 = vmatprep.subr.mxu0 0.0
    %291 = vmatpush1.msra.mxu0 0.0
    %292 = vmatprep.subr.mxu0 0.0
    %293 = vmatpush1.msra.mxu0 0.0
    %294 = vmatprep.subr.mxu0 0.0
    %295 = vmatpush1.msra.mxu0 0.0
    %296 = vmatprep.subr.mxu0 0.0
    %297 = vmatpush1.msra.mxu0 0.0
    %298 = vmatprep.mubr.f32.mxu0 %v138
    %299 = vmatmul.mubr.f32.gmra.mrb[0].mxu0 %v70
    %v300 = vpop.f32.mrb[0].mxu0
    %v301 = vadd.f32 %v216, %v300
    %v302 = vpop.f32.mrb[0].mxu0
    %303 = vmatprep.mubr.f32.mxu0 %v141
    %304 = vmatmul.mubr.f32.gmra.mrb[0].mxu0 %v74
    %v305 = vpop.f32.mrb[0].mxu0
    %v306 = vadd.f32 %v221, %v305
    %v307 = vpop.f32.mrb[0].mxu0
    %308 = vmatprep.mubr.f32.mxu0 %v144
    %309 = vmatmul.mubr.f32.gmra.mrb[0].mxu0 %v78
    %v310 = vpop.f32.mrb[0].mxu0
    %v311 = vadd.f32 %v226, %v310
    %v312 = vpop.f32.mrb[0].mxu0
    %313 = vmatprep.mubr.f32.mxu0 %v147
    %314 = vmatmul.mubr.f32.gmra.mrb[0].mxu0 %v82
    %v315 = vpop.f32.mrb[0].mxu0
    %v316 = vadd.f32 %v231, %v315
    %v317 = vpop.f32.mrb[0].mxu0
    %318 = vdwg.mxu0
    %v319 = vadd.f32 %v64, %v301
    %v320 = vadd.f32 %v65, %v306
    %v321 = vadd.f32 %v66, %v311
    %v322 = vadd.f32 %v67, %v316
    %323 = vst [vmem:[#allocation2] sm:$0xff] %v319
    %324 = vst [vmem:[#allocation2 + $0x8] sm:$0xff] %v320
    %325 = vst [vmem:[#allocation2 + $0x10] sm:$0xff] %v321
    %326 = vst [vmem:[#allocation2 + $0x18] sm:$0xff] %v322
    // Predicated region
    $region30: #{ae_cnn_forward.23} parent=1 // pred_check
      %p327 = pneg %p56
    $region31: #{ae_cnn_forward.23} parent=1 // pred_check_branch
      %329 = sbr.rel (%p327) target = $region33
    $region32: #{ae_cnn_forward.23} parent=1 // pred_region
      %v330 = vld [vmem:[#allocation2] sm:$0xff]
      %v331 = vld [vmem:[#allocation2 + $0x8] sm:$0xff]
      %v332 = vld [vmem:[#allocation2 + $0x10] sm:$0xff]
      %v333 = vld [vmem:[#allocation2 + $0x18] sm:$0xff]
      %v334 = vld [vmem:[#allocation8] sm:$0xff]
      %v335 = vld [vmem:[#allocation8 + $0x8] sm:$0xff]
      %v336 = vld [vmem:[#allocation8 + $0x10] sm:$0xff]
      %v337 = vld [vmem:[#allocation8 + $0x18] sm:$0xff]
      %339 = vset.pattern.permute.xlu0 0
      %340 = vperm.xlu0 %339, %v334
      %v341 = vpop.permute.xlu0 %340
      %344 = vset.pattern.permute.xlu0 0
      %345 = vperm.xlu0 %344, %v335
      %v346 = vpop.permute.xlu0 %345
      %349 = vset.pattern.permute.xlu0 0
      %350 = vperm.xlu0 %349, %v336
      %v351 = vpop.permute.xlu0 %350
      %354 = vset.pattern.permute.xlu0 0
      %355 = vperm.xlu0 %354, %v337
      %v356 = vpop.permute.xlu0 %355
      %v358 = vadd.f32 %v330, %v341
      %v359 = vadd.f32 %v331, %v346
      %v360 = vadd.f32 %v332, %v351
      %v361 = vadd.f32 %v333, %v356
      %v362 = vmax.f32 %v358, 0.0
      %v363 = vmax.f32 %v359, 0.0
      %v364 = vmax.f32 %v360, 0.0
      %v365 = vmax.f32 %v361, 0.0
      %366 = vst [vmem:[#allocation9] sm:$0xff] %v362
      %367 = vst [vmem:[#allocation9 + $0x8] sm:$0xff] %v363
      %368 = vst [vmem:[#allocation9 + $0x10] sm:$0xff] %v364
      %369 = vst [vmem:[#allocation9 + $0x18] sm:$0xff] %v365
    $region33: #{ae_cnn_forward.23} parent=1 // pred_fallthru
      _
    // Predicated region
    $region34: #{ae_cnn_forward.23} parent=1 // pred_check
      _
    $region35: #{ae_cnn_forward.23} parent=1 // pred_check_branch
      %371 = sbr.rel (0) target = $region37
    $region36: #{ae_cnn_forward.23} parent=1 // pred_region
      %s373 = ssub.s32 512, 512
      %374 = vsyncadd [#allocation5], %s373
      %s375 = sshll.u32 [#allocation9], 4
      %s376 = int_to_ptr.vmem [resolvable:$true] %s375
      %381 = dma.vmem_to_hbm [thread:$0]  %s376, 512, %s3, [#allocation5], 128, 128, 8
    $region37: #{ae_cnn_forward.23} parent=1 // pred_fallthru
      _
    // Predicated region
    $region38: #{ae_cnn_forward.23} parent=1 // pred_check
      _
    $region39: #{ae_cnn_forward.23} parent=1 // pred_check_branch
      %383 = sbr.rel (0) target = $region41
    $region40: #{ae_cnn_forward.23} parent=1 // pred_region
      %384 = dma.done [#allocation5], 512
    $region41: #{ae_cnn_forward.23} parent=1 // pred_fallthru
      _
    %385 = vsyncpa [#allocation4], 1
    %386 = vsyncpa [#allocation7], 1
    %387 = vsyncpa [#allocation5], 1

// kernel: ae_cnn_forward.27
$region0: #{ae_cnn_forward.27}
  #allocation0 [shape = 'u32[]', space=smem, size = 0x4, offset = 0x4, fixed_abs, tag = 'smem constant byte address 0x4 - core index']
  #allocation1 [shape = 'u32[144,128]{1,0:T(1,128)}', space=vmem, size = 0x12000, scoped, tag = 'internal scratch']
  #allocation2 [shape = 'f32[64,512]{1,0:T(8,128)}', space=vmem, size = 0x20000, scoped, tag = 'scratch operand']
  %s0 = inlined_call_operand.hbm [shape: f32[64,512], index: 0, kind: input, shape index: {}]
  %s1 = inlined_call_operand.hbm [shape: f32[512,512], index: 1, kind: input, shape index: {}]
  %s2 = inlined_call_operand.hbm [shape: f32[64,1], index: 2, kind: input, shape index: {}]
  %s3 = inlined_call_operand.hbm [shape: f32[64,512], index: 3, kind: output, shape index: {}]
  %s4 = sld [smem:[#allocation0]]
  $region42: #{ae_cnn_forward.27} parent=0
    _
  %s6 = ssub.s32 1, %s4
  %s7 = scalar_select 0, %s6, %s4
  $region1: #{ae_cnn_forward.27} parent=0
    #allocation3 [shape = 'u8[131072]{0}', space=vmem, size = 0x20000, scoped, tag = 'input window, operand 0, single buffered']
    #allocation4 [shape = 's32[1]{0}', space=sflag, size = 0x4, scoped, tag = 'scoped memory for ae_cnn_forward.27']
    #allocation5 [shape = 's32[1]{0}', space=sflag, size = 0x4, scoped, tag = 'scoped memory for ae_cnn_forward.27']
    #allocation6 [shape = 'u8[1048576]{0}', space=vmem, size = 0x100000, scoped, tag = 'input window, operand 1, single buffered']
    #allocation7 [shape = 's32[1]{0}', space=sflag, size = 0x4, scoped, tag = 'scoped memory for ae_cnn_forward.27']
    #allocation8 [shape = 'u8[32768]{0}', space=vmem, size = 0x8000, scoped, tag = 'input window, operand 2, single buffered']
    #allocation9 [shape = 'u8[131072]{0}', space=vmem, size = 0x20000, scoped, tag = 'output window, operand 0, single buffered']
    %8 = vsyncpa [#allocation4], 0
    %9 = vsyncpa [#allocation7], 0
    %10 = vsyncpa [#allocation5], 0
    // Predicated region
    $region2: #{ae_cnn_forward.27} parent=1 // pred_check
      _
    $region3: #{ae_cnn_forward.27} parent=1 // pred_check_branch
      %12 = sbr.rel (0) target = $region5
    $region4: #{ae_cnn_forward.27} parent=1 // pred_region
      %s14 = ssub.s32 4096, 4096
      %15 = vsyncadd [#allocation4], %s14
      %s16 = sshll.u32 [#allocation3], 4
      %s17 = int_to_ptr.vmem [resolvable:$true] %s16
      %22 = dma.hbm_to_vmem [thread:$0]  %s0, 4096, %s17, [#allocation4], 512, 512, 32
    $region5: #{ae_cnn_forward.27} parent=1 // pred_fallthru
      _
    // Predicated region
    $region6: #{ae_cnn_forward.27} parent=1 // pred_check
      _
    $region7: #{ae_cnn_forward.27} parent=1 // pred_check_branch
      %24 = sbr.rel (0) target = $region9
    $region8: #{ae_cnn_forward.27} parent=1 // pred_region
      %s26 = ssub.s32 32768, 32768
      %27 = vsyncadd [#allocation7], %s26
      %s28 = sshll.u32 [#allocation6], 4
      %s29 = int_to_ptr.vmem [resolvable:$true] %s28
      %34 = dma.hbm_to_vmem [thread:$0]  %s1, 32768, %s29, [#allocation7], 512, 512, 32
    $region9: #{ae_cnn_forward.27} parent=1 // pred_fallthru
      _
    // Predicated region
    $region10: #{ae_cnn_forward.27} parent=1 // pred_check
      _
    $region11: #{ae_cnn_forward.27} parent=1 // pred_check_branch
      %36 = sbr.rel (0) target = $region13
    $region12: #{ae_cnn_forward.27} parent=1 // pred_region
      %s38 = ssub.s32 1024, 1024
      %39 = vsyncadd [#allocation7], %s38
      %s40 = sshll.u32 [#allocation8], 4
      %s41 = int_to_ptr.vmem [resolvable:$true] %s40
      %46 = dma.hbm_to_vmem [thread:$0]  %s2, 1024, %s41, [#allocation7], 128, 128, 8
    $region13: #{ae_cnn_forward.27} parent=1 // pred_fallthru
      _
    // Predicated region
    $region14: #{ae_cnn_forward.27} parent=1 // pred_check
      _
    $region15: #{ae_cnn_forward.27} parent=1 // pred_check_branch
      %48 = sbr.rel (0) target = $region17
    $region16: #{ae_cnn_forward.27} parent=1 // pred_region
      %49 = dma.done [#allocation4], 4096
    $region17: #{ae_cnn_forward.27} parent=1 // pred_fallthru
      _
    // Predicated region
    $region18: #{ae_cnn_forward.27} parent=1 // pred_check
      _
    $region19: #{ae_cnn_forward.27} parent=1 // pred_check_branch
      %51 = sbr.rel (0) target = $region21
    $region20: #{ae_cnn_forward.27} parent=1 // pred_region
      %52 = dma.done [#allocation7], 32768
    $region21: #{ae_cnn_forward.27} parent=1 // pred_fallthru
      _
    // Predicated region
    $region22: #{ae_cnn_forward.27} parent=1 // pred_check
      _
    $region23: #{ae_cnn_forward.27} parent=1 // pred_check_branch
      %54 = sbr.rel (0) target = $region25
    $region24: #{ae_cnn_forward.27} parent=1 // pred_region
      %55 = dma.done [#allocation7], 1024
    $region25: #{ae_cnn_forward.27} parent=1 // pred_fallthru
      _
    %p56 = scmp.eq.s32.totalorder 0, 0
    // Predicated region
    $region26: #{ae_cnn_forward.27} parent=1 // pred_check
      %p57 = pneg %p56
    $region27: #{ae_cnn_forward.27} parent=1 // pred_check_branch
      %59 = sbr.rel (%p57) target = $region29
    $region28: #{ae_cnn_forward.27} parent=1 // pred_region
      %60 = vst [vmem:[#allocation2] sm:$0xff] 0.0
      %61 = vst [vmem:[#allocation2 + $0x8] sm:$0xff] 0.0
      %62 = vst [vmem:[#allocation2 + $0x10] sm:$0xff] 0.0
      %63 = vst [vmem:[#allocation2 + $0x18] sm:$0xff] 0.0
      %64 = vst [vmem:[#allocation2 + $0x20] sm:$0xff] 0.0
      %65 = vst [vmem:[#allocation2 + $0x28] sm:$0xff] 0.0
      %66 = vst [vmem:[#allocation2 + $0x30] sm:$0xff] 0.0
      %67 = vst [vmem:[#allocation2 + $0x38] sm:$0xff] 0.0
      %68 = vst [vmem:[#allocation2 + $0x40] sm:$0xff] 0.0
      %69 = vst [vmem:[#allocation2 + $0x48] sm:$0xff] 0.0
      %70 = vst [vmem:[#allocation2 + $0x50] sm:$0xff] 0.0
      %71 = vst [vmem:[#allocation2 + $0x58] sm:$0xff] 0.0
      %72 = vst [vmem:[#allocation2 + $0x60] sm:$0xff] 0.0
      %73 = vst [vmem:[#allocation2 + $0x68] sm:$0xff] 0.0
      %74 = vst [vmem:[#allocation2 + $0x70] sm:$0xff] 0.0
      %75 = vst [vmem:[#allocation2 + $0x78] sm:$0xff] 0.0
      %76 = vst [vmem:[#allocation2 + $0x80] sm:$0xff] 0.0
      %77 = vst [vmem:[#allocation2 + $0x88] sm:$0xff] 0.0
      %78 = vst [vmem:[#allocation2 + $0x90] sm:$0xff] 0.0
      %79 = vst [vmem:[#allocation2 + $0x98] sm:$0xff] 0.0
      %80 = vst [vmem:[#allocation2 + $0xa0] sm:$0xff] 0.0
      %81 = vst [vmem:[#allocation2 + $0xa8] sm:$0xff] 0.0
      %82 = vst [vmem:[#allocation2 + $0xb0] sm:$0xff] 0.0
      %83 = vst [vmem:[#allocation2 + $0xb8] sm:$0xff] 0.0
      %84 = vst [vmem:[#allocation2 + $0xc0] sm:$0xff] 0.0
      %85 = vst [vmem:[#allocation2 + $0xc8] sm:$0xff] 0.0
      %86 = vst [vmem:[#allocation2 + $0xd0] sm:$0xff] 0.0
      %87 = vst [vmem:[#allocation2 + $0xd8] sm:$0xff] 0.0
      %88 = vst [vmem:[#allocation2 + $0xe0] sm:$0xff] 0.0
      %89 = vst [vmem:[#allocation2 + $0xe8] sm:$0xff] 0.0
      %90 = vst [vmem:[#allocation2 + $0xf0] sm:$0xff] 0.0
      %91 = vst [vmem:[#allocation2 + $0xf8] sm:$0xff] 0.0
    $region29: #{ae_cnn_forward.27} parent=1 // pred_fallthru
      _
    %v92 = vld [vmem:[#allocation2] sm:$0xff]
    %v93 = vld [vmem:[#allocation2 + $0x8] sm:$0xff]
    %v94 = vld [vmem:[#allocation2 + $0x10] sm:$0xff]
    %v95 = vld [vmem:[#allocation2 + $0x18] sm:$0xff]
    %v96 = vld [vmem:[#allocation2 + $0x20] sm:$0xff]
    %v97 = vld [vmem:[#allocation2 + $0x28] sm:$0xff]
    %v98 = vld [vmem:[#allocation2 + $0x30] sm:$0xff]
    %v99 = vld [vmem:[#allocation2 + $0x38] sm:$0xff]
    %v100 = vld [vmem:[#allocation2 + $0x40] sm:$0xff]
    %v101 = vld [vmem:[#allocation2 + $0x48] sm:$0xff]
    %v102 = vld [vmem:[#allocation2 + $0x50] sm:$0xff]
    %v103 = vld [vmem:[#allocation2 + $0x58] sm:$0xff]
    %v104 = vld [vmem:[#allocation2 + $0x60] sm:$0xff]
    %v105 = vld [vmem:[#allocation2 + $0x68] sm:$0xff]
    %v106 = vld [vmem:[#allocation2 + $0x70] sm:$0xff]
    %v107 = vld [vmem:[#allocation2 + $0x78] sm:$0xff]
    %v108 = vld [vmem:[#allocation2 + $0x80] sm:$0xff]
    %v109 = vld [vmem:[#allocation2 + $0x88] sm:$0xff]
    %v110 = vld [vmem:[#allocation2 + $0x90] sm:$0xff]
    %v111 = vld [vmem:[#allocation2 + $0x98] sm:$0xff]
    %v112 = vld [vmem:[#allocation2 + $0xa0] sm:$0xff]
    %v113 = vld [vmem:[#allocation2 + $0xa8] sm:$0xff]
    %v114 = vld [vmem:[#allocation2 + $0xb0] sm:$0xff]
    %v115 = vld [vmem:[#allocation2 + $0xb8] sm:$0xff]
    %v116 = vld [vmem:[#allocation2 + $0xc0] sm:$0xff]
    %v117 = vld [vmem:[#allocation2 + $0xc8] sm:$0xff]
    %v118 = vld [vmem:[#allocation2 + $0xd0] sm:$0xff]
    %v119 = vld [vmem:[#allocation2 + $0xd8] sm:$0xff]
    %v120 = vld [vmem:[#allocation2 + $0xe0] sm:$0xff]
    %v121 = vld [vmem:[#allocation2 + $0xe8] sm:$0xff]
    %v122 = vld [vmem:[#allocation2 + $0xf0] sm:$0xff]
    %v123 = vld [vmem:[#allocation2 + $0xf8] sm:$0xff]
    %v124 = vld [vmem:[#allocation3] sm:$0xff]
    %v125 = vld [vmem:[#allocation3 + $0x8] sm:$0xff]
    %v126 = vld [vmem:[#allocation3 + $0x10] sm:$0xff]
    %v127 = vld [vmem:[#allocation3 + $0x18] sm:$0xff]
    %v128 = vld [vmem:[#allocation3 + $0x20] sm:$0xff]
    %v129 = vld [vmem:[#allocation3 + $0x28] sm:$0xff]
    %v130 = vld [vmem:[#allocation3 + $0x30] sm:$0xff]
    %v131 = vld [vmem:[#allocation3 + $0x38] sm:$0xff]
    %v132 = vld [vmem:[#allocation3 + $0x40] sm:$0xff]
    %v133 = vld [vmem:[#allocation3 + $0x48] sm:$0xff]
    %v134 = vld [vmem:[#allocation3 + $0x50] sm:$0xff]
    %v135 = vld [vmem:[#allocation3 + $0x58] sm:$0xff]
    %v136 = vld [vmem:[#allocation3 + $0x60] sm:$0xff]
    %v137 = vld [vmem:[#allocation3 + $0x68] sm:$0xff]
    %v138 = vld [vmem:[#allocation3 + $0x70] sm:$0xff]
    %v139 = vld [vmem:[#allocation3 + $0x78] sm:$0xff]
    %v140 = vld [vmem:[#allocation3 + $0x80] sm:$0xff]
    %v141 = vld [vmem:[#allocation3 + $0x88] sm:$0xff]
    %v142 = vld [vmem:[#allocation3 + $0x90] sm:$0xff]
    %v143 = vld [vmem:[#allocation3 + $0x98] sm:$0xff]
    %v144 = vld [vmem:[#allocation3 + $0xa0] sm:$0xff]
    %v145 = vld [vmem:[#allocation3 + $0xa8] sm:$0xff]
    %v146 = vld [vmem:[#allocation3 + $0xb0] sm:$0xff]
    %v147 = vld [vmem:[#allocation3 + $0xb8] sm:$0xff]
    %v148 = vld [vmem:[#allocation3 + $0xc0] sm:$0xff]
    %v149 = vld [vmem:[#allocation3 + $0xc8] sm:$0xff]
    %v150 = vld [vmem:[#allocation3 + $0xd0] sm:$0xff]
    %v151 = vld [vmem:[#allocation3 + $0xd8] sm:$0xff]
    %v152 = vld [vmem:[#allocation3 + $0xe0] sm:$0xff]
    %v153 = vld [vmem:[#allocation3 + $0xe8] sm:$0xff]
    %v154 = vld [vmem:[#allocation3 + $0xf0] sm:$0xff]
    %v155 = vld [vmem:[#allocation3 + $0xf8] sm:$0xff]
    %v156 = vld [vmem:[#allocation6] sm:$0xff]
    %v157 = vld [vmem:[#allocation6 + $0x8] sm:$0xff]
    %v158 = vld [vmem:[#allocation6 + $0x10] sm:$0xff]
    %v159 = vld [vmem:[#allocation6 + $0x18] sm:$0xff]
    %v160 = vld [vmem:[#allocation6 + $0x20] sm:$0xff]
    %v161 = vld [vmem:[#allocation6 + $0x28] sm:$0xff]
    %v162 = vld [vmem:[#allocation6 + $0x30] sm:$0xff]
    %v163 = vld [vmem:[#allocation6 + $0x38] sm:$0xff]
    %v164 = vld [vmem:[#allocation6 + $0x40] sm:$0xff]
    %v165 = vld [vmem:[#allocation6 + $0x48] sm:$0xff]
    %v166 = vld [vmem:[#allocation6 + $0x50] sm:$0xff]
    %v167 = vld [vmem:[#allocation6 + $0x58] sm:$0xff]
    %v168 = vld [vmem:[#allocation6 + $0x60] sm:$0xff]
    %v169 = vld [vmem:[#allocation6 + $0x68] sm:$0xff]
    %v170 = vld [vmem:[#allocation6 + $0x70] sm:$0xff]
    %v171 = vld [vmem:[#allocation6 + $0x78] sm:$0xff]
    %v172 = vld [vmem:[#allocation6 + $0x80] sm:$0xff]
    %v173 = vld [vmem:[#allocation6 + $0x88] sm:$0xff]
    %v174 = vld [vmem:[#allocation6 + $0x90] sm:$0xff]
    %v175 = vld [vmem:[#allocation6 + $0x98] sm:$0xff]
    %v176 = vld [vmem:[#allocation6 + $0xa0] sm:$0xff]
    %v177 = vld [vmem:[#allocation6 + $0xa8] sm:$0xff]
    %v178 = vld [vmem:[#allocation6 + $0xb0] sm:$0xff]
    %v179 = vld [vmem:[#allocation6 + $0xb8] sm:$0xff]
    %v180 = vld [vmem:[#allocation6 + $0xc0] sm:$0xff]
    %v181 = vld [vmem:[#allocation6 + $0xc8] sm:$0xff]
    %v182 = vld [vmem:[#allocation6 + $0xd0] sm:$0xff]
    %v183 = vld [vmem:[#allocation6 + $0xd8] sm:$0xff]
    %v184 = vld [vmem:[#allocation6 + $0xe0] sm:$0xff]
    %v185 = vld [vmem:[#allocation6 + $0xe8] sm:$0xff]
    %v186 = vld [vmem:[#allocation6 + $0xf0] sm:$0xff]
    %v187 = vld [vmem:[#allocation6 + $0xf8] sm:$0xff]
    %v188 = vld [vmem:[#allocation6 + $0x100] sm:$0xff]
    %v189 = vld [vmem:[#allocation6 + $0x108] sm:$0xff]
    %v190 = vld [vmem:[#allocation6 + $0x110] sm:$0xff]
    %v191 = vld [vmem:[#allocation6 + $0x118] sm:$0xff]
    %v192 = vld [vmem:[#allocation6 + $0x120] sm:$0xff]
    %v193 = vld [vmem:[#allocation6 + $0x128] sm:$0xff]
    %v194 = vld [vmem:[#allocation6 + $0x130] sm:$0xff]
    %v195 = vld [vmem:[#allocation6 + $0x138] sm:$0xff]
    %v196 = vld [vmem:[#allocation6 + $0x140] sm:$0xff]
    %v197 = vld [vmem:[#allocation6 + $0x148] sm:$0xff]
    %v198 = vld [vmem:[#allocation6 + $0x150] sm:$0xff]
    %v199 = vld [vmem:[#allocation6 + $0x158] sm:$0xff]
    %v200 = vld [vmem:[#allocation6 + $0x160] sm:$0xff]
    %v201 = vld [vmem:[#allocation6 + $0x168] sm:$0xff]
    %v202 = vld [vmem:[#allocation6 + $0x170] sm:$0xff]
    %v203 = vld [vmem:[#allocation6 + $0x178] sm:$0xff]
    %v204 = vld [vmem:[#allocation6 + $0x180] sm:$0xff]
    %v205 = vld [vmem:[#allocation6 + $0x188] sm:$0xff]
    %v206 = vld [vmem:[#allocation6 + $0x190] sm:$0xff]
    %v207 = vld [vmem:[#allocation6 + $0x198] sm:$0xff]
    %v208 = vld [vmem:[#allocation6 + $0x1a0] sm:$0xff]
    %v209 = vld [vmem:[#allocation6 + $0x1a8] sm:$0xff]
    %v210 = vld [vmem:[#allocation6 + $0x1b0] sm:$0xff]
    %v211 = vld [vmem:[#allocation6 + $0x1b8] sm:$0xff]
    %v212 = vld [vmem:[#allocation6 + $0x1c0] sm:$0xff]
    %v213 = vld [vmem:[#allocation6 + $0x1c8] sm:$0xff]
    %v214 = vld [vmem:[#allocation6 + $0x1d0] sm:$0xff]
    %v215 = vld [vmem:[#allocation6 + $0x1d8] sm:$0xff]
    %v216 = vld [vmem:[#allocation6 + $0x1e0] sm:$0xff]
    %v217 = vld [vmem:[#allocation6 + $0x1e8] sm:$0xff]
    %v218 = vld [vmem:[#allocation6 + $0x1f0] sm:$0xff]
    %v219 = vld [vmem:[#allocation6 + $0x1f8] sm:$0xff]
    %v220 = vld [vmem:[#allocation6 + $0x200] sm:$0xff]
    %v221 = vld [vmem:[#allocation6 + $0x208] sm:$0xff]
    %v222 = vld [vmem:[#allocation6 + $0x210] sm:$0xff]
    %v223 = vld [vmem:[#allocation6 + $0x218] sm:$0xff]
    %v224 = vld [vmem:[#allocation6 + $0x220] sm:$0xff]
    %v225 = vld [vmem:[#allocation6 + $0x228] sm:$0xff]
    %v226 = vld [vmem:[#allocation6 + $0x230] sm:$0xff]
    %v227 = vld [vmem:[#allocation6 + $0x238] sm:$0xff]
    %v228 = vld [vmem:[#allocation6 + $0x240] sm:$0xff]
    %v229 = vld [vmem:[#allocation6 + $0x248] sm:$0xff]
    %v230 = vld [vmem:[#allocation6 + $0x250] sm:$0xff]
    %v231 = vld [vmem:[#allocation6 + $0x258] sm:$0xff]
    %v232 = vld [vmem:[#allocation6 + $0x260] sm:$0xff]
    %v233 = vld [vmem:[#allocation6 + $0x268] sm:$0xff]
    %v234 = vld [vmem:[#allocation6 + $0x270] sm:$0xff]
    %v235 = vld [vmem:[#allocation6 + $0x278] sm:$0xff]
    %v236 = vld [vmem:[#allocation6 + $0x280] sm:$0xff]
    %v237 = vld [vmem:[#allocation6 + $0x288] sm:$0xff]
    %v238 = vld [vmem:[#allocation6 + $0x290] sm:$0xff]
    %v239 = vld [vmem:[#allocation6 + $0x298] sm:$0xff]
    %v240 = vld [vmem:[#allocation6 + $0x2a0] sm:$0xff]
    %v241 = vld [vmem:[#allocation6 + $0x2a8] sm:$0xff]
    %v242 = vld [vmem:[#allocation6 + $0x2b0] sm:$0xff]
    %v243 = vld [vmem:[#allocation6 + $0x2b8] sm:$0xff]
    %v244 = vld [vmem:[#allocation6 + $0x2c0] sm:$0xff]
    %v245 = vld [vmem:[#allocation6 + $0x2c8] sm:$0xff]
    %v246 = vld [vmem:[#allocation6 + $0x2d0] sm:$0xff]
    %v247 = vld [vmem:[#allocation6 + $0x2d8] sm:$0xff]
    %v248 = vld [vmem:[#allocation6 + $0x2e0] sm:$0xff]
    %v249 = vld [vmem:[#allocation6 + $0x2e8] sm:$0xff]
    %v250 = vld [vmem:[#allocation6 + $0x2f0] sm:$0xff]
    %v251 = vld [vmem:[#allocation6 + $0x2f8] sm:$0xff]
    %v252 = vld [vmem:[#allocation6 + $0x300] sm:$0xff]
    %v253 = vld [vmem:[#allocation6 + $0x308] sm:$0xff]
    %v254 = vld [vmem:[#allocation6 + $0x310] sm:$0xff]
    %v255 = vld [vmem:[#allocation6 + $0x318] sm:$0xff]
    %v256 = vld [vmem:[#allocation6 + $0x320] sm:$0xff]
    %v257 = vld [vmem:[#allocation6 + $0x328] sm:$0xff]
    %v258 = vld [vmem:[#allocation6 + $0x330] sm:$0xff]
    %v259 = vld [vmem:[#allocation6 + $0x338] sm:$0xff]
    %v260 = vld [vmem:[#allocation6 + $0x340] sm:$0xff]
    %v261 = vld [vmem:[#allocation6 + $0x348] sm:$0xff]
    %v262 = vld [vmem:[#allocation6 + $0x350] sm:$0xff]
    %v263 = vld [vmem:[#allocation6 + $0x358] sm:$0xff]
    %v264 = vld [vmem:[#allocation6 + $0x360] sm:$0xff]
    %v265 = vld [vmem:[#allocation6 + $0x368] sm:$0xff]
    %v266 = vld [vmem:[#allocation6 + $0x370] sm:$0xff]
    %v267 = vld [vmem:[#allocation6 + $0x378] sm:$0xff]
    %v268 = vld [vmem:[#allocation6 + $0x380] sm:$0xff]
    %v269 = vld [vmem:[#allocation6 + $0x388] sm:$0xff]
    %v270 = vld [vmem:[#allocation6 + $0x390] sm:$0xff]
    %v271 = vld [vmem:[#allocation6 + $0x398] sm:$0xff]
    %v272 = vld [vmem:[#allocation6 + $0x3a0] sm:$0xff]
    %v273 = vld [vmem:[#allocation6 + $0x3a8] sm:$0xff]
    %v274 = vld [vmem:[#allocation6 + $0x3b0] sm:$0xff]
    %v275 = vld [vmem:[#allocation6 + $0x3b8] sm:$0xff]
    %v276 = vld [vmem:[#allocation6 + $0x3c0] sm:$0xff]
    %v277 = vld [vmem:[#allocation6 + $0x3c8] sm:$0xff]
    %v278 = vld [vmem:[#allocation6 + $0x3d0] sm:$0xff]
    %v279 = vld [vmem:[#allocation6 + $0x3d8] sm:$0xff]
    %v280 = vld [vmem:[#allocation6 + $0x3e0] sm:$0xff]
    %v281 = vld [vmem:[#allocation6 + $0x3e8] sm:$0xff]
    %v282 = vld [vmem:[#allocation6 + $0x3f0] sm:$0xff]
    %v283 = vld [vmem:[#allocation6 + $0x3f8] sm:$0xff]
    %v284 = vld [vmem:[#allocation6 + $0x400] sm:$0xff]
    %v285 = vld [vmem:[#allocation6 + $0x408] sm:$0xff]
    %v286 = vld [vmem:[#allocation6 + $0x410] sm:$0xff]
    %v287 = vld [vmem:[#allocation6 + $0x418] sm:$0xff]
    %v288 = vld [vmem:[#allocation6 + $0x420] sm:$0xff]
    %v289 = vld [vmem:[#allocation6 + $0x428] sm:$0xff]
    %v290 = vld [vmem:[#allocation6 + $0x430] sm:$0xff]
    %v291 = vld [vmem:[#allocation6 + $0x438] sm:$0xff]
    %v292 = vld [vmem:[#allocation6 + $0x440] sm:$0xff]
    %v293 = vld [vmem:[#allocation6 + $0x448] sm:$0xff]
    %v294 = vld [vmem:[#allocation6 + $0x450] sm:$0xff]
    %v295 = vld [vmem:[#allocation6 + $0x458] sm:$0xff]
    %v296 = vld [vmem:[#allocation6 + $0x460] sm:$0xff]
    %v297 = vld [vmem:[#allocation6 + $0x468] sm:$0xff]
    %v298 = vld [vmem:[#allocation6 + $0x470] sm:$0xff]
    %v299 = vld [vmem:[#allocation6 + $0x478] sm:$0xff]
    %v300 = vld [vmem:[#allocation6 + $0x480] sm:$0xff]
    %v301 = vld [vmem:[#allocation6 + $0x488] sm:$0xff]
    %v302 = vld [vmem:[#allocation6 + $0x490] sm:$0xff]
    %v303 = vld [vmem:[#allocation6 + $0x498] sm:$0xff]
    %v304 = vld [vmem:[#allocation6 + $0x4a0] sm:$0xff]
    %v305 = vld [vmem:[#allocation6 + $0x4a8] sm:$0xff]
    %v306 = vld [vmem:[#allocation6 + $0x4b0] sm:$0xff]
    %v307 = vld [vmem:[#allocation6 + $0x4b8] sm:$0xff]
    %v308 = vld [vmem:[#allocation6 + $0x4c0] sm:$0xff]
    %v309 = vld [vmem:[#allocation6 + $0x4c8] sm:$0xff]
    %v310 = vld [vmem:[#allocation6 + $0x4d0] sm:$0xff]
    %v311 = vld [vmem:[#allocation6 + $0x4d8] sm:$0xff]
    %v312 = vld [vmem:[#allocation6 + $0x4e0] sm:$0xff]
    %v313 = vld [vmem:[#allocation6 + $0x4e8] sm:$0xff]
    %v314 = vld [vmem:[#allocation6 + $0x4f0] sm:$0xff]
    %v315 = vld [vmem:[#allocation6 + $0x4f8] sm:$0xff]
    %v316 = vld [vmem:[#allocation6 + $0x500] sm:$0xff]
    %v317 = vld [vmem:[#allocation6 + $0x508] sm:$0xff]
    %v318 = vld [vmem:[#allocation6 + $0x510] sm:$0xff]
    %v319 = vld [vmem:[#allocation6 + $0x518] sm:$0xff]
    %v320 = vld [vmem:[#allocation6 + $0x520] sm:$0xff]
    %v321 = vld [vmem:[#allocation6 + $0x528] sm:$0xff]
    %v322 = vld [vmem:[#allocation6 + $0x530] sm:$0xff]
    %v323 = vld [vmem:[#allocation6 + $0x538] sm:$0xff]
    %v324 = vld [vmem:[#allocation6 + $0x540] sm:$0xff]
    %v325 = vld [vmem:[#allocation6 + $0x548] sm:$0xff]
    %v326 = vld [vmem:[#allocation6 + $0x550] sm:$0xff]
    %v327 = vld [vmem:[#allocation6 + $0x558] sm:$0xff]
    %v328 = vld [vmem:[#allocation6 + $0x560] sm:$0xff]
    %v329 = vld [vmem:[#allocation6 + $0x568] sm:$0xff]
    %v330 = vld [vmem:[#allocation6 + $0x570] sm:$0xff]
    %v331 = vld [vmem:[#allocation6 + $0x578] sm:$0xff]
    %v332 = vld [vmem:[#allocation6 + $0x580] sm:$0xff]
    %v333 = vld [vmem:[#allocation6 + $0x588] sm:$0xff]
    %v334 = vld [vmem:[#allocation6 + $0x590] sm:$0xff]
    %v335 = vld [vmem:[#allocation6 + $0x598] sm:$0xff]
    %v336 = vld [vmem:[#allocation6 + $0x5a0] sm:$0xff]
    %v337 = vld [vmem:[#allocation6 + $0x5a8] sm:$0xff]
    %v338 = vld [vmem:[#allocation6 + $0x5b0] sm:$0xff]
    %v339 = vld [vmem:[#allocation6 + $0x5b8] sm:$0xff]
    %v340 = vld [vmem:[#allocation6 + $0x5c0] sm:$0xff]
    %v341 = vld [vmem:[#allocation6 + $0x5c8] sm:$0xff]
    %v342 = vld [vmem:[#allocation6 + $0x5d0] sm:$0xff]
    %v343 = vld [vmem:[#allocation6 + $0x5d8] sm:$0xff]
    %v344 = vld [vmem:[#allocation6 + $0x5e0] sm:$0xff]
    %v345 = vld [vmem:[#allocation6 + $0x5e8] sm:$0xff]
    %v346 = vld [vmem:[#allocation6 + $0x5f0] sm:$0xff]
    %v347 = vld [vmem:[#allocation6 + $0x5f8] sm:$0xff]
    %v348 = vld [vmem:[#allocation6 + $0x600] sm:$0xff]
    %v349 = vld [vmem:[#allocation6 + $0x608] sm:$0xff]
    %v350 = vld [vmem:[#allocation6 + $0x610] sm:$0xff]
    %v351 = vld [vmem:[#allocation6 + $0x618] sm:$0xff]
    %v352 = vld [vmem:[#allocation6 + $0x620] sm:$0xff]
    %v353 = vld [vmem:[#allocation6 + $0x628] sm:$0xff]
    %v354 = vld [vmem:[#allocation6 + $0x630] sm:$0xff]
    %v355 = vld [vmem:[#allocation6 + $0x638] sm:$0xff]
    %v356 = vld [vmem:[#allocation6 + $0x640] sm:$0xff]
    %v357 = vld [vmem:[#allocation6 + $0x648] sm:$0xff]
    %v358 = vld [vmem:[#allocation6 + $0x650] sm:$0xff]
    %v359 = vld [vmem:[#allocation6 + $0x658] sm:$0xff]
    %v360 = vld [vmem:[#allocation6 + $0x660] sm:$0xff]
    %v361 = vld [vmem:[#allocation6 + $0x668] sm:$0xff]
    %v362 = vld [vmem:[#allocation6 + $0x670] sm:$0xff]
    %v363 = vld [vmem:[#allocation6 + $0x678] sm:$0xff]
    %v364 = vld [vmem:[#allocation6 + $0x680] sm:$0xff]
    %v365 = vld [vmem:[#allocation6 + $0x688] sm:$0xff]
    %v366 = vld [vmem:[#allocation6 + $0x690] sm:$0xff]
    %v367 = vld [vmem:[#allocation6 + $0x698] sm:$0xff]
    %v368 = vld [vmem:[#allocation6 + $0x6a0] sm:$0xff]
    %v369 = vld [vmem:[#allocation6 + $0x6a8] sm:$0xff]
    %v370 = vld [vmem:[#allocation6 + $0x6b0] sm:$0xff]
    %v371 = vld [vmem:[#allocation6 + $0x6b8] sm:$0xff]
    %v372 = vld [vmem:[#allocation6 + $0x6c0] sm:$0xff]
    %v373 = vld [vmem:[#allocation6 + $0x6c8] sm:$0xff]
    %v374 = vld [vmem:[#allocation6 + $0x6d0] sm:$0xff]
    %v375 = vld [vmem:[#allocation6 + $0x6d8] sm:$0xff]
    %v376 = vld [vmem:[#allocation6 + $0x6e0] sm:$0xff]
    %v377 = vld [vmem:[#allocation6 + $0x6e8] sm:$0xff]
    %v378 = vld [vmem:[#allocation6 + $0x6f0] sm:$0xff]
    %v379 = vld [vmem:[#allocation6 + $0x6f8] sm:$0xff]
    %v380 = vld [vmem:[#allocation6 + $0x700] sm:$0xff]
    %v381 = vld [vmem:[#allocation6 + $0x708] sm:$0xff]
    %v382 = vld [vmem:[#allocation6 + $0x710] sm:$0xff]
    %v383 = vld [vmem:[#allocation6 + $0x718] sm:$0xff]
    %v384 = vld [vmem:[#allocation6 + $0x720] sm:$0xff]
    %v385 = vld [vmem:[#allocation6 + $0x728] sm:$0xff]
    %v386 = vld [vmem:[#allocation6 + $0x730] sm:$0xff]
    %v387 = vld [vmem:[#allocation6 + $0x738] sm:$0xff]
    %v388 = vld [vmem:[#allocation6 + $0x740] sm:$0xff]
    %v389 = vld [vmem:[#allocation6 + $0x748] sm:$0xff]
    %v390 = vld [vmem:[#allocation6 + $0x750] sm:$0xff]
    %v391 = vld [vmem:[#allocation6 + $0x758] sm:$0xff]
    %v392 = vld [vmem:[#allocation6 + $0x760] sm:$0xff]
    %v393 = vld [vmem:[#allocation6 + $0x768] sm:$0xff]
    %v394 = vld [vmem:[#allocation6 + $0x770] sm:$0xff]
    %v395 = vld [vmem:[#allocation6 + $0x778] sm:$0xff]
    %v396 = vld [vmem:[#allocation6 + $0x780] sm:$0xff]
    %v397 = vld [vmem:[#allocation6 + $0x788] sm:$0xff]
    %v398 = vld [vmem:[#allocation6 + $0x790] sm:$0xff]
    %v399 = vld [vmem:[#allocation6 + $0x798] sm:$0xff]
    %v400 = vld [vmem:[#allocation6 + $0x7a0] sm:$0xff]
    %v401 = vld [vmem:[#allocation6 + $0x7a8] sm:$0xff]
    %v402 = vld [vmem:[#allocation6 + $0x7b0] sm:$0xff]
    %v403 = vld [vmem:[#allocation6 + $0x7b8] sm:$0xff]
    %v404 = vld [vmem:[#allocation6 + $0x7c0] sm:$0xff]
    %v405 = vld [vmem:[#allocation6 + $0x7c8] sm:$0xff]
    %v406 = vld [vmem:[#allocation6 + $0x7d0] sm:$0xff]
    %v407 = vld [vmem:[#allocation6 + $0x7d8] sm:$0xff]
    %v408 = vld [vmem:[#allocation6 + $0x7e0] sm:$0xff]
    %v409 = vld [vmem:[#allocation6 + $0x7e8] sm:$0xff]
    %v410 = vld [vmem:[#allocation6 + $0x7f0] sm:$0xff]
    %v411 = vld [vmem:[#allocation6 + $0x7f8] sm:$0xff]
    %412 = vmatprep.subr.mxu0 %v157
    %413 = vmatpush1.msra.mxu0 %v156
    %414 = vmatprep.subr.mxu0 %v161
    %415 = vmatpush1.msra.mxu0 %v160
    %416 = vmatprep.subr.mxu0 %v165
    %417 = vmatpush1.msra.mxu0 %v164
    %418 = vmatprep.subr.mxu0 %v169
    %419 = vmatpush1.msra.mxu0 %v168
    %420 = vmatprep.subr.mxu0 %v173
    %421 = vmatpush1.msra.mxu0 %v172
    %422 = vmatprep.subr.mxu0 %v177
    %423 = vmatpush1.msra.mxu0 %v176
    %424 = vmatprep.subr.mxu0 %v181
    %425 = vmatpush1.msra.mxu0 %v180
    %426 = vmatprep.subr.mxu0 %v185
    %427 = vmatpush1.msra.mxu0 %v184
    %428 = vmatprep.subr.mxu0 %v189
    %429 = vmatpush1.msra.mxu0 %v188
    %430 = vmatprep.subr.mxu0 %v193
    %431 = vmatpush1.msra.mxu0 %v192
    %432 = vmatprep.subr.mxu0 %v197
    %433 = vmatpush1.msra.mxu0 %v196
    %434 = vmatprep.subr.mxu0 %v201
    %435 = vmatpush1.msra.mxu0 %v200
    %436 = vmatprep.subr.mxu0 %v205
    %437 = vmatpush1.msra.mxu0 %v204
    %438 = vmatprep.subr.mxu0 %v209
    %439 = vmatpush1.msra.mxu0 %v208
    %440 = vmatprep.subr.mxu0 %v213
    %441 = vmatpush1.msra.mxu0 %v212
    %442 = vmatprep.subr.mxu0 %v217
    %443 = vmatpush1.msra.mxu0 %v216
    %444 = vmatprep.subr.mxu0 %v221
    %445 = vmatpush1.msra.mxu0 %v220
    %446 = vmatprep.subr.mxu0 %v225
    %447 = vmatpush1.msra.mxu0 %v224
    %448 = vmatprep.subr.mxu0 %v229
    %449 = vmatpush1.msra.mxu0 %v228
    %450 = vmatprep.subr.mxu0 %v233
    %451 = vmatpush1.msra.mxu0 %v232
    %452 = vmatprep.subr.mxu0 %v237
    %453 = vmatpush1.msra.mxu0 %v236
    %454 = vmatprep.subr.mxu0 %v241
    %455 = vmatpush1.msra.mxu0 %v240
    %456 = vmatprep.subr.mxu0 %v245
    %457 = vmatpush1.msra.mxu0 %v244
    %458 = vmatprep.subr.mxu0 %v249
    %459 = vmatpush1.msra.mxu0 %v248
    %460 = vmatprep.subr.mxu0 %v253
    %461 = vmatpush1.msra.mxu0 %v252
    %462 = vmatprep.subr.mxu0 %v257
    %463 = vmatpush1.msra.mxu0 %v256
    %464 = vmatprep.subr.mxu0 %v261
    %465 = vmatpush1.msra.mxu0 %v260
    %466 = vmatprep.subr.mxu0 %v265
    %467 = vmatpush1.msra.mxu0 %v264
    %468 = vmatprep.subr.mxu0 %v269
    %469 = vmatpush1.msra.mxu0 %v268
    %470 = vmatprep.subr.mxu0 %v273
    %471 = vmatpush1.msra.mxu0 %v272
    %472 = vmatprep.subr.mxu0 %v277
    %473 = vmatpush1.msra.mxu0 %v276
    %474 = vmatprep.subr.mxu0 %v281
    %475 = vmatpush1.msra.mxu0 %v280
    %476 = vmatprep.mubr.f32.mxu0 %v125
    %477 = vmatmul.mubr.f32.gmra.mrb[0].mxu0 %v124
    %v478 = vpop.f32.mrb[0].mxu0
    %v479 = vadd.f32 0.0, %v478
    %v480 = vpop.f32.mrb[0].mxu0
    %v481 = vadd.f32 0.0, %v480
    %482 = vmatprep.mubr.f32.mxu0 %v129
    %483 = vmatmul.mubr.f32.gmra.mrb[0].mxu0 %v128
    %v484 = vpop.f32.mrb[0].mxu0
    %v485 = vadd.f32 0.0, %v484
    %v486 = vpop.f32.mrb[0].mxu0
    %v487 = vadd.f32 0.0, %v486
    %488 = vmatprep.mubr.f32.mxu0 %v133
    %489 = vmatmul.mubr.f32.gmra.mrb[0].mxu0 %v132
    %v490 = vpop.f32.mrb[0].mxu0
    %v491 = vadd.f32 0.0, %v490
    %v492 = vpop.f32.mrb[0].mxu0
    %v493 = vadd.f32 0.0, %v492
    %494 = vmatprep.mubr.f32.mxu0 %v137
    %495 = vmatmul.mubr.f32.gmra.mrb[0].mxu0 %v136
    %v496 = vpop.f32.mrb[0].mxu0
    %v497 = vadd.f32 0.0, %v496
    %v498 = vpop.f32.mrb[0].mxu0
    %v499 = vadd.f32 0.0, %v498
    %500 = vmatprep.mubr.f32.mxu0 %v141
    %501 = vmatmul.mubr.f32.gmra.mrb[0].mxu0 %v140
    %v502 = vpop.f32.mrb[0].mxu0
    %v503 = vadd.f32 0.0, %v502
    %v504 = vpop.f32.mrb[0].mxu0
    %v505 = vadd.f32 0.0, %v504
    %506 = vmatprep.mubr.f32.mxu0 %v145
    %507 = vmatmul.mubr.f32.gmra.mrb[0].mxu0 %v144
    %v508 = vpop.f32.mrb[0].mxu0
    %v509 = vadd.f32 0.0, %v508
    %v510 = vpop.f32.mrb[0].mxu0
    %v511 = vadd.f32 0.0, %v510
    %512 = vmatprep.mubr.f32.mxu0 %v149
    %513 = vmatmul.mubr.f32.gmra.mrb[0].mxu0 %v148
    %v514 = vpop.f32.mrb[0].mxu0
    %v515 = vadd.f32 0.0, %v514
    %v516 = vpop.f32.mrb[0].mxu0
    %v517 = vadd.f32 0.0, %v516
    %518 = vmatprep.mubr.f32.mxu0 %v153
    %519 = vmatmul.mubr.f32.gmra.mrb[0].mxu0 %v152
    %v520 = vpop.f32.mrb[0].mxu0
    %v521 = vadd.f32 0.0, %v520
    %v522 = vpop.f32.mrb[0].mxu0
    %v523 = vadd.f32 0.0, %v522
    %524 = vdwg.mxu0
    %525 = vmatprep.subr.mxu0 %v285
    %526 = vmatpush1.msra.mxu0 %v284
    %527 = vmatprep.subr.mxu0 %v289
    %528 = vmatpush1.msra.mxu0 %v288
    %529 = vmatprep.subr.mxu0 %v293
    %530 = vmatpush1.msra.mxu0 %v292
    %531 = vmatprep.subr.mxu0 %v297
    %532 = vmatpush1.msra.mxu0 %v296
    %533 = vmatprep.subr.mxu0 %v301
    %534 = vmatpush1.msra.mxu0 %v300
    %535 = vmatprep.subr.mxu0 %v305
    %536 = vmatpush1.msra.mxu0 %v304
    %537 = vmatprep.subr.mxu0 %v309
    %538 = vmatpush1.msra.mxu0 %v308
    %539 = vmatprep.subr.mxu0 %v313
    %540 = vmatpush1.msra.mxu0 %v312
    %541 = vmatprep.subr.mxu0 %v317
    %542 = vmatpush1.msra.mxu0 %v316
    %543 = vmatprep.subr.mxu0 %v321
    %544 = vmatpush1.msra.mxu0 %v320
    %545 = vmatprep.subr.mxu0 %v325
    %546 = vmatpush1.msra.mxu0 %v324
    %547 = vmatprep.subr.mxu0 %v329
    %548 = vmatpush1.msra.mxu0 %v328
    %549 = vmatprep.subr.mxu0 %v333
    %550 = vmatpush1.msra.mxu0 %v332
    %551 = vmatprep.subr.mxu0 %v337
    %552 = vmatpush1.msra.mxu0 %v336
    %553 = vmatprep.subr.mxu0 %v341
    %554 = vmatpush1.msra.mxu0 %v340
    %555 = vmatprep.subr.mxu0 %v345
    %556 = vmatpush1.msra.mxu0 %v344
    %557 = vmatprep.subr.mxu0 %v349
    %558 = vmatpush1.msra.mxu0 %v348
    %559 = vmatprep.subr.mxu0 %v353
    %560 = vmatpush1.msra.mxu0 %v352
    %561 = vmatprep.subr.mxu0 %v357
    %562 = vmatpush1.msra.mxu0 %v356
    %563 = vmatprep.subr.mxu0 %v361
    %564 = vmatpush1.msra.mxu0 %v360
    %565 = vmatprep.subr.mxu0 %v365
    %566 = vmatpush1.msra.mxu0 %v364
    %567 = vmatprep.subr.mxu0 %v369
    %568 = vmatpush1.msra.mxu0 %v368
    %569 = vmatprep.subr.mxu0 %v373
    %570 = vmatpush1.msra.mxu0 %v372
    %571 = vmatprep.subr.mxu0 %v377
    %572 = vmatpush1.msra.mxu0 %v376
    %573 = vmatprep.subr.mxu0 %v381
    %574 = vmatpush1.msra.mxu0 %v380
    %575 = vmatprep.subr.mxu0 %v385
    %576 = vmatpush1.msra.mxu0 %v384
    %577 = vmatprep.subr.mxu0 %v389
    %578 = vmatpush1.msra.mxu0 %v388
    %579 = vmatprep.subr.mxu0 %v393
    %580 = vmatpush1.msra.mxu0 %v392
    %581 = vmatprep.subr.mxu0 %v397
    %582 = vmatpush1.msra.mxu0 %v396
    %583 = vmatprep.subr.mxu0 %v401
    %584 = vmatpush1.msra.mxu0 %v400
    %585 = vmatprep.subr.mxu0 %v405
    %586 = vmatpush1.msra.mxu0 %v404
    %587 = vmatprep.subr.mxu0 %v409
    %588 = vmatpush1.msra.mxu0 %v408
    %589 = vmatprep.mubr.f32.mxu0 %v127
    %590 = vmatmul.mubr.f32.gmra.mrb[0].mxu0 %v126
    %v591 = vpop.f32.mrb[0].mxu0
    %v592 = vadd.f32 %v479, %v591
    %v593 = vpop.f32.mrb[0].mxu0
    %v594 = vadd.f32 %v481, %v593
    %595 = vmatprep.mubr.f32.mxu0 %v131
    %596 = vmatmul.mubr.f32.gmra.mrb[0].mxu0 %v130
    %v597 = vpop.f32.mrb[0].mxu0
    %v598 = vadd.f32 %v485, %v597
    %v599 = vpop.f32.mrb[0].mxu0
    %v600 = vadd.f32 %v487, %v599
    %601 = vmatprep.mubr.f32.mxu0 %v135
    %602 = vmatmul.mubr.f32.gmra.mrb[0].mxu0 %v134
    %v603 = vpop.f32.mrb[0].mxu0
    %v604 = vadd.f32 %v491, %v603
    %v605 = vpop.f32.mrb[0].mxu0
    %v606 = vadd.f32 %v493, %v605
    %607 = vmatprep.mubr.f32.mxu0 %v139
    %608 = vmatmul.mubr.f32.gmra.mrb[0].mxu0 %v138
    %v609 = vpop.f32.mrb[0].mxu0
    %v610 = vadd.f32 %v497, %v609
    %v611 = vpop.f32.mrb[0].mxu0
    %v612 = vadd.f32 %v499, %v611
    %613 = vmatprep.mubr.f32.mxu0 %v143
    %614 = vmatmul.mubr.f32.gmra.mrb[0].mxu0 %v142
    %v615 = vpop.f32.mrb[0].mxu0
    %v616 = vadd.f32 %v503, %v615
    %v617 = vpop.f32.mrb[0].mxu0
    %v618 = vadd.f32 %v505, %v617
    %619 = vmatprep.mubr.f32.mxu0 %v147
    %620 = vmatmul.mubr.f32.gmra.mrb[0].mxu0 %v146
    %v621 = vpop.f32.mrb[0].mxu0
    %v622 = vadd.f32 %v509, %v621
    %v623 = vpop.f32.mrb[0].mxu0
    %v624 = vadd.f32 %v511, %v623
    %625 = vmatprep.mubr.f32.mxu0 %v151
    %626 = vmatmul.mubr.f32.gmra.mrb[0].mxu0 %v150
    %v627 = vpop.f32.mrb[0].mxu0
    %v628 = vadd.f32 %v515, %v627
    %v629 = vpop.f32.mrb[0].mxu0
    %v630 = vadd.f32 %v517, %v629
    %631 = vmatprep.mubr.f32.mxu0 %v155
    %632 = vmatmul.mubr.f32.gmra.mrb[0].mxu0 %v154
    %v633 = vpop.f32.mrb[0].mxu0
    %v634 = vadd.f32 %v521, %v633
    %v635 = vpop.f32.mrb[0].mxu0
    %v636 = vadd.f32 %v523, %v635
    %637 = vdwg.mxu0
    %638 = vmatprep.subr.mxu0 %v159
    %639 = vmatpush1.msra.mxu0 %v158
    %640 = vmatprep.subr.mxu0 %v163
    %641 = vmatpush1.msra.mxu0 %v162
    %642 = vmatprep.subr.mxu0 %v167
    %643 = vmatpush1.msra.mxu0 %v166
    %644 = vmatprep.subr.mxu0 %v171
    %645 = vmatpush1.msra.mxu0 %v170
    %646 = vmatprep.subr.mxu0 %v175
    %647 = vmatpush1.msra.mxu0 %v174
    %648 = vmatprep.subr.mxu0 %v179
    %649 = vmatpush1.msra.mxu0 %v178
    %650 = vmatprep.subr.mxu0 %v183
    %651 = vmatpush1.msra.mxu0 %v182
    %652 = vmatprep.subr.mxu0 %v187
    %653 = vmatpush1.msra.mxu0 %v186
    %654 = vmatprep.subr.mxu0 %v191
    %655 = vmatpush1.msra.mxu0 %v190
    %656 = vmatprep.subr.mxu0 %v195
    %657 = vmatpush1.msra.mxu0 %v194
    %658 = vmatprep.subr.mxu0 %v199
    %659 = vmatpush1.msra.mxu0 %v198
    %660 = vmatprep.subr.mxu0 %v203
    %661 = vmatpush1.msra.mxu0 %v202
    %662 = vmatprep.subr.mxu0 %v207
    %663 = vmatpush1.msra.mxu0 %v206
    %664 = vmatprep.subr.mxu0 %v211
    %665 = vmatpush1.msra.mxu0 %v210
    %666 = vmatprep.subr.mxu0 %v215
    %667 = vmatpush1.msra.mxu0 %v214
    %668 = vmatprep.subr.mxu0 %v219
    %669 = vmatpush1.msra.mxu0 %v218
    %670 = vmatprep.subr.mxu0 %v223
    %671 = vmatpush1.msra.mxu0 %v222
    %672 = vmatprep.subr.mxu0 %v227
    %673 = vmatpush1.msra.mxu0 %v226
    %674 = vmatprep.subr.mxu0 %v231
    %675 = vmatpush1.msra.mxu0 %v230
    %676 = vmatprep.subr.mxu0 %v235
    %677 = vmatpush1.msra.mxu0 %v234
    %678 = vmatprep.subr.mxu0 %v239
    %679 = vmatpush1.msra.mxu0 %v238
    %680 = vmatprep.subr.mxu0 %v243
    %681 = vmatpush1.msra.mxu0 %v242
    %682 = vmatprep.subr.mxu0 %v247
    %683 = vmatpush1.msra.mxu0 %v246
    %684 = vmatprep.subr.mxu0 %v251
    %685 = vmatpush1.msra.mxu0 %v250
    %686 = vmatprep.subr.mxu0 %v255
    %687 = vmatpush1.msra.mxu0 %v254
    %688 = vmatprep.subr.mxu0 %v259
    %689 = vmatpush1.msra.mxu0 %v258
    %690 = vmatprep.subr.mxu0 %v263
    %691 = vmatpush1.msra.mxu0 %v262
    %692 = vmatprep.subr.mxu0 %v267
    %693 = vmatpush1.msra.mxu0 %v266
    %694 = vmatprep.subr.mxu0 %v271
    %695 = vmatpush1.msra.mxu0 %v270
    %696 = vmatprep.subr.mxu0 %v275
    %697 = vmatpush1.msra.mxu0 %v274
    %698 = vmatprep.subr.mxu0 %v279
    %699 = vmatpush1.msra.mxu0 %v278
    %700 = vmatprep.subr.mxu0 %v283
    %701 = vmatpush1.msra.mxu0 %v282
    %702 = vmatprep.mubr.f32.mxu0 %v125
    %703 = vmatmul.mubr.f32.gmra.mrb[0].mxu0 %v124
    %v704 = vpop.f32.mrb[0].mxu0
    %v705 = vadd.f32 0.0, %v704
    %v706 = vpop.f32.mrb[0].mxu0
    %v707 = vadd.f32 0.0, %v706
    %708 = vmatprep.mubr.f32.mxu0 %v129
    %709 = vmatmul.mubr.f32.gmra.mrb[0].mxu0 %v128
    %v710 = vpop.f32.mrb[0].mxu0
    %v711 = vadd.f32 0.0, %v710
    %v712 = vpop.f32.mrb[0].mxu0
    %v713 = vadd.f32 0.0, %v712
    %714 = vmatprep.mubr.f32.mxu0 %v133
    %715 = vmatmul.mubr.f32.gmra.mrb[0].mxu0 %v132
    %v716 = vpop.f32.mrb[0].mxu0
    %v717 = vadd.f32 0.0, %v716
    %v718 = vpop.f32.mrb[0].mxu0
    %v719 = vadd.f32 0.0, %v718
    %720 = vmatprep.mubr.f32.mxu0 %v137
    %721 = vmatmul.mubr.f32.gmra.mrb[0].mxu0 %v136
    %v722 = vpop.f32.mrb[0].mxu0
    %v723 = vadd.f32 0.0, %v722
    %v724 = vpop.f32.mrb[0].mxu0
    %v725 = vadd.f32 0.0, %v724
    %726 = vmatprep.mubr.f32.mxu0 %v141
    %727 = vmatmul.mubr.f32.gmra.mrb[0].mxu0 %v140
    %v728 = vpop.f32.mrb[0].mxu0
    %v729 = vadd.f32 0.0, %v728
    %v730 = vpop.f32.mrb[0].mxu0
    %v731 = vadd.f32 0.0, %v730
    %732 = vmatprep.mubr.f32.mxu0 %v145
    %733 = vmatmul.mubr.f32.gmra.mrb[0].mxu0 %v144
    %v734 = vpop.f32.mrb[0].mxu0
    %v735 = vadd.f32 0.0, %v734
    %v736 = vpop.f32.mrb[0].mxu0
    %v737 = vadd.f32 0.0, %v736
    %738 = vmatprep.mubr.f32.mxu0 %v149
    %739 = vmatmul.mubr.f32.gmra.mrb[0].mxu0 %v148
    %v740 = vpop.f32.mrb[0].mxu0
    %v741 = vadd.f32 0.0, %v740
    %v742 = vpop.f32.mrb[0].mxu0
    %v743 = vadd.f32 0.0, %v742
    %744 = vmatprep.mubr.f32.mxu0 %v153
    %745 = vmatmul.mubr.f32.gmra.mrb[0].mxu0 %v152
    %v746 = vpop.f32.mrb[0].mxu0
    %v747 = vadd.f32 0.0, %v746
    %v748 = vpop.f32.mrb[0].mxu0
    %v749 = vadd.f32 0.0, %v748
    %750 = vdwg.mxu0
    %751 = vmatprep.subr.mxu0 %v287
    %752 = vmatpush1.msra.mxu0 %v286
    %753 = vmatprep.subr.mxu0 %v291
    %754 = vmatpush1.msra.mxu0 %v290
    %755 = vmatprep.subr.mxu0 %v295
    %756 = vmatpush1.msra.mxu0 %v294
    %757 = vmatprep.subr.mxu0 %v299
    %758 = vmatpush1.msra.mxu0 %v298
    %759 = vmatprep.subr.mxu0 %v303
    %760 = vmatpush1.msra.mxu0 %v302
    %761 = vmatprep.subr.mxu0 %v307
    %762 = vmatpush1.msra.mxu0 %v306
    %763 = vmatprep.subr.mxu0 %v311
    %764 = vmatpush1.msra.mxu0 %v310
    %765 = vmatprep.subr.mxu0 %v315
    %766 = vmatpush1.msra.mxu0 %v314
    %767 = vmatprep.subr.mxu0 %v319
    %768 = vmatpush1.msra.mxu0 %v318
    %769 = vmatprep.subr.mxu0 %v323
    %770 = vmatpush1.msra.mxu0 %v322
    %771 = vmatprep.subr.mxu0 %v327
    %772 = vmatpush1.msra.mxu0 %v326
    %773 = vmatprep.subr.mxu0 %v331
    %774 = vmatpush1.msra.mxu0 %v330
    %775 = vmatprep.subr.mxu0 %v335
    %776 = vmatpush1.msra.mxu0 %v334
    %777 = vmatprep.subr.mxu0 %v339
    %778 = vmatpush1.msra.mxu0 %v338
    %779 = vmatprep.subr.mxu0 %v343
    %780 = vmatpush1.msra.mxu0 %v342
    %781 = vmatprep.subr.mxu0 %v347
    %782 = vmatpush1.msra.mxu0 %v346
    %783 = vmatprep.subr.mxu0 %v351
    %784 = vmatpush1.msra.mxu0 %v350
    %785 = vmatprep.subr.mxu0 %v355
    %786 = vmatpush1.msra.mxu0 %v354
    %787 = vmatprep.subr.mxu0 %v359
    %788 = vmatpush1.msra.mxu0 %v358
    %789 = vmatprep.subr.mxu0 %v363
    %790 = vmatpush1.msra.mxu0 %v362
    %791 = vmatprep.subr.mxu0 %v367
    %792 = vmatpush1.msra.mxu0 %v366
    %793 = vmatprep.subr.mxu0 %v371
    %794 = vmatpush1.msra.mxu0 %v370
    %795 = vmatprep.subr.mxu0 %v375
    %796 = vmatpush1.msra.mxu0 %v374
    %797 = vmatprep.subr.mxu0 %v379
    %798 = vmatpush1.msra.mxu0 %v378
    %799 = vmatprep.subr.mxu0 %v383
    %800 = vmatpush1.msra.mxu0 %v382
    %801 = vmatprep.subr.mxu0 %v387
    %802 = vmatpush1.msra.mxu0 %v386
    %803 = vmatprep.subr.mxu0 %v391
    %804 = vmatpush1.msra.mxu0 %v390
    %805 = vmatprep.subr.mxu0 %v395
    %806 = vmatpush1.msra.mxu0 %v394
    %807 = vmatprep.subr.mxu0 %v399
    %808 = vmatpush1.msra.mxu0 %v398
    %809 = vmatprep.subr.mxu0 %v403
    %810 = vmatpush1.msra.mxu0 %v402
    %811 = vmatprep.subr.mxu0 %v407
    %812 = vmatpush1.msra.mxu0 %v406
    %813 = vmatprep.subr.mxu0 %v411
    %814 = vmatpush1.msra.mxu0 %v410
    %815 = vmatprep.mubr.f32.mxu0 %v127
    %816 = vmatmul.mubr.f32.gmra.mrb[0].mxu0 %v126
    %v817 = vpop.f32.mrb[0].mxu0
    %v818 = vadd.f32 %v705, %v817
    %v819 = vpop.f32.mrb[0].mxu0
    %v820 = vadd.f32 %v707, %v819
    %821 = vmatprep.mubr.f32.mxu0 %v131
    %822 = vmatmul.mubr.f32.gmra.mrb[0].mxu0 %v130
    %v823 = vpop.f32.mrb[0].mxu0
    %v824 = vadd.f32 %v711, %v823
    %v825 = vpop.f32.mrb[0].mxu0
    %v826 = vadd.f32 %v713, %v825
    %827 = vmatprep.mubr.f32.mxu0 %v135
    %828 = vmatmul.mubr.f32.gmra.mrb[0].mxu0 %v134
    %v829 = vpop.f32.mrb[0].mxu0
    %v830 = vadd.f32 %v717, %v829
    %v831 = vpop.f32.mrb[0].mxu0
    %v832 = vadd.f32 %v719, %v831
    %833 = vmatprep.mubr.f32.mxu0 %v139
    %834 = vmatmul.mubr.f32.gmra.mrb[0].mxu0 %v138
    %v835 = vpop.f32.mrb[0].mxu0
    %v836 = vadd.f32 %v723, %v835
    %v837 = vpop.f32.mrb[0].mxu0
    %v838 = vadd.f32 %v725, %v837
    %839 = vmatprep.mubr.f32.mxu0 %v143
    %840 = vmatmul.mubr.f32.gmra.mrb[0].mxu0 %v142
    %v841 = vpop.f32.mrb[0].mxu0
    %v842 = vadd.f32 %v729, %v841
    %v843 = vpop.f32.mrb[0].mxu0
    %v844 = vadd.f32 %v731, %v843
    %845 = vmatprep.mubr.f32.mxu0 %v147
    %846 = vmatmul.mubr.f32.gmra.mrb[0].mxu0 %v146
    %v847 = vpop.f32.mrb[0].mxu0
    %v848 = vadd.f32 %v735, %v847
    %v849 = vpop.f32.mrb[0].mxu0
    %v850 = vadd.f32 %v737, %v849
    %851 = vmatprep.mubr.f32.mxu0 %v151
    %852 = vmatmul.mubr.f32.gmra.mrb[0].mxu0 %v150
    %v853 = vpop.f32.mrb[0].mxu0
    %v854 = vadd.f32 %v741, %v853
    %v855 = vpop.f32.mrb[0].mxu0
    %v856 = vadd.f32 %v743, %v855
    %857 = vmatprep.mubr.f32.mxu0 %v155
    %858 = vmatmul.mubr.f32.gmra.mrb[0].mxu0 %v154
    %v859 = vpop.f32.mrb[0].mxu0
    %v860 = vadd.f32 %v747, %v859
    %v861 = vpop.f32.mrb[0].mxu0
    %v862 = vadd.f32 %v749, %v861
    %863 = vdwg.mxu0
    %v864 = vadd.f32 %v92, %v592
    %v865 = vadd.f32 %v93, %v594
    %v866 = vadd.f32 %v94, %v818
    %v867 = vadd.f32 %v95, %v820
    %v868 = vadd.f32 %v96, %v598
    %v869 = vadd.f32 %v97, %v600
    %v870 = vadd.f32 %v98, %v824
    %v871 = vadd.f32 %v99, %v826
    %v872 = vadd.f32 %v100, %v604
    %v873 = vadd.f32 %v101, %v606
    %v874 = vadd.f32 %v102, %v830
    %v875 = vadd.f32 %v103, %v832
    %v876 = vadd.f32 %v104, %v610
    %v877 = vadd.f32 %v105, %v612
    %v878 = vadd.f32 %v106, %v836
    %v879 = vadd.f32 %v107, %v838
    %v880 = vadd.f32 %v108, %v616
    %v881 = vadd.f32 %v109, %v618
    %v882 = vadd.f32 %v110, %v842
    %v883 = vadd.f32 %v111, %v844
    %v884 = vadd.f32 %v112, %v622
    %v885 = vadd.f32 %v113, %v624
    %v886 = vadd.f32 %v114, %v848
    %v887 = vadd.f32 %v115, %v850
    %v888 = vadd.f32 %v116, %v628
    %v889 = vadd.f32 %v117, %v630
    %v890 = vadd.f32 %v118, %v854
    %v891 = vadd.f32 %v119, %v856
    %v892 = vadd.f32 %v120, %v634
    %v893 = vadd.f32 %v121, %v636
    %v894 = vadd.f32 %v122, %v860
    %v895 = vadd.f32 %v123, %v862
    %896 = vst [vmem:[#allocation2] sm:$0xff] %v864
    %897 = vst [vmem:[#allocation2 + $0x8] sm:$0xff] %v865
    %898 = vst [vmem:[#allocation2 + $0x10] sm:$0xff] %v866
    %899 = vst [vmem:[#allocation2 + $0x18] sm:$0xff] %v867
    %900 = vst [vmem:[#allocation2 + $0x20] sm:$0xff] %v868
    %901 = vst [vmem:[#allocation2 + $0x28] sm:$0xff] %v869
    %902 = vst [vmem:[#allocation2 + $0x30] sm:$0xff] %v870
    %903 = vst [vmem:[#allocation2 + $0x38] sm:$0xff] %v871
    %904 = vst [vmem:[#allocation2 + $0x40] sm:$0xff] %v872
    %905 = vst [vmem:[#allocation2 + $0x48] sm:$0xff] %v873
    %906 = vst [vmem:[#allocation2 + $0x50] sm:$0xff] %v874
    %907 = vst [vmem:[#allocation2 + $0x58] sm:$0xff] %v875
    %908 = vst [vmem:[#allocation2 + $0x60] sm:$0xff] %v876
    %909 = vst [vmem:[#allocation2 + $0x68] sm:$0xff] %v877
    %910 = vst [vmem:[#allocation2 + $0x70] sm:$0xff] %v878
    %911 = vst [vmem:[#allocation2 + $0x78] sm:$0xff] %v879
    %912 = vst [vmem:[#allocation2 + $0x80] sm:$0xff] %v880
    %913 = vst [vmem:[#allocation2 + $0x88] sm:$0xff] %v881
    %914 = vst [vmem:[#allocation2 + $0x90] sm:$0xff] %v882
    %915 = vst [vmem:[#allocation2 + $0x98] sm:$0xff] %v883
    %916 = vst [vmem:[#allocation2 + $0xa0] sm:$0xff] %v884
    %917 = vst [vmem:[#allocation2 + $0xa8] sm:$0xff] %v885
    %918 = vst [vmem:[#allocation2 + $0xb0] sm:$0xff] %v886
    %919 = vst [vmem:[#allocation2 + $0xb8] sm:$0xff] %v887
    %920 = vst [vmem:[#allocation2 + $0xc0] sm:$0xff] %v888
    %921 = vst [vmem:[#allocation2 + $0xc8] sm:$0xff] %v889
    %922 = vst [vmem:[#allocation2 + $0xd0] sm:$0xff] %v890
    %923 = vst [vmem:[#allocation2 + $0xd8] sm:$0xff] %v891
    %924 = vst [vmem:[#allocation2 + $0xe0] sm:$0xff] %v892
    %925 = vst [vmem:[#allocation2 + $0xe8] sm:$0xff] %v893
    %926 = vst [vmem:[#allocation2 + $0xf0] sm:$0xff] %v894
    %927 = vst [vmem:[#allocation2 + $0xf8] sm:$0xff] %v895
    // Predicated region
    $region30: #{ae_cnn_forward.27} parent=1 // pred_check
      %p928 = pneg %p56
    $region31: #{ae_cnn_forward.27} parent=1 // pred_check_branch
      %930 = sbr.rel (%p928) target = $region33
    $region32: #{ae_cnn_forward.27} parent=1 // pred_region
      %v931 = vld [vmem:[#allocation2] sm:$0xff]
      %v932 = vld [vmem:[#allocation2 + $0x8] sm:$0xff]
      %v933 = vld [vmem:[#allocation2 + $0x10] sm:$0xff]
      %v934 = vld [vmem:[#allocation2 + $0x18] sm:$0xff]
      %v935 = vld [vmem:[#allocation2 + $0x20] sm:$0xff]
      %v936 = vld [vmem:[#allocation2 + $0x28] sm:$0xff]
      %v937 = vld [vmem:[#allocation2 + $0x30] sm:$0xff]
      %v938 = vld [vmem:[#allocation2 + $0x38] sm:$0xff]
      %v939 = vld [vmem:[#allocation2 + $0x40] sm:$0xff]
      %v940 = vld [vmem:[#allocation2 + $0x48] sm:$0xff]
      %v941 = vld [vmem:[#allocation2 + $0x50] sm:$0xff]
      %v942 = vld [vmem:[#allocation2 + $0x58] sm:$0xff]
      %v943 = vld [vmem:[#allocation2 + $0x60] sm:$0xff]
      %v944 = vld [vmem:[#allocation2 + $0x68] sm:$0xff]
      %v945 = vld [vmem:[#allocation2 + $0x70] sm:$0xff]
      %v946 = vld [vmem:[#allocation2 + $0x78] sm:$0xff]
      %v947 = vld [vmem:[#allocation2 + $0x80] sm:$0xff]
      %v948 = vld [vmem:[#allocation2 + $0x88] sm:$0xff]
      %v949 = vld [vmem:[#allocation2 + $0x90] sm:$0xff]
      %v950 = vld [vmem:[#allocation2 + $0x98] sm:$0xff]
      %v951 = vld [vmem:[#allocation2 + $0xa0] sm:$0xff]
      %v952 = vld [vmem:[#allocation2 + $0xa8] sm:$0xff]
      %v953 = vld [vmem:[#allocation2 + $0xb0] sm:$0xff]
      %v954 = vld [vmem:[#allocation2 + $0xb8] sm:$0xff]
      %v955 = vld [vmem:[#allocation2 + $0xc0] sm:$0xff]
      %v956 = vld [vmem:[#allocation2 + $0xc8] sm:$0xff]
      %v957 = vld [vmem:[#allocation2 + $0xd0] sm:$0xff]
      %v958 = vld [vmem:[#allocation2 + $0xd8] sm:$0xff]
      %v959 = vld [vmem:[#allocation2 + $0xe0] sm:$0xff]
      %v960 = vld [vmem:[#allocation2 + $0xe8] sm:$0xff]
      %v961 = vld [vmem:[#allocation2 + $0xf0] sm:$0xff]
      %v962 = vld [vmem:[#allocation2 + $0xf8] sm:$0xff]
      %v963 = vld [vmem:[#allocation8] sm:$0xff]
      %v964 = vld [vmem:[#allocation8 + $0x8] sm:$0xff]
      %v965 = vld [vmem:[#allocation8 + $0x10] sm:$0xff]
      %v966 = vld [vmem:[#allocation8 + $0x18] sm:$0xff]
      %v967 = vld [vmem:[#allocation8 + $0x20] sm:$0xff]
      %v968 = vld [vmem:[#allocation8 + $0x28] sm:$0xff]
      %v969 = vld [vmem:[#allocation8 + $0x30] sm:$0xff]
      %v970 = vld [vmem:[#allocation8 + $0x38] sm:$0xff]
      %972 = vset.pattern.permute.xlu0 0
      %973 = vperm.xlu0 %972, %v963
      %v974 = vpop.permute.xlu0 %973
      %977 = vset.pattern.permute.xlu0 0
      %978 = vperm.xlu0 %977, %v964
      %v979 = vpop.permute.xlu0 %978
      %982 = vset.pattern.permute.xlu0 0
      %983 = vperm.xlu0 %982, %v965
      %v984 = vpop.permute.xlu0 %983
      %987 = vset.pattern.permute.xlu0 0
      %988 = vperm.xlu0 %987, %v966
      %v989 = vpop.permute.xlu0 %988
      %992 = vset.pattern.permute.xlu0 0
      %993 = vperm.xlu0 %992, %v967
      %v994 = vpop.permute.xlu0 %993
      %997 = vset.pattern.permute.xlu0 0
      %998 = vperm.xlu0 %997, %v968
      %v999 = vpop.permute.xlu0 %998
      %1002 = vset.pattern.permute.xlu0 0
      %1003 = vperm.xlu0 %1002, %v969
      %v1004 = vpop.permute.xlu0 %1003
      %1007 = vset.pattern.permute.xlu0 0
      %1008 = vperm.xlu0 %1007, %v970
      %v1009 = vpop.permute.xlu0 %1008
      %v1011 = vadd.f32 %v931, %v974
      %v1012 = vadd.f32 %v932, %v974
      %v1013 = vadd.f32 %v933, %v974
      %v1014 = vadd.f32 %v934, %v974
      %v1015 = vadd.f32 %v935, %v979
      %v1016 = vadd.f32 %v936, %v979
      %v1017 = vadd.f32 %v937, %v979
      %v1018 = vadd.f32 %v938, %v979
      %v1019 = vadd.f32 %v939, %v984
      %v1020 = vadd.f32 %v940, %v984
      %v1021 = vadd.f32 %v941, %v984
      %v1022 = vadd.f32 %v942, %v984
      %v1023 = vadd.f32 %v943, %v989
      %v1024 = vadd.f32 %v944, %v989
      %v1025 = vadd.f32 %v945, %v989
      %v1026 = vadd.f32 %v946, %v989
      %v1027 = vadd.f32 %v947, %v994
      %v1028 = vadd.f32 %v948, %v994
      %v1029 = vadd.f32 %v949, %v994
      %v1030 = vadd.f32 %v950, %v994
      %v1031 = vadd.f32 %v951, %v999
      %v1032 = vadd.f32 %v952, %v999
      %v1033 = vadd.f32 %v953, %v999
      %v1034 = vadd.f32 %v954, %v999
      %v1035 = vadd.f32 %v955, %v1004
      %v1036 = vadd.f32 %v956, %v1004
      %v1037 = vadd.f32 %v957, %v1004
      %v1038 = vadd.f32 %v958, %v1004
      %v1039 = vadd.f32 %v959, %v1009
      %v1040 = vadd.f32 %v960, %v1009
      %v1041 = vadd.f32 %v961, %v1009
      %v1042 = vadd.f32 %v962, %v1009
      %v1043 = vmax.f32 %v1011, 0.0
      %v1044 = vmax.f32 %v1012, 0.0
      %v1045 = vmax.f32 %v1013, 0.0
      %v1046 = vmax.f32 %v1014, 0.0
      %v1047 = vmax.f32 %v1015, 0.0
      %v1048 = vmax.f32 %v1016, 0.0
      %v1049 = vmax.f32 %v1017, 0.0
      %v1050 = vmax.f32 %v1018, 0.0
      %v1051 = vmax.f32 %v1019, 0.0
      %v1052 = vmax.f32 %v1020, 0.0
      %v1053 = vmax.f32 %v1021, 0.0
      %v1054 = vmax.f32 %v1022, 0.0
      %v1055 = vmax.f32 %v1023, 0.0
      %v1056 = vmax.f32 %v1024, 0.0
      %v1057 = vmax.f32 %v1025, 0.0
      %v1058 = vmax.f32 %v1026, 0.0
      %v1059 = vmax.f32 %v1027, 0.0
      %v1060 = vmax.f32 %v1028, 0.0
      %v1061 = vmax.f32 %v1029, 0.0
      %v1062 = vmax.f32 %v1030, 0.0
      %v1063 = vmax.f32 %v1031, 0.0
      %v1064 = vmax.f32 %v1032, 0.0
      %v1065 = vmax.f32 %v1033, 0.0
      %v1066 = vmax.f32 %v1034, 0.0
      %v1067 = vmax.f32 %v1035, 0.0
      %v1068 = vmax.f32 %v1036, 0.0
      %v1069 = vmax.f32 %v1037, 0.0
      %v1070 = vmax.f32 %v1038, 0.0
      %v1071 = vmax.f32 %v1039, 0.0
      %v1072 = vmax.f32 %v1040, 0.0
      %v1073 = vmax.f32 %v1041, 0.0
      %v1074 = vmax.f32 %v1042, 0.0
      %1075 = vst [vmem:[#allocation9] sm:$0xff] %v1043
      %1076 = vst [vmem:[#allocation9 + $0x8] sm:$0xff] %v1044
      %1077 = vst [vmem:[#allocation9 + $0x10] sm:$0xff] %v1045
      %1078 = vst [vmem:[#allocation9 + $0x18] sm:$0xff] %v1046
      %1079 = vst [vmem:[#allocation9 + $0x20] sm:$0xff] %v1047
      %1080 = vst [vmem:[#allocation9 + $0x28] sm:$0xff] %v1048
      %1081 = vst [vmem:[#allocation9 + $0x30] sm:$0xff] %v1049
      %1082 = vst [vmem:[#allocation9 + $0x38] sm:$0xff] %v1050
      %1083 = vst [vmem:[#allocation9 + $0x40] sm:$0xff] %v1051
      %1084 = vst [vmem:[#allocation9 + $0x48] sm:$0xff] %v1052
      %1085 = vst [vmem:[#allocation9 + $0x50] sm:$0xff] %v1053
      %1086 = vst [vmem:[#allocation9 + $0x58] sm:$0xff] %v1054
      %1087 = vst [vmem:[#allocation9 + $0x60] sm:$0xff] %v1055
      %1088 = vst [vmem:[#allocation9 + $0x68] sm:$0xff] %v1056
      %1089 = vst [vmem:[#allocation9 + $0x70] sm:$0xff] %v1057
      %1090 = vst [vmem:[#allocation9 + $0x78] sm:$0xff] %v1058
      %1091 = vst [vmem:[#allocation9 + $0x80] sm:$0xff] %v1059
      %1092 = vst [vmem:[#allocation9 + $0x88] sm:$0xff] %v1060
      %1093 = vst [vmem:[#allocation9 + $0x90] sm:$0xff] %v1061
      %1094 = vst [vmem:[#allocation9 + $0x98] sm:$0xff] %v1062
      %1095 = vst [vmem:[#allocation9 + $0xa0] sm:$0xff] %v1063
      %1096 = vst [vmem:[#allocation9 + $0xa8] sm:$0xff] %v1064
      %1097 = vst [vmem:[#allocation9 + $0xb0] sm:$0xff] %v1065
      %1098 = vst [vmem:[#allocation9 + $0xb8] sm:$0xff] %v1066
      %1099 = vst [vmem:[#allocation9 + $0xc0] sm:$0xff] %v1067
      %1100 = vst [vmem:[#allocation9 + $0xc8] sm:$0xff] %v1068
      %1101 = vst [vmem:[#allocation9 + $0xd0] sm:$0xff] %v1069
      %1102 = vst [vmem:[#allocation9 + $0xd8] sm:$0xff] %v1070
      %1103 = vst [vmem:[#allocation9 + $0xe0] sm:$0xff] %v1071
      %1104 = vst [vmem:[#allocation9 + $0xe8] sm:$0xff] %v1072
      %1105 = vst [vmem:[#allocation9 + $0xf0] sm:$0xff] %v1073
      %1106 = vst [vmem:[#allocation9 + $0xf8] sm:$0xff] %v1074
    $region33: #{ae_cnn_forward.27} parent=1 // pred_fallthru
      _
    // Predicated region
    $region34: #{ae_cnn_forward.27} parent=1 // pred_check
      _
    $region35: #{ae_cnn_forward.27} parent=1 // pred_check_branch
      %1108 = sbr.rel (0) target = $region37
    $region36: #{ae_cnn_forward.27} parent=1 // pred_region
      %s1110 = ssub.s32 4096, 4096
      %1111 = vsyncadd [#allocation5], %s1110
      %s1112 = sshll.u32 [#allocation9], 4
      %s1113 = int_to_ptr.vmem [resolvable:$true] %s1112
      %1118 = dma.vmem_to_hbm [thread:$0]  %s1113, 4096, %s3, [#allocation5], 512, 512, 32
    $region37: #{ae_cnn_forward.27} parent=1 // pred_fallthru
      _
    // Predicated region
    $region38: #{ae_cnn_forward.27} parent=1 // pred_check
      _
    $region39: #{ae_cnn_forward.27} parent=1 // pred_check_branch
      %1120 = sbr.rel (0) target = $region41
    $region40: #{ae_cnn_forward.27} parent=1 // pred_region
      %1121 = dma.done [#allocation5], 4096
    $region41: #{ae_cnn_forward.27} parent=1 // pred_fallthru
      _
    %1122 = vsyncpa [#allocation4], 1
    %1123 = vsyncpa [#allocation7], 1
    %1124 = vsyncpa [#allocation5], 1

// kernel: ae_cnn_forward.31
$region0: #{ae_cnn_forward.31}
  #allocation0 [shape = 'u32[]', space=smem, size = 0x4, offset = 0x4, fixed_abs, tag = 'smem constant byte address 0x4 - core index']
  #allocation1 [shape = 'u32[144,128]{1,0:T(1,128)}', space=vmem, size = 0x12000, scoped, tag = 'internal scratch']
  #allocation2 [shape = 'f32[8,512]{1,0:T(8,128)}', space=vmem, size = 0x4000, scoped, tag = 'scratch operand']
  %s0 = inlined_call_operand.hbm [shape: f32[8,1024], index: 0, kind: input, shape index: {}]
  %s1 = inlined_call_operand.hbm [shape: f32[1024,2560], index: 1, kind: input, shape index: {}]
  %s2 = inlined_call_operand.hbm [shape: f32[8,1], index: 2, kind: input, shape index: {}]
  %s3 = inlined_call_operand.hbm [shape: f32[8,2560], index: 3, kind: output, shape index: {}]
  %s4 = sld [smem:[#allocation0]]
  $region65: #{ae_cnn_forward.31} parent=0
    _
  %s6 = ssub.s32 1, %s4
  %s7 = scalar_select 0, %s6, %s4
  $region1: #{ae_cnn_forward.31} parent=0
    #allocation3 [shape = 'u8[32768]{0}', space=vmem, size = 0x8000, scoped, tag = 'input window, operand 0, single buffered']
    #allocation4 [shape = 's32[2]{0}', space=sflag, size = 0x8, scoped, tag = 'scoped memory for ae_cnn_forward.31']
    #allocation5 [shape = 's32[2]{0}', space=sflag, size = 0x8, scoped, tag = 'scoped memory for ae_cnn_forward.31']
    #allocation6 [shape = 'u8[4194304]{0}', space=vmem, size = 0x400000, scoped, tag = 'input window, operand 1']
    #allocation7 [shape = 's32[2]{0}', space=sflag, size = 0x8, scoped, tag = 'scoped memory for ae_cnn_forward.31']
    #allocation8 [shape = 'u8[4096]{0}', space=vmem, size = 0x1000, scoped, tag = 'input window, operand 2, single buffered']
    #allocation9 [shape = 'u8[32768]{0}', space=vmem, size = 0x8000, scoped, tag = 'output window, operand 0']
    %8 = vsyncpa [#allocation4], 0
    %9 = vsyncpa [#allocation7], 0
    %s10 = scalar_lea.sflag [#allocation7], 1
    %11 = vsyncpa %s10, 0
    %12 = vsyncpa [#allocation5], 0
    %s13 = scalar_lea.sflag [#allocation5], 1
    %14 = vsyncpa %s13, 0
    loop: start=0, step=1, limit=7
    $region2: #{ae_cnn_forward.31} parent=1 // loop_pre_header
      _
    $region3: #{ae_cnn_forward.31} parent=1 // loop_header
      %s16 = sphi 0, %s20
      %p17 = scmp.ge.s32.totalorder %s16, 7
      %s23 = sphi 0, %s42
      %s24 = sphi 0, %s38
      %s25 = sphi 0, %s34
      %s26 = sphi 0, %s23
      %s27 = sphi 0, %s24
      %s28 = sphi 0, %s25
      %s29 = sphi 0, %s26
      %s30 = sphi 0, %s27
      %s31 = sphi 0, %s28
      %s47 = sphi 0, %s49
      %s50 = sphi 0, %s47
      %s51 = sphi 0, %s50
      %s67 = sphi 0, %s51
      %s75 = sphi 0, %s77
      %s78 = sphi 0, %s75
      %s79 = sphi 0, %s78
      %s95 = sphi 0, %s79
      %s101 = sphi 0, %s103
      %s104 = sphi 0, %s101
      %s105 = sphi 0, %s104
      %s121 = sphi 0, %s105
      %s129 = sphi 0, %s131
      %s132 = sphi 0, %s129
      %s133 = sphi 0, %s132
      %s149 = sphi 0, %s133
    $region4: #{ae_cnn_forward.31} parent=1 // loop_header_branch
      %19 = sbr.rel (%p17) target = $region8
    $region5: #{ae_cnn_forward.31} parent=1 // loop_body
      %s21 = ssub.s32 %s16, 1
      %s22 = ssub.s32 %s16, 2
      %s32 = sadd.s32 1, %s25
      %p33 = scmp.ge.s32.totalorder %s32, 1
      %s34 = scalar_select %p33, 0, %s32
      %s35 = sadd.s32 1, %s24
      %s36 = scalar_select %p33, %s35, %s24
      %p37 = scmp.ge.s32.totalorder %s36, 5
      %s38 = scalar_select %p37, 0, %s36
      %s39 = sadd.s32 1, %s23
      %s40 = scalar_select %p37, %s39, %s23
      %p41 = scmp.ge.s32.totalorder %s40, 1
      %s42 = scalar_select %p41, 0, %s40
      %s43 = ssub.s32 %s23, %s42
      %s44 = ssub.s32 %s25, %s34
      %s45 = sor.u32 %s43, %s44
      %p46 = scmp.eq.s32.totalorder %s45, 0
      %s48 = sadd.s32 %s47, 1
      %s49 = scalar_select %p46, %s47, %s48
      %p52 = pneg %p46
      %p53 = scmp.eq.s32.totalorder %s16, 4
      %p54 = por %p52, %p53
      %p55 = scmp.ne.s32.totalorder %s47, %s50
      %p56 = scmp.eq.s32.totalorder %s16, 0
      %p57 = por %p55, %p56
      %p58 = scmp.ne.s32.totalorder %s47, %s50
      %p59 = scmp.eq.s32.totalorder %s21, 4
      %p60 = por %p58, %p59
      %p61 = scmp.ne.s32.totalorder %s50, %s51
      %p62 = scmp.eq.s32.totalorder %s21, 0
      %p63 = por %p61, %p62
      %p64 = scmp.ne.s32.totalorder %s50, %s51
      %p65 = scmp.eq.s32.totalorder %s22, 4
      %p66 = por %p64, %p65
      %p68 = scmp.ne.s32.totalorder %s51, %s67
      %p69 = scmp.eq.s32.totalorder %s22, 0
      %p70 = por %p68, %p69
      %s71 = ssub.s32 %s25, %s34
      %s72 = ssub.s32 %s24, %s38
      %s73 = sor.u32 %s71, %s72
      %p74 = scmp.eq.s32.totalorder %s73, 0
      %s76 = sadd.s32 %s75, 1
      %s77 = scalar_select %p74, %s75, %s76
      %p80 = pneg %p74
      %p81 = scmp.eq.s32.totalorder %s16, 4
      %p82 = por %p80, %p81
      %p83 = scmp.ne.s32.totalorder %s75, %s78
      %p84 = scmp.eq.s32.totalorder %s16, 0
      %p85 = por %p83, %p84
      %p86 = scmp.ne.s32.totalorder %s75, %s78
      %p87 = scmp.eq.s32.totalorder %s21, 4
      %p88 = por %p86, %p87
      %p89 = scmp.ne.s32.totalorder %s78, %s79
      %p90 = scmp.eq.s32.totalorder %s21, 0
      %p91 = por %p89, %p90
      %p92 = scmp.ne.s32.totalorder %s78, %s79
      %p93 = scmp.eq.s32.totalorder %s22, 4
      %p94 = por %p92, %p93
      %p96 = scmp.ne.s32.totalorder %s79, %s95
      %p97 = scmp.eq.s32.totalorder %s22, 0
      %p98 = por %p96, %p97
      %s99 = ssub.s32 %s23, %s42
      %p100 = scmp.eq.s32.totalorder %s99, 0
      %s102 = sadd.s32 %s101, 1
      %s103 = scalar_select %p100, %s101, %s102
      %p106 = pneg %p100
      %p107 = scmp.eq.s32.totalorder %s16, 4
      %p108 = por %p106, %p107
      %p109 = scmp.ne.s32.totalorder %s101, %s104
      %p110 = scmp.eq.s32.totalorder %s16, 0
      %p111 = por %p109, %p110
      %p112 = scmp.ne.s32.totalorder %s101, %s104
      %p113 = scmp.eq.s32.totalorder %s21, 4
      %p114 = por %p112, %p113
      %p115 = scmp.ne.s32.totalorder %s104, %s105
      %p116 = scmp.eq.s32.totalorder %s21, 0
      %p117 = por %p115, %p116
      %p118 = scmp.ne.s32.totalorder %s104, %s105
      %p119 = scmp.eq.s32.totalorder %s22, 4
      %p120 = por %p118, %p119
      %p122 = scmp.ne.s32.totalorder %s105, %s121
      %p123 = scmp.eq.s32.totalorder %s22, 0
      %p124 = por %p122, %p123
      %s125 = ssub.s32 %s23, %s42
      %s126 = ssub.s32 %s24, %s38
      %s127 = sor.u32 %s125, %s126
      %p128 = scmp.eq.s32.totalorder %s127, 0
      %s130 = sadd.s32 %s129, 1
      %s131 = scalar_select %p128, %s129, %s130
      %p134 = pneg %p128
      %p135 = scmp.eq.s32.totalorder %s16, 4
      %p136 = por %p134, %p135
      %p137 = scmp.ne.s32.totalorder %s129, %s132
      %p138 = scmp.eq.s32.totalorder %s16, 0
      %p139 = por %p137, %p138
      %p140 = scmp.ne.s32.totalorder %s129, %s132
      %p141 = scmp.eq.s32.totalorder %s21, 4
      %p142 = por %p140, %p141
      %p143 = scmp.ne.s32.totalorder %s132, %s133
      %p144 = scmp.eq.s32.totalorder %s21, 0
      %p145 = por %p143, %p144
      %p146 = scmp.ne.s32.totalorder %s132, %s133
      %p147 = scmp.eq.s32.totalorder %s22, 4
      %p148 = por %p146, %p147
      %p150 = scmp.ne.s32.totalorder %s133, %s149
      %p151 = scmp.eq.s32.totalorder %s22, 0
      %p152 = por %p150, %p151
      %p153 = scmp.le.s32.totalorder 1, %s16
      %p154 = scmp.lt.s32.totalorder %s16, 6
      %p155 = pnand %p153, %p154
      %p156 = pneg %p155
      // Predicated region
      $region9: #{ae_cnn_forward.31} parent=5 // pred_check
        _
      $region10: #{ae_cnn_forward.31} parent=5 // pred_check_branch
        %158 = sbr.rel (%p155) target = $region12
      $region11: #{ae_cnn_forward.31} parent=5 // pred_region
        %s159 = ssub.s32 %s16, 1
        // Predicated region
        $region13: #{ae_cnn_forward.31} parent=11 // pred_check
          %p160 = pneg %p63
        $region14: #{ae_cnn_forward.31} parent=11 // pred_check_branch
          %162 = sbr.rel (%p160) target = $region16
        $region15: #{ae_cnn_forward.31} parent=11 // pred_region
          %s163 = smul.u32 8, %s28
          %s165 = ssub.s32 1024, 1024
          %166 = vsyncadd [#allocation4], %s165
          %s167 = smul.addr %s26, 8
          %s168 = sadd.s32 %s163, %s167
          %s169 = smul.addr %s168, 128
          %s170 = scalar_lea.hbm %s0, %s169
          %s172 = sshll.u32 [#allocation3], 4
          %s173 = int_to_ptr.vmem [resolvable:$true] %s172
          %175 = dma.hbm_to_vmem [thread:$0]  %s170, 1024, %s173, [#allocation4]
        $region16: #{ae_cnn_forward.31} parent=11 // pred_fallthru
          _
        // Predicated region
        $region17: #{ae_cnn_forward.31} parent=11 // pred_check
          %p176 = pneg %p117
        $region18: #{ae_cnn_forward.31} parent=11 // pred_check_branch
          %178 = sbr.rel (%p176) target = $region20
        $region19: #{ae_cnn_forward.31} parent=11 // pred_region
          %s180 = ssub.s32 128, 128
          %181 = vsyncadd [#allocation7], %s180
          %s182 = smul.addr %s26, 128
          %s183 = scalar_lea.hbm %s2, %s182
          %s185 = sshll.u32 [#allocation8], 4
          %s186 = int_to_ptr.vmem [resolvable:$true] %s185
          %188 = dma.hbm_to_vmem [thread:$0]  %s183, 128, %s186, [#allocation7]
        $region20: #{ae_cnn_forward.31} parent=11 // pred_fallthru
          _
      $region12: #{ae_cnn_forward.31} parent=5 // pred_fallthru
        _
      %p189 = scmp.lt.s32.totalorder %s16, 5
      // Predicated region
      $region21: #{ae_cnn_forward.31} parent=5 // pred_check
        %p190 = pneg %p189
      $region22: #{ae_cnn_forward.31} parent=5 // pred_check_branch
        %192 = sbr.rel (%p190) target = $region24
      $region23: #{ae_cnn_forward.31} parent=5 // pred_region
        // Predicated region
        $region25: #{ae_cnn_forward.31} parent=23 // pred_check
          %p193 = pneg %p85
        $region26: #{ae_cnn_forward.31} parent=23 // pred_check_branch
          %195 = sbr.rel (%p193) target = $region28
        $region27: #{ae_cnn_forward.31} parent=23 // pred_region
          %s196 = sand.u32 %s16, 1
          %s197 = scalar_lea.sflag [#allocation7], %s196
          %s198 = sand.u32 %s75, 1
          %s199 = smul.addr %s198, 4096
          %s200 = scalar_lea.vmem [#allocation6], %s199
          %s201 = smul.u32 128, %s25
          %s202 = smul.u32 4, %s24
          %s204 = ssub.s32 65536, 65536
          %205 = vsyncadd %s197, %s204
          %s206 = smul.addr %s201, 20
          %s207 = sadd.s32 %s202, %s206
          %s208 = smul.addr %s207, 128
          %s209 = scalar_lea.hbm %s1, %s208
          %s210 = sshll.u32 %s200, 4
          %s211 = int_to_ptr.vmem [resolvable:$true] %s210
          %216 = dma.hbm_to_vmem [thread:$0]  %s209, 65536, %s211, %s197, 2560, 512, 32
        $region28: #{ae_cnn_forward.31} parent=23 // pred_fallthru
          _
      $region24: #{ae_cnn_forward.31} parent=5 // pred_fallthru
        _
      %p217 = scmp.le.s32.totalorder 1, %s16
      %p218 = scmp.lt.s32.totalorder %s16, 6
      %p219 = pnand %p217, %p218
      %p220 = pneg %p219
      // Predicated region
      $region29: #{ae_cnn_forward.31} parent=5 // pred_check
        _
      $region30: #{ae_cnn_forward.31} parent=5 // pred_check_branch
        %222 = sbr.rel (%p219) target = $region32
      $region31: #{ae_cnn_forward.31} parent=5 // pred_region
        %s223 = ssub.s32 %s16, 1
        // Predicated region
        $region33: #{ae_cnn_forward.31} parent=31 // pred_check
          %p224 = pneg %p63
        $region34: #{ae_cnn_forward.31} parent=31 // pred_check_branch
          %226 = sbr.rel (%p224) target = $region36
        $region35: #{ae_cnn_forward.31} parent=31 // pred_region
          %227 = dma.done [#allocation4], 1024
        $region36: #{ae_cnn_forward.31} parent=31 // pred_fallthru
          _
        %s228 = sand.u32 %s21, 1
        %s229 = scalar_lea.sflag [#allocation7], %s228
        %s230 = sand.u32 %s78, 1
        %s231 = smul.addr %s230, 4096
        %s232 = scalar_lea.vmem [#allocation6], %s231
        // Predicated region
        $region37: #{ae_cnn_forward.31} parent=31 // pred_check
          %p233 = pneg %p91
        $region38: #{ae_cnn_forward.31} parent=31 // pred_check_branch
          %235 = sbr.rel (%p233) target = $region40
        $region39: #{ae_cnn_forward.31} parent=31 // pred_region
          %236 = dma.done %s229, 65536
        $region40: #{ae_cnn_forward.31} parent=31 // pred_fallthru
          _
        // Predicated region
        $region41: #{ae_cnn_forward.31} parent=31 // pred_check
          %p237 = pneg %p117
        $region42: #{ae_cnn_forward.31} parent=31 // pred_check_branch
          %239 = sbr.rel (%p237) target = $region44
        $region43: #{ae_cnn_forward.31} parent=31 // pred_region
          %240 = dma.done [#allocation7], 128
        $region44: #{ae_cnn_forward.31} parent=31 // pred_fallthru
          _
        %p241 = pneg %p63
        %p242 = pneg %p60
        %s243 = sand.u32 %s21, 1
        %s244 = scalar_lea.sflag [#allocation7], %s243
        %s245 = sand.u32 %s78, 1
        %s246 = smul.addr %s245, 4096
        %s247 = scalar_lea.vmem [#allocation6], %s246
        %p248 = pneg %p91
        %p249 = pneg %p88
        %p250 = pneg %p117
        %p251 = pneg %p114
        %p252 = pneg %p145
        %p253 = pneg %p142
        %s254 = sand.u32 %s132, 1
        %s255 = scalar_lea.sflag [#allocation5], %s254
        %s256 = sand.u32 %s132, 1
        %s257 = smul.addr %s256, 32
        %s258 = scalar_lea.vmem [#allocation9], %s257
        %s259 = smul.u32 8, %s28
        %s260 = smul.u32 128, %s28
        %s261 = smul.u32 4, %s27
        %s262 = smul.u32 4, %s27
        %p263 = scmp.eq.s32.totalorder %s28, 0
        // Predicated region
        $region45: #{ae_cnn_forward.31} parent=31 // pred_check
          %p264 = pneg %p263
        $region46: #{ae_cnn_forward.31} parent=31 // pred_check_branch
          %266 = sbr.rel (%p264) target = $region48
        $region47: #{ae_cnn_forward.31} parent=31 // pred_region
          %267 = vst [vmem:[#allocation2] sm:$0xff] 0.0
          %268 = vst [vmem:[#allocation2 + $0x8] sm:$0xff] 0.0
          %269 = vst [vmem:[#allocation2 + $0x10] sm:$0xff] 0.0
          %270 = vst [vmem:[#allocation2 + $0x18] sm:$0xff] 0.0
        $region48: #{ae_cnn_forward.31} parent=31 // pred_fallthru
          _
        %v271 = vld [vmem:[#allocation2] sm:$0xff]
        %v272 = vld [vmem:[#allocation2 + $0x8] sm:$0xff]
        %v273 = vld [vmem:[#allocation2 + $0x10] sm:$0xff]
        %v274 = vld [vmem:[#allocation2 + $0x18] sm:$0xff]
        %v275 = vld [vmem:[#allocation3] sm:$0xff]
        %v276 = vld [vmem:[#allocation3 + $0x8] sm:$0xff]
        %v277 = vld [vmem:[#allocation3 + $0x10] sm:$0xff]
        %v278 = vld [vmem:[#allocation3 + $0x18] sm:$0xff]
        %v279 = vld [vmem:[#allocation3 + $0x20] sm:$0xff]
        %v280 = vld [vmem:[#allocation3 + $0x28] sm:$0xff]
        %v281 = vld [vmem:[#allocation3 + $0x30] sm:$0xff]
        %v282 = vld [vmem:[#allocation3 + $0x38] sm:$0xff]
        %v283 = vld [vmem:[%s232] sm:$0xff]
        %v284 = vld [vmem:[%s232 + $0x8] sm:$0xff]
        %v285 = vld [vmem:[%s232 + $0x10] sm:$0xff]
        %v286 = vld [vmem:[%s232 + $0x18] sm:$0xff]
        %v287 = vld [vmem:[%s232 + $0x20] sm:$0xff]
        %v288 = vld [vmem:[%s232 + $0x28] sm:$0xff]
        %v289 = vld [vmem:[%s232 + $0x30] sm:$0xff]
        %v290 = vld [vmem:[%s232 + $0x38] sm:$0xff]
        %v291 = vld [vmem:[%s232 + $0x40] sm:$0xff]
        %v292 = vld [vmem:[%s232 + $0x48] sm:$0xff]
        %v293 = vld [vmem:[%s232 + $0x50] sm:$0xff]
        %v294 = vld [vmem:[%s232 + $0x58] sm:$0xff]
        %v295 = vld [vmem:[%s232 + $0x60] sm:$0xff]
        %v296 = vld [vmem:[%s232 + $0x68] sm:$0xff]
        %v297 = vld [vmem:[%s232 + $0x70] sm:$0xff]
        %v298 = vld [vmem:[%s232 + $0x78] sm:$0xff]
        %v299 = vld [vmem:[%s232 + $0x80] sm:$0xff]
        %v300 = vld [vmem:[%s232 + $0x88] sm:$0xff]
        %v301 = vld [vmem:[%s232 + $0x90] sm:$0xff]
        %v302 = vld [vmem:[%s232 + $0x98] sm:$0xff]
        %v303 = vld [vmem:[%s232 + $0xa0] sm:$0xff]
        %v304 = vld [vmem:[%s232 + $0xa8] sm:$0xff]
        %v305 = vld [vmem:[%s232 + $0xb0] sm:$0xff]
        %v306 = vld [vmem:[%s232 + $0xb8] sm:$0xff]
        %v307 = vld [vmem:[%s232 + $0xc0] sm:$0xff]
        %v308 = vld [vmem:[%s232 + $0xc8] sm:$0xff]
        %v309 = vld [vmem:[%s232 + $0xd0] sm:$0xff]
        %v310 = vld [vmem:[%s232 + $0xd8] sm:$0xff]
        %v311 = vld [vmem:[%s232 + $0xe0] sm:$0xff]
        %v312 = vld [vmem:[%s232 + $0xe8] sm:$0xff]
        %v313 = vld [vmem:[%s232 + $0xf0] sm:$0xff]
        %v314 = vld [vmem:[%s232 + $0xf8] sm:$0xff]
        %v315 = vld [vmem:[%s232 + $0x100] sm:$0xff]
        %v316 = vld [vmem:[%s232 + $0x108] sm:$0xff]
        %v317 = vld [vmem:[%s232 + $0x110] sm:$0xff]
        %v318 = vld [vmem:[%s232 + $0x118] sm:$0xff]
        %v319 = vld [vmem:[%s232 + $0x120] sm:$0xff]
        %v320 = vld [vmem:[%s232 + $0x128] sm:$0xff]
        %v321 = vld [vmem:[%s232 + $0x130] sm:$0xff]
        %v322 = vld [vmem:[%s232 + $0x138] sm:$0xff]
        %v323 = vld [vmem:[%s232 + $0x140] sm:$0xff]
        %v324 = vld [vmem:[%s232 + $0x148] sm:$0xff]
        %v325 = vld [vmem:[%s232 + $0x150] sm:$0xff]
        %v326 = vld [vmem:[%s232 + $0x158] sm:$0xff]
        %v327 = vld [vmem:[%s232 + $0x160] sm:$0xff]
        %v328 = vld [vmem:[%s232 + $0x168] sm:$0xff]
        %v329 = vld [vmem:[%s232 + $0x170] sm:$0xff]
        %v330 = vld [vmem:[%s232 + $0x178] sm:$0xff]
        %v331 = vld [vmem:[%s232 + $0x180] sm:$0xff]
        %v332 = vld [vmem:[%s232 + $0x188] sm:$0xff]
        %v333 = vld [vmem:[%s232 + $0x190] sm:$0xff]
        %v334 = vld [vmem:[%s232 + $0x198] sm:$0xff]
        %v335 = vld [vmem:[%s232 + $0x1a0] sm:$0xff]
        %v336 = vld [vmem:[%s232 + $0x1a8] sm:$0xff]
        %v337 = vld [vmem:[%s232 + $0x1b0] sm:$0xff]
        %v338 = vld [vmem:[%s232 + $0x1b8] sm:$0xff]
        %v339 = vld [vmem:[%s232 + $0x1c0] sm:$0xff]
        %v340 = vld [vmem:[%s232 + $0x1c8] sm:$0xff]
        %v341 = vld [vmem:[%s232 + $0x1d0] sm:$0xff]
        %v342 = vld [vmem:[%s232 + $0x1d8] sm:$0xff]
        %v343 = vld [vmem:[%s232 + $0x1e0] sm:$0xff]
        %v344 = vld [vmem:[%s232 + $0x1e8] sm:$0xff]
        %v345 = vld [vmem:[%s232 + $0x1f0] sm:$0xff]
        %v346 = vld [vmem:[%s232 + $0x1f8] sm:$0xff]
        %v347 = vld [vmem:[%s232 + $0x200] sm:$0xff]
        %v348 = vld [vmem:[%s232 + $0x208] sm:$0xff]
        %v349 = vld [vmem:[%s232 + $0x210] sm:$0xff]
        %v350 = vld [vmem:[%s232 + $0x218] sm:$0xff]
        %v351 = vld [vmem:[%s232 + $0x220] sm:$0xff]
        %v352 = vld [vmem:[%s232 + $0x228] sm:$0xff]
        %v353 = vld [vmem:[%s232 + $0x230] sm:$0xff]
        %v354 = vld [vmem:[%s232 + $0x238] sm:$0xff]
        %v355 = vld [vmem:[%s232 + $0x240] sm:$0xff]
        %v356 = vld [vmem:[%s232 + $0x248] sm:$0xff]
        %v357 = vld [vmem:[%s232 + $0x250] sm:$0xff]
        %v358 = vld [vmem:[%s232 + $0x258] sm:$0xff]
        %v359 = vld [vmem:[%s232 + $0x260] sm:$0xff]
        %v360 = vld [vmem:[%s232 + $0x268] sm:$0xff]
        %v361 = vld [vmem:[%s232 + $0x270] sm:$0xff]
        %v362 = vld [vmem:[%s232 + $0x278] sm:$0xff]
        %v363 = vld [vmem:[%s232 + $0x280] sm:$0xff]
        %v364 = vld [vmem:[%s232 + $0x288] sm:$0xff]
        %v365 = vld [vmem:[%s232 + $0x290] sm:$0xff]
        %v366 = vld [vmem:[%s232 + $0x298] sm:$0xff]
        %v367 = vld [vmem:[%s232 + $0x2a0] sm:$0xff]
        %v368 = vld [vmem:[%s232 + $0x2a8] sm:$0xff]
        %v369 = vld [vmem:[%s232 + $0x2b0] sm:$0xff]
        %v370 = vld [vmem:[%s232 + $0x2b8] sm:$0xff]
        %v371 = vld [vmem:[%s232 + $0x2c0] sm:$0xff]
        %v372 = vld [vmem:[%s232 + $0x2c8] sm:$0xff]
        %v373 = vld [vmem:[%s232 + $0x2d0] sm:$0xff]
        %v374 = vld [vmem:[%s232 + $0x2d8] sm:$0xff]
        %v375 = vld [vmem:[%s232 + $0x2e0] sm:$0xff]
        %v376 = vld [vmem:[%s232 + $0x2e8] sm:$0xff]
        %v377 = vld [vmem:[%s232 + $0x2f0] sm:$0xff]
        %v378 = vld [vmem:[%s232 + $0x2f8] sm:$0xff]
        %v379 = vld [vmem:[%s232 + $0x300] sm:$0xff]
        %v380 = vld [vmem:[%s232 + $0x308] sm:$0xff]
        %v381 = vld [vmem:[%s232 + $0x310] sm:$0xff]
        %v382 = vld [vmem:[%s232 + $0x318] sm:$0xff]
        %v383 = vld [vmem:[%s232 + $0x320] sm:$0xff]
        %v384 = vld [vmem:[%s232 + $0x328] sm:$0xff]
        %v385 = vld [vmem:[%s232 + $0x330] sm:$0xff]
        %v386 = vld [vmem:[%s232 + $0x338] sm:$0xff]
        %v387 = vld [vmem:[%s232 + $0x340] sm:$0xff]
        %v388 = vld [vmem:[%s232 + $0x348] sm:$0xff]
        %v389 = vld [vmem:[%s232 + $0x350] sm:$0xff]
        %v390 = vld [vmem:[%s232 + $0x358] sm:$0xff]
        %v391 = vld [vmem:[%s232 + $0x360] sm:$0xff]
        %v392 = vld [vmem:[%s232 + $0x368] sm:$0xff]
        %v393 = vld [vmem:[%s232 + $0x370] sm:$0xff]
        %v394 = vld [vmem:[%s232 + $0x378] sm:$0xff]
        %v395 = vld [vmem:[%s232 + $0x380] sm:$0xff]
        %v396 = vld [vmem:[%s232 + $0x388] sm:$0xff]
        %v397 = vld [vmem:[%s232 + $0x390] sm:$0xff]
        %v398 = vld [vmem:[%s232 + $0x398] sm:$0xff]
        %v399 = vld [vmem:[%s232 + $0x3a0] sm:$0xff]
        %v400 = vld [vmem:[%s232 + $0x3a8] sm:$0xff]
        %v401 = vld [vmem:[%s232 + $0x3b0] sm:$0xff]
        %v402 = vld [vmem:[%s232 + $0x3b8] sm:$0xff]
        %v403 = vld [vmem:[%s232 + $0x3c0] sm:$0xff]
        %v404 = vld [vmem:[%s232 + $0x3c8] sm:$0xff]
        %v405 = vld [vmem:[%s232 + $0x3d0] sm:$0xff]
        %v406 = vld [vmem:[%s232 + $0x3d8] sm:$0xff]
        %v407 = vld [vmem:[%s232 + $0x3e0] sm:$0xff]
        %v408 = vld [vmem:[%s232 + $0x3e8] sm:$0xff]
        %v409 = vld [vmem:[%s232 + $0x3f0] sm:$0xff]
        %v410 = vld [vmem:[%s232 + $0x3f8] sm:$0xff]
        %v411 = vld [vmem:[%s232 + $0x400] sm:$0xff]
        %v412 = vld [vmem:[%s232 + $0x408] sm:$0xff]
        %v413 = vld [vmem:[%s232 + $0x410] sm:$0xff]
        %v414 = vld [vmem:[%s232 + $0x418] sm:$0xff]
        %v415 = vld [vmem:[%s232 + $0x420] sm:$0xff]
        %v416 = vld [vmem:[%s232 + $0x428] sm:$0xff]
        %v417 = vld [vmem:[%s232 + $0x430] sm:$0xff]
        %v418 = vld [vmem:[%s232 + $0x438] sm:$0xff]
        %v419 = vld [vmem:[%s232 + $0x440] sm:$0xff]
        %v420 = vld [vmem:[%s232 + $0x448] sm:$0xff]
        %v421 = vld [vmem:[%s232 + $0x450] sm:$0xff]
        %v422 = vld [vmem:[%s232 + $0x458] sm:$0xff]
        %v423 = vld [vmem:[%s232 + $0x460] sm:$0xff]
        %v424 = vld [vmem:[%s232 + $0x468] sm:$0xff]
        %v425 = vld [vmem:[%s232 + $0x470] sm:$0xff]
        %v426 = vld [vmem:[%s232 + $0x478] sm:$0xff]
        %v427 = vld [vmem:[%s232 + $0x480] sm:$0xff]
        %v428 = vld [vmem:[%s232 + $0x488] sm:$0xff]
        %v429 = vld [vmem:[%s232 + $0x490] sm:$0xff]
        %v430 = vld [vmem:[%s232 + $0x498] sm:$0xff]
        %v431 = vld [vmem:[%s232 + $0x4a0] sm:$0xff]
        %v432 = vld [vmem:[%s232 + $0x4a8] sm:$0xff]
        %v433 = vld [vmem:[%s232 + $0x4b0] sm:$0xff]
        %v434 = vld [vmem:[%s232 + $0x4b8] sm:$0xff]
        %v435 = vld [vmem:[%s232 + $0x4c0] sm:$0xff]
        %v436 = vld [vmem:[%s232 + $0x4c8] sm:$0xff]
        %v437 = vld [vmem:[%s232 + $0x4d0] sm:$0xff]
        %v438 = vld [vmem:[%s232 + $0x4d8] sm:$0xff]
        %v439 = vld [vmem:[%s232 + $0x4e0] sm:$0xff]
        %v440 = vld [vmem:[%s232 + $0x4e8] sm:$0xff]
        %v441 = vld [vmem:[%s232 + $0x4f0] sm:$0xff]
        %v442 = vld [vmem:[%s232 + $0x4f8] sm:$0xff]
        %v443 = vld [vmem:[%s232 + $0x500] sm:$0xff]
        %v444 = vld [vmem:[%s232 + $0x508] sm:$0xff]
        %v445 = vld [vmem:[%s232 + $0x510] sm:$0xff]
        %v446 = vld [vmem:[%s232 + $0x518] sm:$0xff]
        %v447 = vld [vmem:[%s232 + $0x520] sm:$0xff]
        %v448 = vld [vmem:[%s232 + $0x528] sm:$0xff]
        %v449 = vld [vmem:[%s232 + $0x530] sm:$0xff]
        %v450 = vld [vmem:[%s232 + $0x538] sm:$0xff]
        %v451 = vld [vmem:[%s232 + $0x540] sm:$0xff]
        %v452 = vld [vmem:[%s232 + $0x548] sm:$0xff]
        %v453 = vld [vmem:[%s232 + $0x550] sm:$0xff]
        %v454 = vld [vmem:[%s232 + $0x558] sm:$0xff]
        %v455 = vld [vmem:[%s232 + $0x560] sm:$0xff]
        %v456 = vld [vmem:[%s232 + $0x568] sm:$0xff]
        %v457 = vld [vmem:[%s232 + $0x570] sm:$0xff]
        %v458 = vld [vmem:[%s232 + $0x578] sm:$0xff]
        %v459 = vld [vmem:[%s232 + $0x580] sm:$0xff]
        %v460 = vld [vmem:[%s232 + $0x588] sm:$0xff]
        %v461 = vld [vmem:[%s232 + $0x590] sm:$0xff]
        %v462 = vld [vmem:[%s232 + $0x598] sm:$0xff]
        %v463 = vld [vmem:[%s232 + $0x5a0] sm:$0xff]
        %v464 = vld [vmem:[%s232 + $0x5a8] sm:$0xff]
        %v465 = vld [vmem:[%s232 + $0x5b0] sm:$0xff]
        %v466 = vld [vmem:[%s232 + $0x5b8] sm:$0xff]
        %v467 = vld [vmem:[%s232 + $0x5c0] sm:$0xff]
        %v468 = vld [vmem:[%s232 + $0x5c8] sm:$0xff]
        %v469 = vld [vmem:[%s232 + $0x5d0] sm:$0xff]
        %v470 = vld [vmem:[%s232 + $0x5d8] sm:$0xff]
        %v471 = vld [vmem:[%s232 + $0x5e0] sm:$0xff]
        %v472 = vld [vmem:[%s232 + $0x5e8] sm:$0xff]
        %v473 = vld [vmem:[%s232 + $0x5f0] sm:$0xff]
        %v474 = vld [vmem:[%s232 + $0x5f8] sm:$0xff]
        %v475 = vld [vmem:[%s232 + $0x600] sm:$0xff]
        %v476 = vld [vmem:[%s232 + $0x608] sm:$0xff]
        %v477 = vld [vmem:[%s232 + $0x610] sm:$0xff]
        %v478 = vld [vmem:[%s232 + $0x618] sm:$0xff]
        %v479 = vld [vmem:[%s232 + $0x620] sm:$0xff]
        %v480 = vld [vmem:[%s232 + $0x628] sm:$0xff]
        %v481 = vld [vmem:[%s232 + $0x630] sm:$0xff]
        %v482 = vld [vmem:[%s232 + $0x638] sm:$0xff]
        %v483 = vld [vmem:[%s232 + $0x640] sm:$0xff]
        %v484 = vld [vmem:[%s232 + $0x648] sm:$0xff]
        %v485 = vld [vmem:[%s232 + $0x650] sm:$0xff]
        %v486 = vld [vmem:[%s232 + $0x658] sm:$0xff]
        %v487 = vld [vmem:[%s232 + $0x660] sm:$0xff]
        %v488 = vld [vmem:[%s232 + $0x668] sm:$0xff]
        %v489 = vld [vmem:[%s232 + $0x670] sm:$0xff]
        %v490 = vld [vmem:[%s232 + $0x678] sm:$0xff]
        %v491 = vld [vmem:[%s232 + $0x680] sm:$0xff]
        %v492 = vld [vmem:[%s232 + $0x688] sm:$0xff]
        %v493 = vld [vmem:[%s232 + $0x690] sm:$0xff]
        %v494 = vld [vmem:[%s232 + $0x698] sm:$0xff]
        %v495 = vld [vmem:[%s232 + $0x6a0] sm:$0xff]
        %v496 = vld [vmem:[%s232 + $0x6a8] sm:$0xff]
        %v497 = vld [vmem:[%s232 + $0x6b0] sm:$0xff]
        %v498 = vld [vmem:[%s232 + $0x6b8] sm:$0xff]
        %v499 = vld [vmem:[%s232 + $0x6c0] sm:$0xff]
        %v500 = vld [vmem:[%s232 + $0x6c8] sm:$0xff]
        %v501 = vld [vmem:[%s232 + $0x6d0] sm:$0xff]
        %v502 = vld [vmem:[%s232 + $0x6d8] sm:$0xff]
        %v503 = vld [vmem:[%s232 + $0x6e0] sm:$0xff]
        %v504 = vld [vmem:[%s232 + $0x6e8] sm:$0xff]
        %v505 = vld [vmem:[%s232 + $0x6f0] sm:$0xff]
        %v506 = vld [vmem:[%s232 + $0x6f8] sm:$0xff]
        %v507 = vld [vmem:[%s232 + $0x700] sm:$0xff]
        %v508 = vld [vmem:[%s232 + $0x708] sm:$0xff]
        %v509 = vld [vmem:[%s232 + $0x710] sm:$0xff]
        %v510 = vld [vmem:[%s232 + $0x718] sm:$0xff]
        %v511 = vld [vmem:[%s232 + $0x720] sm:$0xff]
        %v512 = vld [vmem:[%s232 + $0x728] sm:$0xff]
        %v513 = vld [vmem:[%s232 + $0x730] sm:$0xff]
        %v514 = vld [vmem:[%s232 + $0x738] sm:$0xff]
        %v515 = vld [vmem:[%s232 + $0x740] sm:$0xff]
        %v516 = vld [vmem:[%s232 + $0x748] sm:$0xff]
        %v517 = vld [vmem:[%s232 + $0x750] sm:$0xff]
        %v518 = vld [vmem:[%s232 + $0x758] sm:$0xff]
        %v519 = vld [vmem:[%s232 + $0x760] sm:$0xff]
        %v520 = vld [vmem:[%s232 + $0x768] sm:$0xff]
        %v521 = vld [vmem:[%s232 + $0x770] sm:$0xff]
        %v522 = vld [vmem:[%s232 + $0x778] sm:$0xff]
        %v523 = vld [vmem:[%s232 + $0x780] sm:$0xff]
        %v524 = vld [vmem:[%s232 + $0x788] sm:$0xff]
        %v525 = vld [vmem:[%s232 + $0x790] sm:$0xff]
        %v526 = vld [vmem:[%s232 + $0x798] sm:$0xff]
        %v527 = vld [vmem:[%s232 + $0x7a0] sm:$0xff]
        %v528 = vld [vmem:[%s232 + $0x7a8] sm:$0xff]
        %v529 = vld [vmem:[%s232 + $0x7b0] sm:$0xff]
        %v530 = vld [vmem:[%s232 + $0x7b8] sm:$0xff]
        %v531 = vld [vmem:[%s232 + $0x7c0] sm:$0xff]
        %v532 = vld [vmem:[%s232 + $0x7c8] sm:$0xff]
        %v533 = vld [vmem:[%s232 + $0x7d0] sm:$0xff]
        %v534 = vld [vmem:[%s232 + $0x7d8] sm:$0xff]
        %v535 = vld [vmem:[%s232 + $0x7e0] sm:$0xff]
        %v536 = vld [vmem:[%s232 + $0x7e8] sm:$0xff]
        %v537 = vld [vmem:[%s232 + $0x7f0] sm:$0xff]
        %v538 = vld [vmem:[%s232 + $0x7f8] sm:$0xff]
        %v539 = vld [vmem:[%s232 + $0x800] sm:$0xff]
        %v540 = vld [vmem:[%s232 + $0x808] sm:$0xff]
        %v541 = vld [vmem:[%s232 + $0x810] sm:$0xff]
        %v542 = vld [vmem:[%s232 + $0x818] sm:$0xff]
        %v543 = vld [vmem:[%s232 + $0x820] sm:$0xff]
        %v544 = vld [vmem:[%s232 + $0x828] sm:$0xff]
        %v545 = vld [vmem:[%s232 + $0x830] sm:$0xff]
        %v546 = vld [vmem:[%s232 + $0x838] sm:$0xff]
        %v547 = vld [vmem:[%s232 + $0x840] sm:$0xff]
        %v548 = vld [vmem:[%s232 + $0x848] sm:$0xff]
        %v549 = vld [vmem:[%s232 + $0x850] sm:$0xff]
        %v550 = vld [vmem:[%s232 + $0x858] sm:$0xff]
        %v551 = vld [vmem:[%s232 + $0x860] sm:$0xff]
        %v552 = vld [vmem:[%s232 + $0x868] sm:$0xff]
        %v553 = vld [vmem:[%s232 + $0x870] sm:$0xff]
        %v554 = vld [vmem:[%s232 + $0x878] sm:$0xff]
        %v555 = vld [vmem:[%s232 + $0x880] sm:$0xff]
        %v556 = vld [vmem:[%s232 + $0x888] sm:$0xff]
        %v557 = vld [vmem:[%s232 + $0x890] sm:$0xff]
        %v558 = vld [vmem:[%s232 + $0x898] sm:$0xff]
        %v559 = vld [vmem:[%s232 + $0x8a0] sm:$0xff]
        %v560 = vld [vmem:[%s232 + $0x8a8] sm:$0xff]
        %v561 = vld [vmem:[%s232 + $0x8b0] sm:$0xff]
        %v562 = vld [vmem:[%s232 + $0x8b8] sm:$0xff]
        %v563 = vld [vmem:[%s232 + $0x8c0] sm:$0xff]
        %v564 = vld [vmem:[%s232 + $0x8c8] sm:$0xff]
        %v565 = vld [vmem:[%s232 + $0x8d0] sm:$0xff]
        %v566 = vld [vmem:[%s232 + $0x8d8] sm:$0xff]
        %v567 = vld [vmem:[%s232 + $0x8e0] sm:$0xff]
        %v568 = vld [vmem:[%s232 + $0x8e8] sm:$0xff]
        %v569 = vld [vmem:[%s232 + $0x8f0] sm:$0xff]
        %v570 = vld [vmem:[%s232 + $0x8f8] sm:$0xff]
        %v571 = vld [vmem:[%s232 + $0x900] sm:$0xff]
        %v572 = vld [vmem:[%s232 + $0x908] sm:$0xff]
        %v573 = vld [vmem:[%s232 + $0x910] sm:$0xff]
        %v574 = vld [vmem:[%s232 + $0x918] sm:$0xff]
        %v575 = vld [vmem:[%s232 + $0x920] sm:$0xff]
        %v576 = vld [vmem:[%s232 + $0x928] sm:$0xff]
        %v577 = vld [vmem:[%s232 + $0x930] sm:$0xff]
        %v578 = vld [vmem:[%s232 + $0x938] sm:$0xff]
        %v579 = vld [vmem:[%s232 + $0x940] sm:$0xff]
        %v580 = vld [vmem:[%s232 + $0x948] sm:$0xff]
        %v581 = vld [vmem:[%s232 + $0x950] sm:$0xff]
        %v582 = vld [vmem:[%s232 + $0x958] sm:$0xff]
        %v583 = vld [vmem:[%s232 + $0x960] sm:$0xff]
        %v584 = vld [vmem:[%s232 + $0x968] sm:$0xff]
        %v585 = vld [vmem:[%s232 + $0x970] sm:$0xff]
        %v586 = vld [vmem:[%s232 + $0x978] sm:$0xff]
        %v587 = vld [vmem:[%s232 + $0x980] sm:$0xff]
        %v588 = vld [vmem:[%s232 + $0x988] sm:$0xff]
        %v589 = vld [vmem:[%s232 + $0x990] sm:$0xff]
        %v590 = vld [vmem:[%s232 + $0x998] sm:$0xff]
        %v591 = vld [vmem:[%s232 + $0x9a0] sm:$0xff]
        %v592 = vld [vmem:[%s232 + $0x9a8] sm:$0xff]
        %v593 = vld [vmem:[%s232 + $0x9b0] sm:$0xff]
        %v594 = vld [vmem:[%s232 + $0x9b8] sm:$0xff]
        %v595 = vld [vmem:[%s232 + $0x9c0] sm:$0xff]
        %v596 = vld [vmem:[%s232 + $0x9c8] sm:$0xff]
        %v597 = vld [vmem:[%s232 + $0x9d0] sm:$0xff]
        %v598 = vld [vmem:[%s232 + $0x9d8] sm:$0xff]
        %v599 = vld [vmem:[%s232 + $0x9e0] sm:$0xff]
        %v600 = vld [vmem:[%s232 + $0x9e8] sm:$0xff]
        %v601 = vld [vmem:[%s232 + $0x9f0] sm:$0xff]
        %v602 = vld [vmem:[%s232 + $0x9f8] sm:$0xff]
        %v603 = vld [vmem:[%s232 + $0xa00] sm:$0xff]
        %v604 = vld [vmem:[%s232 + $0xa08] sm:$0xff]
        %v605 = vld [vmem:[%s232 + $0xa10] sm:$0xff]
        %v606 = vld [vmem:[%s232 + $0xa18] sm:$0xff]
        %v607 = vld [vmem:[%s232 + $0xa20] sm:$0xff]
        %v608 = vld [vmem:[%s232 + $0xa28] sm:$0xff]
        %v609 = vld [vmem:[%s232 + $0xa30] sm:$0xff]
        %v610 = vld [vmem:[%s232 + $0xa38] sm:$0xff]
        %v611 = vld [vmem:[%s232 + $0xa40] sm:$0xff]
        %v612 = vld [vmem:[%s232 + $0xa48] sm:$0xff]
        %v613 = vld [vmem:[%s232 + $0xa50] sm:$0xff]
        %v614 = vld [vmem:[%s232 + $0xa58] sm:$0xff]
        %v615 = vld [vmem:[%s232 + $0xa60] sm:$0xff]
        %v616 = vld [vmem:[%s232 + $0xa68] sm:$0xff]
        %v617 = vld [vmem:[%s232 + $0xa70] sm:$0xff]
        %v618 = vld [vmem:[%s232 + $0xa78] sm:$0xff]
        %v619 = vld [vmem:[%s232 + $0xa80] sm:$0xff]
        %v620 = vld [vmem:[%s232 + $0xa88] sm:$0xff]
        %v621 = vld [vmem:[%s232 + $0xa90] sm:$0xff]
        %v622 = vld [vmem:[%s232 + $0xa98] sm:$0xff]
        %v623 = vld [vmem:[%s232 + $0xaa0] sm:$0xff]
        %v624 = vld [vmem:[%s232 + $0xaa8] sm:$0xff]
        %v625 = vld [vmem:[%s232 + $0xab0] sm:$0xff]
        %v626 = vld [vmem:[%s232 + $0xab8] sm:$0xff]
        %v627 = vld [vmem:[%s232 + $0xac0] sm:$0xff]
        %v628 = vld [vmem:[%s232 + $0xac8] sm:$0xff]
        %v629 = vld [vmem:[%s232 + $0xad0] sm:$0xff]
        %v630 = vld [vmem:[%s232 + $0xad8] sm:$0xff]
        %v631 = vld [vmem:[%s232 + $0xae0] sm:$0xff]
        %v632 = vld [vmem:[%s232 + $0xae8] sm:$0xff]
        %v633 = vld [vmem:[%s232 + $0xaf0] sm:$0xff]
        %v634 = vld [vmem:[%s232 + $0xaf8] sm:$0xff]
        %v635 = vld [vmem:[%s232 + $0xb00] sm:$0xff]
        %v636 = vld [vmem:[%s232 + $0xb08] sm:$0xff]
        %v637 = vld [vmem:[%s232 + $0xb10] sm:$0xff]
        %v638 = vld [vmem:[%s232 + $0xb18] sm:$0xff]
        %v639 = vld [vmem:[%s232 + $0xb20] sm:$0xff]
        %v640 = vld [vmem:[%s232 + $0xb28] sm:$0xff]
        %v641 = vld [vmem:[%s232 + $0xb30] sm:$0xff]
        %v642 = vld [vmem:[%s232 + $0xb38] sm:$0xff]
        %v643 = vld [vmem:[%s232 + $0xb40] sm:$0xff]
        %v644 = vld [vmem:[%s232 + $0xb48] sm:$0xff]
        %v645 = vld [vmem:[%s232 + $0xb50] sm:$0xff]
        %v646 = vld [vmem:[%s232 + $0xb58] sm:$0xff]
        %v647 = vld [vmem:[%s232 + $0xb60] sm:$0xff]
        %v648 = vld [vmem:[%s232 + $0xb68] sm:$0xff]
        %v649 = vld [vmem:[%s232 + $0xb70] sm:$0xff]
        %v650 = vld [vmem:[%s232 + $0xb78] sm:$0xff]
        %v651 = vld [vmem:[%s232 + $0xb80] sm:$0xff]
        %v652 = vld [vmem:[%s232 + $0xb88] sm:$0xff]
        %v653 = vld [vmem:[%s232 + $0xb90] sm:$0xff]
        %v654 = vld [vmem:[%s232 + $0xb98] sm:$0xff]
        %v655 = vld [vmem:[%s232 + $0xba0] sm:$0xff]
        %v656 = vld [vmem:[%s232 + $0xba8] sm:$0xff]
        %v657 = vld [vmem:[%s232 + $0xbb0] sm:$0xff]
        %v658 = vld [vmem:[%s232 + $0xbb8] sm:$0xff]
        %v659 = vld [vmem:[%s232 + $0xbc0] sm:$0xff]
        %v660 = vld [vmem:[%s232 + $0xbc8] sm:$0xff]
        %v661 = vld [vmem:[%s232 + $0xbd0] sm:$0xff]
        %v662 = vld [vmem:[%s232 + $0xbd8] sm:$0xff]
        %v663 = vld [vmem:[%s232 + $0xbe0] sm:$0xff]
        %v664 = vld [vmem:[%s232 + $0xbe8] sm:$0xff]
        %v665 = vld [vmem:[%s232 + $0xbf0] sm:$0xff]
        %v666 = vld [vmem:[%s232 + $0xbf8] sm:$0xff]
        %v667 = vld [vmem:[%s232 + $0xc00] sm:$0xff]
        %v668 = vld [vmem:[%s232 + $0xc08] sm:$0xff]
        %v669 = vld [vmem:[%s232 + $0xc10] sm:$0xff]
        %v670 = vld [vmem:[%s232 + $0xc18] sm:$0xff]
        %v671 = vld [vmem:[%s232 + $0xc20] sm:$0xff]
        %v672 = vld [vmem:[%s232 + $0xc28] sm:$0xff]
        %v673 = vld [vmem:[%s232 + $0xc30] sm:$0xff]
        %v674 = vld [vmem:[%s232 + $0xc38] sm:$0xff]
        %v675 = vld [vmem:[%s232 + $0xc40] sm:$0xff]
        %v676 = vld [vmem:[%s232 + $0xc48] sm:$0xff]
        %v677 = vld [vmem:[%s232 + $0xc50] sm:$0xff]
        %v678 = vld [vmem:[%s232 + $0xc58] sm:$0xff]
        %v679 = vld [vmem:[%s232 + $0xc60] sm:$0xff]
        %v680 = vld [vmem:[%s232 + $0xc68] sm:$0xff]
        %v681 = vld [vmem:[%s232 + $0xc70] sm:$0xff]
        %v682 = vld [vmem:[%s232 + $0xc78] sm:$0xff]
        %v683 = vld [vmem:[%s232 + $0xc80] sm:$0xff]
        %v684 = vld [vmem:[%s232 + $0xc88] sm:$0xff]
        %v685 = vld [vmem:[%s232 + $0xc90] sm:$0xff]
        %v686 = vld [vmem:[%s232 + $0xc98] sm:$0xff]
        %v687 = vld [vmem:[%s232 + $0xca0] sm:$0xff]
        %v688 = vld [vmem:[%s232 + $0xca8] sm:$0xff]
        %v689 = vld [vmem:[%s232 + $0xcb0] sm:$0xff]
        %v690 = vld [vmem:[%s232 + $0xcb8] sm:$0xff]
        %v691 = vld [vmem:[%s232 + $0xcc0] sm:$0xff]
        %v692 = vld [vmem:[%s232 + $0xcc8] sm:$0xff]
        %v693 = vld [vmem:[%s232 + $0xcd0] sm:$0xff]
        %v694 = vld [vmem:[%s232 + $0xcd8] sm:$0xff]
        %v695 = vld [vmem:[%s232 + $0xce0] sm:$0xff]
        %v696 = vld [vmem:[%s232 + $0xce8] sm:$0xff]
        %v697 = vld [vmem:[%s232 + $0xcf0] sm:$0xff]
        %v698 = vld [vmem:[%s232 + $0xcf8] sm:$0xff]
        %v699 = vld [vmem:[%s232 + $0xd00] sm:$0xff]
        %v700 = vld [vmem:[%s232 + $0xd08] sm:$0xff]
        %v701 = vld [vmem:[%s232 + $0xd10] sm:$0xff]
        %v702 = vld [vmem:[%s232 + $0xd18] sm:$0xff]
        %v703 = vld [vmem:[%s232 + $0xd20] sm:$0xff]
        %v704 = vld [vmem:[%s232 + $0xd28] sm:$0xff]
        %v705 = vld [vmem:[%s232 + $0xd30] sm:$0xff]
        %v706 = vld [vmem:[%s232 + $0xd38] sm:$0xff]
        %v707 = vld [vmem:[%s232 + $0xd40] sm:$0xff]
        %v708 = vld [vmem:[%s232 + $0xd48] sm:$0xff]
        %v709 = vld [vmem:[%s232 + $0xd50] sm:$0xff]
        %v710 = vld [vmem:[%s232 + $0xd58] sm:$0xff]
        %v711 = vld [vmem:[%s232 + $0xd60] sm:$0xff]
        %v712 = vld [vmem:[%s232 + $0xd68] sm:$0xff]
        %v713 = vld [vmem:[%s232 + $0xd70] sm:$0xff]
        %v714 = vld [vmem:[%s232 + $0xd78] sm:$0xff]
        %v715 = vld [vmem:[%s232 + $0xd80] sm:$0xff]
        %v716 = vld [vmem:[%s232 + $0xd88] sm:$0xff]
        %v717 = vld [vmem:[%s232 + $0xd90] sm:$0xff]
        %v718 = vld [vmem:[%s232 + $0xd98] sm:$0xff]
        %v719 = vld [vmem:[%s232 + $0xda0] sm:$0xff]
        %v720 = vld [vmem:[%s232 + $0xda8] sm:$0xff]
        %v721 = vld [vmem:[%s232 + $0xdb0] sm:$0xff]
        %v722 = vld [vmem:[%s232 + $0xdb8] sm:$0xff]
        %v723 = vld [vmem:[%s232 + $0xdc0] sm:$0xff]
        %v724 = vld [vmem:[%s232 + $0xdc8] sm:$0xff]
        %v725 = vld [vmem:[%s232 + $0xdd0] sm:$0xff]
        %v726 = vld [vmem:[%s232 + $0xdd8] sm:$0xff]
        %v727 = vld [vmem:[%s232 + $0xde0] sm:$0xff]
        %v728 = vld [vmem:[%s232 + $0xde8] sm:$0xff]
        %v729 = vld [vmem:[%s232 + $0xdf0] sm:$0xff]
        %v730 = vld [vmem:[%s232 + $0xdf8] sm:$0xff]
        %v731 = vld [vmem:[%s232 + $0xe00] sm:$0xff]
        %v732 = vld [vmem:[%s232 + $0xe08] sm:$0xff]
        %v733 = vld [vmem:[%s232 + $0xe10] sm:$0xff]
        %v734 = vld [vmem:[%s232 + $0xe18] sm:$0xff]
        %v735 = vld [vmem:[%s232 + $0xe20] sm:$0xff]
        %v736 = vld [vmem:[%s232 + $0xe28] sm:$0xff]
        %v737 = vld [vmem:[%s232 + $0xe30] sm:$0xff]
        %v738 = vld [vmem:[%s232 + $0xe38] sm:$0xff]
        %v739 = vld [vmem:[%s232 + $0xe40] sm:$0xff]
        %v740 = vld [vmem:[%s232 + $0xe48] sm:$0xff]
        %v741 = vld [vmem:[%s232 + $0xe50] sm:$0xff]
        %v742 = vld [vmem:[%s232 + $0xe58] sm:$0xff]
        %v743 = vld [vmem:[%s232 + $0xe60] sm:$0xff]
        %v744 = vld [vmem:[%s232 + $0xe68] sm:$0xff]
        %v745 = vld [vmem:[%s232 + $0xe70] sm:$0xff]
        %v746 = vld [vmem:[%s232 + $0xe78] sm:$0xff]
        %v747 = vld [vmem:[%s232 + $0xe80] sm:$0xff]
        %v748 = vld [vmem:[%s232 + $0xe88] sm:$0xff]
        %v749 = vld [vmem:[%s232 + $0xe90] sm:$0xff]
        %v750 = vld [vmem:[%s232 + $0xe98] sm:$0xff]
        %v751 = vld [vmem:[%s232 + $0xea0] sm:$0xff]
        %v752 = vld [vmem:[%s232 + $0xea8] sm:$0xff]
        %v753 = vld [vmem:[%s232 + $0xeb0] sm:$0xff]
        %v754 = vld [vmem:[%s232 + $0xeb8] sm:$0xff]
        %v755 = vld [vmem:[%s232 + $0xec0] sm:$0xff]
        %v756 = vld [vmem:[%s232 + $0xec8] sm:$0xff]
        %v757 = vld [vmem:[%s232 + $0xed0] sm:$0xff]
        %v758 = vld [vmem:[%s232 + $0xed8] sm:$0xff]
        %v759 = vld [vmem:[%s232 + $0xee0] sm:$0xff]
        %v760 = vld [vmem:[%s232 + $0xee8] sm:$0xff]
        %v761 = vld [vmem:[%s232 + $0xef0] sm:$0xff]
        %v762 = vld [vmem:[%s232 + $0xef8] sm:$0xff]
        %v763 = vld [vmem:[%s232 + $0xf00] sm:$0xff]
        %v764 = vld [vmem:[%s232 + $0xf08] sm:$0xff]
        %v765 = vld [vmem:[%s232 + $0xf10] sm:$0xff]
        %v766 = vld [vmem:[%s232 + $0xf18] sm:$0xff]
        %v767 = vld [vmem:[%s232 + $0xf20] sm:$0xff]
        %v768 = vld [vmem:[%s232 + $0xf28] sm:$0xff]
        %v769 = vld [vmem:[%s232 + $0xf30] sm:$0xff]
        %v770 = vld [vmem:[%s232 + $0xf38] sm:$0xff]
        %v771 = vld [vmem:[%s232 + $0xf40] sm:$0xff]
        %v772 = vld [vmem:[%s232 + $0xf48] sm:$0xff]
        %v773 = vld [vmem:[%s232 + $0xf50] sm:$0xff]
        %v774 = vld [vmem:[%s232 + $0xf58] sm:$0xff]
        %v775 = vld [vmem:[%s232 + $0xf60] sm:$0xff]
        %v776 = vld [vmem:[%s232 + $0xf68] sm:$0xff]
        %v777 = vld [vmem:[%s232 + $0xf70] sm:$0xff]
        %v778 = vld [vmem:[%s232 + $0xf78] sm:$0xff]
        %v779 = vld [vmem:[%s232 + $0xf80] sm:$0xff]
        %v780 = vld [vmem:[%s232 + $0xf88] sm:$0xff]
        %v781 = vld [vmem:[%s232 + $0xf90] sm:$0xff]
        %v782 = vld [vmem:[%s232 + $0xf98] sm:$0xff]
        %v783 = vld [vmem:[%s232 + $0xfa0] sm:$0xff]
        %v784 = vld [vmem:[%s232 + $0xfa8] sm:$0xff]
        %v785 = vld [vmem:[%s232 + $0xfb0] sm:$0xff]
        %v786 = vld [vmem:[%s232 + $0xfb8] sm:$0xff]
        %v787 = vld [vmem:[%s232 + $0xfc0] sm:$0xff]
        %v788 = vld [vmem:[%s232 + $0xfc8] sm:$0xff]
        %v789 = vld [vmem:[%s232 + $0xfd0] sm:$0xff]
        %v790 = vld [vmem:[%s232 + $0xfd8] sm:$0xff]
        %v791 = vld [vmem:[%s232 + $0xfe0] sm:$0xff]
        %v792 = vld [vmem:[%s232 + $0xfe8] sm:$0xff]
        %v793 = vld [vmem:[%s232 + $0xff0] sm:$0xff]
        %v794 = vld [vmem:[%s232 + $0xff8] sm:$0xff]
        %795 = vmatprep.subr.mxu0 %v284
        %796 = vmatpush1.msra.mxu0 %v283
        %797 = vmatprep.subr.mxu0 %v288
        %798 = vmatpush1.msra.mxu0 %v287
        %799 = vmatprep.subr.mxu0 %v292
        %800 = vmatpush1.msra.mxu0 %v291
        %801 = vmatprep.subr.mxu0 %v296
        %802 = vmatpush1.msra.mxu0 %v295
        %803 = vmatprep.subr.mxu0 %v300
        %804 = vmatpush1.msra.mxu0 %v299
        %805 = vmatprep.subr.mxu0 %v304
        %806 = vmatpush1.msra.mxu0 %v303
        %807 = vmatprep.subr.mxu0 %v308
        %808 = vmatpush1.msra.mxu0 %v307
        %809 = vmatprep.subr.mxu0 %v312
        %810 = vmatpush1.msra.mxu0 %v311
        %811 = vmatprep.subr.mxu0 %v316
        %812 = vmatpush1.msra.mxu0 %v315
        %813 = vmatprep.subr.mxu0 %v320
        %814 = vmatpush1.msra.mxu0 %v319
        %815 = vmatprep.subr.mxu0 %v324
        %816 = vmatpush1.msra.mxu0 %v323
        %817 = vmatprep.subr.mxu0 %v328
        %818 = vmatpush1.msra.mxu0 %v327
        %819 = vmatprep.subr.mxu0 %v332
        %820 = vmatpush1.msra.mxu0 %v331
        %821 = vmatprep.subr.mxu0 %v336
        %822 = vmatpush1.msra.mxu0 %v335
        %823 = vmatprep.subr.mxu0 %v340
        %824 = vmatpush1.msra.mxu0 %v339
        %825 = vmatprep.subr.mxu0 %v344
        %826 = vmatpush1.msra.mxu0 %v343
        %827 = vmatprep.subr.mxu0 %v348
        %828 = vmatpush1.msra.mxu0 %v347
        %829 = vmatprep.subr.mxu0 %v352
        %830 = vmatpush1.msra.mxu0 %v351
        %831 = vmatprep.subr.mxu0 %v356
        %832 = vmatpush1.msra.mxu0 %v355
        %833 = vmatprep.subr.mxu0 %v360
        %834 = vmatpush1.msra.mxu0 %v359
        %835 = vmatprep.subr.mxu0 %v364
        %836 = vmatpush1.msra.mxu0 %v363
        %837 = vmatprep.subr.mxu0 %v368
        %838 = vmatpush1.msra.mxu0 %v367
        %839 = vmatprep.subr.mxu0 %v372
        %840 = vmatpush1.msra.mxu0 %v371
        %841 = vmatprep.subr.mxu0 %v376
        %842 = vmatpush1.msra.mxu0 %v375
        %843 = vmatprep.subr.mxu0 %v380
        %844 = vmatpush1.msra.mxu0 %v379
        %845 = vmatprep.subr.mxu0 %v384
        %846 = vmatpush1.msra.mxu0 %v383
        %847 = vmatprep.subr.mxu0 %v388
        %848 = vmatpush1.msra.mxu0 %v387
        %849 = vmatprep.subr.mxu0 %v392
        %850 = vmatpush1.msra.mxu0 %v391
        %851 = vmatprep.subr.mxu0 %v396
        %852 = vmatpush1.msra.mxu0 %v395
        %853 = vmatprep.subr.mxu0 %v400
        %854 = vmatpush1.msra.mxu0 %v399
        %855 = vmatprep.subr.mxu0 %v404
        %856 = vmatpush1.msra.mxu0 %v403
        %857 = vmatprep.subr.mxu0 %v408
        %858 = vmatpush1.msra.mxu0 %v407
        %859 = vmatprep.mubr.f32.mxu0 %v276
        %860 = vmatmul.mubr.f32.gmra.mrb[0].mxu0 %v275
        %v861 = vpop.f32.mrb[0].mxu0
        %v862 = vadd.f32 0.0, %v861
        %v863 = vpop.f32.mrb[0].mxu0
        %v864 = vadd.f32 0.0, %v863
        %865 = vdwg.mxu0
        %866 = vmatprep.subr.mxu0 %v412
        %867 = vmatpush1.msra.mxu0 %v411
        %868 = vmatprep.subr.mxu0 %v416
        %869 = vmatpush1.msra.mxu0 %v415
        %870 = vmatprep.subr.mxu0 %v420
        %871 = vmatpush1.msra.mxu0 %v419
        %872 = vmatprep.subr.mxu0 %v424
        %873 = vmatpush1.msra.mxu0 %v423
        %874 = vmatprep.subr.mxu0 %v428
        %875 = vmatpush1.msra.mxu0 %v427
        %876 = vmatprep.subr.mxu0 %v432
        %877 = vmatpush1.msra.mxu0 %v431
        %878 = vmatprep.subr.mxu0 %v436
        %879 = vmatpush1.msra.mxu0 %v435
        %880 = vmatprep.subr.mxu0 %v440
        %881 = vmatpush1.msra.mxu0 %v439
        %882 = vmatprep.subr.mxu0 %v444
        %883 = vmatpush1.msra.mxu0 %v443
        %884 = vmatprep.subr.mxu0 %v448
        %885 = vmatpush1.msra.mxu0 %v447
        %886 = vmatprep.subr.mxu0 %v452
        %887 = vmatpush1.msra.mxu0 %v451
        %888 = vmatprep.subr.mxu0 %v456
        %889 = vmatpush1.msra.mxu0 %v455
        %890 = vmatprep.subr.mxu0 %v460
        %891 = vmatpush1.msra.mxu0 %v459
        %892 = vmatprep.subr.mxu0 %v464
        %893 = vmatpush1.msra.mxu0 %v463
        %894 = vmatprep.subr.mxu0 %v468
        %895 = vmatpush1.msra.mxu0 %v467
        %896 = vmatprep.subr.mxu0 %v472
        %897 = vmatpush1.msra.mxu0 %v471
        %898 = vmatprep.subr.mxu0 %v476
        %899 = vmatpush1.msra.mxu0 %v475
        %900 = vmatprep.subr.mxu0 %v480
        %901 = vmatpush1.msra.mxu0 %v479
        %902 = vmatprep.subr.mxu0 %v484
        %903 = vmatpush1.msra.mxu0 %v483
        %904 = vmatprep.subr.mxu0 %v488
        %905 = vmatpush1.msra.mxu0 %v487
        %906 = vmatprep.subr.mxu0 %v492
        %907 = vmatpush1.msra.mxu0 %v491
        %908 = vmatprep.subr.mxu0 %v496
        %909 = vmatpush1.msra.mxu0 %v495
        %910 = vmatprep.subr.mxu0 %v500
        %911 = vmatpush1.msra.mxu0 %v499
        %912 = vmatprep.subr.mxu0 %v504
        %913 = vmatpush1.msra.mxu0 %v503
        %914 = vmatprep.subr.mxu0 %v508
        %915 = vmatpush1.msra.mxu0 %v507
        %916 = vmatprep.subr.mxu0 %v512
        %917 = vmatpush1.msra.mxu0 %v511
        %918 = vmatprep.subr.mxu0 %v516
        %919 = vmatpush1.msra.mxu0 %v515
        %920 = vmatprep.subr.mxu0 %v520
        %921 = vmatpush1.msra.mxu0 %v519
        %922 = vmatprep.subr.mxu0 %v524
        %923 = vmatpush1.msra.mxu0 %v523
        %924 = vmatprep.subr.mxu0 %v528
        %925 = vmatpush1.msra.mxu0 %v527
        %926 = vmatprep.subr.mxu0 %v532
        %927 = vmatpush1.msra.mxu0 %v531
        %928 = vmatprep.subr.mxu0 %v536
        %929 = vmatpush1.msra.mxu0 %v535
        %930 = vmatprep.mubr.f32.mxu0 %v278
        %931 = vmatmul.mubr.f32.gmra.mrb[0].mxu0 %v277
        %v932 = vpop.f32.mrb[0].mxu0
        %v933 = vadd.f32 %v862, %v932
        %v934 = vpop.f32.mrb[0].mxu0
        %v935 = vadd.f32 %v864, %v934
        %936 = vdwg.mxu0
        %937 = vmatprep.subr.mxu0 %v540
        %938 = vmatpush1.msra.mxu0 %v539
        %939 = vmatprep.subr.mxu0 %v544
        %940 = vmatpush1.msra.mxu0 %v543
        %941 = vmatprep.subr.mxu0 %v548
        %942 = vmatpush1.msra.mxu0 %v547
        %943 = vmatprep.subr.mxu0 %v552
        %944 = vmatpush1.msra.mxu0 %v551
        %945 = vmatprep.subr.mxu0 %v556
        %946 = vmatpush1.msra.mxu0 %v555
        %947 = vmatprep.subr.mxu0 %v560
        %948 = vmatpush1.msra.mxu0 %v559
        %949 = vmatprep.subr.mxu0 %v564
        %950 = vmatpush1.msra.mxu0 %v563
        %951 = vmatprep.subr.mxu0 %v568
        %952 = vmatpush1.msra.mxu0 %v567
        %953 = vmatprep.subr.mxu0 %v572
        %954 = vmatpush1.msra.mxu0 %v571
        %955 = vmatprep.subr.mxu0 %v576
        %956 = vmatpush1.msra.mxu0 %v575
        %957 = vmatprep.subr.mxu0 %v580
        %958 = vmatpush1.msra.mxu0 %v579
        %959 = vmatprep.subr.mxu0 %v584
        %960 = vmatpush1.msra.mxu0 %v583
        %961 = vmatprep.subr.mxu0 %v588
        %962 = vmatpush1.msra.mxu0 %v587
        %963 = vmatprep.subr.mxu0 %v592
        %964 = vmatpush1.msra.mxu0 %v591
        %965 = vmatprep.subr.mxu0 %v596
        %966 = vmatpush1.msra.mxu0 %v595
        %967 = vmatprep.subr.mxu0 %v600
        %968 = vmatpush1.msra.mxu0 %v599
        %969 = vmatprep.subr.mxu0 %v604
        %970 = vmatpush1.msra.mxu0 %v603
        %971 = vmatprep.subr.mxu0 %v608
        %972 = vmatpush1.msra.mxu0 %v607
        %973 = vmatprep.subr.mxu0 %v612
        %974 = vmatpush1.msra.mxu0 %v611
        %975 = vmatprep.subr.mxu0 %v616
        %976 = vmatpush1.msra.mxu0 %v615
        %977 = vmatprep.subr.mxu0 %v620
        %978 = vmatpush1.msra.mxu0 %v619
        %979 = vmatprep.subr.mxu0 %v624
        %980 = vmatpush1.msra.mxu0 %v623
        %981 = vmatprep.subr.mxu0 %v628
        %982 = vmatpush1.msra.mxu0 %v627
        %983 = vmatprep.subr.mxu0 %v632
        %984 = vmatpush1.msra.mxu0 %v631
        %985 = vmatprep.subr.mxu0 %v636
        %986 = vmatpush1.msra.mxu0 %v635
        %987 = vmatprep.subr.mxu0 %v640
        %988 = vmatpush1.msra.mxu0 %v639
        %989 = vmatprep.subr.mxu0 %v644
        %990 = vmatpush1.msra.mxu0 %v643
        %991 = vmatprep.subr.mxu0 %v648
        %992 = vmatpush1.msra.mxu0 %v647
        %993 = vmatprep.subr.mxu0 %v652
        %994 = vmatpush1.msra.mxu0 %v651
        %995 = vmatprep.subr.mxu0 %v656
        %996 = vmatpush1.msra.mxu0 %v655
        %997 = vmatprep.subr.mxu0 %v660
        %998 = vmatpush1.msra.mxu0 %v659
        %999 = vmatprep.subr.mxu0 %v664
        %1000 = vmatpush1.msra.mxu0 %v663
        %1001 = vmatprep.mubr.f32.mxu0 %v280
        %1002 = vmatmul.mubr.f32.gmra.mrb[0].mxu0 %v279
        %v1003 = vpop.f32.mrb[0].mxu0
        %v1004 = vadd.f32 %v933, %v1003
        %v1005 = vpop.f32.mrb[0].mxu0
        %v1006 = vadd.f32 %v935, %v1005
        %1007 = vdwg.mxu0
        %1008 = vmatprep.subr.mxu0 %v668
        %1009 = vmatpush1.msra.mxu0 %v667
        %1010 = vmatprep.subr.mxu0 %v672
        %1011 = vmatpush1.msra.mxu0 %v671
        %1012 = vmatprep.subr.mxu0 %v676
        %1013 = vmatpush1.msra.mxu0 %v675
        %1014 = vmatprep.subr.mxu0 %v680
        %1015 = vmatpush1.msra.mxu0 %v679
        %1016 = vmatprep.subr.mxu0 %v684
        %1017 = vmatpush1.msra.mxu0 %v683
        %1018 = vmatprep.subr.mxu0 %v688
        %1019 = vmatpush1.msra.mxu0 %v687
        %1020 = vmatprep.subr.mxu0 %v692
        %1021 = vmatpush1.msra.mxu0 %v691
        %1022 = vmatprep.subr.mxu0 %v696
        %1023 = vmatpush1.msra.mxu0 %v695
        %1024 = vmatprep.subr.mxu0 %v700
        %1025 = vmatpush1.msra.mxu0 %v699
        %1026 = vmatprep.subr.mxu0 %v704
        %1027 = vmatpush1.msra.mxu0 %v703
        %1028 = vmatprep.subr.mxu0 %v708
        %1029 = vmatpush1.msra.mxu0 %v707
        %1030 = vmatprep.subr.mxu0 %v712
        %1031 = vmatpush1.msra.mxu0 %v711
        %1032 = vmatprep.subr.mxu0 %v716
        %1033 = vmatpush1.msra.mxu0 %v715
        %1034 = vmatprep.subr.mxu0 %v720
        %1035 = vmatpush1.msra.mxu0 %v719
        %1036 = vmatprep.subr.mxu0 %v724
        %1037 = vmatpush1.msra.mxu0 %v723
        %1038 = vmatprep.subr.mxu0 %v728
        %1039 = vmatpush1.msra.mxu0 %v727
        %1040 = vmatprep.subr.mxu0 %v732
        %1041 = vmatpush1.msra.mxu0 %v731
        %1042 = vmatprep.subr.mxu0 %v736
        %1043 = vmatpush1.msra.mxu0 %v735
        %1044 = vmatprep.subr.mxu0 %v740
        %1045 = vmatpush1.msra.mxu0 %v739
        %1046 = vmatprep.subr.mxu0 %v744
        %1047 = vmatpush1.msra.mxu0 %v743
        %1048 = vmatprep.subr.mxu0 %v748
        %1049 = vmatpush1.msra.mxu0 %v747
        %1050 = vmatprep.subr.mxu0 %v752
        %1051 = vmatpush1.msra.mxu0 %v751
        %1052 = vmatprep.subr.mxu0 %v756
        %1053 = vmatpush1.msra.mxu0 %v755
        %1054 = vmatprep.subr.mxu0 %v760
        %1055 = vmatpush1.msra.mxu0 %v759
        %1056 = vmatprep.subr.mxu0 %v764
        %1057 = vmatpush1.msra.mxu0 %v763
        %1058 = vmatprep.subr.mxu0 %v768
        %1059 = vmatpush1.msra.mxu0 %v767
        %1060 = vmatprep.subr.mxu0 %v772
        %1061 = vmatpush1.msra.mxu0 %v771
        %1062 = vmatprep.subr.mxu0 %v776
        %1063 = vmatpush1.msra.mxu0 %v775
        %1064 = vmatprep.subr.mxu0 %v780
        %1065 = vmatpush1.msra.mxu0 %v779
        %1066 = vmatprep.subr.mxu0 %v784
        %1067 = vmatpush1.msra.mxu0 %v783
        %1068 = vmatprep.subr.mxu0 %v788
        %1069 = vmatpush1.msra.mxu0 %v787
        %1070 = vmatprep.subr.mxu0 %v792
        %1071 = vmatpush1.msra.mxu0 %v791
        %1072 = vmatprep.mubr.f32.mxu0 %v282
        %1073 = vmatmul.mubr.f32.gmra.mrb[0].mxu0 %v281
        %v1074 = vpop.f32.mrb[0].mxu0
        %v1075 = vadd.f32 %v1004, %v1074
        %v1076 = vpop.f32.mrb[0].mxu0
        %v1077 = vadd.f32 %v1006, %v1076
        %1078 = vdwg.mxu0
        %1079 = vmatprep.subr.mxu0 %v286
        %1080 = vmatpush1.msra.mxu0 %v285
        %1081 = vmatprep.subr.mxu0 %v290
        %1082 = vmatpush1.msra.mxu0 %v289
        %1083 = vmatprep.subr.mxu0 %v294
        %1084 = vmatpush1.msra.mxu0 %v293
        %1085 = vmatprep.subr.mxu0 %v298
        %1086 = vmatpush1.msra.mxu0 %v297
        %1087 = vmatprep.subr.mxu0 %v302
        %1088 = vmatpush1.msra.mxu0 %v301
        %1089 = vmatprep.subr.mxu0 %v306
        %1090 = vmatpush1.msra.mxu0 %v305
        %1091 = vmatprep.subr.mxu0 %v310
        %1092 = vmatpush1.msra.mxu0 %v309
        %1093 = vmatprep.subr.mxu0 %v314
        %1094 = vmatpush1.msra.mxu0 %v313
        %1095 = vmatprep.subr.mxu0 %v318
        %1096 = vmatpush1.msra.mxu0 %v317
        %1097 = vmatprep.subr.mxu0 %v322
        %1098 = vmatpush1.msra.mxu0 %v321
        %1099 = vmatprep.subr.mxu0 %v326
        %1100 = vmatpush1.msra.mxu0 %v325
        %1101 = vmatprep.subr.mxu0 %v330
        %1102 = vmatpush1.msra.mxu0 %v329
        %1103 = vmatprep.subr.mxu0 %v334
        %1104 = vmatpush1.msra.mxu0 %v333
        %1105 = vmatprep.subr.mxu0 %v338
        %1106 = vmatpush1.msra.mxu0 %v337
        %1107 = vmatprep.subr.mxu0 %v342
        %1108 = vmatpush1.msra.mxu0 %v341
        %1109 = vmatprep.subr.mxu0 %v346
        %1110 = vmatpush1.msra.mxu0 %v345
        %1111 = vmatprep.subr.mxu0 %v350
        %1112 = vmatpush1.msra.mxu0 %v349
        %1113 = vmatprep.subr.mxu0 %v354
        %1114 = vmatpush1.msra.mxu0 %v353
        %1115 = vmatprep.subr.mxu0 %v358
        %1116 = vmatpush1.msra.mxu0 %v357
        %1117 = vmatprep.subr.mxu0 %v362
        %1118 = vmatpush1.msra.mxu0 %v361
        %1119 = vmatprep.subr.mxu0 %v366
        %1120 = vmatpush1.msra.mxu0 %v365
        %1121 = vmatprep.subr.mxu0 %v370
        %1122 = vmatpush1.msra.mxu0 %v369
        %1123 = vmatprep.subr.mxu0 %v374
        %1124 = vmatpush1.msra.mxu0 %v373
        %1125 = vmatprep.subr.mxu0 %v378
        %1126 = vmatpush1.msra.mxu0 %v377
        %1127 = vmatprep.subr.mxu0 %v382
        %1128 = vmatpush1.msra.mxu0 %v381
        %1129 = vmatprep.subr.mxu0 %v386
        %1130 = vmatpush1.msra.mxu0 %v385
        %1131 = vmatprep.subr.mxu0 %v390
        %1132 = vmatpush1.msra.mxu0 %v389
        %1133 = vmatprep.subr.mxu0 %v394
        %1134 = vmatpush1.msra.mxu0 %v393
        %1135 = vmatprep.subr.mxu0 %v398
        %1136 = vmatpush1.msra.mxu0 %v397
        %1137 = vmatprep.subr.mxu0 %v402
        %1138 = vmatpush1.msra.mxu0 %v401
        %1139 = vmatprep.subr.mxu0 %v406
        %1140 = vmatpush1.msra.mxu0 %v405
        %1141 = vmatprep.subr.mxu0 %v410
        %1142 = vmatpush1.msra.mxu0 %v409
        %1143 = vmatprep.mubr.f32.mxu0 %v276
        %1144 = vmatmul.mubr.f32.gmra.mrb[0].mxu0 %v275
        %v1145 = vpop.f32.mrb[0].mxu0
        %v1146 = vadd.f32 0.0, %v1145
        %v1147 = vpop.f32.mrb[0].mxu0
        %v1148 = vadd.f32 0.0, %v1147
        %1149 = vdwg.mxu0
        %1150 = vmatprep.subr.mxu0 %v414
        %1151 = vmatpush1.msra.mxu0 %v413
        %1152 = vmatprep.subr.mxu0 %v418
        %1153 = vmatpush1.msra.mxu0 %v417
        %1154 = vmatprep.subr.mxu0 %v422
        %1155 = vmatpush1.msra.mxu0 %v421
        %1156 = vmatprep.subr.mxu0 %v426
        %1157 = vmatpush1.msra.mxu0 %v425
        %1158 = vmatprep.subr.mxu0 %v430
        %1159 = vmatpush1.msra.mxu0 %v429
        %1160 = vmatprep.subr.mxu0 %v434
        %1161 = vmatpush1.msra.mxu0 %v433
        %1162 = vmatprep.subr.mxu0 %v438
        %1163 = vmatpush1.msra.mxu0 %v437
        %1164 = vmatprep.subr.mxu0 %v442
        %1165 = vmatpush1.msra.mxu0 %v441
        %1166 = vmatprep.subr.mxu0 %v446
        %1167 = vmatpush1.msra.mxu0 %v445
        %1168 = vmatprep.subr.mxu0 %v450
        %1169 = vmatpush1.msra.mxu0 %v449
        %1170 = vmatprep.subr.mxu0 %v454
        %1171 = vmatpush1.msra.mxu0 %v453
        %1172 = vmatprep.subr.mxu0 %v458
        %1173 = vmatpush1.msra.mxu0 %v457
        %1174 = vmatprep.subr.mxu0 %v462
        %1175 = vmatpush1.msra.mxu0 %v461
        %1176 = vmatprep.subr.mxu0 %v466
        %1177 = vmatpush1.msra.mxu0 %v465
        %1178 = vmatprep.subr.mxu0 %v470
        %1179 = vmatpush1.msra.mxu0 %v469
        %1180 = vmatprep.subr.mxu0 %v474
        %1181 = vmatpush1.msra.mxu0 %v473
        %1182 = vmatprep.subr.mxu0 %v478
        %1183 = vmatpush1.msra.mxu0 %v477
        %1184 = vmatprep.subr.mxu0 %v482
        %1185 = vmatpush1.msra.mxu0 %v481
        %1186 = vmatprep.subr.mxu0 %v486
        %1187 = vmatpush1.msra.mxu0 %v485
        %1188 = vmatprep.subr.mxu0 %v490
        %1189 = vmatpush1.msra.mxu0 %v489
        %1190 = vmatprep.subr.mxu0 %v494
        %1191 = vmatpush1.msra.mxu0 %v493
        %1192 = vmatprep.subr.mxu0 %v498
        %1193 = vmatpush1.msra.mxu0 %v497
        %1194 = vmatprep.subr.mxu0 %v502
        %1195 = vmatpush1.msra.mxu0 %v501
        %1196 = vmatprep.subr.mxu0 %v506
        %1197 = vmatpush1.msra.mxu0 %v505
        %1198 = vmatprep.subr.mxu0 %v510
        %1199 = vmatpush1.msra.mxu0 %v509
        %1200 = vmatprep.subr.mxu0 %v514
        %1201 = vmatpush1.msra.mxu0 %v513
        %1202 = vmatprep.subr.mxu0 %v518
        %1203 = vmatpush1.msra.mxu0 %v517
        %1204 = vmatprep.subr.mxu0 %v522
        %1205 = vmatpush1.msra.mxu0 %v521
        %1206 = vmatprep.subr.mxu0 %v526
        %1207 = vmatpush1.msra.mxu0 %v525
        %1208 = vmatprep.subr.mxu0 %v530
        %1209 = vmatpush1.msra.mxu0 %v529
        %1210 = vmatprep.subr.mxu0 %v534
        %1211 = vmatpush1.msra.mxu0 %v533
        %1212 = vmatprep.subr.mxu0 %v538
        %1213 = vmatpush1.msra.mxu0 %v537
        %1214 = vmatprep.mubr.f32.mxu0 %v278
        %1215 = vmatmul.mubr.f32.gmra.mrb[0].mxu0 %v277
        %v1216 = vpop.f32.mrb[0].mxu0
        %v1217 = vadd.f32 %v1146, %v1216
        %v1218 = vpop.f32.mrb[0].mxu0
        %v1219 = vadd.f32 %v1148, %v1218
        %1220 = vdwg.mxu0
        %1221 = vmatprep.subr.mxu0 %v542
        %1222 = vmatpush1.msra.mxu0 %v541
        %1223 = vmatprep.subr.mxu0 %v546
        %1224 = vmatpush1.msra.mxu0 %v545
        %1225 = vmatprep.subr.mxu0 %v550
        %1226 = vmatpush1.msra.mxu0 %v549
        %1227 = vmatprep.subr.mxu0 %v554
        %1228 = vmatpush1.msra.mxu0 %v553
        %1229 = vmatprep.subr.mxu0 %v558
        %1230 = vmatpush1.msra.mxu0 %v557
        %1231 = vmatprep.subr.mxu0 %v562
        %1232 = vmatpush1.msra.mxu0 %v561
        %1233 = vmatprep.subr.mxu0 %v566
        %1234 = vmatpush1.msra.mxu0 %v565
        %1235 = vmatprep.subr.mxu0 %v570
        %1236 = vmatpush1.msra.mxu0 %v569
        %1237 = vmatprep.subr.mxu0 %v574
        %1238 = vmatpush1.msra.mxu0 %v573
        %1239 = vmatprep.subr.mxu0 %v578
        %1240 = vmatpush1.msra.mxu0 %v577
        %1241 = vmatprep.subr.mxu0 %v582
        %1242 = vmatpush1.msra.mxu0 %v581
        %1243 = vmatprep.subr.mxu0 %v586
        %1244 = vmatpush1.msra.mxu0 %v585
        %1245 = vmatprep.subr.mxu0 %v590
        %1246 = vmatpush1.msra.mxu0 %v589
        %1247 = vmatprep.subr.mxu0 %v594
        %1248 = vmatpush1.msra.mxu0 %v593
        %1249 = vmatprep.subr.mxu0 %v598
        %1250 = vmatpush1.msra.mxu0 %v597
        %1251 = vmatprep.subr.mxu0 %v602
        %1252 = vmatpush1.msra.mxu0 %v601
        %1253 = vmatprep.subr.mxu0 %v606
        %1254 = vmatpush1.msra.mxu0 %v605
        %1255 = vmatprep.subr.mxu0 %v610
        %1256 = vmatpush1.msra.mxu0 %v609
        %1257 = vmatprep.subr.mxu0 %v614
        %1258 = vmatpush1.msra.mxu0 %v613
        %1259 = vmatprep.subr.mxu0 %v618
        %1260 = vmatpush1.msra.mxu0 %v617
        %1261 = vmatprep.subr.mxu0 %v622
        %1262 = vmatpush1.msra.mxu0 %v621
        %1263 = vmatprep.subr.mxu0 %v626
        %1264 = vmatpush1.msra.mxu0 %v625
        %1265 = vmatprep.subr.mxu0 %v630
        %1266 = vmatpush1.msra.mxu0 %v629
        %1267 = vmatprep.subr.mxu0 %v634
        %1268 = vmatpush1.msra.mxu0 %v633
        %1269 = vmatprep.subr.mxu0 %v638
        %1270 = vmatpush1.msra.mxu0 %v637
        %1271 = vmatprep.subr.mxu0 %v642
        %1272 = vmatpush1.msra.mxu0 %v641
        %1273 = vmatprep.subr.mxu0 %v646
        %1274 = vmatpush1.msra.mxu0 %v645
        %1275 = vmatprep.subr.mxu0 %v650
        %1276 = vmatpush1.msra.mxu0 %v649
        %1277 = vmatprep.subr.mxu0 %v654
        %1278 = vmatpush1.msra.mxu0 %v653
        %1279 = vmatprep.subr.mxu0 %v658
        %1280 = vmatpush1.msra.mxu0 %v657
        %1281 = vmatprep.subr.mxu0 %v662
        %1282 = vmatpush1.msra.mxu0 %v661
        %1283 = vmatprep.subr.mxu0 %v666
        %1284 = vmatpush1.msra.mxu0 %v665
        %1285 = vmatprep.mubr.f32.mxu0 %v280
        %1286 = vmatmul.mubr.f32.gmra.mrb[0].mxu0 %v279
        %v1287 = vpop.f32.mrb[0].mxu0
        %v1288 = vadd.f32 %v1217, %v1287
        %v1289 = vpop.f32.mrb[0].mxu0
        %v1290 = vadd.f32 %v1219, %v1289
        %1291 = vdwg.mxu0
        %1292 = vmatprep.subr.mxu0 %v670
        %1293 = vmatpush1.msra.mxu0 %v669
        %1294 = vmatprep.subr.mxu0 %v674
        %1295 = vmatpush1.msra.mxu0 %v673
        %1296 = vmatprep.subr.mxu0 %v678
        %1297 = vmatpush1.msra.mxu0 %v677
        %1298 = vmatprep.subr.mxu0 %v682
        %1299 = vmatpush1.msra.mxu0 %v681
        %1300 = vmatprep.subr.mxu0 %v686
        %1301 = vmatpush1.msra.mxu0 %v685
        %1302 = vmatprep.subr.mxu0 %v690
        %1303 = vmatpush1.msra.mxu0 %v689
        %1304 = vmatprep.subr.mxu0 %v694
        %1305 = vmatpush1.msra.mxu0 %v693
        %1306 = vmatprep.subr.mxu0 %v698
        %1307 = vmatpush1.msra.mxu0 %v697
        %1308 = vmatprep.subr.mxu0 %v702
        %1309 = vmatpush1.msra.mxu0 %v701
        %1310 = vmatprep.subr.mxu0 %v706
        %1311 = vmatpush1.msra.mxu0 %v705
        %1312 = vmatprep.subr.mxu0 %v710
        %1313 = vmatpush1.msra.mxu0 %v709
        %1314 = vmatprep.subr.mxu0 %v714
        %1315 = vmatpush1.msra.mxu0 %v713
        %1316 = vmatprep.subr.mxu0 %v718
        %1317 = vmatpush1.msra.mxu0 %v717
        %1318 = vmatprep.subr.mxu0 %v722
        %1319 = vmatpush1.msra.mxu0 %v721
        %1320 = vmatprep.subr.mxu0 %v726
        %1321 = vmatpush1.msra.mxu0 %v725
        %1322 = vmatprep.subr.mxu0 %v730
        %1323 = vmatpush1.msra.mxu0 %v729
        %1324 = vmatprep.subr.mxu0 %v734
        %1325 = vmatpush1.msra.mxu0 %v733
        %1326 = vmatprep.subr.mxu0 %v738
        %1327 = vmatpush1.msra.mxu0 %v737
        %1328 = vmatprep.subr.mxu0 %v742
        %1329 = vmatpush1.msra.mxu0 %v741
        %1330 = vmatprep.subr.mxu0 %v746
        %1331 = vmatpush1.msra.mxu0 %v745
        %1332 = vmatprep.subr.mxu0 %v750
        %1333 = vmatpush1.msra.mxu0 %v749
        %1334 = vmatprep.subr.mxu0 %v754
        %1335 = vmatpush1.msra.mxu0 %v753
        %1336 = vmatprep.subr.mxu0 %v758
        %1337 = vmatpush1.msra.mxu0 %v757
        %1338 = vmatprep.subr.mxu0 %v762
        %1339 = vmatpush1.msra.mxu0 %v761
        %1340 = vmatprep.subr.mxu0 %v766
        %1341 = vmatpush1.msra.mxu0 %v765
        %1342 = vmatprep.subr.mxu0 %v770
        %1343 = vmatpush1.msra.mxu0 %v769
        %1344 = vmatprep.subr.mxu0 %v774
        %1345 = vmatpush1.msra.mxu0 %v773
        %1346 = vmatprep.subr.mxu0 %v778
        %1347 = vmatpush1.msra.mxu0 %v777
        %1348 = vmatprep.subr.mxu0 %v782
        %1349 = vmatpush1.msra.mxu0 %v781
        %1350 = vmatprep.subr.mxu0 %v786
        %1351 = vmatpush1.msra.mxu0 %v785
        %1352 = vmatprep.subr.mxu0 %v790
        %1353 = vmatpush1.msra.mxu0 %v789
        %1354 = vmatprep.subr.mxu0 %v794
        %1355 = vmatpush1.msra.mxu0 %v793
        %1356 = vmatprep.mubr.f32.mxu0 %v282
        %1357 = vmatmul.mubr.f32.gmra.mrb[0].mxu0 %v281
        %v1358 = vpop.f32.mrb[0].mxu0
        %v1359 = vadd.f32 %v1288, %v1358
        %v1360 = vpop.f32.mrb[0].mxu0
        %v1361 = vadd.f32 %v1290, %v1360
        %1362 = vdwg.mxu0
        %v1363 = vadd.f32 %v271, %v1075
        %v1364 = vadd.f32 %v272, %v1077
        %v1365 = vadd.f32 %v273, %v1359
        %v1366 = vadd.f32 %v274, %v1361
        %1367 = vst [vmem:[#allocation2] sm:$0xff] %v1363
        %1368 = vst [vmem:[#allocation2 + $0x8] sm:$0xff] %v1364
        %1369 = vst [vmem:[#allocation2 + $0x10] sm:$0xff] %v1365
        %1370 = vst [vmem:[#allocation2 + $0x18] sm:$0xff] %v1366
        // Predicated region
        $region49: #{ae_cnn_forward.31} parent=31 // pred_check
          %p1371 = pneg %p263
        $region50: #{ae_cnn_forward.31} parent=31 // pred_check_branch
          %1373 = sbr.rel (%p1371) target = $region52
        $region51: #{ae_cnn_forward.31} parent=31 // pred_region
          %v1374 = vld [vmem:[#allocation2] sm:$0xff]
          %v1375 = vld [vmem:[#allocation2 + $0x8] sm:$0xff]
          %v1376 = vld [vmem:[#allocation2 + $0x10] sm:$0xff]
          %v1377 = vld [vmem:[#allocation2 + $0x18] sm:$0xff]
          %v1378 = vld [vmem:[#allocation8] sm:$0xff]
          %1380 = vset.pattern.permute.xlu0 0
          %1381 = vperm.xlu0 %1380, %v1378
          %v1382 = vpop.permute.xlu0 %1381
          %v1384 = vadd.f32 %v1374, %v1382
          %v1385 = vadd.f32 %v1375, %v1382
          %v1386 = vadd.f32 %v1376, %v1382
          %v1387 = vadd.f32 %v1377, %v1382
          %v1388 = vmul.f32 %v1384, 0.5
          %v1389 = vmul.f32 %v1385, 0.5
          %v1390 = vmul.f32 %v1386, 0.5
          %v1391 = vmul.f32 %v1387, 0.5
          %v1392 = vtanh.pop %v1388
          %v1393 = vtanh.pop %v1389
          %v1394 = vtanh.pop %v1390
          %v1395 = vtanh.pop %v1391
          %v1396 = vadd.f32 %v1392, 1.0
          %v1397 = vadd.f32 %v1393, 1.0
          %v1398 = vadd.f32 %v1394, 1.0
          %v1399 = vadd.f32 %v1395, 1.0
          %v1400 = vmul.f32 %v1396, 0.5
          %v1401 = vmul.f32 %v1397, 0.5
          %v1402 = vmul.f32 %v1398, 0.5
          %v1403 = vmul.f32 %v1399, 0.5
          %1404 = vst [vmem:[%s258] sm:$0xff] %v1400
          %1405 = vst [vmem:[%s258 + $0x8] sm:$0xff] %v1401
          %1406 = vst [vmem:[%s258 + $0x10] sm:$0xff] %v1402
          %1407 = vst [vmem:[%s258 + $0x18] sm:$0xff] %v1403
        $region52: #{ae_cnn_forward.31} parent=31 // pred_fallthru
          _
        %s1408 = sand.u32 %s132, 1
        %s1409 = scalar_lea.sflag [#allocation5], %s1408
        %s1410 = sand.u32 %s132, 1
        %s1411 = smul.addr %s1410, 32
        %s1412 = scalar_lea.vmem [#allocation9], %s1411
        // Predicated region
        $region53: #{ae_cnn_forward.31} parent=31 // pred_check
          %p1413 = pneg %p142
        $region54: #{ae_cnn_forward.31} parent=31 // pred_check_branch
          %1415 = sbr.rel (%p1413) target = $region56
        $region55: #{ae_cnn_forward.31} parent=31 // pred_region
          %s1416 = smul.u32 4, %s27
          %s1418 = ssub.s32 512, 512
          %1419 = vsyncadd %s1409, %s1418
          %s1420 = smul.addr %s26, 20
          %s1421 = sadd.s32 %s1416, %s1420
          %s1422 = smul.addr %s1421, 128
          %s1423 = scalar_lea.hbm %s3, %s1422
          %s1425 = sshll.u32 %s1412, 4
          %s1426 = int_to_ptr.vmem [resolvable:$true] %s1425
          %1428 = dma.vmem_to_hbm [thread:$0]  %s1426, 512, %s1423, %s1409
        $region56: #{ae_cnn_forward.31} parent=31 // pred_fallthru
          _
      $region32: #{ae_cnn_forward.31} parent=5 // pred_fallthru
        _
      %p1429 = scmp.le.s32.totalorder 2, %s16
      // Predicated region
      $region57: #{ae_cnn_forward.31} parent=5 // pred_check
        %p1430 = pneg %p1429
      $region58: #{ae_cnn_forward.31} parent=5 // pred_check_branch
        %1432 = sbr.rel (%p1430) target = $region60
      $region59: #{ae_cnn_forward.31} parent=5 // pred_region
        %s1433 = ssub.s32 %s16, 2
        // Predicated region
        $region61: #{ae_cnn_forward.31} parent=59 // pred_check
          %p1434 = pneg %p148
        $region62: #{ae_cnn_forward.31} parent=59 // pred_check_branch
          %1436 = sbr.rel (%p1434) target = $region64
        $region63: #{ae_cnn_forward.31} parent=59 // pred_region
          %s1437 = sand.u32 %s133, 1
          %s1438 = scalar_lea.sflag [#allocation5], %s1437
          %s1439 = sand.u32 %s133, 1
          %s1440 = smul.addr %s1439, 32
          %s1441 = scalar_lea.vmem [#allocation9], %s1440
          %1442 = dma.done %s1438, 512
        $region64: #{ae_cnn_forward.31} parent=59 // pred_fallthru
          _
      $region60: #{ae_cnn_forward.31} parent=5 // pred_fallthru
        _
    $region6: #{ae_cnn_forward.31} parent=1 // loop_footer
      %s20 = sadd.s32 1, %s16
    $region7: #{ae_cnn_forward.31} parent=1 // loop_footer_branch
      %15 = sbr.rel target = $region3
    $region8: #{ae_cnn_forward.31} parent=1 // loop_exit
      _
    %1443 = vsyncpa [#allocation4], 1
    %s1444 = scalar_lea.sflag [#allocation4], 1
    %1445 = vsyncpa %s1444, 1
    %1446 = vsyncpa [#allocation7], 1
    %s1447 = scalar_lea.sflag [#allocation7], 1
    %1448 = vsyncpa %s1447, 1
    %1449 = vsyncpa [#allocation5], 1
    %s1450 = scalar_lea.sflag [#allocation5], 1
    %1451 = vsyncpa %s1450, 1

</llo_original>
